<compile_context>
chip_gen: v6e
topology: v6e:2x2x1
jax: 0.10.0
libtpu: 0.0.40
codegen_flags: <defaults>
</compile_context>

<pallas_src>
import functools

import jax
import jax.numpy as jnp
from jax import lax
from jax.experimental import pallas as pl
from jax.experimental.pallas import tpu as pltpu


# --------------------------- in-kernel helpers -----------------------------
def _unpack_lanes(a2d, w_count, c):
    """(H, W*C) lane-packed slab -> (H, W, C) via static lane slices."""
    h = a2d.shape[0]
    cols = [a2d[:, w * c:(w + 1) * c].reshape(h, 1, c) for w in range(w_count)]
    return jnp.concatenate(cols, axis=1)


def _pack_lanes(a3d):
    """(H, W, C) -> (H, W*C) lane-packed slab via static slices + concat."""
    w_count = a3d.shape[1]
    return jnp.concatenate([a3d[:, w, :] for w in range(w_count)], axis=-1)


def _shift2d(a, dy, dx):
    """a shifted so result[y, x] = a[y+dy, x+dx] (zero fill out of range)."""
    h, w, c = a.shape
    if dy:
        zr = jnp.zeros((1, w, c), a.dtype)
        a = (jnp.concatenate([zr, a[:h - 1]], axis=0) if dy < 0
             else jnp.concatenate([a[1:], zr], axis=0))
    if dx:
        zc = jnp.zeros((a.shape[0], 1, c), a.dtype)
        a = (jnp.concatenate([zc, a[:, :w - 1]], axis=1) if dx < 0
             else jnp.concatenate([a[:, 1:], zc], axis=1))
    return a


def _im2col_3x3(a):
    """(H, W, C) -> (H*W, 9*C) patch matrix for a 3x3 / pad=1 / stride=1 conv."""
    h, w, c = a.shape
    taps = [_shift2d(a, ky - 1, kx - 1) for ky in range(3) for kx in range(3)]
    return jnp.concatenate(taps, axis=-1).reshape(h * w, 9 * c)


# -------------------------------- kernels ----------------------------------
def _make_stage1_kernel(H, W, Cin, Cout):
    def kernel(x_ref, s1_ref, b1_ref, w_ref,
               out1_ref, sc_ref, psum_ref, psq_ref):
        # lane-dense load + BN1/ReLU (pre-broadcast scale/bias rows, pure VPU)
        xd = x_ref[0]                                            # (H, W*Cin)
        a2d = jnp.maximum(xd * s1_ref[...] + b1_ref[...], 0.0)   # relu(bn1(x))

        # im2col -> single MXU matmul; conv1 and the 1x1 shortcut share it
        a = _unpack_lanes(a2d, W, Cin)                           # (H, W, Cin)
        patches = _im2col_3x3(a)                                 # (H*W, 9*Cin)
        res = jnp.dot(patches.astype(w_ref.dtype), w_ref[...],
                      preferred_element_type=jnp.float32)        # (H*W, 2*Cout)
        out1 = res[:, :Cout]
        sc = res[:, Cout:]

        # BN2 partial statistics (per image); avoids re-reading out1 from HBM
        psum_ref[0] = jnp.sum(out1, axis=0, keepdims=True)
        psq_ref[0] = jnp.sum(out1 * out1, axis=0, keepdims=True)

        # lane-dense stores (W*Cout = full 128-lane rows)
        out1_ref[0] = _pack_lanes(out1.reshape(H, W, Cout))
        sc_ref[0] = _pack_lanes(sc.reshape(H, W, Cout))
    return kernel


def _make_stage2_kernel(H, W, Cout):
    def kernel(y_ref, s2_ref, b2_ref, w_ref, sc_ref, out_ref):
        yd = y_ref[0]                                            # (H, W*Cout)
        a2d = jnp.maximum(yd * s2_ref[...] + b2_ref[...], 0.0)   # relu(bn2(y))

        a = _unpack_lanes(a2d, W, Cout)                          # (H, W, Cout)
        patches = _im2col_3x3(a)                                 # (H*W, 9*Cout)
        conv = jnp.dot(patches.astype(w_ref.dtype), w_ref[...],
                       preferred_element_type=jnp.float32)       # (H*W, Cout)

        # single fused lane-dense write: conv2 + shortcut
        out_ref[0] = _pack_lanes(conv.reshape(H, W, Cout)) + sc_ref[0]
    return kernel


# -------------------------------- wrapper ----------------------------------
def preact_block_forward(x_nchw, params, eps=1e-5, compute_dtype=jnp.float32):
    """PreActBlock forward (stride=1, in_planes != planes -> shortcut conv)."""
    # TODO(synk): stride > 1 and the identity-shortcut configuration are not
    # implemented; only the module's default stride=1, Cin != Cout path is.
    # TODO(synk): running_mean / running_var updates of training-mode BN are
    # not emitted (forward output only).
    g1, be1, w1, g2, be2, w2, ws = params
    N, Cin, H, W = x_nchw.shape
    Cout = w1.shape[0]

    x = jnp.transpose(x_nchw, (0, 2, 3, 1)).astype(jnp.float32)   # NCHW -> NHWC
    x_ld = x.reshape(N, H, W * Cin)                               # lane-dense slabs

    # BN1 (training-mode batch stats) folded into lane-dense scale/bias rows.
    m1 = jnp.mean(x, axis=(0, 1, 2))
    v1 = jnp.var(x, axis=(0, 1, 2))
    s1 = g1 / jnp.sqrt(v1 + eps)
    b1 = be1 - m1 * s1
    s1_row = jnp.tile(s1, W).reshape(1, W * Cin)
    b1_row = jnp.tile(b1, W).reshape(1, W * Cin)

    # conv1 OIHW -> (9*Cin, Cout) im2col weight; fold the 1x1 shortcut conv
    # into the same matmul by appending its (zero-embedded) columns.
    w1_mat = jnp.transpose(w1, (2, 3, 1, 0)).reshape(9 * Cin, Cout)
    ws_mat = ws.reshape(Cout, Cin).T                               # (Cin, Cout)
    ws_emb = jnp.zeros((9 * Cin, Cout), jnp.float32).at[4 * Cin:5 * Cin].set(ws_mat)
    w1ws = jnp.concatenate([w1_mat, ws_emb], axis=1).astype(compute_dtype)

    out1_ld, sc_ld, psum, psq = pl.pallas_call(
        _make_stage1_kernel(H, W, Cin, Cout),
        grid=(N,),
        in_specs=[pl.BlockSpec((1, H, W * Cin), lambda i: (i, 0, 0)),
                  pl.BlockSpec((1, W * Cin), lambda i: (0, 0)),
                  pl.BlockSpec((1, W * Cin), lambda i: (0, 0)),
                  pl.BlockSpec((9 * Cin, 2 * Cout), lambda i: (0, 0))],
        out_specs=(pl.BlockSpec((1, H, W * Cout), lambda i: (i, 0, 0)),
                   pl.BlockSpec((1, H, W * Cout), lambda i: (i, 0, 0)),
                   pl.BlockSpec((1, 1, Cout), lambda i: (i, 0, 0)),
                   pl.BlockSpec((1, 1, Cout), lambda i: (i, 0, 0))),
        out_shape=(jax.ShapeDtypeStruct((N, H, W * Cout), jnp.float32),
                   jax.ShapeDtypeStruct((N, H, W * Cout), jnp.float32),
                   jax.ShapeDtypeStruct((N, 1, Cout), jnp.float32),
                   jax.ShapeDtypeStruct((N, 1, Cout), jnp.float32)),
        compiler_params=pltpu.CompilerParams(
            dimension_semantics=("parallel",)),
    )(x_ld, s1_row, b1_row, w1ws)

    # BN2 from kernel-emitted partial sums (only (N,1,Cout) arrays touched).
    n_el = N * H * W
    m2 = jnp.sum(psum, axis=(0, 1)) / n_el
    v2 = jnp.maximum(jnp.sum(psq, axis=(0, 1)) / n_el - m2 * m2, 0.0)
    s2 = g2 / jnp.sqrt(v2 + eps)
    b2 = be2 - m2 * s2
    s2_row = jnp.tile(s2, W).reshape(1, W * Cout)
    b2_row = jnp.tile(b2, W).reshape(1, W * Cout)

    w2_mat = jnp.transpose(w2, (2, 3, 1, 0)).reshape(9 * Cout, Cout).astype(compute_dtype)

    out_ld = pl.pallas_call(
        _make_stage2_kernel(H, W, Cout),
        grid=(N,),
        in_specs=[pl.BlockSpec((1, H, W * Cout), lambda i: (i, 0, 0)),
                  pl.BlockSpec((1, W * Cout), lambda i: (0, 0)),
                  pl.BlockSpec((1, W * Cout), lambda i: (0, 0)),
                  pl.BlockSpec((9 * Cout, Cout), lambda i: (0, 0)),
                  pl.BlockSpec((1, H, W * Cout), lambda i: (i, 0, 0))],
        out_specs=pl.BlockSpec((1, H, W * Cout), lambda i: (i, 0, 0)),
        out_shape=jax.ShapeDtypeStruct((N, H, W * Cout), jnp.float32),
        compiler_params=pltpu.CompilerParams(
            dimension_semantics=("parallel",)),
    )(out1_ld, s2_row, b2_row, w2_mat, sc_ld)

    out = out_ld.reshape(N, H, W, Cout)
    return jnp.transpose(out, (0, 3, 1, 2))                       # NHWC -> NCHW


# --------------------------- pure-JAX reference ----------------------------
def _conv_nchw(x, w, stride, padding):
    return lax.conv_general_dilated(
        x, w, window_strides=(stride, stride),
        padding=((padding, padding), (padding, padding)),
        dimension_numbers=('NCHW', 'OIHW', 'NCHW'),
        precision=lax.Precision.HIGHEST)


def preact_block_reference(x, params, eps=1e-5):
    g1, be1, w1, g2, be2, w2, ws = params

    def bn(t, g, b):
        m = jnp.mean(t, axis=(0, 2, 3), keepdims=True)
        v = jnp.var(t, axis=(0, 2, 3), keepdims=True)
        return ((t - m) / jnp.sqrt(v + eps) * g.reshape(1, -1, 1, 1)
                + b.reshape(1, -1, 1, 1))

    out = jax.nn.relu(bn(x, g1, be1))
    shortcut = _conv_nchw(out, ws, 1, 0)
    out = _conv_nchw(out, w1, 1, 1)
    out = _conv_nchw(jax.nn.relu(bn(out, g2, be2)), w2, 1, 1)
    return out + shortcut


if __name__ == "__main__":
    # shapes consistent with the module: x is NCHW, in_planes=4, planes=8
    N, Cin, Cout, H, W = 2, 4, 8, 16, 16
    key = jax.random.PRNGKey(0)
    ks = jax.random.split(key, 8)

    x = jax.random.normal(ks[0], (N, Cin, H, W), jnp.float32)
    g1 = 1.0 + 0.1 * jax.random.normal(ks[1], (Cin,), jnp.float32)     # bn1.weight
    be1 = 0.1 * jax.random.normal(ks[2], (Cin,), jnp.float32)          # bn1.bias
    w1 = 0.1 * jax.random.normal(ks[3], (Cout, Cin, 3, 3), jnp.float32)   # conv1
    g2 = 1.0 + 0.1 * jax.random.normal(ks[4], (Cout,), jnp.float32)    # bn2.weight
    be2 = 0.1 * jax.random.normal(ks[5], (Cout,), jnp.float32)         # bn2.bias
    w2 = 0.1 * jax.random.normal(ks[6], (Cout, Cout, 3, 3), jnp.float32)  # conv2
    ws = 0.1 * jax.random.normal(ks[7], (Cout, Cin, 1, 1), jnp.float32)   # shortcut
    params = (g1, be1, w1, g2, be2, w2, ws)

    ref = preact_block_reference(x, params)

    # f32 MXU operands (tight tolerance)
    out = jax.block_until_ready(jax.jit(preact_block_forward)(x, params))
    assert out.shape == (N, Cout, H, W), out.shape
    if not jnp.allclose(out, ref, atol=2e-3, rtol=2e-3):
        raise AssertionError(
            f"f32 mismatch vs reference, max abs err = {jnp.max(jnp.abs(out - ref))}")

    # bf16 MXU operands with f32 accumulation (v6e/v7x fast path), looser tol
    fwd_bf16 = jax.jit(functools.partial(preact_block_forward,
                                         compute_dtype=jnp.bfloat16))
    out_b = jax.block_until_ready(fwd_bf16(x, params))
    if not jnp.allclose(out_b, ref, atol=5e-2, rtol=5e-2):
        raise AssertionError(
            f"bf16 mismatch vs reference, max abs err = {jnp.max(jnp.abs(out_b - ref))}")

    print("KERNEL_OK")
</pallas_src>

<mosaic_0001>
module attributes {stable_mosaic.version = 11 : i64} {
  func.func @kernel(%arg0: i32, %arg1: memref<1x16x64xf32, #tpu.memory_space<vmem>>, %arg2: memref<1x64xf32, #tpu.memory_space<vmem>>, %arg3: memref<1x64xf32, #tpu.memory_space<vmem>>, %arg4: memref<36x16xf32, #tpu.memory_space<vmem>>, %arg5: memref<1x16x128xf32, #tpu.memory_space<vmem>>, %arg6: memref<1x16x128xf32, #tpu.memory_space<vmem>>, %arg7: memref<1x1x8xf32, #tpu.memory_space<vmem>>, %arg8: memref<1x1x8xf32, #tpu.memory_space<vmem>>) attributes {dimension_semantics = [#tpu.dimension_semantics<parallel>], iteration_bounds = array<i64: 2>, scalar_prefetch = 0 : i64, scratch_operands = 0 : i64, tpu.core_type = #tpu.core_type<tc>, window_params = [{transform_indices = @transform_0, window_bounds = array<i64: 1, 16, 64>}, {pipeline_mode = #tpu.pipeline_mode<synchronous>, transform_indices = @transform_1, window_bounds = array<i64: 1, 64>}, {pipeline_mode = #tpu.pipeline_mode<synchronous>, transform_indices = @transform_2, window_bounds = array<i64: 1, 64>}, {pipeline_mode = #tpu.pipeline_mode<synchronous>, transform_indices = @transform_3, window_bounds = array<i64: 36, 16>}, {transform_indices = @transform_4, window_bounds = array<i64: 1, 16, 128>}, {transform_indices = @transform_5, window_bounds = array<i64: 1, 16, 128>}, {transform_indices = @transform_6, window_bounds = array<i64: 1, 1, 8>}, {transform_indices = @transform_7, window_bounds = array<i64: 1, 1, 8>}]} {
    %c0 = arith.constant 0 : index
    %c0_0 = arith.constant 0 : index
    %c0_1 = arith.constant 0 : index
    %0 = vector.load %arg1[%c0, %c0_0, %c0_1] : memref<1x16x64xf32, #tpu.memory_space<vmem>>, vector<1x16x64xf32>
    %1 = vector.shape_cast %0 : vector<1x16x64xf32> to vector<16x64xf32>
    %c0_2 = arith.constant 0 : index
    %c0_3 = arith.constant 0 : index
    %2 = vector.load %arg2[%c0_2, %c0_3] : memref<1x64xf32, #tpu.memory_space<vmem>>, vector<1x64xf32>
    %3 = vector.broadcast %2 : vector<1x64xf32> to vector<16x64xf32>
    %4 = arith.mulf %1, %3 : vector<16x64xf32>
    %c0_4 = arith.constant 0 : index
    %c0_5 = arith.constant 0 : index
    %5 = vector.load %arg3[%c0_4, %c0_5] : memref<1x64xf32, #tpu.memory_space<vmem>>, vector<1x64xf32>
    %6 = vector.broadcast %5 : vector<1x64xf32> to vector<16x64xf32>
    %7 = arith.addf %4, %6 : vector<16x64xf32>
    %cst = arith.constant 0.000000e+00 : f32
    %8 = vector.broadcast %cst : f32 to vector<16x64xf32>
    %9 = arith.maximumf %7, %8 : vector<16x64xf32>
    %10 = vector.extract_strided_slice %9 {offsets = [0, 0], sizes = [16, 4], strides = [1, 1]} : vector<16x64xf32> to vector<16x4xf32>
    %11 = vector.shape_cast %10 : vector<16x4xf32> to vector<16x1x4xf32>
    %12 = vector.extract_strided_slice %9 {offsets = [0, 4], sizes = [16, 4], strides = [1, 1]} : vector<16x64xf32> to vector<16x4xf32>
    %13 = vector.shape_cast %12 : vector<16x4xf32> to vector<16x1x4xf32>
    %14 = vector.extract_strided_slice %9 {offsets = [0, 8], sizes = [16, 4], strides = [1, 1]} : vector<16x64xf32> to vector<16x4xf32>
    %15 = vector.shape_cast %14 : vector<16x4xf32> to vector<16x1x4xf32>
    %16 = vector.extract_strided_slice %9 {offsets = [0, 12], sizes = [16, 4], strides = [1, 1]} : vector<16x64xf32> to vector<16x4xf32>
    %17 = vector.shape_cast %16 : vector<16x4xf32> to vector<16x1x4xf32>
    %18 = vector.extract_strided_slice %9 {offsets = [0, 16], sizes = [16, 4], strides = [1, 1]} : vector<16x64xf32> to vector<16x4xf32>
    %19 = vector.shape_cast %18 : vector<16x4xf32> to vector<16x1x4xf32>
    %20 = vector.extract_strided_slice %9 {offsets = [0, 20], sizes = [16, 4], strides = [1, 1]} : vector<16x64xf32> to vector<16x4xf32>
    %21 = vector.shape_cast %20 : vector<16x4xf32> to vector<16x1x4xf32>
    %22 = vector.extract_strided_slice %9 {offsets = [0, 24], sizes = [16, 4], strides = [1, 1]} : vector<16x64xf32> to vector<16x4xf32>
    %23 = vector.shape_cast %22 : vector<16x4xf32> to vector<16x1x4xf32>
    %24 = vector.extract_strided_slice %9 {offsets = [0, 28], sizes = [16, 4], strides = [1, 1]} : vector<16x64xf32> to vector<16x4xf32>
    %25 = vector.shape_cast %24 : vector<16x4xf32> to vector<16x1x4xf32>
    %26 = vector.extract_strided_slice %9 {offsets = [0, 32], sizes = [16, 4], strides = [1, 1]} : vector<16x64xf32> to vector<16x4xf32>
    %27 = vector.shape_cast %26 : vector<16x4xf32> to vector<16x1x4xf32>
    %28 = vector.extract_strided_slice %9 {offsets = [0, 36], sizes = [16, 4], strides = [1, 1]} : vector<16x64xf32> to vector<16x4xf32>
    %29 = vector.shape_cast %28 : vector<16x4xf32> to vector<16x1x4xf32>
    %30 = vector.extract_strided_slice %9 {offsets = [0, 40], sizes = [16, 4], strides = [1, 1]} : vector<16x64xf32> to vector<16x4xf32>
    %31 = vector.shape_cast %30 : vector<16x4xf32> to vector<16x1x4xf32>
    %32 = vector.extract_strided_slice %9 {offsets = [0, 44], sizes = [16, 4], strides = [1, 1]} : vector<16x64xf32> to vector<16x4xf32>
    %33 = vector.shape_cast %32 : vector<16x4xf32> to vector<16x1x4xf32>
    %34 = vector.extract_strided_slice %9 {offsets = [0, 48], sizes = [16, 4], strides = [1, 1]} : vector<16x64xf32> to vector<16x4xf32>
    %35 = vector.shape_cast %34 : vector<16x4xf32> to vector<16x1x4xf32>
    %36 = vector.extract_strided_slice %9 {offsets = [0, 52], sizes = [16, 4], strides = [1, 1]} : vector<16x64xf32> to vector<16x4xf32>
    %37 = vector.shape_cast %36 : vector<16x4xf32> to vector<16x1x4xf32>
    %38 = vector.extract_strided_slice %9 {offsets = [0, 56], sizes = [16, 4], strides = [1, 1]} : vector<16x64xf32> to vector<16x4xf32>
    %39 = vector.shape_cast %38 : vector<16x4xf32> to vector<16x1x4xf32>
    %40 = vector.extract_strided_slice %9 {offsets = [0, 60], sizes = [16, 4], strides = [1, 1]} : vector<16x64xf32> to vector<16x4xf32>
    %41 = vector.shape_cast %40 : vector<16x4xf32> to vector<16x1x4xf32>
    %42 = tpu.concatenate %11, %13, %15, %17, %19, %21, %23, %25, %27, %29, %31, %33, %35, %37, %39, %41 in 1 : vector<16x1x4xf32>, vector<16x1x4xf32>, vector<16x1x4xf32>, vector<16x1x4xf32>, vector<16x1x4xf32>, vector<16x1x4xf32>, vector<16x1x4xf32>, vector<16x1x4xf32>, vector<16x1x4xf32>, vector<16x1x4xf32>, vector<16x1x4xf32>, vector<16x1x4xf32>, vector<16x1x4xf32>, vector<16x1x4xf32>, vector<16x1x4xf32>, vector<16x1x4xf32> -> vector<16x16x4xf32>
    %cst_6 = arith.constant 0.000000e+00 : f32
    %43 = vector.broadcast %cst_6 : f32 to vector<1x16x4xf32>
    %44 = vector.extract_strided_slice %42 {offsets = [0, 0, 0], sizes = [15, 16, 4], strides = [1, 1, 1]} : vector<16x16x4xf32> to vector<15x16x4xf32>
    %45 = tpu.concatenate %43, %44 in 0 : vector<1x16x4xf32>, vector<15x16x4xf32> -> vector<16x16x4xf32>
    %cst_7 = arith.constant 0.000000e+00 : f32
    %46 = vector.broadcast %cst_7 : f32 to vector<16x1x4xf32>
    %47 = vector.extract_strided_slice %45 {offsets = [0, 0, 0], sizes = [16, 15, 4], strides = [1, 1, 1]} : vector<16x16x4xf32> to vector<16x15x4xf32>
    %48 = tpu.concatenate %46, %47 in 1 : vector<16x1x4xf32>, vector<16x15x4xf32> -> vector<16x16x4xf32>
    %cst_8 = arith.constant 0.000000e+00 : f32
    %49 = vector.broadcast %cst_8 : f32 to vector<1x16x4xf32>
    %50 = vector.extract_strided_slice %42 {offsets = [0, 0, 0], sizes = [15, 16, 4], strides = [1, 1, 1]} : vector<16x16x4xf32> to vector<15x16x4xf32>
    %51 = tpu.concatenate %49, %50 in 0 : vector<1x16x4xf32>, vector<15x16x4xf32> -> vector<16x16x4xf32>
    %cst_9 = arith.constant 0.000000e+00 : f32
    %52 = vector.broadcast %cst_9 : f32 to vector<1x16x4xf32>
    %53 = vector.extract_strided_slice %42 {offsets = [0, 0, 0], sizes = [15, 16, 4], strides = [1, 1, 1]} : vector<16x16x4xf32> to vector<15x16x4xf32>
    %54 = tpu.concatenate %52, %53 in 0 : vector<1x16x4xf32>, vector<15x16x4xf32> -> vector<16x16x4xf32>
    %cst_10 = arith.constant 0.000000e+00 : f32
    %55 = vector.broadcast %cst_10 : f32 to vector<16x1x4xf32>
    %56 = vector.extract_strided_slice %54 {offsets = [0, 1, 0], sizes = [16, 15, 4], strides = [1, 1, 1]} : vector<16x16x4xf32> to vector<16x15x4xf32>
    %57 = tpu.concatenate %56, %55 in 1 : vector<16x15x4xf32>, vector<16x1x4xf32> -> vector<16x16x4xf32>
    %cst_11 = arith.constant 0.000000e+00 : f32
    %58 = vector.broadcast %cst_11 : f32 to vector<16x1x4xf32>
    %59 = vector.extract_strided_slice %42 {offsets = [0, 0, 0], sizes = [16, 15, 4], strides = [1, 1, 1]} : vector<16x16x4xf32> to vector<16x15x4xf32>
    %60 = tpu.concatenate %58, %59 in 1 : vector<16x1x4xf32>, vector<16x15x4xf32> -> vector<16x16x4xf32>
    %cst_12 = arith.constant 0.000000e+00 : f32
    %61 = vector.broadcast %cst_12 : f32 to vector<16x1x4xf32>
    %62 = vector.extract_strided_slice %42 {offsets = [0, 1, 0], sizes = [16, 15, 4], strides = [1, 1, 1]} : vector<16x16x4xf32> to vector<16x15x4xf32>
    %63 = tpu.concatenate %62, %61 in 1 : vector<16x15x4xf32>, vector<16x1x4xf32> -> vector<16x16x4xf32>
    %cst_13 = arith.constant 0.000000e+00 : f32
    %64 = vector.broadcast %cst_13 : f32 to vector<1x16x4xf32>
    %65 = vector.extract_strided_slice %42 {offsets = [1, 0, 0], sizes = [15, 16, 4], strides = [1, 1, 1]} : vector<16x16x4xf32> to vector<15x16x4xf32>
    %66 = tpu.concatenate %65, %64 in 0 : vector<15x16x4xf32>, vector<1x16x4xf32> -> vector<16x16x4xf32>
    %cst_14 = arith.constant 0.000000e+00 : f32
    %67 = vector.broadcast %cst_14 : f32 to vector<16x1x4xf32>
    %68 = vector.extract_strided_slice %66 {offsets = [0, 0, 0], sizes = [16, 15, 4], strides = [1, 1, 1]} : vector<16x16x4xf32> to vector<16x15x4xf32>
    %69 = tpu.concatenate %67, %68 in 1 : vector<16x1x4xf32>, vector<16x15x4xf32> -> vector<16x16x4xf32>
    %cst_15 = arith.constant 0.000000e+00 : f32
    %70 = vector.broadcast %cst_15 : f32 to vector<1x16x4xf32>
    %71 = vector.extract_strided_slice %42 {offsets = [1, 0, 0], sizes = [15, 16, 4], strides = [1, 1, 1]} : vector<16x16x4xf32> to vector<15x16x4xf32>
    %72 = tpu.concatenate %71, %70 in 0 : vector<15x16x4xf32>, vector<1x16x4xf32> -> vector<16x16x4xf32>
    %cst_16 = arith.constant 0.000000e+00 : f32
    %73 = vector.broadcast %cst_16 : f32 to vector<1x16x4xf32>
    %74 = vector.extract_strided_slice %42 {offsets = [1, 0, 0], sizes = [15, 16, 4], strides = [1, 1, 1]} : vector<16x16x4xf32> to vector<15x16x4xf32>
    %75 = tpu.concatenate %74, %73 in 0 : vector<15x16x4xf32>, vector<1x16x4xf32> -> vector<16x16x4xf32>
    %cst_17 = arith.constant 0.000000e+00 : f32
    %76 = vector.broadcast %cst_17 : f32 to vector<16x1x4xf32>
    %77 = vector.extract_strided_slice %75 {offsets = [0, 1, 0], sizes = [16, 15, 4], strides = [1, 1, 1]} : vector<16x16x4xf32> to vector<16x15x4xf32>
    %78 = tpu.concatenate %77, %76 in 1 : vector<16x15x4xf32>, vector<16x1x4xf32> -> vector<16x16x4xf32>
    %79 = tpu.concatenate %48, %51, %57, %60, %42, %63, %69, %72, %78 in 2 : vector<16x16x4xf32>, vector<16x16x4xf32>, vector<16x16x4xf32>, vector<16x16x4xf32>, vector<16x16x4xf32>, vector<16x16x4xf32>, vector<16x16x4xf32>, vector<16x16x4xf32>, vector<16x16x4xf32> -> vector<16x16x36xf32>
    %80 = vector.shape_cast %79 : vector<16x16x36xf32> to vector<256x36xf32>
    %c0_18 = arith.constant 0 : index
    %c0_19 = arith.constant 0 : index
    %81 = vector.load %arg4[%c0_18, %c0_19] : memref<36x16xf32, #tpu.memory_space<vmem>>, vector<36x16xf32>
    %cst_20 = arith.constant dense<0.000000e+00> : vector<256x16xf32>
    %82 = tpu.matmul %80, %81, %cst_20 {dimension_numbers = #tpu.dot_dimension_numbers<[1], [0], [0], [1], [0, 0, 1, 1], [], []>} : vector<256x36xf32>, vector<36x16xf32>, vector<256x16xf32> -> vector<256x16xf32>
    %83 = vector.extract_strided_slice %82 {offsets = [0, 0], sizes = [256, 8], strides = [1, 1]} : vector<256x16xf32> to vector<256x8xf32>
    %84 = vector.extract_strided_slice %82 {offsets = [0, 8], sizes = [256, 8], strides = [1, 1]} : vector<256x16xf32> to vector<256x8xf32>
    %cst_21 = arith.constant dense<0.000000e+00> : vector<8xf32>
    %85 = vector.multi_reduction <add>, %83, %cst_21 [0] : vector<256x8xf32> to vector<8xf32>
    %86 = vector.shape_cast %85 : vector<8xf32> to vector<1x8xf32>
    %c0_22 = arith.constant 0 : index
    %c0_23 = arith.constant 0 : index
    %c0_24 = arith.constant 0 : index
    %87 = vector.load %arg7[%c0_22, %c0_23, %c0_24] : memref<1x1x8xf32, #tpu.memory_space<vmem>>, vector<1x1x8xf32>
    %88 = vector.shape_cast %87 : vector<1x1x8xf32> to vector<1x8xf32>
    %89 = vector.shape_cast %86 : vector<1x8xf32> to vector<1x1x8xf32>
    tpu.vector_store %arg7[%c0_22, %c0_23, %c0_24], %89 {strides = array<i32>} : memref<1x1x8xf32, #tpu.memory_space<vmem>>, vector<1x1x8xf32>,
    %90 = arith.mulf %83, %83 : vector<256x8xf32>
    %cst_25 = arith.constant dense<0.000000e+00> : vector<8xf32>
    %91 = vector.multi_reduction <add>, %90, %cst_25 [0] : vector<256x8xf32> to vector<8xf32>
    %92 = vector.shape_cast %91 : vector<8xf32> to vector<1x8xf32>
    %c0_26 = arith.constant 0 : index
    %c0_27 = arith.constant 0 : index
    %c0_28 = arith.constant 0 : index
    %93 = vector.load %arg8[%c0_26, %c0_27, %c0_28] : memref<1x1x8xf32, #tpu.memory_space<vmem>>, vector<1x1x8xf32>
    %94 = vector.shape_cast %93 : vector<1x1x8xf32> to vector<1x8xf32>
    %95 = vector.shape_cast %92 : vector<1x8xf32> to vector<1x1x8xf32>
    tpu.vector_store %arg8[%c0_26, %c0_27, %c0_28], %95 {strides = array<i32>} : memref<1x1x8xf32, #tpu.memory_space<vmem>>, vector<1x1x8xf32>,
    %96 = vector.shape_cast %83 : vector<256x8xf32> to vector<16x16x8xf32>
    %97 = vector.extract_strided_slice %96 {offsets = [0, 0, 0], sizes = [16, 1, 8], strides = [1, 1, 1]} : vector<16x16x8xf32> to vector<16x1x8xf32>
    %98 = vector.shape_cast %97 : vector<16x1x8xf32> to vector<16x8xf32>
    %99 = vector.extract_strided_slice %96 {offsets = [0, 1, 0], sizes = [16, 1, 8], strides = [1, 1, 1]} : vector<16x16x8xf32> to vector<16x1x8xf32>
    %100 = vector.shape_cast %99 : vector<16x1x8xf32> to vector<16x8xf32>
    %101 = vector.extract_strided_slice %96 {offsets = [0, 2, 0], sizes = [16, 1, 8], strides = [1, 1, 1]} : vector<16x16x8xf32> to vector<16x1x8xf32>
    %102 = vector.shape_cast %101 : vector<16x1x8xf32> to vector<16x8xf32>
    %103 = vector.extract_strided_slice %96 {offsets = [0, 3, 0], sizes = [16, 1, 8], strides = [1, 1, 1]} : vector<16x16x8xf32> to vector<16x1x8xf32>
    %104 = vector.shape_cast %103 : vector<16x1x8xf32> to vector<16x8xf32>
    %105 = vector.extract_strided_slice %96 {offsets = [0, 4, 0], sizes = [16, 1, 8], strides = [1, 1, 1]} : vector<16x16x8xf32> to vector<16x1x8xf32>
    %106 = vector.shape_cast %105 : vector<16x1x8xf32> to vector<16x8xf32>
    %107 = vector.extract_strided_slice %96 {offsets = [0, 5, 0], sizes = [16, 1, 8], strides = [1, 1, 1]} : vector<16x16x8xf32> to vector<16x1x8xf32>
    %108 = vector.shape_cast %107 : vector<16x1x8xf32> to vector<16x8xf32>
    %109 = vector.extract_strided_slice %96 {offsets = [0, 6, 0], sizes = [16, 1, 8], strides = [1, 1, 1]} : vector<16x16x8xf32> to vector<16x1x8xf32>
    %110 = vector.shape_cast %109 : vector<16x1x8xf32> to vector<16x8xf32>
    %111 = vector.extract_strided_slice %96 {offsets = [0, 7, 0], sizes = [16, 1, 8], strides = [1, 1, 1]} : vector<16x16x8xf32> to vector<16x1x8xf32>
    %112 = vector.shape_cast %111 : vector<16x1x8xf32> to vector<16x8xf32>
    %113 = vector.extract_strided_slice %96 {offsets = [0, 8, 0], sizes = [16, 1, 8], strides = [1, 1, 1]} : vector<16x16x8xf32> to vector<16x1x8xf32>
    %114 = vector.shape_cast %113 : vector<16x1x8xf32> to vector<16x8xf32>
    %115 = vector.extract_strided_slice %96 {offsets = [0, 9, 0], sizes = [16, 1, 8], strides = [1, 1, 1]} : vector<16x16x8xf32> to vector<16x1x8xf32>
    %116 = vector.shape_cast %115 : vector<16x1x8xf32> to vector<16x8xf32>
    %117 = vector.extract_strided_slice %96 {offsets = [0, 10, 0], sizes = [16, 1, 8], strides = [1, 1, 1]} : vector<16x16x8xf32> to vector<16x1x8xf32>
    %118 = vector.shape_cast %117 : vector<16x1x8xf32> to vector<16x8xf32>
    %119 = vector.extract_strided_slice %96 {offsets = [0, 11, 0], sizes = [16, 1, 8], strides = [1, 1, 1]} : vector<16x16x8xf32> to vector<16x1x8xf32>
    %120 = vector.shape_cast %119 : vector<16x1x8xf32> to vector<16x8xf32>
    %121 = vector.extract_strided_slice %96 {offsets = [0, 12, 0], sizes = [16, 1, 8], strides = [1, 1, 1]} : vector<16x16x8xf32> to vector<16x1x8xf32>
    %122 = vector.shape_cast %121 : vector<16x1x8xf32> to vector<16x8xf32>
    %123 = vector.extract_strided_slice %96 {offsets = [0, 13, 0], sizes = [16, 1, 8], strides = [1, 1, 1]} : vector<16x16x8xf32> to vector<16x1x8xf32>
    %124 = vector.shape_cast %123 : vector<16x1x8xf32> to vector<16x8xf32>
    %125 = vector.extract_strided_slice %96 {offsets = [0, 14, 0], sizes = [16, 1, 8], strides = [1, 1, 1]} : vector<16x16x8xf32> to vector<16x1x8xf32>
    %126 = vector.shape_cast %125 : vector<16x1x8xf32> to vector<16x8xf32>
    %127 = vector.extract_strided_slice %96 {offsets = [0, 15, 0], sizes = [16, 1, 8], strides = [1, 1, 1]} : vector<16x16x8xf32> to vector<16x1x8xf32>
    %128 = vector.shape_cast %127 : vector<16x1x8xf32> to vector<16x8xf32>
    %129 = tpu.concatenate %98, %100, %102, %104, %106, %108, %110, %112, %114, %116, %118, %120, %122, %124, %126, %128 in 1 : vector<16x8xf32>, vector<16x8xf32>, vector<16x8xf32>, vector<16x8xf32>, vector<16x8xf32>, vector<16x8xf32>, vector<16x8xf32>, vector<16x8xf32>, vector<16x8xf32>, vector<16x8xf32>, vector<16x8xf32>, vector<16x8xf32>, vector<16x8xf32>, vector<16x8xf32>, vector<16x8xf32>, vector<16x8xf32> -> vector<16x128xf32>
    %c0_29 = arith.constant 0 : index
    %c0_30 = arith.constant 0 : index
    %c0_31 = arith.constant 0 : index
    %130 = vector.load %arg5[%c0_29, %c0_30, %c0_31] : memref<1x16x128xf32, #tpu.memory_space<vmem>>, vector<1x16x128xf32>
    %131 = vector.shape_cast %130 : vector<1x16x128xf32> to vector<16x128xf32>
    %132 = vector.shape_cast %129 : vector<16x128xf32> to vector<1x16x128xf32>
    tpu.vector_store %arg5[%c0_29, %c0_30, %c0_31], %132 {strides = array<i32>} : memref<1x16x128xf32, #tpu.memory_space<vmem>>, vector<1x16x128xf32>,
    %133 = vector.shape_cast %84 : vector<256x8xf32> to vector<16x16x8xf32>
    %134 = vector.extract_strided_slice %133 {offsets = [0, 0, 0], sizes = [16, 1, 8], strides = [1, 1, 1]} : vector<16x16x8xf32> to vector<16x1x8xf32>
    %135 = vector.shape_cast %134 : vector<16x1x8xf32> to vector<16x8xf32>
    %136 = vector.extract_strided_slice %133 {offsets = [0, 1, 0], sizes = [16, 1, 8], strides = [1, 1, 1]} : vector<16x16x8xf32> to vector<16x1x8xf32>
    %137 = vector.shape_cast %136 : vector<16x1x8xf32> to vector<16x8xf32>
    %138 = vector.extract_strided_slice %133 {offsets = [0, 2, 0], sizes = [16, 1, 8], strides = [1, 1, 1]} : vector<16x16x8xf32> to vector<16x1x8xf32>
    %139 = vector.shape_cast %138 : vector<16x1x8xf32> to vector<16x8xf32>
    %140 = vector.extract_strided_slice %133 {offsets = [0, 3, 0], sizes = [16, 1, 8], strides = [1, 1, 1]} : vector<16x16x8xf32> to vector<16x1x8xf32>
    %141 = vector.shape_cast %140 : vector<16x1x8xf32> to vector<16x8xf32>
    %142 = vector.extract_strided_slice %133 {offsets = [0, 4, 0], sizes = [16, 1, 8], strides = [1, 1, 1]} : vector<16x16x8xf32> to vector<16x1x8xf32>
    %143 = vector.shape_cast %142 : vector<16x1x8xf32> to vector<16x8xf32>
    %144 = vector.extract_strided_slice %133 {offsets = [0, 5, 0], sizes = [16, 1, 8], strides = [1, 1, 1]} : vector<16x16x8xf32> to vector<16x1x8xf32>
    %145 = vector.shape_cast %144 : vector<16x1x8xf32> to vector<16x8xf32>
    %146 = vector.extract_strided_slice %133 {offsets = [0, 6, 0], sizes = [16, 1, 8], strides = [1, 1, 1]} : vector<16x16x8xf32> to vector<16x1x8xf32>
    %147 = vector.shape_cast %146 : vector<16x1x8xf32> to vector<16x8xf32>
    %148 = vector.extract_strided_slice %133 {offsets = [0, 7, 0], sizes = [16, 1, 8], strides = [1, 1, 1]} : vector<16x16x8xf32> to vector<16x1x8xf32>
    %149 = vector.shape_cast %148 : vector<16x1x8xf32> to vector<16x8xf32>
    %150 = vector.extract_strided_slice %133 {offsets = [0, 8, 0], sizes = [16, 1, 8], strides = [1, 1, 1]} : vector<16x16x8xf32> to vector<16x1x8xf32>
    %151 = vector.shape_cast %150 : vector<16x1x8xf32> to vector<16x8xf32>
    %152 = vector.extract_strided_slice %133 {offsets = [0, 9, 0], sizes = [16, 1, 8], strides = [1, 1, 1]} : vector<16x16x8xf32> to vector<16x1x8xf32>
    %153 = vector.shape_cast %152 : vector<16x1x8xf32> to vector<16x8xf32>
    %154 = vector.extract_strided_slice %133 {offsets = [0, 10, 0], sizes = [16, 1, 8], strides = [1, 1, 1]} : vector<16x16x8xf32> to vector<16x1x8xf32>
    %155 = vector.shape_cast %154 : vector<16x1x8xf32> to vector<16x8xf32>
    %156 = vector.extract_strided_slice %133 {offsets = [0, 11, 0], sizes = [16, 1, 8], strides = [1, 1, 1]} : vector<16x16x8xf32> to vector<16x1x8xf32>
    %157 = vector.shape_cast %156 : vector<16x1x8xf32> to vector<16x8xf32>
    %158 = vector.extract_strided_slice %133 {offsets = [0, 12, 0], sizes = [16, 1, 8], strides = [1, 1, 1]} : vector<16x16x8xf32> to vector<16x1x8xf32>
    %159 = vector.shape_cast %158 : vector<16x1x8xf32> to vector<16x8xf32>
    %160 = vector.extract_strided_slice %133 {offsets = [0, 13, 0], sizes = [16, 1, 8], strides = [1, 1, 1]} : vector<16x16x8xf32> to vector<16x1x8xf32>
    %161 = vector.shape_cast %160 : vector<16x1x8xf32> to vector<16x8xf32>
    %162 = vector.extract_strided_slice %133 {offsets = [0, 14, 0], sizes = [16, 1, 8], strides = [1, 1, 1]} : vector<16x16x8xf32> to vector<16x1x8xf32>
    %163 = vector.shape_cast %162 : vector<16x1x8xf32> to vector<16x8xf32>
    %164 = vector.extract_strided_slice %133 {offsets = [0, 15, 0], sizes = [16, 1, 8], strides = [1, 1, 1]} : vector<16x16x8xf32> to vector<16x1x8xf32>
    %165 = vector.shape_cast %164 : vector<16x1x8xf32> to vector<16x8xf32>
    %166 = tpu.concatenate %135, %137, %139, %141, %143, %145, %147, %149, %151, %153, %155, %157, %159, %161, %163, %165 in 1 : vector<16x8xf32>, vector<16x8xf32>, vector<16x8xf32>, vector<16x8xf32>, vector<16x8xf32>, vector<16x8xf32>, vector<16x8xf32>, vector<16x8xf32>, vector<16x8xf32>, vector<16x8xf32>, vector<16x8xf32>, vector<16x8xf32>, vector<16x8xf32>, vector<16x8xf32>, vector<16x8xf32>, vector<16x8xf32> -> vector<16x128xf32>
    %c0_32 = arith.constant 0 : index
    %c0_33 = arith.constant 0 : index
    %c0_34 = arith.constant 0 : index
    %167 = vector.load %arg6[%c0_32, %c0_33, %c0_34] : memref<1x16x128xf32, #tpu.memory_space<vmem>>, vector<1x16x128xf32>
    %168 = vector.shape_cast %167 : vector<1x16x128xf32> to vector<16x128xf32>
    %169 = vector.shape_cast %166 : vector<16x128xf32> to vector<1x16x128xf32>
    tpu.vector_store %arg6[%c0_32, %c0_33, %c0_34], %169 {strides = array<i32>} : memref<1x16x128xf32, #tpu.memory_space<vmem>>, vector<1x16x128xf32>,
    return
  }
  func.func @transform_0(%arg0: i32) -> (i32, i32, i32) {
    %c0_i32 = arith.constant 0 : i32
    %c0_i32_0 = arith.constant 0 : i32
    %c0_i32_1 = arith.constant 0 : i32
    return %arg0, %c0_i32, %c0_i32_0 : i32, i32, i32
  }
  func.func @transform_1(%arg0: i32) -> (i32, i32) {
    %c0_i32 = arith.constant 0 : i32
    %c0_i32_0 = arith.constant 0 : i32
    %c0_i32_1 = arith.constant 0 : i32
    return %c0_i32, %c0_i32_0 : i32, i32
  }
  func.func @transform_2(%arg0: i32) -> (i32, i32) {
    %c0_i32 = arith.constant 0 : i32
    %c0_i32_0 = arith.constant 0 : i32
    %c0_i32_1 = arith.constant 0 : i32
    return %c0_i32, %c0_i32_0 : i32, i32
  }
  func.func @transform_3(%arg0: i32) -> (i32, i32) {
    %c0_i32 = arith.constant 0 : i32
    %c0_i32_0 = arith.constant 0 : i32
    %c0_i32_1 = arith.constant 0 : i32
    return %c0_i32, %c0_i32_0 : i32, i32
  }
  func.func @transform_4(%arg0: i32) -> (i32, i32, i32) {
    %c0_i32 = arith.constant 0 : i32
    %c0_i32_0 = arith.constant 0 : i32
    %c0_i32_1 = arith.constant 0 : i32
    return %arg0, %c0_i32, %c0_i32_0 : i32, i32, i32
  }
  func.func @transform_5(%arg0: i32) -> (i32, i32, i32) {
    %c0_i32 = arith.constant 0 : i32
    %c0_i32_0 = arith.constant 0 : i32
    %c0_i32_1 = arith.constant 0 : i32
    return %arg0, %c0_i32, %c0_i32_0 : i32, i32, i32
  }
  func.func @transform_6(%arg0: i32) -> (i32, i32, i32) {
    %c0_i32 = arith.constant 0 : i32
    %c0_i32_0 = arith.constant 0 : i32
    %c0_i32_1 = arith.constant 0 : i32
    return %arg0, %c0_i32, %c0_i32_0 : i32, i32, i32
  }
  func.func @transform_7(%arg0: i32) -> (i32, i32, i32) {
    %c0_i32 = arith.constant 0 : i32
    %c0_i32_0 = arith.constant 0 : i32
    %c0_i32_1 = arith.constant 0 : i32
    return %arg0, %c0_i32, %c0_i32_0 : i32, i32, i32
  }
}

module attributes {stable_mosaic.version = 11 : i64} {
  func.func @kernel(%arg0: i32, %arg1: memref<1x16x128xf32, #tpu.memory_space<vmem>>, %arg2: memref<1x128xf32, #tpu.memory_space<vmem>>, %arg3: memref<1x128xf32, #tpu.memory_space<vmem>>, %arg4: memref<72x8xf32, #tpu.memory_space<vmem>>, %arg5: memref<1x16x128xf32, #tpu.memory_space<vmem>>, %arg6: memref<1x16x128xf32, #tpu.memory_space<vmem>>) attributes {dimension_semantics = [#tpu.dimension_semantics<parallel>], iteration_bounds = array<i64: 2>, scalar_prefetch = 0 : i64, scratch_operands = 0 : i64, tpu.core_type = #tpu.core_type<tc>, window_params = [{transform_indices = @transform_0, window_bounds = array<i64: 1, 16, 128>}, {pipeline_mode = #tpu.pipeline_mode<synchronous>, transform_indices = @transform_1, window_bounds = array<i64: 1, 128>}, {pipeline_mode = #tpu.pipeline_mode<synchronous>, transform_indices = @transform_2, window_bounds = array<i64: 1, 128>}, {pipeline_mode = #tpu.pipeline_mode<synchronous>, transform_indices = @transform_3, window_bounds = array<i64: 72, 8>}, {transform_indices = @transform_4, window_bounds = array<i64: 1, 16, 128>}, {transform_indices = @transform_5, window_bounds = array<i64: 1, 16, 128>}]} {
    %c0 = arith.constant 0 : index
    %c0_0 = arith.constant 0 : index
    %c0_1 = arith.constant 0 : index
    %0 = vector.load %arg1[%c0, %c0_0, %c0_1] : memref<1x16x128xf32, #tpu.memory_space<vmem>>, vector<1x16x128xf32>
    %1 = vector.shape_cast %0 : vector<1x16x128xf32> to vector<16x128xf32>
    %c0_2 = arith.constant 0 : index
    %c0_3 = arith.constant 0 : index
    %2 = vector.load %arg2[%c0_2, %c0_3] : memref<1x128xf32, #tpu.memory_space<vmem>>, vector<1x128xf32>
    %3 = vector.broadcast %2 : vector<1x128xf32> to vector<16x128xf32>
    %4 = arith.mulf %1, %3 : vector<16x128xf32>
    %c0_4 = arith.constant 0 : index
    %c0_5 = arith.constant 0 : index
    %5 = vector.load %arg3[%c0_4, %c0_5] : memref<1x128xf32, #tpu.memory_space<vmem>>, vector<1x128xf32>
    %6 = vector.broadcast %5 : vector<1x128xf32> to vector<16x128xf32>
    %7 = arith.addf %4, %6 : vector<16x128xf32>
    %cst = arith.constant 0.000000e+00 : f32
    %8 = vector.broadcast %cst : f32 to vector<16x128xf32>
    %9 = arith.maximumf %7, %8 : vector<16x128xf32>
    %10 = vector.extract_strided_slice %9 {offsets = [0, 0], sizes = [16, 8], strides = [1, 1]} : vector<16x128xf32> to vector<16x8xf32>
    %11 = vector.shape_cast %10 : vector<16x8xf32> to vector<16x1x8xf32>
    %12 = vector.extract_strided_slice %9 {offsets = [0, 8], sizes = [16, 8], strides = [1, 1]} : vector<16x128xf32> to vector<16x8xf32>
    %13 = vector.shape_cast %12 : vector<16x8xf32> to vector<16x1x8xf32>
    %14 = vector.extract_strided_slice %9 {offsets = [0, 16], sizes = [16, 8], strides = [1, 1]} : vector<16x128xf32> to vector<16x8xf32>
    %15 = vector.shape_cast %14 : vector<16x8xf32> to vector<16x1x8xf32>
    %16 = vector.extract_strided_slice %9 {offsets = [0, 24], sizes = [16, 8], strides = [1, 1]} : vector<16x128xf32> to vector<16x8xf32>
    %17 = vector.shape_cast %16 : vector<16x8xf32> to vector<16x1x8xf32>
    %18 = vector.extract_strided_slice %9 {offsets = [0, 32], sizes = [16, 8], strides = [1, 1]} : vector<16x128xf32> to vector<16x8xf32>
    %19 = vector.shape_cast %18 : vector<16x8xf32> to vector<16x1x8xf32>
    %20 = vector.extract_strided_slice %9 {offsets = [0, 40], sizes = [16, 8], strides = [1, 1]} : vector<16x128xf32> to vector<16x8xf32>
    %21 = vector.shape_cast %20 : vector<16x8xf32> to vector<16x1x8xf32>
    %22 = vector.extract_strided_slice %9 {offsets = [0, 48], sizes = [16, 8], strides = [1, 1]} : vector<16x128xf32> to vector<16x8xf32>
    %23 = vector.shape_cast %22 : vector<16x8xf32> to vector<16x1x8xf32>
    %24 = vector.extract_strided_slice %9 {offsets = [0, 56], sizes = [16, 8], strides = [1, 1]} : vector<16x128xf32> to vector<16x8xf32>
    %25 = vector.shape_cast %24 : vector<16x8xf32> to vector<16x1x8xf32>
    %26 = vector.extract_strided_slice %9 {offsets = [0, 64], sizes = [16, 8], strides = [1, 1]} : vector<16x128xf32> to vector<16x8xf32>
    %27 = vector.shape_cast %26 : vector<16x8xf32> to vector<16x1x8xf32>
    %28 = vector.extract_strided_slice %9 {offsets = [0, 72], sizes = [16, 8], strides = [1, 1]} : vector<16x128xf32> to vector<16x8xf32>
    %29 = vector.shape_cast %28 : vector<16x8xf32> to vector<16x1x8xf32>
    %30 = vector.extract_strided_slice %9 {offsets = [0, 80], sizes = [16, 8], strides = [1, 1]} : vector<16x128xf32> to vector<16x8xf32>
    %31 = vector.shape_cast %30 : vector<16x8xf32> to vector<16x1x8xf32>
    %32 = vector.extract_strided_slice %9 {offsets = [0, 88], sizes = [16, 8], strides = [1, 1]} : vector<16x128xf32> to vector<16x8xf32>
    %33 = vector.shape_cast %32 : vector<16x8xf32> to vector<16x1x8xf32>
    %34 = vector.extract_strided_slice %9 {offsets = [0, 96], sizes = [16, 8], strides = [1, 1]} : vector<16x128xf32> to vector<16x8xf32>
    %35 = vector.shape_cast %34 : vector<16x8xf32> to vector<16x1x8xf32>
    %36 = vector.extract_strided_slice %9 {offsets = [0, 104], sizes = [16, 8], strides = [1, 1]} : vector<16x128xf32> to vector<16x8xf32>
    %37 = vector.shape_cast %36 : vector<16x8xf32> to vector<16x1x8xf32>
    %38 = vector.extract_strided_slice %9 {offsets = [0, 112], sizes = [16, 8], strides = [1, 1]} : vector<16x128xf32> to vector<16x8xf32>
    %39 = vector.shape_cast %38 : vector<16x8xf32> to vector<16x1x8xf32>
    %40 = vector.extract_strided_slice %9 {offsets = [0, 120], sizes = [16, 8], strides = [1, 1]} : vector<16x128xf32> to vector<16x8xf32>
    %41 = vector.shape_cast %40 : vector<16x8xf32> to vector<16x1x8xf32>
    %42 = tpu.concatenate %11, %13, %15, %17, %19, %21, %23, %25, %27, %29, %31, %33, %35, %37, %39, %41 in 1 : vector<16x1x8xf32>, vector<16x1x8xf32>, vector<16x1x8xf32>, vector<16x1x8xf32>, vector<16x1x8xf32>, vector<16x1x8xf32>, vector<16x1x8xf32>, vector<16x1x8xf32>, vector<16x1x8xf32>, vector<16x1x8xf32>, vector<16x1x8xf32>, vector<16x1x8xf32>, vector<16x1x8xf32>, vector<16x1x8xf32>, vector<16x1x8xf32>, vector<16x1x8xf32> -> vector<16x16x8xf32>
    %cst_6 = arith.constant 0.000000e+00 : f32
    %43 = vector.broadcast %cst_6 : f32 to vector<1x16x8xf32>
    %44 = vector.extract_strided_slice %42 {offsets = [0, 0, 0], sizes = [15, 16, 8], strides = [1, 1, 1]} : vector<16x16x8xf32> to vector<15x16x8xf32>
    %45 = tpu.concatenate %43, %44 in 0 : vector<1x16x8xf32>, vector<15x16x8xf32> -> vector<16x16x8xf32>
    %cst_7 = arith.constant 0.000000e+00 : f32
    %46 = vector.broadcast %cst_7 : f32 to vector<16x1x8xf32>
    %47 = vector.extract_strided_slice %45 {offsets = [0, 0, 0], sizes = [16, 15, 8], strides = [1, 1, 1]} : vector<16x16x8xf32> to vector<16x15x8xf32>
    %48 = tpu.concatenate %46, %47 in 1 : vector<16x1x8xf32>, vector<16x15x8xf32> -> vector<16x16x8xf32>
    %cst_8 = arith.constant 0.000000e+00 : f32
    %49 = vector.broadcast %cst_8 : f32 to vector<1x16x8xf32>
    %50 = vector.extract_strided_slice %42 {offsets = [0, 0, 0], sizes = [15, 16, 8], strides = [1, 1, 1]} : vector<16x16x8xf32> to vector<15x16x8xf32>
    %51 = tpu.concatenate %49, %50 in 0 : vector<1x16x8xf32>, vector<15x16x8xf32> -> vector<16x16x8xf32>
    %cst_9 = arith.constant 0.000000e+00 : f32
    %52 = vector.broadcast %cst_9 : f32 to vector<1x16x8xf32>
    %53 = vector.extract_strided_slice %42 {offsets = [0, 0, 0], sizes = [15, 16, 8], strides = [1, 1, 1]} : vector<16x16x8xf32> to vector<15x16x8xf32>
    %54 = tpu.concatenate %52, %53 in 0 : vector<1x16x8xf32>, vector<15x16x8xf32> -> vector<16x16x8xf32>
    %cst_10 = arith.constant 0.000000e+00 : f32
    %55 = vector.broadcast %cst_10 : f32 to vector<16x1x8xf32>
    %56 = vector.extract_strided_slice %54 {offsets = [0, 1, 0], sizes = [16, 15, 8], strides = [1, 1, 1]} : vector<16x16x8xf32> to vector<16x15x8xf32>
    %57 = tpu.concatenate %56, %55 in 1 : vector<16x15x8xf32>, vector<16x1x8xf32> -> vector<16x16x8xf32>
    %cst_11 = arith.constant 0.000000e+00 : f32
    %58 = vector.broadcast %cst_11 : f32 to vector<16x1x8xf32>
    %59 = vector.extract_strided_slice %42 {offsets = [0, 0, 0], sizes = [16, 15, 8], strides = [1, 1, 1]} : vector<16x16x8xf32> to vector<16x15x8xf32>
    %60 = tpu.concatenate %58, %59 in 1 : vector<16x1x8xf32>, vector<16x15x8xf32> -> vector<16x16x8xf32>
    %cst_12 = arith.constant 0.000000e+00 : f32
    %61 = vector.broadcast %cst_12 : f32 to vector<16x1x8xf32>
    %62 = vector.extract_strided_slice %42 {offsets = [0, 1, 0], sizes = [16, 15, 8], strides = [1, 1, 1]} : vector<16x16x8xf32> to vector<16x15x8xf32>
    %63 = tpu.concatenate %62, %61 in 1 : vector<16x15x8xf32>, vector<16x1x8xf32> -> vector<16x16x8xf32>
    %cst_13 = arith.constant 0.000000e+00 : f32
    %64 = vector.broadcast %cst_13 : f32 to vector<1x16x8xf32>
    %65 = vector.extract_strided_slice %42 {offsets = [1, 0, 0], sizes = [15, 16, 8], strides = [1, 1, 1]} : vector<16x16x8xf32> to vector<15x16x8xf32>
    %66 = tpu.concatenate %65, %64 in 0 : vector<15x16x8xf32>, vector<1x16x8xf32> -> vector<16x16x8xf32>
    %cst_14 = arith.constant 0.000000e+00 : f32
    %67 = vector.broadcast %cst_14 : f32 to vector<16x1x8xf32>
    %68 = vector.extract_strided_slice %66 {offsets = [0, 0, 0], sizes = [16, 15, 8], strides = [1, 1, 1]} : vector<16x16x8xf32> to vector<16x15x8xf32>
    %69 = tpu.concatenate %67, %68 in 1 : vector<16x1x8xf32>, vector<16x15x8xf32> -> vector<16x16x8xf32>
    %cst_15 = arith.constant 0.000000e+00 : f32
    %70 = vector.broadcast %cst_15 : f32 to vector<1x16x8xf32>
    %71 = vector.extract_strided_slice %42 {offsets = [1, 0, 0], sizes = [15, 16, 8], strides = [1, 1, 1]} : vector<16x16x8xf32> to vector<15x16x8xf32>
    %72 = tpu.concatenate %71, %70 in 0 : vector<15x16x8xf32>, vector<1x16x8xf32> -> vector<16x16x8xf32>
    %cst_16 = arith.constant 0.000000e+00 : f32
    %73 = vector.broadcast %cst_16 : f32 to vector<1x16x8xf32>
    %74 = vector.extract_strided_slice %42 {offsets = [1, 0, 0], sizes = [15, 16, 8], strides = [1, 1, 1]} : vector<16x16x8xf32> to vector<15x16x8xf32>
    %75 = tpu.concatenate %74, %73 in 0 : vector<15x16x8xf32>, vector<1x16x8xf32> -> vector<16x16x8xf32>
    %cst_17 = arith.constant 0.000000e+00 : f32
    %76 = vector.broadcast %cst_17 : f32 to vector<16x1x8xf32>
    %77 = vector.extract_strided_slice %75 {offsets = [0, 1, 0], sizes = [16, 15, 8], strides = [1, 1, 1]} : vector<16x16x8xf32> to vector<16x15x8xf32>
    %78 = tpu.concatenate %77, %76 in 1 : vector<16x15x8xf32>, vector<16x1x8xf32> -> vector<16x16x8xf32>
    %79 = tpu.concatenate %48, %51, %57, %60, %42, %63, %69, %72, %78 in 2 : vector<16x16x8xf32>, vector<16x16x8xf32>, vector<16x16x8xf32>, vector<16x16x8xf32>, vector<16x16x8xf32>, vector<16x16x8xf32>, vector<16x16x8xf32>, vector<16x16x8xf32>, vector<16x16x8xf32> -> vector<16x16x72xf32>
    %80 = vector.shape_cast %79 : vector<16x16x72xf32> to vector<256x72xf32>
    %c0_18 = arith.constant 0 : index
    %c0_19 = arith.constant 0 : index
    %81 = vector.load %arg4[%c0_18, %c0_19] : memref<72x8xf32, #tpu.memory_space<vmem>>, vector<72x8xf32>
    %cst_20 = arith.constant dense<0.000000e+00> : vector<256x8xf32>
    %82 = tpu.matmul %80, %81, %cst_20 {dimension_numbers = #tpu.dot_dimension_numbers<[1], [0], [0], [1], [0, 0, 1, 1], [], []>} : vector<256x72xf32>, vector<72x8xf32>, vector<256x8xf32> -> vector<256x8xf32>
    %83 = vector.shape_cast %82 : vector<256x8xf32> to vector<16x16x8xf32>
    %84 = vector.extract_strided_slice %83 {offsets = [0, 0, 0], sizes = [16, 1, 8], strides = [1, 1, 1]} : vector<16x16x8xf32> to vector<16x1x8xf32>
    %85 = vector.shape_cast %84 : vector<16x1x8xf32> to vector<16x8xf32>
    %86 = vector.extract_strided_slice %83 {offsets = [0, 1, 0], sizes = [16, 1, 8], strides = [1, 1, 1]} : vector<16x16x8xf32> to vector<16x1x8xf32>
    %87 = vector.shape_cast %86 : vector<16x1x8xf32> to vector<16x8xf32>
    %88 = vector.extract_strided_slice %83 {offsets = [0, 2, 0], sizes = [16, 1, 8], strides = [1, 1, 1]} : vector<16x16x8xf32> to vector<16x1x8xf32>
    %89 = vector.shape_cast %88 : vector<16x1x8xf32> to vector<16x8xf32>
    %90 = vector.extract_strided_slice %83 {offsets = [0, 3, 0], sizes = [16, 1, 8], strides = [1, 1, 1]} : vector<16x16x8xf32> to vector<16x1x8xf32>
    %91 = vector.shape_cast %90 : vector<16x1x8xf32> to vector<16x8xf32>
    %92 = vector.extract_strided_slice %83 {offsets = [0, 4, 0], sizes = [16, 1, 8], strides = [1, 1, 1]} : vector<16x16x8xf32> to vector<16x1x8xf32>
    %93 = vector.shape_cast %92 : vector<16x1x8xf32> to vector<16x8xf32>
    %94 = vector.extract_strided_slice %83 {offsets = [0, 5, 0], sizes = [16, 1, 8], strides = [1, 1, 1]} : vector<16x16x8xf32> to vector<16x1x8xf32>
    %95 = vector.shape_cast %94 : vector<16x1x8xf32> to vector<16x8xf32>
    %96 = vector.extract_strided_slice %83 {offsets = [0, 6, 0], sizes = [16, 1, 8], strides = [1, 1, 1]} : vector<16x16x8xf32> to vector<16x1x8xf32>
    %97 = vector.shape_cast %96 : vector<16x1x8xf32> to vector<16x8xf32>
    %98 = vector.extract_strided_slice %83 {offsets = [0, 7, 0], sizes = [16, 1, 8], strides = [1, 1, 1]} : vector<16x16x8xf32> to vector<16x1x8xf32>
    %99 = vector.shape_cast %98 : vector<16x1x8xf32> to vector<16x8xf32>
    %100 = vector.extract_strided_slice %83 {offsets = [0, 8, 0], sizes = [16, 1, 8], strides = [1, 1, 1]} : vector<16x16x8xf32> to vector<16x1x8xf32>
    %101 = vector.shape_cast %100 : vector<16x1x8xf32> to vector<16x8xf32>
    %102 = vector.extract_strided_slice %83 {offsets = [0, 9, 0], sizes = [16, 1, 8], strides = [1, 1, 1]} : vector<16x16x8xf32> to vector<16x1x8xf32>
    %103 = vector.shape_cast %102 : vector<16x1x8xf32> to vector<16x8xf32>
    %104 = vector.extract_strided_slice %83 {offsets = [0, 10, 0], sizes = [16, 1, 8], strides = [1, 1, 1]} : vector<16x16x8xf32> to vector<16x1x8xf32>
    %105 = vector.shape_cast %104 : vector<16x1x8xf32> to vector<16x8xf32>
    %106 = vector.extract_strided_slice %83 {offsets = [0, 11, 0], sizes = [16, 1, 8], strides = [1, 1, 1]} : vector<16x16x8xf32> to vector<16x1x8xf32>
    %107 = vector.shape_cast %106 : vector<16x1x8xf32> to vector<16x8xf32>
    %108 = vector.extract_strided_slice %83 {offsets = [0, 12, 0], sizes = [16, 1, 8], strides = [1, 1, 1]} : vector<16x16x8xf32> to vector<16x1x8xf32>
    %109 = vector.shape_cast %108 : vector<16x1x8xf32> to vector<16x8xf32>
    %110 = vector.extract_strided_slice %83 {offsets = [0, 13, 0], sizes = [16, 1, 8], strides = [1, 1, 1]} : vector<16x16x8xf32> to vector<16x1x8xf32>
    %111 = vector.shape_cast %110 : vector<16x1x8xf32> to vector<16x8xf32>
    %112 = vector.extract_strided_slice %83 {offsets = [0, 14, 0], sizes = [16, 1, 8], strides = [1, 1, 1]} : vector<16x16x8xf32> to vector<16x1x8xf32>
    %113 = vector.shape_cast %112 : vector<16x1x8xf32> to vector<16x8xf32>
    %114 = vector.extract_strided_slice %83 {offsets = [0, 15, 0], sizes = [16, 1, 8], strides = [1, 1, 1]} : vector<16x16x8xf32> to vector<16x1x8xf32>
    %115 = vector.shape_cast %114 : vector<16x1x8xf32> to vector<16x8xf32>
    %116 = tpu.concatenate %85, %87, %89, %91, %93, %95, %97, %99, %101, %103, %105, %107, %109, %111, %113, %115 in 1 : vector<16x8xf32>, vector<16x8xf32>, vector<16x8xf32>, vector<16x8xf32>, vector<16x8xf32>, vector<16x8xf32>, vector<16x8xf32>, vector<16x8xf32>, vector<16x8xf32>, vector<16x8xf32>, vector<16x8xf32>, vector<16x8xf32>, vector<16x8xf32>, vector<16x8xf32>, vector<16x8xf32>, vector<16x8xf32> -> vector<16x128xf32>
    %c0_21 = arith.constant 0 : index
    %c0_22 = arith.constant 0 : index
    %c0_23 = arith.constant 0 : index
    %117 = vector.load %arg5[%c0_21, %c0_22, %c0_23] : memref<1x16x128xf32, #tpu.memory_space<vmem>>, vector<1x16x128xf32>
    %118 = vector.shape_cast %117 : vector<1x16x128xf32> to vector<16x128xf32>
    %119 = arith.addf %116, %118 : vector<16x128xf32>
    %c0_24 = arith.constant 0 : index
    %c0_25 = arith.constant 0 : index
    %c0_26 = arith.constant 0 : index
    %120 = vector.load %arg6[%c0_24, %c0_25, %c0_26] : memref<1x16x128xf32, #tpu.memory_space<vmem>>, vector<1x16x128xf32>
    %121 = vector.shape_cast %120 : vector<1x16x128xf32> to vector<16x128xf32>
    %122 = vector.shape_cast %119 : vector<16x128xf32> to vector<1x16x128xf32>
    tpu.vector_store %arg6[%c0_24, %c0_25, %c0_26], %122 {strides = array<i32>} : memref<1x16x128xf32, #tpu.memory_space<vmem>>, vector<1x16x128xf32>,
    return
  }
  func.func @transform_0(%arg0: i32) -> (i32, i32, i32) {
    %c0_i32 = arith.constant 0 : i32
    %c0_i32_0 = arith.constant 0 : i32
    %c0_i32_1 = arith.constant 0 : i32
    return %arg0, %c0_i32, %c0_i32_0 : i32, i32, i32
  }
  func.func @transform_1(%arg0: i32) -> (i32, i32) {
    %c0_i32 = arith.constant 0 : i32
    %c0_i32_0 = arith.constant 0 : i32
    %c0_i32_1 = arith.constant 0 : i32
    return %c0_i32, %c0_i32_0 : i32, i32
  }
  func.func @transform_2(%arg0: i32) -> (i32, i32) {
    %c0_i32 = arith.constant 0 : i32
    %c0_i32_0 = arith.constant 0 : i32
    %c0_i32_1 = arith.constant 0 : i32
    return %c0_i32, %c0_i32_0 : i32, i32
  }
  func.func @transform_3(%arg0: i32) -> (i32, i32) {
    %c0_i32 = arith.constant 0 : i32
    %c0_i32_0 = arith.constant 0 : i32
    %c0_i32_1 = arith.constant 0 : i32
    return %c0_i32, %c0_i32_0 : i32, i32
  }
  func.func @transform_4(%arg0: i32) -> (i32, i32, i32) {
    %c0_i32 = arith.constant 0 : i32
    %c0_i32_0 = arith.constant 0 : i32
    %c0_i32_1 = arith.constant 0 : i32
    return %arg0, %c0_i32, %c0_i32_0 : i32, i32, i32
  }
  func.func @transform_5(%arg0: i32) -> (i32, i32, i32) {
    %c0_i32 = arith.constant 0 : i32
    %c0_i32_0 = arith.constant 0 : i32
    %c0_i32_1 = arith.constant 0 : i32
    return %arg0, %c0_i32, %c0_i32_0 : i32, i32, i32
  }
}

</mosaic_0001>

<llo_original>
// kernel: tile.28
$region0: #{tile.28}
  #allocation0 [shape = 's32[1]{0}', space=sflag, size = 0x4, scoped, tag = 'scoped memory for tile.28']
  %s0 = inlined_call_operand.vmem [shape: f32[4], index: 0, kind: input, shape index: {}]
  %s1 = inlined_call_operand.vmem [shape: f32[16,4], index: 1, kind: output, shape index: {}]
  // Predicated region
  $region2: #{tile.28} parent=0 // pred_check
    _
  $region3: #{tile.28} parent=0 // pred_check_branch
    %3 = sbr.rel (0) target = $region5
  $region4: #{tile.28} parent=0 // pred_region
    _
  $region5: #{tile.28} parent=0 // pred_fallthru
    _
  %v4 = vld [vmem:[%s0] ss:$0 sm:$0xff]
  %5 = vst [vmem:[%s1] sm:$0xff] %v4
  %s6 = scalar_lea.vmem %s1, 8
  %7 = vst [vmem:[%s6] sm:$0xff] %v4

// kernel: tile.29
$region0: #{tile.29}
  %s0 = inlined_call_operand.vmem [shape: f32[16,4], index: 0, kind: input, shape index: {}]
  %s1 = inlined_call_operand.vmem [shape: f32[1,64], index: 1, kind: output, shape index: {}]
  $region1: #{tile.29} parent=0
    #allocation0 [shape = 'u8[4096]{0}', space=vmem, size = 0x1000, scoped, tag = 'scoped mem for output reshape']
    %v2 = vld [vmem:[%s0] sm:$0x1]
    %vm3 = vcmask 31744
    %4 = vst.msk [vmem:[#allocation0] sm:$0x1] %vm3, %v2
    %s5 = scalar_lea.vmem %s0, 15
    %v6 = vld [vmem:[%s5] sm:$0x1]
    %7 = vrot.lane.b32.xlu0 %v6, 60
    %v8 = vpop.permute.xlu0 %7
    %vm9 = vcmask 523744
    %10 = vst.msk [vmem:[#allocation0] sm:$0x1] %vm9, %v8
    %s11 = scalar_lea.vmem %s0, 14
    %v12 = vld [vmem:[%s11] sm:$0x1]
    %13 = vrot.lane.b32.xlu0 %v12, 56
    %v14 = vpop.permute.xlu0 %13
    %vm15 = vcmask 490944
    %16 = vst.msk [vmem:[#allocation0] sm:$0x1] %vm15, %v14
    %s17 = scalar_lea.vmem %s0, 13
    %v18 = vld [vmem:[%s17] sm:$0x1]
    %19 = vrot.lane.b32.xlu0 %v18, 52
    %v20 = vpop.permute.xlu0 %19
    %vm21 = vcmask 458144
    %22 = vst.msk [vmem:[#allocation0] sm:$0x1] %vm21, %v20
    %s23 = scalar_lea.vmem %s0, 12
    %v24 = vld [vmem:[%s23] sm:$0x1]
    %25 = vrot.lane.b32.xlu0 %v24, 48
    %v26 = vpop.permute.xlu0 %25
    %vm27 = vcmask 425344
    %28 = vst.msk [vmem:[#allocation0] sm:$0x1] %vm27, %v26
    %s29 = scalar_lea.vmem %s0, 11
    %v30 = vld [vmem:[%s29] sm:$0x1]
    %31 = vrot.lane.b32.xlu0 %v30, 44
    %v32 = vpop.permute.xlu0 %31
    %vm33 = vcmask 392544
    %34 = vst.msk [vmem:[#allocation0] sm:$0x1] %vm33, %v32
    %s35 = scalar_lea.vmem %s0, 10
    %v36 = vld [vmem:[%s35] sm:$0x1]
    %37 = vrot.lane.b32.xlu0 %v36, 40
    %v38 = vpop.permute.xlu0 %37
    %vm39 = vcmask 359744
    %40 = vst.msk [vmem:[#allocation0] sm:$0x1] %vm39, %v38
    %s41 = scalar_lea.vmem %s0, 9
    %v42 = vld [vmem:[%s41] sm:$0x1]
    %43 = vrot.lane.b32.xlu0 %v42, 36
    %v44 = vpop.permute.xlu0 %43
    %vm45 = vcmask 326944
    %46 = vst.msk [vmem:[#allocation0] sm:$0x1] %vm45, %v44
    %s47 = scalar_lea.vmem %s0, 8
    %v48 = vld [vmem:[%s47] sm:$0x1]
    %49 = vrot.lane.b32.xlu0 %v48, 32
    %v50 = vpop.permute.xlu0 %49
    %vm51 = vcmask 294144
    %52 = vst.msk [vmem:[#allocation0] sm:$0x1] %vm51, %v50
    %s53 = scalar_lea.vmem %s0, 7
    %v54 = vld [vmem:[%s53] sm:$0x1]
    %55 = vrot.lane.b32.xlu0 %v54, 28
    %v56 = vpop.permute.xlu0 %55
    %vm57 = vcmask 261344
    %58 = vst.msk [vmem:[#allocation0] sm:$0x1] %vm57, %v56
    %s59 = scalar_lea.vmem %s0, 6
    %v60 = vld [vmem:[%s59] sm:$0x1]
    %61 = vrot.lane.b32.xlu0 %v60, 24
    %v62 = vpop.permute.xlu0 %61
    %vm63 = vcmask 228544
    %64 = vst.msk [vmem:[#allocation0] sm:$0x1] %vm63, %v62
    %s65 = scalar_lea.vmem %s0, 5
    %v66 = vld [vmem:[%s65] sm:$0x1]
    %67 = vrot.lane.b32.xlu0 %v66, 20
    %v68 = vpop.permute.xlu0 %67
    %vm69 = vcmask 195744
    %70 = vst.msk [vmem:[#allocation0] sm:$0x1] %vm69, %v68
    %s71 = scalar_lea.vmem %s0, 4
    %v72 = vld [vmem:[%s71] sm:$0x1]
    %73 = vrot.lane.b32.xlu0 %v72, 16
    %v74 = vpop.permute.xlu0 %73
    %vm75 = vcmask 162944
    %76 = vst.msk [vmem:[#allocation0] sm:$0x1] %vm75, %v74
    %s77 = scalar_lea.vmem %s0, 3
    %v78 = vld [vmem:[%s77] sm:$0x1]
    %79 = vrot.lane.b32.xlu0 %v78, 12
    %v80 = vpop.permute.xlu0 %79
    %vm81 = vcmask 130144
    %82 = vst.msk [vmem:[#allocation0] sm:$0x1] %vm81, %v80
    %s83 = scalar_lea.vmem %s0, 2
    %v84 = vld [vmem:[%s83] sm:$0x1]
    %85 = vrot.lane.b32.xlu0 %v84, 8
    %v86 = vpop.permute.xlu0 %85
    %vm87 = vcmask 97344
    %88 = vst.msk [vmem:[#allocation0] sm:$0x1] %vm87, %v86
    %s89 = scalar_lea.vmem %s0, 1
    %v90 = vld [vmem:[%s89] sm:$0x1]
    %91 = vrot.lane.b32.xlu0 %v90, 4
    %v92 = vpop.permute.xlu0 %91
    %vm93 = vcmask 64544
    %94 = vst.msk [vmem:[#allocation0] sm:$0x1] %vm93, %v92
    %s96 = sshll.u32 1, 1
    %s97 = ssub.s32 %s96, 1
    %v99 = vld [vmem:[#allocation0] sm:%s97]
    %s100 = sshll.u32 1, 1
    %s101 = ssub.s32 %s100, 1
    %102 = vst [vmem:[%s1] sm:%s101] %v99

// kernel: tile.38
$region0: #{tile.38}
  #allocation0 [shape = 's32[1]{0}', space=sflag, size = 0x4, scoped, tag = 'scoped memory for tile.38']
  %s0 = inlined_call_operand.vmem [shape: f32[8], index: 0, kind: input, shape index: {}]
  %s1 = inlined_call_operand.vmem [shape: f32[16,8], index: 1, kind: output, shape index: {}]
  // Predicated region
  $region2: #{tile.38} parent=0 // pred_check
    _
  $region3: #{tile.38} parent=0 // pred_check_branch
    %3 = sbr.rel (0) target = $region5
  $region4: #{tile.38} parent=0 // pred_region
    _
  $region5: #{tile.38} parent=0 // pred_fallthru
    _
  %v4 = vld [vmem:[%s0] ss:$0 sm:$0xff]
  %5 = vst [vmem:[%s1] sm:$0xff] %v4
  %s6 = scalar_lea.vmem %s1, 8
  %7 = vst [vmem:[%s6] sm:$0xff] %v4

// kernel: tile.39
$region0: #{tile.39}
  %s0 = inlined_call_operand.vmem [shape: f32[16,8], index: 0, kind: input, shape index: {}]
  %s1 = inlined_call_operand.vmem [shape: f32[1,128], index: 1, kind: output, shape index: {}]
  $region1: #{tile.39} parent=0
    #allocation0 [shape = 'u8[4096]{0}', space=vmem, size = 0x1000, scoped, tag = 'scoped mem for output reshape']
    %v2 = vld [vmem:[%s0] sm:$0x1]
    %vm3 = vcmask 64512
    %4 = vst.msk [vmem:[#allocation0] sm:$0x1] %vm3, %v2
    %s5 = scalar_lea.vmem %s0, 15
    %v6 = vld [vmem:[%s5] sm:$0x1]
    %7 = vrot.lane.b32.xlu0 %v6, 120
    %v8 = vpop.permute.xlu0 %7
    %vm9 = vcmask 1048512
    %10 = vst.msk [vmem:[#allocation0] sm:$0x1] %vm9, %v8
    %s11 = scalar_lea.vmem %s0, 14
    %v12 = vld [vmem:[%s11] sm:$0x1]
    %13 = vrot.lane.b32.xlu0 %v12, 112
    %v14 = vpop.permute.xlu0 %13
    %vm15 = vcmask 982912
    %16 = vst.msk [vmem:[#allocation0] sm:$0x1] %vm15, %v14
    %s17 = scalar_lea.vmem %s0, 13
    %v18 = vld [vmem:[%s17] sm:$0x1]
    %19 = vrot.lane.b32.xlu0 %v18, 104
    %v20 = vpop.permute.xlu0 %19
    %vm21 = vcmask 917312
    %22 = vst.msk [vmem:[#allocation0] sm:$0x1] %vm21, %v20
    %s23 = scalar_lea.vmem %s0, 12
    %v24 = vld [vmem:[%s23] sm:$0x1]
    %25 = vrot.lane.b32.xlu0 %v24, 96
    %v26 = vpop.permute.xlu0 %25
    %vm27 = vcmask 851712
    %28 = vst.msk [vmem:[#allocation0] sm:$0x1] %vm27, %v26
    %s29 = scalar_lea.vmem %s0, 11
    %v30 = vld [vmem:[%s29] sm:$0x1]
    %31 = vrot.lane.b32.xlu0 %v30, 88
    %v32 = vpop.permute.xlu0 %31
    %vm33 = vcmask 786112
    %34 = vst.msk [vmem:[#allocation0] sm:$0x1] %vm33, %v32
    %s35 = scalar_lea.vmem %s0, 10
    %v36 = vld [vmem:[%s35] sm:$0x1]
    %37 = vrot.lane.b32.xlu0 %v36, 80
    %v38 = vpop.permute.xlu0 %37
    %vm39 = vcmask 720512
    %40 = vst.msk [vmem:[#allocation0] sm:$0x1] %vm39, %v38
    %s41 = scalar_lea.vmem %s0, 9
    %v42 = vld [vmem:[%s41] sm:$0x1]
    %43 = vrot.lane.b32.xlu0 %v42, 72
    %v44 = vpop.permute.xlu0 %43
    %vm45 = vcmask 654912
    %46 = vst.msk [vmem:[#allocation0] sm:$0x1] %vm45, %v44
    %s47 = scalar_lea.vmem %s0, 8
    %v48 = vld [vmem:[%s47] sm:$0x1]
    %49 = vrot.lane.b32.xlu0 %v48, 64
    %v50 = vpop.permute.xlu0 %49
    %vm51 = vcmask 589312
    %52 = vst.msk [vmem:[#allocation0] sm:$0x1] %vm51, %v50
    %s53 = scalar_lea.vmem %s0, 7
    %v54 = vld [vmem:[%s53] sm:$0x1]
    %55 = vrot.lane.b32.xlu0 %v54, 56
    %v56 = vpop.permute.xlu0 %55
    %vm57 = vcmask 523712
    %58 = vst.msk [vmem:[#allocation0] sm:$0x1] %vm57, %v56
    %s59 = scalar_lea.vmem %s0, 6
    %v60 = vld [vmem:[%s59] sm:$0x1]
    %61 = vrot.lane.b32.xlu0 %v60, 48
    %v62 = vpop.permute.xlu0 %61
    %vm63 = vcmask 458112
    %64 = vst.msk [vmem:[#allocation0] sm:$0x1] %vm63, %v62
    %s65 = scalar_lea.vmem %s0, 5
    %v66 = vld [vmem:[%s65] sm:$0x1]
    %67 = vrot.lane.b32.xlu0 %v66, 40
    %v68 = vpop.permute.xlu0 %67
    %vm69 = vcmask 392512
    %70 = vst.msk [vmem:[#allocation0] sm:$0x1] %vm69, %v68
    %s71 = scalar_lea.vmem %s0, 4
    %v72 = vld [vmem:[%s71] sm:$0x1]
    %73 = vrot.lane.b32.xlu0 %v72, 32
    %v74 = vpop.permute.xlu0 %73
    %vm75 = vcmask 326912
    %76 = vst.msk [vmem:[#allocation0] sm:$0x1] %vm75, %v74
    %s77 = scalar_lea.vmem %s0, 3
    %v78 = vld [vmem:[%s77] sm:$0x1]
    %79 = vrot.lane.b32.xlu0 %v78, 24
    %v80 = vpop.permute.xlu0 %79
    %vm81 = vcmask 261312
    %82 = vst.msk [vmem:[#allocation0] sm:$0x1] %vm81, %v80
    %s83 = scalar_lea.vmem %s0, 2
    %v84 = vld [vmem:[%s83] sm:$0x1]
    %85 = vrot.lane.b32.xlu0 %v84, 16
    %v86 = vpop.permute.xlu0 %85
    %vm87 = vcmask 195712
    %88 = vst.msk [vmem:[#allocation0] sm:$0x1] %vm87, %v86
    %s89 = scalar_lea.vmem %s0, 1
    %v90 = vld [vmem:[%s89] sm:$0x1]
    %91 = vrot.lane.b32.xlu0 %v90, 8
    %v92 = vpop.permute.xlu0 %91
    %vm93 = vcmask 130112
    %94 = vst.msk [vmem:[#allocation0] sm:$0x1] %vm93, %v92
    %s96 = sshll.u32 1, 1
    %s97 = ssub.s32 %s96, 1
    %v99 = vld [vmem:[#allocation0] sm:%s97]
    %s100 = sshll.u32 1, 1
    %s101 = ssub.s32 %s100, 1
    %102 = vst [vmem:[%s1] sm:%s101] %v99

// kernel: preact_block_forward.3
$region0: #{preact_block_forward.3}
  #allocation0 [shape = 'u32[]', space=smem, size = 0x4, offset = 0x4, fixed_abs, tag = 'smem constant byte address 0x4 - core index']
  #allocation1 [shape = 'u32[144,128]{1,0:T(1,128)}', space=vmem, size = 0x12000, scoped, tag = 'internal scratch']
  %s0 = inlined_call_operand.vmem [shape: f32[2,16,128], index: 0, kind: input, shape index: {}]
  %s1 = inlined_call_operand.vmem [shape: f32[1,128], index: 1, kind: input, shape index: {}]
  %s2 = inlined_call_operand.vmem [shape: f32[1,128], index: 2, kind: input, shape index: {}]
  %s3 = inlined_call_operand.vmem [shape: f32[72,8], index: 3, kind: input, shape index: {}]
  %s4 = inlined_call_operand.vmem [shape: f32[2,16,128], index: 4, kind: input, shape index: {}]
  %s5 = inlined_call_operand.vmem [shape: f32[2,16,128], index: 5, kind: output, shape index: {}]
  %s6 = sld [smem:[#allocation0]]
  $region53: #{preact_block_forward.3} parent=0
    _
  %s8 = ssub.s32 1, %s6
  %s9 = scalar_select 0, %s8, %s6
  loop: start=0, step=1, limit=4
  $region2: #{preact_block_forward.3} parent=0 // loop_pre_header
    _
  $region3: #{preact_block_forward.3} parent=0 // loop_header
    %s11 = sphi 0, %s15
    %p12 = scmp.ge.s32.totalorder %s11, 4
    %s21 = sphi 0, %s23
    %s24 = sphi 0, %s21
    %s25 = sphi 0, %s24
    %s41 = sphi 0, %s25
    %s45 = sphi 0, %s45
    %s47 = sphi 0, %s45
    %s48 = sphi 0, %s47
    %s62 = sphi 0, %s48
    %s66 = sphi 0, %s66
    %s68 = sphi 0, %s66
    %s69 = sphi 0, %s68
    %s83 = sphi 0, %s69
    %s87 = sphi 0, %s87
    %s89 = sphi 0, %s87
    %s90 = sphi 0, %s89
    %s104 = sphi 0, %s90
    %s110 = sphi 0, %s112
    %s113 = sphi 0, %s110
    %s114 = sphi 0, %s113
    %s130 = sphi 0, %s114
    %s136 = sphi 0, %s138
    %s139 = sphi 0, %s136
    %s140 = sphi 0, %s139
    %s156 = sphi 0, %s140
  $region4: #{preact_block_forward.3} parent=0 // loop_header_branch
    %14 = sbr.rel (%p12) target = $region8
  $region5: #{preact_block_forward.3} parent=0 // loop_body
    %s16 = ssub.s32 %s11, 1
    %s17 = ssub.s32 %s11, 2
    %s18 = sadd.s32 %s11, 1
    %s19 = ssub.s32 %s11, %s18
    %p20 = scmp.eq.s32.totalorder %s19, 0
    %s22 = sadd.s32 %s21, 1
    %s23 = scalar_select %p20, %s21, %s22
    %p26 = pneg %p20
    %p27 = scmp.eq.s32.totalorder %s11, 1
    %p28 = por %p26, %p27
    %p29 = scmp.ne.s32.totalorder %s21, %s24
    %p30 = scmp.eq.s32.totalorder %s11, 0
    %p31 = por %p29, %p30
    %p32 = scmp.ne.s32.totalorder %s21, %s24
    %p33 = scmp.eq.s32.totalorder %s16, 1
    %p34 = por %p32, %p33
    %p35 = scmp.ne.s32.totalorder %s24, %s25
    %p36 = scmp.eq.s32.totalorder %s16, 0
    %p37 = por %p35, %p36
    %p38 = scmp.ne.s32.totalorder %s24, %s25
    %p39 = scmp.eq.s32.totalorder %s17, 1
    %p40 = por %p38, %p39
    %p42 = scmp.ne.s32.totalorder %s25, %s41
    %p43 = scmp.eq.s32.totalorder %s17, 0
    %p44 = por %p42, %p43
    %s46 = sadd.s32 %s45, 1
    %p49 = scmp.eq.s32.totalorder %s11, 1
    %p50 = scmp.ne.s32.totalorder %s45, %s47
    %p51 = scmp.eq.s32.totalorder %s11, 0
    %p52 = por %p50, %p51
    %p53 = scmp.ne.s32.totalorder %s45, %s47
    %p54 = scmp.eq.s32.totalorder %s16, 1
    %p55 = por %p53, %p54
    %p56 = scmp.ne.s32.totalorder %s47, %s48
    %p57 = scmp.eq.s32.totalorder %s16, 0
    %p58 = por %p56, %p57
    %p59 = scmp.ne.s32.totalorder %s47, %s48
    %p60 = scmp.eq.s32.totalorder %s17, 1
    %p61 = por %p59, %p60
    %p63 = scmp.ne.s32.totalorder %s48, %s62
    %p64 = scmp.eq.s32.totalorder %s17, 0
    %p65 = por %p63, %p64
    %s67 = sadd.s32 %s66, 1
    %p70 = scmp.eq.s32.totalorder %s11, 1
    %p71 = scmp.ne.s32.totalorder %s66, %s68
    %p72 = scmp.eq.s32.totalorder %s11, 0
    %p73 = por %p71, %p72
    %p74 = scmp.ne.s32.totalorder %s66, %s68
    %p75 = scmp.eq.s32.totalorder %s16, 1
    %p76 = por %p74, %p75
    %p77 = scmp.ne.s32.totalorder %s68, %s69
    %p78 = scmp.eq.s32.totalorder %s16, 0
    %p79 = por %p77, %p78
    %p80 = scmp.ne.s32.totalorder %s68, %s69
    %p81 = scmp.eq.s32.totalorder %s17, 1
    %p82 = por %p80, %p81
    %p84 = scmp.ne.s32.totalorder %s69, %s83
    %p85 = scmp.eq.s32.totalorder %s17, 0
    %p86 = por %p84, %p85
    %s88 = sadd.s32 %s87, 1
    %p91 = scmp.eq.s32.totalorder %s11, 1
    %p92 = scmp.ne.s32.totalorder %s87, %s89
    %p93 = scmp.eq.s32.totalorder %s11, 0
    %p94 = por %p92, %p93
    %p95 = scmp.ne.s32.totalorder %s87, %s89
    %p96 = scmp.eq.s32.totalorder %s16, 1
    %p97 = por %p95, %p96
    %p98 = scmp.ne.s32.totalorder %s89, %s90
    %p99 = scmp.eq.s32.totalorder %s16, 0
    %p100 = por %p98, %p99
    %p101 = scmp.ne.s32.totalorder %s89, %s90
    %p102 = scmp.eq.s32.totalorder %s17, 1
    %p103 = por %p101, %p102
    %p105 = scmp.ne.s32.totalorder %s90, %s104
    %p106 = scmp.eq.s32.totalorder %s17, 0
    %p107 = por %p105, %p106
    %s108 = ssub.s32 %s11, %s18
    %p109 = scmp.eq.s32.totalorder %s108, 0
    %s111 = sadd.s32 %s110, 1
    %s112 = scalar_select %p109, %s110, %s111
    %p115 = pneg %p109
    %p116 = scmp.eq.s32.totalorder %s11, 1
    %p117 = por %p115, %p116
    %p118 = scmp.ne.s32.totalorder %s110, %s113
    %p119 = scmp.eq.s32.totalorder %s11, 0
    %p120 = por %p118, %p119
    %p121 = scmp.ne.s32.totalorder %s110, %s113
    %p122 = scmp.eq.s32.totalorder %s16, 1
    %p123 = por %p121, %p122
    %p124 = scmp.ne.s32.totalorder %s113, %s114
    %p125 = scmp.eq.s32.totalorder %s16, 0
    %p126 = por %p124, %p125
    %p127 = scmp.ne.s32.totalorder %s113, %s114
    %p128 = scmp.eq.s32.totalorder %s17, 1
    %p129 = por %p127, %p128
    %p131 = scmp.ne.s32.totalorder %s114, %s130
    %p132 = scmp.eq.s32.totalorder %s17, 0
    %p133 = por %p131, %p132
    %s134 = ssub.s32 %s11, %s18
    %p135 = scmp.eq.s32.totalorder %s134, 0
    %s137 = sadd.s32 %s136, 1
    %s138 = scalar_select %p135, %s136, %s137
    %p141 = pneg %p135
    %p142 = scmp.eq.s32.totalorder %s11, 1
    %p143 = por %p141, %p142
    %p144 = scmp.ne.s32.totalorder %s136, %s139
    %p145 = scmp.eq.s32.totalorder %s11, 0
    %p146 = por %p144, %p145
    %p147 = scmp.ne.s32.totalorder %s136, %s139
    %p148 = scmp.eq.s32.totalorder %s16, 1
    %p149 = por %p147, %p148
    %p150 = scmp.ne.s32.totalorder %s139, %s140
    %p151 = scmp.eq.s32.totalorder %s16, 0
    %p152 = por %p150, %p151
    %p153 = scmp.ne.s32.totalorder %s139, %s140
    %p154 = scmp.eq.s32.totalorder %s17, 1
    %p155 = por %p153, %p154
    %p157 = scmp.ne.s32.totalorder %s140, %s156
    %p158 = scmp.eq.s32.totalorder %s17, 0
    %p159 = por %p157, %p158
    %p160 = scmp.le.s32.totalorder 1, %s11
    %p161 = scmp.lt.s32.totalorder %s11, 3
    %p162 = pnand %p160, %p161
    %p163 = pneg %p162
    // Predicated region
    $region9: #{preact_block_forward.3} parent=5 // pred_check
      _
    $region10: #{preact_block_forward.3} parent=5 // pred_check_branch
      %165 = sbr.rel (%p162) target = $region12
    $region11: #{preact_block_forward.3} parent=5 // pred_region
      %s166 = ssub.s32 %s11, 1
      // Predicated region
      $region13: #{preact_block_forward.3} parent=11 // pred_check
        %p167 = pneg %p58
      $region14: #{preact_block_forward.3} parent=11 // pred_check_branch
        %169 = sbr.rel (%p167) target = $region16
      $region15: #{preact_block_forward.3} parent=11 // pred_region
        _
      $region16: #{preact_block_forward.3} parent=11 // pred_fallthru
        _
      // Predicated region
      $region17: #{preact_block_forward.3} parent=11 // pred_check
        %p170 = pneg %p79
      $region18: #{preact_block_forward.3} parent=11 // pred_check_branch
        %172 = sbr.rel (%p170) target = $region20
      $region19: #{preact_block_forward.3} parent=11 // pred_region
        _
      $region20: #{preact_block_forward.3} parent=11 // pred_fallthru
        _
      // Predicated region
      $region21: #{preact_block_forward.3} parent=11 // pred_check
        %p173 = pneg %p100
      $region22: #{preact_block_forward.3} parent=11 // pred_check_branch
        %175 = sbr.rel (%p173) target = $region24
      $region23: #{preact_block_forward.3} parent=11 // pred_region
        _
      $region24: #{preact_block_forward.3} parent=11 // pred_fallthru
        _
    $region12: #{preact_block_forward.3} parent=5 // pred_fallthru
      _
    %p176 = scmp.lt.s32.totalorder %s11, 2
    // Predicated region
    $region25: #{preact_block_forward.3} parent=5 // pred_check
      %p177 = pneg %p176
    $region26: #{preact_block_forward.3} parent=5 // pred_check_branch
      %179 = sbr.rel (%p177) target = $region28
    $region27: #{preact_block_forward.3} parent=5 // pred_region
      // Predicated region
      $region29: #{preact_block_forward.3} parent=27 // pred_check
        %p180 = pneg %p31
      $region30: #{preact_block_forward.3} parent=27 // pred_check_branch
        %182 = sbr.rel (%p180) target = $region32
      $region31: #{preact_block_forward.3} parent=27 // pred_region
        %p183 = scmp.lt.s32.totalorder %s11, 1
        %s184 = scalar_select %p183, %s11, 1
        %s185 = smul.addr %s184, 2
        %s186 = smul.addr %s185, 8
        %s187 = scalar_lea.vmem %s0, %s186
      $region32: #{preact_block_forward.3} parent=27 // pred_fallthru
        _
      // Predicated region
      $region33: #{preact_block_forward.3} parent=27 // pred_check
        %p188 = pneg %p120
      $region34: #{preact_block_forward.3} parent=27 // pred_check_branch
        %190 = sbr.rel (%p188) target = $region36
      $region35: #{preact_block_forward.3} parent=27 // pred_region
        %p191 = scmp.lt.s32.totalorder %s11, 1
        %s192 = scalar_select %p191, %s11, 1
        %s193 = smul.addr %s192, 2
        %s194 = smul.addr %s193, 8
        %s195 = scalar_lea.vmem %s4, %s194
      $region36: #{preact_block_forward.3} parent=27 // pred_fallthru
        _
    $region28: #{preact_block_forward.3} parent=5 // pred_fallthru
      _
    %p196 = scmp.le.s32.totalorder 1, %s11
    %p197 = scmp.lt.s32.totalorder %s11, 3
    %p198 = pnand %p196, %p197
    %p199 = pneg %p198
    // Predicated region
    $region37: #{preact_block_forward.3} parent=5 // pred_check
      _
    $region38: #{preact_block_forward.3} parent=5 // pred_check_branch
      %201 = sbr.rel (%p198) target = $region40
    $region39: #{preact_block_forward.3} parent=5 // pred_region
      %s202 = ssub.s32 %s11, 1
      %p203 = scmp.lt.s32.totalorder %s16, 1
      %s204 = scalar_select %p203, %s16, 1
      %s205 = smul.addr %s204, 2
      %s206 = smul.addr %s205, 8
      %s207 = scalar_lea.vmem %s0, %s206
      %p208 = pneg %p37
      %p209 = pneg %p34
      %p210 = pneg %p58
      %p211 = pneg %p55
      %p212 = pneg %p79
      %p213 = pneg %p76
      %p214 = pneg %p100
      %p215 = pneg %p97
      %p216 = scmp.lt.s32.totalorder %s16, 1
      %s217 = scalar_select %p216, %s16, 1
      %s218 = smul.addr %s217, 2
      %s219 = smul.addr %s218, 8
      %s220 = scalar_lea.vmem %s4, %s219
      %p221 = pneg %p126
      %p222 = pneg %p123
      %p223 = pneg %p152
      %p224 = pneg %p149
      %p225 = scmp.lt.s32.totalorder %s16, 1
      %s226 = scalar_select %p225, %s16, 1
      %s227 = smul.addr %s226, 2
      %s228 = smul.addr %s227, 8
      %s229 = scalar_lea.vmem %s5, %s228
      %p230 = scmp.lt.s32.totalorder %s16, 1
      %s231 = scalar_select %p230, %s16, 1
      %s232 = smul.addr %s231, 2
      %s233 = smul.addr %s232, 8
      %s234 = scalar_lea.vmem %s0, %s233
      %p235 = scmp.lt.s32.totalorder %s16, 1
      %s236 = scalar_select %p235, %s16, 1
      %s237 = smul.addr %s236, 2
      %s238 = smul.addr %s237, 8
      %s239 = scalar_lea.vmem %s4, %s238
      %p240 = scmp.lt.s32.totalorder %s16, 1
      %s241 = scalar_select %p240, %s16, 1
      %s242 = smul.addr %s241, 2
      %s243 = smul.addr %s242, 8
      %s244 = scalar_lea.vmem %s5, %s243
      %v245 = vld [vmem:[%s234] sm:$0xff]
      %v246 = vld [vmem:[%s234 + $0x8] sm:$0xff]
      %v247 = vld [vmem:[%s1] sm:$0x1]
      %v249 = vlaneseq
      %v250 = vshrl.u32 %v249, 7
      %v251 = vsub.s32 0, %v250
      %v252 = vrot.slane %v247, %v251
      %v254 = vmul.f32 %v245, %v252
      %v255 = vmul.f32 %v246, %v252
      %v256 = vld [vmem:[%s2] sm:$0x1]
      %v258 = vlaneseq
      %v259 = vshrl.u32 %v258, 7
      %v260 = vsub.s32 0, %v259
      %v261 = vrot.slane %v256, %v260
      %v263 = vadd.f32 %v254, %v261
      %v264 = vadd.f32 %v255, %v261
      %v265 = vmax.f32 %v263, 0.0
      %v266 = vmax.f32 %v264, 0.0
      %v269 = vcombine.high %v265, %v265
      %v271 = vunpack.c.l.s4 1966171168
      %v272 = vunpack.c.0.s8 %v271
      %v273 = vlaneseq
      %v274 = vshrl.u32 %v273, 7
      %v275 = vsub.s32 %v272, %v274
      %v276 = vrot.slane %v265, %v275
      %v278 = vunpack.c.l.s4 1966171168
      %v279 = vunpack.c.0.s8 %v278
      %v280 = vlaneseq
      %v281 = vshrl.u32 %v280, 7
      %v282 = vsub.s32 %v279, %v281
      %v283 = vrot.slane %v269, %v282
      %v284 = vcombine.high %v276, %v276
      %v285 = vcombine.high %v283, %v283
      %v287 = vunpack.c.l.s4 1966171168
      %v288 = vunpack.c.0.s8 %v287
      %v289 = vlaneseq
      %v290 = vshrl.u32 %v289, 7
      %v291 = vsub.s32 %v288, %v290
      %v292 = vrot.slane %v276, %v291
      %v294 = vunpack.c.l.s4 1966171168
      %v295 = vunpack.c.0.s8 %v294
      %v296 = vlaneseq
      %v297 = vshrl.u32 %v296, 7
      %v298 = vsub.s32 %v295, %v297
      %v299 = vrot.slane %v283, %v298
      %v301 = vunpack.c.l.s4 1966171168
      %v302 = vunpack.c.0.s8 %v301
      %v303 = vlaneseq
      %v304 = vshrl.u32 %v303, 7
      %v305 = vsub.s32 %v302, %v304
      %v306 = vrot.slane %v284, %v305
      %v308 = vunpack.c.l.s4 1966171168
      %v309 = vunpack.c.0.s8 %v308
      %v310 = vlaneseq
      %v311 = vshrl.u32 %v310, 7
      %v312 = vsub.s32 %v309, %v311
      %v313 = vrot.slane %v285, %v312
      %v314 = vcombine.high %v292, %v292
      %v315 = vcombine.high %v299, %v299
      %v316 = vcombine.high %v306, %v306
      %v317 = vcombine.high %v313, %v313
      %v318 = vcombine.high %v266, %v266
      %v320 = vunpack.c.l.s4 1966171168
      %v321 = vunpack.c.0.s8 %v320
      %v322 = vlaneseq
      %v323 = vshrl.u32 %v322, 7
      %v324 = vsub.s32 %v321, %v323
      %v325 = vrot.slane %v266, %v324
      %v327 = vunpack.c.l.s4 1966171168
      %v328 = vunpack.c.0.s8 %v327
      %v329 = vlaneseq
      %v330 = vshrl.u32 %v329, 7
      %v331 = vsub.s32 %v328, %v330
      %v332 = vrot.slane %v318, %v331
      %v333 = vcombine.high %v325, %v325
      %v334 = vcombine.high %v332, %v332
      %v336 = vunpack.c.l.s4 1966171168
      %v337 = vunpack.c.0.s8 %v336
      %v338 = vlaneseq
      %v339 = vshrl.u32 %v338, 7
      %v340 = vsub.s32 %v337, %v339
      %v341 = vrot.slane %v325, %v340
      %v343 = vunpack.c.l.s4 1966171168
      %v344 = vunpack.c.0.s8 %v343
      %v345 = vlaneseq
      %v346 = vshrl.u32 %v345, 7
      %v347 = vsub.s32 %v344, %v346
      %v348 = vrot.slane %v332, %v347
      %v350 = vunpack.c.l.s4 1966171168
      %v351 = vunpack.c.0.s8 %v350
      %v352 = vlaneseq
      %v353 = vshrl.u32 %v352, 7
      %v354 = vsub.s32 %v351, %v353
      %v355 = vrot.slane %v333, %v354
      %v357 = vunpack.c.l.s4 1966171168
      %v358 = vunpack.c.0.s8 %v357
      %v359 = vlaneseq
      %v360 = vshrl.u32 %v359, 7
      %v361 = vsub.s32 %v358, %v360
      %v362 = vrot.slane %v334, %v361
      %v363 = vcombine.high %v341, %v341
      %v364 = vcombine.high %v348, %v348
      %v365 = vcombine.high %v355, %v355
      %v366 = vcombine.high %v362, %v362
      %v383 = vlaneseq
      %v384 = vshrl.u32 %v383, 7
      %v385 = vsub.s32 0, %v384
      %v386 = vrot.slane %v292, %v385
      %v387 = vlaneseq
      %v388 = vshrl.u32 %v387, 7
      %v389 = vsub.s32 0, %v388
      %v390 = vrot.slane %v306, %v389
      %v391 = vlaneseq
      %v392 = vshrl.u32 %v391, 7
      %v393 = vsub.s32 0, %v392
      %v394 = vrot.slane %v314, %v393
      %v395 = vlaneseq
      %v396 = vshrl.u32 %v395, 7
      %v397 = vsub.s32 0, %v396
      %v398 = vrot.slane %v316, %v397
      %v399 = vlaneseq
      %v400 = vshrl.u32 %v399, 7
      %v401 = vsub.s32 0, %v400
      %v402 = vrot.slane %v299, %v401
      %v403 = vlaneseq
      %v404 = vshrl.u32 %v403, 7
      %v405 = vsub.s32 0, %v404
      %v406 = vrot.slane %v313, %v405
      %v407 = vlaneseq
      %v408 = vshrl.u32 %v407, 7
      %v409 = vsub.s32 0, %v408
      %v410 = vrot.slane %v315, %v409
      %v411 = vlaneseq
      %v412 = vshrl.u32 %v411, 7
      %v413 = vsub.s32 0, %v412
      %v414 = vrot.slane %v317, %v413
      %v415 = vlaneseq
      %v416 = vshrl.u32 %v415, 7
      %v417 = vsub.s32 0, %v416
      %v418 = vrot.slane %v341, %v417
      %v419 = vlaneseq
      %v420 = vshrl.u32 %v419, 7
      %v421 = vsub.s32 0, %v420
      %v422 = vrot.slane %v355, %v421
      %v423 = vlaneseq
      %v424 = vshrl.u32 %v423, 7
      %v425 = vsub.s32 0, %v424
      %v426 = vrot.slane %v363, %v425
      %v427 = vlaneseq
      %v428 = vshrl.u32 %v427, 7
      %v429 = vsub.s32 0, %v428
      %v430 = vrot.slane %v365, %v429
      %v431 = vlaneseq
      %v432 = vshrl.u32 %v431, 7
      %v433 = vsub.s32 0, %v432
      %v434 = vrot.slane %v348, %v433
      %v435 = vlaneseq
      %v436 = vshrl.u32 %v435, 7
      %v437 = vsub.s32 0, %v436
      %v438 = vrot.slane %v362, %v437
      %v439 = vlaneseq
      %v440 = vshrl.u32 %v439, 7
      %v441 = vsub.s32 0, %v440
      %v442 = vrot.slane %v364, %v441
      %v443 = vlaneseq
      %v444 = vshrl.u32 %v443, 7
      %v445 = vsub.s32 0, %v444
      %v446 = vrot.slane %v366, %v445
      %447 = vrot.lane.b32.xlu0 %v386, 120
      %v448 = vpop.permute.xlu0 %447
      %449 = vrot.lane.b32.xlu0 %v390, 120
      %v450 = vpop.permute.xlu0 %449
      %451 = vrot.lane.b32.xlu0 %v394, 120
      %v452 = vpop.permute.xlu0 %451
      %453 = vrot.lane.b32.xlu0 %v398, 120
      %v454 = vpop.permute.xlu0 %453
      %455 = vrot.lane.b32.xlu0 %v402, 120
      %v456 = vpop.permute.xlu0 %455
      %457 = vrot.lane.b32.xlu0 %v406, 120
      %v458 = vpop.permute.xlu0 %457
      %459 = vrot.lane.b32.xlu0 %v410, 120
      %v460 = vpop.permute.xlu0 %459
      %461 = vrot.lane.b32.xlu0 %v414, 120
      %v462 = vpop.permute.xlu0 %461
      %463 = vrot.lane.b32.xlu0 %v418, 120
      %v464 = vpop.permute.xlu0 %463
      %465 = vrot.lane.b32.xlu0 %v422, 120
      %v466 = vpop.permute.xlu0 %465
      %467 = vrot.lane.b32.xlu0 %v426, 120
      %v468 = vpop.permute.xlu0 %467
      %469 = vrot.lane.b32.xlu0 %v430, 120
      %v470 = vpop.permute.xlu0 %469
      %471 = vrot.lane.b32.xlu0 %v434, 120
      %v472 = vpop.permute.xlu0 %471
      %473 = vrot.lane.b32.xlu0 %v438, 120
      %v474 = vpop.permute.xlu0 %473
      %475 = vrot.lane.b32.xlu0 %v442, 120
      %v476 = vpop.permute.xlu0 %475
      %477 = vrot.lane.b32.xlu0 %v446, 120
      %v478 = vpop.permute.xlu0 %477
      %495 = vrot.lane.b32.xlu0 %v386, 112
      %v496 = vpop.permute.xlu0 %495
      %497 = vrot.lane.b32.xlu0 %v390, 112
      %v498 = vpop.permute.xlu0 %497
      %499 = vrot.lane.b32.xlu0 %v394, 112
      %v500 = vpop.permute.xlu0 %499
      %501 = vrot.lane.b32.xlu0 %v398, 112
      %v502 = vpop.permute.xlu0 %501
      %503 = vrot.lane.b32.xlu0 %v402, 112
      %v504 = vpop.permute.xlu0 %503
      %505 = vrot.lane.b32.xlu0 %v406, 112
      %v506 = vpop.permute.xlu0 %505
      %507 = vrot.lane.b32.xlu0 %v410, 112
      %v508 = vpop.permute.xlu0 %507
      %509 = vrot.lane.b32.xlu0 %v414, 112
      %v510 = vpop.permute.xlu0 %509
      %511 = vrot.lane.b32.xlu0 %v418, 112
      %v512 = vpop.permute.xlu0 %511
      %513 = vrot.lane.b32.xlu0 %v422, 112
      %v514 = vpop.permute.xlu0 %513
      %515 = vrot.lane.b32.xlu0 %v426, 112
      %v516 = vpop.permute.xlu0 %515
      %517 = vrot.lane.b32.xlu0 %v430, 112
      %v518 = vpop.permute.xlu0 %517
      %519 = vrot.lane.b32.xlu0 %v434, 112
      %v520 = vpop.permute.xlu0 %519
      %521 = vrot.lane.b32.xlu0 %v438, 112
      %v522 = vpop.permute.xlu0 %521
      %523 = vrot.lane.b32.xlu0 %v442, 112
      %v524 = vpop.permute.xlu0 %523
      %525 = vrot.lane.b32.xlu0 %v446, 112
      %v526 = vpop.permute.xlu0 %525
      %543 = vrot.lane.b32.xlu0 %v386, 104
      %v544 = vpop.permute.xlu0 %543
      %545 = vrot.lane.b32.xlu0 %v390, 104
      %v546 = vpop.permute.xlu0 %545
      %547 = vrot.lane.b32.xlu0 %v394, 104
      %v548 = vpop.permute.xlu0 %547
      %549 = vrot.lane.b32.xlu0 %v398, 104
      %v550 = vpop.permute.xlu0 %549
      %551 = vrot.lane.b32.xlu0 %v402, 104
      %v552 = vpop.permute.xlu0 %551
      %553 = vrot.lane.b32.xlu0 %v406, 104
      %v554 = vpop.permute.xlu0 %553
      %555 = vrot.lane.b32.xlu0 %v410, 104
      %v556 = vpop.permute.xlu0 %555
      %557 = vrot.lane.b32.xlu0 %v414, 104
      %v558 = vpop.permute.xlu0 %557
      %559 = vrot.lane.b32.xlu0 %v418, 104
      %v560 = vpop.permute.xlu0 %559
      %561 = vrot.lane.b32.xlu0 %v422, 104
      %v562 = vpop.permute.xlu0 %561
      %563 = vrot.lane.b32.xlu0 %v426, 104
      %v564 = vpop.permute.xlu0 %563
      %565 = vrot.lane.b32.xlu0 %v430, 104
      %v566 = vpop.permute.xlu0 %565
      %567 = vrot.lane.b32.xlu0 %v434, 104
      %v568 = vpop.permute.xlu0 %567
      %569 = vrot.lane.b32.xlu0 %v438, 104
      %v570 = vpop.permute.xlu0 %569
      %571 = vrot.lane.b32.xlu0 %v442, 104
      %v572 = vpop.permute.xlu0 %571
      %573 = vrot.lane.b32.xlu0 %v446, 104
      %v574 = vpop.permute.xlu0 %573
      %591 = vrot.lane.b32.xlu0 %v386, 96
      %v592 = vpop.permute.xlu0 %591
      %593 = vrot.lane.b32.xlu0 %v390, 96
      %v594 = vpop.permute.xlu0 %593
      %595 = vrot.lane.b32.xlu0 %v394, 96
      %v596 = vpop.permute.xlu0 %595
      %597 = vrot.lane.b32.xlu0 %v398, 96
      %v598 = vpop.permute.xlu0 %597
      %599 = vrot.lane.b32.xlu0 %v402, 96
      %v600 = vpop.permute.xlu0 %599
      %601 = vrot.lane.b32.xlu0 %v406, 96
      %v602 = vpop.permute.xlu0 %601
      %603 = vrot.lane.b32.xlu0 %v410, 96
      %v604 = vpop.permute.xlu0 %603
      %605 = vrot.lane.b32.xlu0 %v414, 96
      %v606 = vpop.permute.xlu0 %605
      %607 = vrot.lane.b32.xlu0 %v418, 96
      %v608 = vpop.permute.xlu0 %607
      %609 = vrot.lane.b32.xlu0 %v422, 96
      %v610 = vpop.permute.xlu0 %609
      %611 = vrot.lane.b32.xlu0 %v426, 96
      %v612 = vpop.permute.xlu0 %611
      %613 = vrot.lane.b32.xlu0 %v430, 96
      %v614 = vpop.permute.xlu0 %613
      %615 = vrot.lane.b32.xlu0 %v434, 96
      %v616 = vpop.permute.xlu0 %615
      %617 = vrot.lane.b32.xlu0 %v438, 96
      %v618 = vpop.permute.xlu0 %617
      %619 = vrot.lane.b32.xlu0 %v442, 96
      %v620 = vpop.permute.xlu0 %619
      %621 = vrot.lane.b32.xlu0 %v446, 96
      %v622 = vpop.permute.xlu0 %621
      %639 = vrot.lane.b32.xlu0 %v386, 88
      %v640 = vpop.permute.xlu0 %639
      %641 = vrot.lane.b32.xlu0 %v390, 88
      %v642 = vpop.permute.xlu0 %641
      %643 = vrot.lane.b32.xlu0 %v394, 88
      %v644 = vpop.permute.xlu0 %643
      %645 = vrot.lane.b32.xlu0 %v398, 88
      %v646 = vpop.permute.xlu0 %645
      %647 = vrot.lane.b32.xlu0 %v402, 88
      %v648 = vpop.permute.xlu0 %647
      %649 = vrot.lane.b32.xlu0 %v406, 88
      %v650 = vpop.permute.xlu0 %649
      %651 = vrot.lane.b32.xlu0 %v410, 88
      %v652 = vpop.permute.xlu0 %651
      %653 = vrot.lane.b32.xlu0 %v414, 88
      %v654 = vpop.permute.xlu0 %653
      %655 = vrot.lane.b32.xlu0 %v418, 88
      %v656 = vpop.permute.xlu0 %655
      %657 = vrot.lane.b32.xlu0 %v422, 88
      %v658 = vpop.permute.xlu0 %657
      %659 = vrot.lane.b32.xlu0 %v426, 88
      %v660 = vpop.permute.xlu0 %659
      %661 = vrot.lane.b32.xlu0 %v430, 88
      %v662 = vpop.permute.xlu0 %661
      %663 = vrot.lane.b32.xlu0 %v434, 88
      %v664 = vpop.permute.xlu0 %663
      %665 = vrot.lane.b32.xlu0 %v438, 88
      %v666 = vpop.permute.xlu0 %665
      %667 = vrot.lane.b32.xlu0 %v442, 88
      %v668 = vpop.permute.xlu0 %667
      %669 = vrot.lane.b32.xlu0 %v446, 88
      %v670 = vpop.permute.xlu0 %669
      %687 = vrot.lane.b32.xlu0 %v386, 80
      %v688 = vpop.permute.xlu0 %687
      %689 = vrot.lane.b32.xlu0 %v390, 80
      %v690 = vpop.permute.xlu0 %689
      %691 = vrot.lane.b32.xlu0 %v394, 80
      %v692 = vpop.permute.xlu0 %691
      %693 = vrot.lane.b32.xlu0 %v398, 80
      %v694 = vpop.permute.xlu0 %693
      %695 = vrot.lane.b32.xlu0 %v402, 80
      %v696 = vpop.permute.xlu0 %695
      %697 = vrot.lane.b32.xlu0 %v406, 80
      %v698 = vpop.permute.xlu0 %697
      %699 = vrot.lane.b32.xlu0 %v410, 80
      %v700 = vpop.permute.xlu0 %699
      %701 = vrot.lane.b32.xlu0 %v414, 80
      %v702 = vpop.permute.xlu0 %701
      %703 = vrot.lane.b32.xlu0 %v418, 80
      %v704 = vpop.permute.xlu0 %703
      %705 = vrot.lane.b32.xlu0 %v422, 80
      %v706 = vpop.permute.xlu0 %705
      %707 = vrot.lane.b32.xlu0 %v426, 80
      %v708 = vpop.permute.xlu0 %707
      %709 = vrot.lane.b32.xlu0 %v430, 80
      %v710 = vpop.permute.xlu0 %709
      %711 = vrot.lane.b32.xlu0 %v434, 80
      %v712 = vpop.permute.xlu0 %711
      %713 = vrot.lane.b32.xlu0 %v438, 80
      %v714 = vpop.permute.xlu0 %713
      %715 = vrot.lane.b32.xlu0 %v442, 80
      %v716 = vpop.permute.xlu0 %715
      %717 = vrot.lane.b32.xlu0 %v446, 80
      %v718 = vpop.permute.xlu0 %717
      %735 = vrot.lane.b32.xlu0 %v386, 72
      %v736 = vpop.permute.xlu0 %735
      %737 = vrot.lane.b32.xlu0 %v390, 72
      %v738 = vpop.permute.xlu0 %737
      %739 = vrot.lane.b32.xlu0 %v394, 72
      %v740 = vpop.permute.xlu0 %739
      %741 = vrot.lane.b32.xlu0 %v398, 72
      %v742 = vpop.permute.xlu0 %741
      %743 = vrot.lane.b32.xlu0 %v402, 72
      %v744 = vpop.permute.xlu0 %743
      %745 = vrot.lane.b32.xlu0 %v406, 72
      %v746 = vpop.permute.xlu0 %745
      %747 = vrot.lane.b32.xlu0 %v410, 72
      %v748 = vpop.permute.xlu0 %747
      %749 = vrot.lane.b32.xlu0 %v414, 72
      %v750 = vpop.permute.xlu0 %749
      %751 = vrot.lane.b32.xlu0 %v418, 72
      %v752 = vpop.permute.xlu0 %751
      %753 = vrot.lane.b32.xlu0 %v422, 72
      %v754 = vpop.permute.xlu0 %753
      %755 = vrot.lane.b32.xlu0 %v426, 72
      %v756 = vpop.permute.xlu0 %755
      %757 = vrot.lane.b32.xlu0 %v430, 72
      %v758 = vpop.permute.xlu0 %757
      %759 = vrot.lane.b32.xlu0 %v434, 72
      %v760 = vpop.permute.xlu0 %759
      %761 = vrot.lane.b32.xlu0 %v438, 72
      %v762 = vpop.permute.xlu0 %761
      %763 = vrot.lane.b32.xlu0 %v442, 72
      %v764 = vpop.permute.xlu0 %763
      %765 = vrot.lane.b32.xlu0 %v446, 72
      %v766 = vpop.permute.xlu0 %765
      %783 = vrot.lane.b32.xlu0 %v386, 64
      %v784 = vpop.permute.xlu0 %783
      %785 = vrot.lane.b32.xlu0 %v390, 64
      %v786 = vpop.permute.xlu0 %785
      %787 = vrot.lane.b32.xlu0 %v394, 64
      %v788 = vpop.permute.xlu0 %787
      %789 = vrot.lane.b32.xlu0 %v398, 64
      %v790 = vpop.permute.xlu0 %789
      %791 = vrot.lane.b32.xlu0 %v402, 64
      %v792 = vpop.permute.xlu0 %791
      %793 = vrot.lane.b32.xlu0 %v406, 64
      %v794 = vpop.permute.xlu0 %793
      %795 = vrot.lane.b32.xlu0 %v410, 64
      %v796 = vpop.permute.xlu0 %795
      %797 = vrot.lane.b32.xlu0 %v414, 64
      %v798 = vpop.permute.xlu0 %797
      %799 = vrot.lane.b32.xlu0 %v418, 64
      %v800 = vpop.permute.xlu0 %799
      %801 = vrot.lane.b32.xlu0 %v422, 64
      %v802 = vpop.permute.xlu0 %801
      %803 = vrot.lane.b32.xlu0 %v426, 64
      %v804 = vpop.permute.xlu0 %803
      %805 = vrot.lane.b32.xlu0 %v430, 64
      %v806 = vpop.permute.xlu0 %805
      %807 = vrot.lane.b32.xlu0 %v434, 64
      %v808 = vpop.permute.xlu0 %807
      %809 = vrot.lane.b32.xlu0 %v438, 64
      %v810 = vpop.permute.xlu0 %809
      %811 = vrot.lane.b32.xlu0 %v442, 64
      %v812 = vpop.permute.xlu0 %811
      %813 = vrot.lane.b32.xlu0 %v446, 64
      %v814 = vpop.permute.xlu0 %813
      %831 = vrot.lane.b32.xlu0 %v386, 56
      %v832 = vpop.permute.xlu0 %831
      %833 = vrot.lane.b32.xlu0 %v390, 56
      %v834 = vpop.permute.xlu0 %833
      %835 = vrot.lane.b32.xlu0 %v394, 56
      %v836 = vpop.permute.xlu0 %835
      %837 = vrot.lane.b32.xlu0 %v398, 56
      %v838 = vpop.permute.xlu0 %837
      %839 = vrot.lane.b32.xlu0 %v402, 56
      %v840 = vpop.permute.xlu0 %839
      %841 = vrot.lane.b32.xlu0 %v406, 56
      %v842 = vpop.permute.xlu0 %841
      %843 = vrot.lane.b32.xlu0 %v410, 56
      %v844 = vpop.permute.xlu0 %843
      %845 = vrot.lane.b32.xlu0 %v414, 56
      %v846 = vpop.permute.xlu0 %845
      %847 = vrot.lane.b32.xlu0 %v418, 56
      %v848 = vpop.permute.xlu0 %847
      %849 = vrot.lane.b32.xlu0 %v422, 56
      %v850 = vpop.permute.xlu0 %849
      %851 = vrot.lane.b32.xlu0 %v426, 56
      %v852 = vpop.permute.xlu0 %851
      %853 = vrot.lane.b32.xlu0 %v430, 56
      %v854 = vpop.permute.xlu0 %853
      %855 = vrot.lane.b32.xlu0 %v434, 56
      %v856 = vpop.permute.xlu0 %855
      %857 = vrot.lane.b32.xlu0 %v438, 56
      %v858 = vpop.permute.xlu0 %857
      %859 = vrot.lane.b32.xlu0 %v442, 56
      %v860 = vpop.permute.xlu0 %859
      %861 = vrot.lane.b32.xlu0 %v446, 56
      %v862 = vpop.permute.xlu0 %861
      %879 = vrot.lane.b32.xlu0 %v386, 48
      %v880 = vpop.permute.xlu0 %879
      %881 = vrot.lane.b32.xlu0 %v390, 48
      %v882 = vpop.permute.xlu0 %881
      %883 = vrot.lane.b32.xlu0 %v394, 48
      %v884 = vpop.permute.xlu0 %883
      %885 = vrot.lane.b32.xlu0 %v398, 48
      %v886 = vpop.permute.xlu0 %885
      %887 = vrot.lane.b32.xlu0 %v402, 48
      %v888 = vpop.permute.xlu0 %887
      %889 = vrot.lane.b32.xlu0 %v406, 48
      %v890 = vpop.permute.xlu0 %889
      %891 = vrot.lane.b32.xlu0 %v410, 48
      %v892 = vpop.permute.xlu0 %891
      %893 = vrot.lane.b32.xlu0 %v414, 48
      %v894 = vpop.permute.xlu0 %893
      %895 = vrot.lane.b32.xlu0 %v418, 48
      %v896 = vpop.permute.xlu0 %895
      %897 = vrot.lane.b32.xlu0 %v422, 48
      %v898 = vpop.permute.xlu0 %897
      %899 = vrot.lane.b32.xlu0 %v426, 48
      %v900 = vpop.permute.xlu0 %899
      %901 = vrot.lane.b32.xlu0 %v430, 48
      %v902 = vpop.permute.xlu0 %901
      %903 = vrot.lane.b32.xlu0 %v434, 48
      %v904 = vpop.permute.xlu0 %903
      %905 = vrot.lane.b32.xlu0 %v438, 48
      %v906 = vpop.permute.xlu0 %905
      %907 = vrot.lane.b32.xlu0 %v442, 48
      %v908 = vpop.permute.xlu0 %907
      %909 = vrot.lane.b32.xlu0 %v446, 48
      %v910 = vpop.permute.xlu0 %909
      %927 = vrot.lane.b32.xlu0 %v386, 40
      %v928 = vpop.permute.xlu0 %927
      %929 = vrot.lane.b32.xlu0 %v390, 40
      %v930 = vpop.permute.xlu0 %929
      %931 = vrot.lane.b32.xlu0 %v394, 40
      %v932 = vpop.permute.xlu0 %931
      %933 = vrot.lane.b32.xlu0 %v398, 40
      %v934 = vpop.permute.xlu0 %933
      %935 = vrot.lane.b32.xlu0 %v402, 40
      %v936 = vpop.permute.xlu0 %935
      %937 = vrot.lane.b32.xlu0 %v406, 40
      %v938 = vpop.permute.xlu0 %937
      %939 = vrot.lane.b32.xlu0 %v410, 40
      %v940 = vpop.permute.xlu0 %939
      %941 = vrot.lane.b32.xlu0 %v414, 40
      %v942 = vpop.permute.xlu0 %941
      %943 = vrot.lane.b32.xlu0 %v418, 40
      %v944 = vpop.permute.xlu0 %943
      %945 = vrot.lane.b32.xlu0 %v422, 40
      %v946 = vpop.permute.xlu0 %945
      %947 = vrot.lane.b32.xlu0 %v426, 40
      %v948 = vpop.permute.xlu0 %947
      %949 = vrot.lane.b32.xlu0 %v430, 40
      %v950 = vpop.permute.xlu0 %949
      %951 = vrot.lane.b32.xlu0 %v434, 40
      %v952 = vpop.permute.xlu0 %951
      %953 = vrot.lane.b32.xlu0 %v438, 40
      %v954 = vpop.permute.xlu0 %953
      %955 = vrot.lane.b32.xlu0 %v442, 40
      %v956 = vpop.permute.xlu0 %955
      %957 = vrot.lane.b32.xlu0 %v446, 40
      %v958 = vpop.permute.xlu0 %957
      %975 = vrot.lane.b32.xlu0 %v386, 32
      %v976 = vpop.permute.xlu0 %975
      %977 = vrot.lane.b32.xlu0 %v390, 32
      %v978 = vpop.permute.xlu0 %977
      %979 = vrot.lane.b32.xlu0 %v394, 32
      %v980 = vpop.permute.xlu0 %979
      %981 = vrot.lane.b32.xlu0 %v398, 32
      %v982 = vpop.permute.xlu0 %981
      %983 = vrot.lane.b32.xlu0 %v402, 32
      %v984 = vpop.permute.xlu0 %983
      %985 = vrot.lane.b32.xlu0 %v406, 32
      %v986 = vpop.permute.xlu0 %985
      %987 = vrot.lane.b32.xlu0 %v410, 32
      %v988 = vpop.permute.xlu0 %987
      %989 = vrot.lane.b32.xlu0 %v414, 32
      %v990 = vpop.permute.xlu0 %989
      %991 = vrot.lane.b32.xlu0 %v418, 32
      %v992 = vpop.permute.xlu0 %991
      %993 = vrot.lane.b32.xlu0 %v422, 32
      %v994 = vpop.permute.xlu0 %993
      %995 = vrot.lane.b32.xlu0 %v426, 32
      %v996 = vpop.permute.xlu0 %995
      %997 = vrot.lane.b32.xlu0 %v430, 32
      %v998 = vpop.permute.xlu0 %997
      %999 = vrot.lane.b32.xlu0 %v434, 32
      %v1000 = vpop.permute.xlu0 %999
      %1001 = vrot.lane.b32.xlu0 %v438, 32
      %v1002 = vpop.permute.xlu0 %1001
      %1003 = vrot.lane.b32.xlu0 %v442, 32
      %v1004 = vpop.permute.xlu0 %1003
      %1005 = vrot.lane.b32.xlu0 %v446, 32
      %v1006 = vpop.permute.xlu0 %1005
      %1023 = vrot.lane.b32.xlu0 %v386, 24
      %v1024 = vpop.permute.xlu0 %1023
      %1025 = vrot.lane.b32.xlu0 %v390, 24
      %v1026 = vpop.permute.xlu0 %1025
      %1027 = vrot.lane.b32.xlu0 %v394, 24
      %v1028 = vpop.permute.xlu0 %1027
      %1029 = vrot.lane.b32.xlu0 %v398, 24
      %v1030 = vpop.permute.xlu0 %1029
      %1031 = vrot.lane.b32.xlu0 %v402, 24
      %v1032 = vpop.permute.xlu0 %1031
      %1033 = vrot.lane.b32.xlu0 %v406, 24
      %v1034 = vpop.permute.xlu0 %1033
      %1035 = vrot.lane.b32.xlu0 %v410, 24
      %v1036 = vpop.permute.xlu0 %1035
      %1037 = vrot.lane.b32.xlu0 %v414, 24
      %v1038 = vpop.permute.xlu0 %1037
      %1039 = vrot.lane.b32.xlu0 %v418, 24
      %v1040 = vpop.permute.xlu0 %1039
      %1041 = vrot.lane.b32.xlu0 %v422, 24
      %v1042 = vpop.permute.xlu0 %1041
      %1043 = vrot.lane.b32.xlu0 %v426, 24
      %v1044 = vpop.permute.xlu0 %1043
      %1045 = vrot.lane.b32.xlu0 %v430, 24
      %v1046 = vpop.permute.xlu0 %1045
      %1047 = vrot.lane.b32.xlu0 %v434, 24
      %v1048 = vpop.permute.xlu0 %1047
      %1049 = vrot.lane.b32.xlu0 %v438, 24
      %v1050 = vpop.permute.xlu0 %1049
      %1051 = vrot.lane.b32.xlu0 %v442, 24
      %v1052 = vpop.permute.xlu0 %1051
      %1053 = vrot.lane.b32.xlu0 %v446, 24
      %v1054 = vpop.permute.xlu0 %1053
      %1071 = vrot.lane.b32.xlu0 %v386, 16
      %v1072 = vpop.permute.xlu0 %1071
      %1073 = vrot.lane.b32.xlu0 %v390, 16
      %v1074 = vpop.permute.xlu0 %1073
      %1075 = vrot.lane.b32.xlu0 %v394, 16
      %v1076 = vpop.permute.xlu0 %1075
      %1077 = vrot.lane.b32.xlu0 %v398, 16
      %v1078 = vpop.permute.xlu0 %1077
      %1079 = vrot.lane.b32.xlu0 %v402, 16
      %v1080 = vpop.permute.xlu0 %1079
      %1081 = vrot.lane.b32.xlu0 %v406, 16
      %v1082 = vpop.permute.xlu0 %1081
      %1083 = vrot.lane.b32.xlu0 %v410, 16
      %v1084 = vpop.permute.xlu0 %1083
      %1085 = vrot.lane.b32.xlu0 %v414, 16
      %v1086 = vpop.permute.xlu0 %1085
      %1087 = vrot.lane.b32.xlu0 %v418, 16
      %v1088 = vpop.permute.xlu0 %1087
      %1089 = vrot.lane.b32.xlu0 %v422, 16
      %v1090 = vpop.permute.xlu0 %1089
      %1091 = vrot.lane.b32.xlu0 %v426, 16
      %v1092 = vpop.permute.xlu0 %1091
      %1093 = vrot.lane.b32.xlu0 %v430, 16
      %v1094 = vpop.permute.xlu0 %1093
      %1095 = vrot.lane.b32.xlu0 %v434, 16
      %v1096 = vpop.permute.xlu0 %1095
      %1097 = vrot.lane.b32.xlu0 %v438, 16
      %v1098 = vpop.permute.xlu0 %1097
      %1099 = vrot.lane.b32.xlu0 %v442, 16
      %v1100 = vpop.permute.xlu0 %1099
      %1101 = vrot.lane.b32.xlu0 %v446, 16
      %v1102 = vpop.permute.xlu0 %1101
      %1119 = vrot.lane.b32.xlu0 %v386, 8
      %v1120 = vpop.permute.xlu0 %1119
      %1121 = vrot.lane.b32.xlu0 %v390, 8
      %v1122 = vpop.permute.xlu0 %1121
      %1123 = vrot.lane.b32.xlu0 %v394, 8
      %v1124 = vpop.permute.xlu0 %1123
      %1125 = vrot.lane.b32.xlu0 %v398, 8
      %v1126 = vpop.permute.xlu0 %1125
      %1127 = vrot.lane.b32.xlu0 %v402, 8
      %v1128 = vpop.permute.xlu0 %1127
      %1129 = vrot.lane.b32.xlu0 %v406, 8
      %v1130 = vpop.permute.xlu0 %1129
      %1131 = vrot.lane.b32.xlu0 %v410, 8
      %v1132 = vpop.permute.xlu0 %1131
      %1133 = vrot.lane.b32.xlu0 %v414, 8
      %v1134 = vpop.permute.xlu0 %1133
      %1135 = vrot.lane.b32.xlu0 %v418, 8
      %v1136 = vpop.permute.xlu0 %1135
      %1137 = vrot.lane.b32.xlu0 %v422, 8
      %v1138 = vpop.permute.xlu0 %1137
      %1139 = vrot.lane.b32.xlu0 %v426, 8
      %v1140 = vpop.permute.xlu0 %1139
      %1141 = vrot.lane.b32.xlu0 %v430, 8
      %v1142 = vpop.permute.xlu0 %1141
      %1143 = vrot.lane.b32.xlu0 %v434, 8
      %v1144 = vpop.permute.xlu0 %1143
      %1145 = vrot.lane.b32.xlu0 %v438, 8
      %v1146 = vpop.permute.xlu0 %1145
      %1147 = vrot.lane.b32.xlu0 %v442, 8
      %v1148 = vpop.permute.xlu0 %1147
      %1149 = vrot.lane.b32.xlu0 %v446, 8
      %v1150 = vpop.permute.xlu0 %1149
      %vm1167 = vcmask 1040384
      %v1168 = vsel %vm1167, %v292, %v448
      %v1169 = vsel %vm1167, %v306, %v450
      %v1170 = vsel %vm1167, %v314, %v452
      %v1171 = vsel %vm1167, %v316, %v454
      %v1172 = vsel %vm1167, %v299, %v456
      %v1173 = vsel %vm1167, %v313, %v458
      %v1174 = vsel %vm1167, %v315, %v460
      %v1175 = vsel %vm1167, %v317, %v462
      %v1176 = vsel %vm1167, %v341, %v464
      %v1177 = vsel %vm1167, %v355, %v466
      %v1178 = vsel %vm1167, %v363, %v468
      %v1179 = vsel %vm1167, %v365, %v470
      %v1180 = vsel %vm1167, %v348, %v472
      %v1181 = vsel %vm1167, %v362, %v474
      %v1182 = vsel %vm1167, %v364, %v476
      %v1183 = vsel %vm1167, %v366, %v478
      %vm1184 = vcmask 1041408
      %v1185 = vsel %vm1184, %v1168, %v496
      %v1186 = vsel %vm1184, %v1169, %v498
      %v1187 = vsel %vm1184, %v1170, %v500
      %v1188 = vsel %vm1184, %v1171, %v502
      %v1189 = vsel %vm1184, %v1172, %v504
      %v1190 = vsel %vm1184, %v1173, %v506
      %v1191 = vsel %vm1184, %v1174, %v508
      %v1192 = vsel %vm1184, %v1175, %v510
      %v1193 = vsel %vm1184, %v1176, %v512
      %v1194 = vsel %vm1184, %v1177, %v514
      %v1195 = vsel %vm1184, %v1178, %v516
      %v1196 = vsel %vm1184, %v1179, %v518
      %v1197 = vsel %vm1184, %v1180, %v520
      %v1198 = vsel %vm1184, %v1181, %v522
      %v1199 = vsel %vm1184, %v1182, %v524
      %v1200 = vsel %vm1184, %v1183, %v526
      %vm1201 = vcmask 1042432
      %v1202 = vsel %vm1201, %v1185, %v544
      %v1203 = vsel %vm1201, %v1186, %v546
      %v1204 = vsel %vm1201, %v1187, %v548
      %v1205 = vsel %vm1201, %v1188, %v550
      %v1206 = vsel %vm1201, %v1189, %v552
      %v1207 = vsel %vm1201, %v1190, %v554
      %v1208 = vsel %vm1201, %v1191, %v556
      %v1209 = vsel %vm1201, %v1192, %v558
      %v1210 = vsel %vm1201, %v1193, %v560
      %v1211 = vsel %vm1201, %v1194, %v562
      %v1212 = vsel %vm1201, %v1195, %v564
      %v1213 = vsel %vm1201, %v1196, %v566
      %v1214 = vsel %vm1201, %v1197, %v568
      %v1215 = vsel %vm1201, %v1198, %v570
      %v1216 = vsel %vm1201, %v1199, %v572
      %v1217 = vsel %vm1201, %v1200, %v574
      %vm1218 = vcmask 1043456
      %v1219 = vsel %vm1218, %v1202, %v592
      %v1220 = vsel %vm1218, %v1203, %v594
      %v1221 = vsel %vm1218, %v1204, %v596
      %v1222 = vsel %vm1218, %v1205, %v598
      %v1223 = vsel %vm1218, %v1206, %v600
      %v1224 = vsel %vm1218, %v1207, %v602
      %v1225 = vsel %vm1218, %v1208, %v604
      %v1226 = vsel %vm1218, %v1209, %v606
      %v1227 = vsel %vm1218, %v1210, %v608
      %v1228 = vsel %vm1218, %v1211, %v610
      %v1229 = vsel %vm1218, %v1212, %v612
      %v1230 = vsel %vm1218, %v1213, %v614
      %v1231 = vsel %vm1218, %v1214, %v616
      %v1232 = vsel %vm1218, %v1215, %v618
      %v1233 = vsel %vm1218, %v1216, %v620
      %v1234 = vsel %vm1218, %v1217, %v622
      %vm1235 = vcmask 1044480
      %v1236 = vsel %vm1235, %v1219, %v640
      %v1237 = vsel %vm1235, %v1220, %v642
      %v1238 = vsel %vm1235, %v1221, %v644
      %v1239 = vsel %vm1235, %v1222, %v646
      %v1240 = vsel %vm1235, %v1223, %v648
      %v1241 = vsel %vm1235, %v1224, %v650
      %v1242 = vsel %vm1235, %v1225, %v652
      %v1243 = vsel %vm1235, %v1226, %v654
      %v1244 = vsel %vm1235, %v1227, %v656
      %v1245 = vsel %vm1235, %v1228, %v658
      %v1246 = vsel %vm1235, %v1229, %v660
      %v1247 = vsel %vm1235, %v1230, %v662
      %v1248 = vsel %vm1235, %v1231, %v664
      %v1249 = vsel %vm1235, %v1232, %v666
      %v1250 = vsel %vm1235, %v1233, %v668
      %v1251 = vsel %vm1235, %v1234, %v670
      %vm1252 = vcmask 1045504
      %v1253 = vsel %vm1252, %v1236, %v688
      %v1254 = vsel %vm1252, %v1237, %v690
      %v1255 = vsel %vm1252, %v1238, %v692
      %v1256 = vsel %vm1252, %v1239, %v694
      %v1257 = vsel %vm1252, %v1240, %v696
      %v1258 = vsel %vm1252, %v1241, %v698
      %v1259 = vsel %vm1252, %v1242, %v700
      %v1260 = vsel %vm1252, %v1243, %v702
      %v1261 = vsel %vm1252, %v1244, %v704
      %v1262 = vsel %vm1252, %v1245, %v706
      %v1263 = vsel %vm1252, %v1246, %v708
      %v1264 = vsel %vm1252, %v1247, %v710
      %v1265 = vsel %vm1252, %v1248, %v712
      %v1266 = vsel %vm1252, %v1249, %v714
      %v1267 = vsel %vm1252, %v1250, %v716
      %v1268 = vsel %vm1252, %v1251, %v718
      %vm1269 = vcmask 1046528
      %v1270 = vsel %vm1269, %v1253, %v736
      %v1271 = vsel %vm1269, %v1254, %v738
      %v1272 = vsel %vm1269, %v1255, %v740
      %v1273 = vsel %vm1269, %v1256, %v742
      %v1274 = vsel %vm1269, %v1257, %v744
      %v1275 = vsel %vm1269, %v1258, %v746
      %v1276 = vsel %vm1269, %v1259, %v748
      %v1277 = vsel %vm1269, %v1260, %v750
      %v1278 = vsel %vm1269, %v1261, %v752
      %v1279 = vsel %vm1269, %v1262, %v754
      %v1280 = vsel %vm1269, %v1263, %v756
      %v1281 = vsel %vm1269, %v1264, %v758
      %v1282 = vsel %vm1269, %v1265, %v760
      %v1283 = vsel %vm1269, %v1266, %v762
      %v1284 = vsel %vm1269, %v1267, %v764
      %v1285 = vsel %vm1269, %v1268, %v766
      %v1286 = vsel %vm1167, %v784, %v832
      %v1287 = vsel %vm1167, %v786, %v834
      %v1288 = vsel %vm1167, %v788, %v836
      %v1289 = vsel %vm1167, %v790, %v838
      %v1290 = vsel %vm1167, %v792, %v840
      %v1291 = vsel %vm1167, %v794, %v842
      %v1292 = vsel %vm1167, %v796, %v844
      %v1293 = vsel %vm1167, %v798, %v846
      %v1294 = vsel %vm1167, %v800, %v848
      %v1295 = vsel %vm1167, %v802, %v850
      %v1296 = vsel %vm1167, %v804, %v852
      %v1297 = vsel %vm1167, %v806, %v854
      %v1298 = vsel %vm1167, %v808, %v856
      %v1299 = vsel %vm1167, %v810, %v858
      %v1300 = vsel %vm1167, %v812, %v860
      %v1301 = vsel %vm1167, %v814, %v862
      %v1302 = vsel %vm1184, %v1286, %v880
      %v1303 = vsel %vm1184, %v1287, %v882
      %v1304 = vsel %vm1184, %v1288, %v884
      %v1305 = vsel %vm1184, %v1289, %v886
      %v1306 = vsel %vm1184, %v1290, %v888
      %v1307 = vsel %vm1184, %v1291, %v890
      %v1308 = vsel %vm1184, %v1292, %v892
      %v1309 = vsel %vm1184, %v1293, %v894
      %v1310 = vsel %vm1184, %v1294, %v896
      %v1311 = vsel %vm1184, %v1295, %v898
      %v1312 = vsel %vm1184, %v1296, %v900
      %v1313 = vsel %vm1184, %v1297, %v902
      %v1314 = vsel %vm1184, %v1298, %v904
      %v1315 = vsel %vm1184, %v1299, %v906
      %v1316 = vsel %vm1184, %v1300, %v908
      %v1317 = vsel %vm1184, %v1301, %v910
      %v1318 = vsel %vm1201, %v1302, %v928
      %v1319 = vsel %vm1201, %v1303, %v930
      %v1320 = vsel %vm1201, %v1304, %v932
      %v1321 = vsel %vm1201, %v1305, %v934
      %v1322 = vsel %vm1201, %v1306, %v936
      %v1323 = vsel %vm1201, %v1307, %v938
      %v1324 = vsel %vm1201, %v1308, %v940
      %v1325 = vsel %vm1201, %v1309, %v942
      %v1326 = vsel %vm1201, %v1310, %v944
      %v1327 = vsel %vm1201, %v1311, %v946
      %v1328 = vsel %vm1201, %v1312, %v948
      %v1329 = vsel %vm1201, %v1313, %v950
      %v1330 = vsel %vm1201, %v1314, %v952
      %v1331 = vsel %vm1201, %v1315, %v954
      %v1332 = vsel %vm1201, %v1316, %v956
      %v1333 = vsel %vm1201, %v1317, %v958
      %v1334 = vsel %vm1218, %v1318, %v976
      %v1335 = vsel %vm1218, %v1319, %v978
      %v1336 = vsel %vm1218, %v1320, %v980
      %v1337 = vsel %vm1218, %v1321, %v982
      %v1338 = vsel %vm1218, %v1322, %v984
      %v1339 = vsel %vm1218, %v1323, %v986
      %v1340 = vsel %vm1218, %v1324, %v988
      %v1341 = vsel %vm1218, %v1325, %v990
      %v1342 = vsel %vm1218, %v1326, %v992
      %v1343 = vsel %vm1218, %v1327, %v994
      %v1344 = vsel %vm1218, %v1328, %v996
      %v1345 = vsel %vm1218, %v1329, %v998
      %v1346 = vsel %vm1218, %v1330, %v1000
      %v1347 = vsel %vm1218, %v1331, %v1002
      %v1348 = vsel %vm1218, %v1332, %v1004
      %v1349 = vsel %vm1218, %v1333, %v1006
      %v1350 = vsel %vm1235, %v1334, %v1024
      %v1351 = vsel %vm1235, %v1335, %v1026
      %v1352 = vsel %vm1235, %v1336, %v1028
      %v1353 = vsel %vm1235, %v1337, %v1030
      %v1354 = vsel %vm1235, %v1338, %v1032
      %v1355 = vsel %vm1235, %v1339, %v1034
      %v1356 = vsel %vm1235, %v1340, %v1036
      %v1357 = vsel %vm1235, %v1341, %v1038
      %v1358 = vsel %vm1235, %v1342, %v1040
      %v1359 = vsel %vm1235, %v1343, %v1042
      %v1360 = vsel %vm1235, %v1344, %v1044
      %v1361 = vsel %vm1235, %v1345, %v1046
      %v1362 = vsel %vm1235, %v1346, %v1048
      %v1363 = vsel %vm1235, %v1347, %v1050
      %v1364 = vsel %vm1235, %v1348, %v1052
      %v1365 = vsel %vm1235, %v1349, %v1054
      %v1366 = vsel %vm1252, %v1350, %v1072
      %v1367 = vsel %vm1252, %v1351, %v1074
      %v1368 = vsel %vm1252, %v1352, %v1076
      %v1369 = vsel %vm1252, %v1353, %v1078
      %v1370 = vsel %vm1252, %v1354, %v1080
      %v1371 = vsel %vm1252, %v1355, %v1082
      %v1372 = vsel %vm1252, %v1356, %v1084
      %v1373 = vsel %vm1252, %v1357, %v1086
      %v1374 = vsel %vm1252, %v1358, %v1088
      %v1375 = vsel %vm1252, %v1359, %v1090
      %v1376 = vsel %vm1252, %v1360, %v1092
      %v1377 = vsel %vm1252, %v1361, %v1094
      %v1378 = vsel %vm1252, %v1362, %v1096
      %v1379 = vsel %vm1252, %v1363, %v1098
      %v1380 = vsel %vm1252, %v1364, %v1100
      %v1381 = vsel %vm1252, %v1365, %v1102
      %v1382 = vsel %vm1269, %v1366, %v1120
      %v1383 = vsel %vm1269, %v1367, %v1122
      %v1384 = vsel %vm1269, %v1368, %v1124
      %v1385 = vsel %vm1269, %v1369, %v1126
      %v1386 = vsel %vm1269, %v1370, %v1128
      %v1387 = vsel %vm1269, %v1371, %v1130
      %v1388 = vsel %vm1269, %v1372, %v1132
      %v1389 = vsel %vm1269, %v1373, %v1134
      %v1390 = vsel %vm1269, %v1374, %v1136
      %v1391 = vsel %vm1269, %v1375, %v1138
      %v1392 = vsel %vm1269, %v1376, %v1140
      %v1393 = vsel %vm1269, %v1377, %v1142
      %v1394 = vsel %vm1269, %v1378, %v1144
      %v1395 = vsel %vm1269, %v1379, %v1146
      %v1396 = vsel %vm1269, %v1380, %v1148
      %v1397 = vsel %vm1269, %v1381, %v1150
      %v1429 = vrot.slane 0.0, 7
      %v1430 = vsel %vm1167, %v1429, %v1429
      %v1431 = vrot.slane %v1270, 7
      %v1432 = vrot.slane %v1382, 7
      %v1433 = vsel %vm1167, %v1431, %v1432
      %v1434 = vrot.slane %v1271, 7
      %v1435 = vrot.slane %v1383, 7
      %v1436 = vsel %vm1167, %v1434, %v1435
      %v1437 = vrot.slane %v1272, 7
      %v1438 = vrot.slane %v1384, 7
      %v1439 = vsel %vm1167, %v1437, %v1438
      %v1440 = vrot.slane %v1273, 7
      %v1441 = vrot.slane %v1385, 7
      %v1442 = vsel %vm1167, %v1440, %v1441
      %v1443 = vrot.slane %v1274, 7
      %v1444 = vrot.slane %v1386, 7
      %v1445 = vsel %vm1167, %v1443, %v1444
      %v1446 = vrot.slane %v1275, 7
      %v1447 = vrot.slane %v1387, 7
      %v1448 = vsel %vm1167, %v1446, %v1447
      %v1449 = vrot.slane %v1276, 7
      %v1450 = vrot.slane %v1388, 7
      %v1451 = vsel %vm1167, %v1449, %v1450
      %v1452 = vrot.slane %v1277, 7
      %v1453 = vrot.slane %v1389, 7
      %v1454 = vsel %vm1167, %v1452, %v1453
      %v1455 = vrot.slane %v1278, 7
      %v1456 = vrot.slane %v1390, 7
      %v1457 = vsel %vm1167, %v1455, %v1456
      %v1458 = vrot.slane %v1279, 7
      %v1459 = vrot.slane %v1391, 7
      %v1460 = vsel %vm1167, %v1458, %v1459
      %v1461 = vrot.slane %v1280, 7
      %v1462 = vrot.slane %v1392, 7
      %v1463 = vsel %vm1167, %v1461, %v1462
      %v1464 = vrot.slane %v1281, 7
      %v1465 = vrot.slane %v1393, 7
      %v1466 = vsel %vm1167, %v1464, %v1465
      %v1467 = vrot.slane %v1282, 7
      %v1468 = vrot.slane %v1394, 7
      %v1469 = vsel %vm1167, %v1467, %v1468
      %v1470 = vrot.slane %v1283, 7
      %v1471 = vrot.slane %v1395, 7
      %v1472 = vsel %vm1167, %v1470, %v1471
      %v1473 = vrot.slane %v1284, 7
      %v1474 = vrot.slane %v1396, 7
      %v1475 = vsel %vm1167, %v1473, %v1474
      %v1508 = vsel %vm1167, 0.0, %v1429
      %v1509 = vsel %vm1167, 0.0, %v1431
      %v1510 = vsel %vm1167, 0.0, %v1434
      %v1511 = vsel %vm1167, 0.0, %v1437
      %v1512 = vsel %vm1167, 0.0, %v1440
      %v1513 = vsel %vm1167, 0.0, %v1443
      %v1514 = vsel %vm1167, 0.0, %v1446
      %v1515 = vsel %vm1167, 0.0, %v1449
      %v1516 = vsel %vm1167, 0.0, %v1452
      %v1517 = vsel %vm1167, 0.0, %v1455
      %v1518 = vsel %vm1167, 0.0, %v1458
      %v1519 = vsel %vm1167, 0.0, %v1461
      %v1520 = vsel %vm1167, 0.0, %v1464
      %v1521 = vsel %vm1167, 0.0, %v1467
      %v1522 = vsel %vm1167, 0.0, %v1470
      %v1523 = vsel %vm1167, 0.0, %v1473
      %v1524 = vrot.slane 0.0, 1
      %v1525 = vsel %vm1269, %v1524, %v1524
      %v1526 = vrot.slane %v1270, 1
      %v1527 = vrot.slane %v1382, 1
      %v1528 = vsel %vm1269, %v1526, %v1527
      %v1529 = vrot.slane %v1271, 1
      %v1530 = vrot.slane %v1383, 1
      %v1531 = vsel %vm1269, %v1529, %v1530
      %v1532 = vrot.slane %v1272, 1
      %v1533 = vrot.slane %v1384, 1
      %v1534 = vsel %vm1269, %v1532, %v1533
      %v1535 = vrot.slane %v1273, 1
      %v1536 = vrot.slane %v1385, 1
      %v1537 = vsel %vm1269, %v1535, %v1536
      %v1538 = vrot.slane %v1274, 1
      %v1539 = vrot.slane %v1386, 1
      %v1540 = vsel %vm1269, %v1538, %v1539
      %v1541 = vrot.slane %v1275, 1
      %v1542 = vrot.slane %v1387, 1
      %v1543 = vsel %vm1269, %v1541, %v1542
      %v1544 = vrot.slane %v1276, 1
      %v1545 = vrot.slane %v1388, 1
      %v1546 = vsel %vm1269, %v1544, %v1545
      %v1547 = vrot.slane %v1277, 1
      %v1548 = vrot.slane %v1389, 1
      %v1549 = vsel %vm1269, %v1547, %v1548
      %v1550 = vrot.slane %v1278, 1
      %v1551 = vrot.slane %v1390, 1
      %v1552 = vsel %vm1269, %v1550, %v1551
      %v1553 = vrot.slane %v1279, 1
      %v1554 = vrot.slane %v1391, 1
      %v1555 = vsel %vm1269, %v1553, %v1554
      %v1556 = vrot.slane %v1280, 1
      %v1557 = vrot.slane %v1392, 1
      %v1558 = vsel %vm1269, %v1556, %v1557
      %v1559 = vrot.slane %v1281, 1
      %v1560 = vrot.slane %v1393, 1
      %v1561 = vsel %vm1269, %v1559, %v1560
      %v1562 = vrot.slane %v1282, 1
      %v1563 = vrot.slane %v1394, 1
      %v1564 = vsel %vm1269, %v1562, %v1563
      %v1565 = vrot.slane %v1283, 1
      %v1566 = vrot.slane %v1395, 1
      %v1567 = vsel %vm1269, %v1565, %v1566
      %v1568 = vrot.slane %v1284, 1
      %v1569 = vrot.slane %v1396, 1
      %v1570 = vsel %vm1269, %v1568, %v1569
      %v1587 = vsel %vm1269, %v1524, 0.0
      %v1588 = vsel %vm1269, %v1527, 0.0
      %v1589 = vsel %vm1269, %v1530, 0.0
      %v1590 = vsel %vm1269, %v1533, 0.0
      %v1591 = vsel %vm1269, %v1536, 0.0
      %v1592 = vsel %vm1269, %v1539, 0.0
      %v1593 = vsel %vm1269, %v1542, 0.0
      %v1594 = vsel %vm1269, %v1545, 0.0
      %v1595 = vsel %vm1269, %v1548, 0.0
      %v1596 = vsel %vm1269, %v1551, 0.0
      %v1597 = vsel %vm1269, %v1554, 0.0
      %v1598 = vsel %vm1269, %v1557, 0.0
      %v1599 = vsel %vm1269, %v1560, 0.0
      %v1600 = vsel %vm1269, %v1563, 0.0
      %v1601 = vsel %vm1269, %v1566, 0.0
      %v1602 = vsel %vm1269, %v1569, 0.0
      %v1605 = vrot.slane %v1285, 7
      %v1606 = vrot.slane %v1397, 7
      %v1607 = vsel %vm1167, %v1605, %v1606
      %v1609 = vsel %vm1167, 0.0, %v1605
      %v1610 = vrot.slane %v1285, 1
      %v1611 = vrot.slane %v1397, 1
      %v1612 = vsel %vm1269, %v1610, %v1611
      %v1614 = vsel %vm1269, %v1611, 0.0
      %1615 = vrot.lane.b32.xlu0 0.0, 8
      %v1616 = vpop.permute.xlu0 %1615
      %1617 = vrot.lane.b32.xlu0 %v1270, 8
      %v1618 = vpop.permute.xlu0 %1617
      %1619 = vrot.lane.b32.xlu0 %v1382, 8
      %v1620 = vpop.permute.xlu0 %1619
      %1621 = vrot.lane.b32.xlu0 %v1271, 8
      %v1622 = vpop.permute.xlu0 %1621
      %1623 = vrot.lane.b32.xlu0 %v1383, 8
      %v1624 = vpop.permute.xlu0 %1623
      %1625 = vrot.lane.b32.xlu0 %v1272, 8
      %v1626 = vpop.permute.xlu0 %1625
      %1627 = vrot.lane.b32.xlu0 %v1384, 8
      %v1628 = vpop.permute.xlu0 %1627
      %1629 = vrot.lane.b32.xlu0 %v1273, 8
      %v1630 = vpop.permute.xlu0 %1629
      %1631 = vrot.lane.b32.xlu0 %v1385, 8
      %v1632 = vpop.permute.xlu0 %1631
      %1633 = vrot.lane.b32.xlu0 %v1274, 8
      %v1634 = vpop.permute.xlu0 %1633
      %1635 = vrot.lane.b32.xlu0 %v1386, 8
      %v1636 = vpop.permute.xlu0 %1635
      %1637 = vrot.lane.b32.xlu0 %v1275, 8
      %v1638 = vpop.permute.xlu0 %1637
      %1639 = vrot.lane.b32.xlu0 %v1387, 8
      %v1640 = vpop.permute.xlu0 %1639
      %1641 = vrot.lane.b32.xlu0 %v1276, 8
      %v1642 = vpop.permute.xlu0 %1641
      %1643 = vrot.lane.b32.xlu0 %v1388, 8
      %v1644 = vpop.permute.xlu0 %1643
      %1645 = vrot.lane.b32.xlu0 %v1277, 8
      %v1646 = vpop.permute.xlu0 %1645
      %1647 = vrot.lane.b32.xlu0 %v1389, 8
      %v1648 = vpop.permute.xlu0 %1647
      %1649 = vrot.lane.b32.xlu0 %v1278, 8
      %v1650 = vpop.permute.xlu0 %1649
      %1651 = vrot.lane.b32.xlu0 %v1390, 8
      %v1652 = vpop.permute.xlu0 %1651
      %1653 = vrot.lane.b32.xlu0 %v1279, 8
      %v1654 = vpop.permute.xlu0 %1653
      %1655 = vrot.lane.b32.xlu0 %v1391, 8
      %v1656 = vpop.permute.xlu0 %1655
      %1657 = vrot.lane.b32.xlu0 %v1280, 8
      %v1658 = vpop.permute.xlu0 %1657
      %1659 = vrot.lane.b32.xlu0 %v1392, 8
      %v1660 = vpop.permute.xlu0 %1659
      %1661 = vrot.lane.b32.xlu0 %v1281, 8
      %v1662 = vpop.permute.xlu0 %1661
      %1663 = vrot.lane.b32.xlu0 %v1393, 8
      %v1664 = vpop.permute.xlu0 %1663
      %1665 = vrot.lane.b32.xlu0 %v1282, 8
      %v1666 = vpop.permute.xlu0 %1665
      %1667 = vrot.lane.b32.xlu0 %v1394, 8
      %v1668 = vpop.permute.xlu0 %1667
      %1669 = vrot.lane.b32.xlu0 %v1283, 8
      %v1670 = vpop.permute.xlu0 %1669
      %1671 = vrot.lane.b32.xlu0 %v1395, 8
      %v1672 = vpop.permute.xlu0 %1671
      %1673 = vrot.lane.b32.xlu0 %v1284, 8
      %v1674 = vpop.permute.xlu0 %1673
      %1675 = vrot.lane.b32.xlu0 %v1396, 8
      %v1676 = vpop.permute.xlu0 %1675
      %1724 = vrot.lane.b32.xlu0 %v1525, 16
      %v1725 = vpop.permute.xlu0 %1724
      %1726 = vrot.lane.b32.xlu0 %v1587, 16
      %v1727 = vpop.permute.xlu0 %1726
      %1728 = vrot.lane.b32.xlu0 %v1528, 16
      %v1729 = vpop.permute.xlu0 %1728
      %1730 = vrot.lane.b32.xlu0 %v1588, 16
      %v1731 = vpop.permute.xlu0 %1730
      %1732 = vrot.lane.b32.xlu0 %v1531, 16
      %v1733 = vpop.permute.xlu0 %1732
      %1734 = vrot.lane.b32.xlu0 %v1589, 16
      %v1735 = vpop.permute.xlu0 %1734
      %1736 = vrot.lane.b32.xlu0 %v1534, 16
      %v1737 = vpop.permute.xlu0 %1736
      %1738 = vrot.lane.b32.xlu0 %v1590, 16
      %v1739 = vpop.permute.xlu0 %1738
      %1740 = vrot.lane.b32.xlu0 %v1537, 16
      %v1741 = vpop.permute.xlu0 %1740
      %1742 = vrot.lane.b32.xlu0 %v1591, 16
      %v1743 = vpop.permute.xlu0 %1742
      %1744 = vrot.lane.b32.xlu0 %v1540, 16
      %v1745 = vpop.permute.xlu0 %1744
      %1746 = vrot.lane.b32.xlu0 %v1592, 16
      %v1747 = vpop.permute.xlu0 %1746
      %1748 = vrot.lane.b32.xlu0 %v1543, 16
      %v1749 = vpop.permute.xlu0 %1748
      %1750 = vrot.lane.b32.xlu0 %v1593, 16
      %v1751 = vpop.permute.xlu0 %1750
      %1752 = vrot.lane.b32.xlu0 %v1546, 16
      %v1753 = vpop.permute.xlu0 %1752
      %1754 = vrot.lane.b32.xlu0 %v1594, 16
      %v1755 = vpop.permute.xlu0 %1754
      %1756 = vrot.lane.b32.xlu0 %v1549, 16
      %v1757 = vpop.permute.xlu0 %1756
      %1758 = vrot.lane.b32.xlu0 %v1595, 16
      %v1759 = vpop.permute.xlu0 %1758
      %1760 = vrot.lane.b32.xlu0 %v1552, 16
      %v1761 = vpop.permute.xlu0 %1760
      %1762 = vrot.lane.b32.xlu0 %v1596, 16
      %v1763 = vpop.permute.xlu0 %1762
      %1764 = vrot.lane.b32.xlu0 %v1555, 16
      %v1765 = vpop.permute.xlu0 %1764
      %1766 = vrot.lane.b32.xlu0 %v1597, 16
      %v1767 = vpop.permute.xlu0 %1766
      %1768 = vrot.lane.b32.xlu0 %v1558, 16
      %v1769 = vpop.permute.xlu0 %1768
      %1770 = vrot.lane.b32.xlu0 %v1598, 16
      %v1771 = vpop.permute.xlu0 %1770
      %1772 = vrot.lane.b32.xlu0 %v1561, 16
      %v1773 = vpop.permute.xlu0 %1772
      %1774 = vrot.lane.b32.xlu0 %v1599, 16
      %v1775 = vpop.permute.xlu0 %1774
      %1776 = vrot.lane.b32.xlu0 %v1564, 16
      %v1777 = vpop.permute.xlu0 %1776
      %1778 = vrot.lane.b32.xlu0 %v1600, 16
      %v1779 = vpop.permute.xlu0 %1778
      %1780 = vrot.lane.b32.xlu0 %v1567, 16
      %v1781 = vpop.permute.xlu0 %1780
      %1782 = vrot.lane.b32.xlu0 %v1601, 16
      %v1783 = vpop.permute.xlu0 %1782
      %1784 = vrot.lane.b32.xlu0 %v1570, 16
      %v1785 = vpop.permute.xlu0 %1784
      %1786 = vrot.lane.b32.xlu0 %v1602, 16
      %v1787 = vpop.permute.xlu0 %1786
      %1836 = vrot.lane.b32.xlu0 %v1509, 24
      %v1837 = vpop.permute.xlu0 %1836
      %1838 = vrot.lane.b32.xlu0 %v1433, 24
      %v1839 = vpop.permute.xlu0 %1838
      %1840 = vrot.lane.b32.xlu0 %v1510, 24
      %v1841 = vpop.permute.xlu0 %1840
      %1842 = vrot.lane.b32.xlu0 %v1436, 24
      %v1843 = vpop.permute.xlu0 %1842
      %1844 = vrot.lane.b32.xlu0 %v1511, 24
      %v1845 = vpop.permute.xlu0 %1844
      %1846 = vrot.lane.b32.xlu0 %v1439, 24
      %v1847 = vpop.permute.xlu0 %1846
      %1848 = vrot.lane.b32.xlu0 %v1512, 24
      %v1849 = vpop.permute.xlu0 %1848
      %1850 = vrot.lane.b32.xlu0 %v1442, 24
      %v1851 = vpop.permute.xlu0 %1850
      %1852 = vrot.lane.b32.xlu0 %v1513, 24
      %v1853 = vpop.permute.xlu0 %1852
      %1854 = vrot.lane.b32.xlu0 %v1445, 24
      %v1855 = vpop.permute.xlu0 %1854
      %1856 = vrot.lane.b32.xlu0 %v1514, 24
      %v1857 = vpop.permute.xlu0 %1856
      %1858 = vrot.lane.b32.xlu0 %v1448, 24
      %v1859 = vpop.permute.xlu0 %1858
      %1860 = vrot.lane.b32.xlu0 %v1515, 24
      %v1861 = vpop.permute.xlu0 %1860
      %1862 = vrot.lane.b32.xlu0 %v1451, 24
      %v1863 = vpop.permute.xlu0 %1862
      %1864 = vrot.lane.b32.xlu0 %v1516, 24
      %v1865 = vpop.permute.xlu0 %1864
      %1866 = vrot.lane.b32.xlu0 %v1454, 24
      %v1867 = vpop.permute.xlu0 %1866
      %1868 = vrot.lane.b32.xlu0 %v1517, 24
      %v1869 = vpop.permute.xlu0 %1868
      %1870 = vrot.lane.b32.xlu0 %v1457, 24
      %v1871 = vpop.permute.xlu0 %1870
      %1872 = vrot.lane.b32.xlu0 %v1518, 24
      %v1873 = vpop.permute.xlu0 %1872
      %1874 = vrot.lane.b32.xlu0 %v1460, 24
      %v1875 = vpop.permute.xlu0 %1874
      %1876 = vrot.lane.b32.xlu0 %v1519, 24
      %v1877 = vpop.permute.xlu0 %1876
      %1878 = vrot.lane.b32.xlu0 %v1463, 24
      %v1879 = vpop.permute.xlu0 %1878
      %1880 = vrot.lane.b32.xlu0 %v1520, 24
      %v1881 = vpop.permute.xlu0 %1880
      %1882 = vrot.lane.b32.xlu0 %v1466, 24
      %v1883 = vpop.permute.xlu0 %1882
      %1884 = vrot.lane.b32.xlu0 %v1521, 24
      %v1885 = vpop.permute.xlu0 %1884
      %1886 = vrot.lane.b32.xlu0 %v1469, 24
      %v1887 = vpop.permute.xlu0 %1886
      %1888 = vrot.lane.b32.xlu0 %v1522, 24
      %v1889 = vpop.permute.xlu0 %1888
      %1890 = vrot.lane.b32.xlu0 %v1472, 24
      %v1891 = vpop.permute.xlu0 %1890
      %1892 = vrot.lane.b32.xlu0 %v1523, 24
      %v1893 = vpop.permute.xlu0 %1892
      %1894 = vrot.lane.b32.xlu0 %v1475, 24
      %v1895 = vpop.permute.xlu0 %1894
      %1896 = vrot.lane.b32.xlu0 %v1609, 24
      %v1897 = vpop.permute.xlu0 %1896
      %1898 = vrot.lane.b32.xlu0 %v1607, 24
      %v1899 = vpop.permute.xlu0 %1898
      %1932 = vrot.lane.b32.xlu0 %v1270, 32
      %v1933 = vpop.permute.xlu0 %1932
      %1934 = vrot.lane.b32.xlu0 %v1382, 32
      %v1935 = vpop.permute.xlu0 %1934
      %1936 = vrot.lane.b32.xlu0 %v1271, 32
      %v1937 = vpop.permute.xlu0 %1936
      %1938 = vrot.lane.b32.xlu0 %v1383, 32
      %v1939 = vpop.permute.xlu0 %1938
      %1940 = vrot.lane.b32.xlu0 %v1272, 32
      %v1941 = vpop.permute.xlu0 %1940
      %1942 = vrot.lane.b32.xlu0 %v1384, 32
      %v1943 = vpop.permute.xlu0 %1942
      %1944 = vrot.lane.b32.xlu0 %v1273, 32
      %v1945 = vpop.permute.xlu0 %1944
      %1946 = vrot.lane.b32.xlu0 %v1385, 32
      %v1947 = vpop.permute.xlu0 %1946
      %1948 = vrot.lane.b32.xlu0 %v1274, 32
      %v1949 = vpop.permute.xlu0 %1948
      %1950 = vrot.lane.b32.xlu0 %v1386, 32
      %v1951 = vpop.permute.xlu0 %1950
      %1952 = vrot.lane.b32.xlu0 %v1275, 32
      %v1953 = vpop.permute.xlu0 %1952
      %1954 = vrot.lane.b32.xlu0 %v1387, 32
      %v1955 = vpop.permute.xlu0 %1954
      %1956 = vrot.lane.b32.xlu0 %v1276, 32
      %v1957 = vpop.permute.xlu0 %1956
      %1958 = vrot.lane.b32.xlu0 %v1388, 32
      %v1959 = vpop.permute.xlu0 %1958
      %1960 = vrot.lane.b32.xlu0 %v1277, 32
      %v1961 = vpop.permute.xlu0 %1960
      %1962 = vrot.lane.b32.xlu0 %v1389, 32
      %v1963 = vpop.permute.xlu0 %1962
      %1964 = vrot.lane.b32.xlu0 %v1278, 32
      %v1965 = vpop.permute.xlu0 %1964
      %1966 = vrot.lane.b32.xlu0 %v1390, 32
      %v1967 = vpop.permute.xlu0 %1966
      %1968 = vrot.lane.b32.xlu0 %v1279, 32
      %v1969 = vpop.permute.xlu0 %1968
      %1970 = vrot.lane.b32.xlu0 %v1391, 32
      %v1971 = vpop.permute.xlu0 %1970
      %1972 = vrot.lane.b32.xlu0 %v1280, 32
      %v1973 = vpop.permute.xlu0 %1972
      %1974 = vrot.lane.b32.xlu0 %v1392, 32
      %v1975 = vpop.permute.xlu0 %1974
      %1976 = vrot.lane.b32.xlu0 %v1281, 32
      %v1977 = vpop.permute.xlu0 %1976
      %1978 = vrot.lane.b32.xlu0 %v1393, 32
      %v1979 = vpop.permute.xlu0 %1978
      %1980 = vrot.lane.b32.xlu0 %v1282, 32
      %v1981 = vpop.permute.xlu0 %1980
      %1982 = vrot.lane.b32.xlu0 %v1394, 32
      %v1983 = vpop.permute.xlu0 %1982
      %1984 = vrot.lane.b32.xlu0 %v1283, 32
      %v1985 = vpop.permute.xlu0 %1984
      %1986 = vrot.lane.b32.xlu0 %v1395, 32
      %v1987 = vpop.permute.xlu0 %1986
      %1988 = vrot.lane.b32.xlu0 %v1284, 32
      %v1989 = vpop.permute.xlu0 %1988
      %1990 = vrot.lane.b32.xlu0 %v1396, 32
      %v1991 = vpop.permute.xlu0 %1990
      %1992 = vrot.lane.b32.xlu0 %v1285, 32
      %v1993 = vpop.permute.xlu0 %1992
      %1994 = vrot.lane.b32.xlu0 %v1397, 32
      %v1995 = vpop.permute.xlu0 %1994
      %2029 = vrot.lane.b32.xlu0 %v1528, 40
      %v2030 = vpop.permute.xlu0 %2029
      %2031 = vrot.lane.b32.xlu0 %v1588, 40
      %v2032 = vpop.permute.xlu0 %2031
      %2033 = vrot.lane.b32.xlu0 %v1531, 40
      %v2034 = vpop.permute.xlu0 %2033
      %2035 = vrot.lane.b32.xlu0 %v1589, 40
      %v2036 = vpop.permute.xlu0 %2035
      %2037 = vrot.lane.b32.xlu0 %v1534, 40
      %v2038 = vpop.permute.xlu0 %2037
      %2039 = vrot.lane.b32.xlu0 %v1590, 40
      %v2040 = vpop.permute.xlu0 %2039
      %2041 = vrot.lane.b32.xlu0 %v1537, 40
      %v2042 = vpop.permute.xlu0 %2041
      %2043 = vrot.lane.b32.xlu0 %v1591, 40
      %v2044 = vpop.permute.xlu0 %2043
      %2045 = vrot.lane.b32.xlu0 %v1540, 40
      %v2046 = vpop.permute.xlu0 %2045
      %2047 = vrot.lane.b32.xlu0 %v1592, 40
      %v2048 = vpop.permute.xlu0 %2047
      %2049 = vrot.lane.b32.xlu0 %v1543, 40
      %v2050 = vpop.permute.xlu0 %2049
      %2051 = vrot.lane.b32.xlu0 %v1593, 40
      %v2052 = vpop.permute.xlu0 %2051
      %2053 = vrot.lane.b32.xlu0 %v1546, 40
      %v2054 = vpop.permute.xlu0 %2053
      %2055 = vrot.lane.b32.xlu0 %v1594, 40
      %v2056 = vpop.permute.xlu0 %2055
      %2057 = vrot.lane.b32.xlu0 %v1549, 40
      %v2058 = vpop.permute.xlu0 %2057
      %2059 = vrot.lane.b32.xlu0 %v1595, 40
      %v2060 = vpop.permute.xlu0 %2059
      %2061 = vrot.lane.b32.xlu0 %v1552, 40
      %v2062 = vpop.permute.xlu0 %2061
      %2063 = vrot.lane.b32.xlu0 %v1596, 40
      %v2064 = vpop.permute.xlu0 %2063
      %2065 = vrot.lane.b32.xlu0 %v1555, 40
      %v2066 = vpop.permute.xlu0 %2065
      %2067 = vrot.lane.b32.xlu0 %v1597, 40
      %v2068 = vpop.permute.xlu0 %2067
      %2069 = vrot.lane.b32.xlu0 %v1558, 40
      %v2070 = vpop.permute.xlu0 %2069
      %2071 = vrot.lane.b32.xlu0 %v1598, 40
      %v2072 = vpop.permute.xlu0 %2071
      %2073 = vrot.lane.b32.xlu0 %v1561, 40
      %v2074 = vpop.permute.xlu0 %2073
      %2075 = vrot.lane.b32.xlu0 %v1599, 40
      %v2076 = vpop.permute.xlu0 %2075
      %2077 = vrot.lane.b32.xlu0 %v1564, 40
      %v2078 = vpop.permute.xlu0 %2077
      %2079 = vrot.lane.b32.xlu0 %v1600, 40
      %v2080 = vpop.permute.xlu0 %2079
      %2081 = vrot.lane.b32.xlu0 %v1567, 40
      %v2082 = vpop.permute.xlu0 %2081
      %2083 = vrot.lane.b32.xlu0 %v1601, 40
      %v2084 = vpop.permute.xlu0 %2083
      %2085 = vrot.lane.b32.xlu0 %v1570, 40
      %v2086 = vpop.permute.xlu0 %2085
      %2087 = vrot.lane.b32.xlu0 %v1602, 40
      %v2088 = vpop.permute.xlu0 %2087
      %2089 = vrot.lane.b32.xlu0 %v1612, 40
      %v2090 = vpop.permute.xlu0 %2089
      %2091 = vrot.lane.b32.xlu0 %v1614, 40
      %v2092 = vpop.permute.xlu0 %2091
      %2126 = vrot.lane.b32.xlu0 %v1510, 48
      %v2127 = vpop.permute.xlu0 %2126
      %2128 = vrot.lane.b32.xlu0 %v1436, 48
      %v2129 = vpop.permute.xlu0 %2128
      %2130 = vrot.lane.b32.xlu0 %v1511, 48
      %v2131 = vpop.permute.xlu0 %2130
      %2132 = vrot.lane.b32.xlu0 %v1439, 48
      %v2133 = vpop.permute.xlu0 %2132
      %2134 = vrot.lane.b32.xlu0 %v1512, 48
      %v2135 = vpop.permute.xlu0 %2134
      %2136 = vrot.lane.b32.xlu0 %v1442, 48
      %v2137 = vpop.permute.xlu0 %2136
      %2138 = vrot.lane.b32.xlu0 %v1513, 48
      %v2139 = vpop.permute.xlu0 %2138
      %2140 = vrot.lane.b32.xlu0 %v1445, 48
      %v2141 = vpop.permute.xlu0 %2140
      %2142 = vrot.lane.b32.xlu0 %v1514, 48
      %v2143 = vpop.permute.xlu0 %2142
      %2144 = vrot.lane.b32.xlu0 %v1448, 48
      %v2145 = vpop.permute.xlu0 %2144
      %2146 = vrot.lane.b32.xlu0 %v1515, 48
      %v2147 = vpop.permute.xlu0 %2146
      %2148 = vrot.lane.b32.xlu0 %v1451, 48
      %v2149 = vpop.permute.xlu0 %2148
      %2150 = vrot.lane.b32.xlu0 %v1516, 48
      %v2151 = vpop.permute.xlu0 %2150
      %2152 = vrot.lane.b32.xlu0 %v1454, 48
      %v2153 = vpop.permute.xlu0 %2152
      %2154 = vrot.lane.b32.xlu0 %v1517, 48
      %v2155 = vpop.permute.xlu0 %2154
      %2156 = vrot.lane.b32.xlu0 %v1457, 48
      %v2157 = vpop.permute.xlu0 %2156
      %2158 = vrot.lane.b32.xlu0 %v1518, 48
      %v2159 = vpop.permute.xlu0 %2158
      %2160 = vrot.lane.b32.xlu0 %v1460, 48
      %v2161 = vpop.permute.xlu0 %2160
      %2162 = vrot.lane.b32.xlu0 %v1519, 48
      %v2163 = vpop.permute.xlu0 %2162
      %2164 = vrot.lane.b32.xlu0 %v1463, 48
      %v2165 = vpop.permute.xlu0 %2164
      %2166 = vrot.lane.b32.xlu0 %v1520, 48
      %v2167 = vpop.permute.xlu0 %2166
      %2168 = vrot.lane.b32.xlu0 %v1466, 48
      %v2169 = vpop.permute.xlu0 %2168
      %2170 = vrot.lane.b32.xlu0 %v1521, 48
      %v2171 = vpop.permute.xlu0 %2170
      %2172 = vrot.lane.b32.xlu0 %v1469, 48
      %v2173 = vpop.permute.xlu0 %2172
      %2174 = vrot.lane.b32.xlu0 %v1522, 48
      %v2175 = vpop.permute.xlu0 %2174
      %2176 = vrot.lane.b32.xlu0 %v1472, 48
      %v2177 = vpop.permute.xlu0 %2176
      %2178 = vrot.lane.b32.xlu0 %v1523, 48
      %v2179 = vpop.permute.xlu0 %2178
      %2180 = vrot.lane.b32.xlu0 %v1475, 48
      %v2181 = vpop.permute.xlu0 %2180
      %2182 = vrot.lane.b32.xlu0 %v1609, 48
      %v2183 = vpop.permute.xlu0 %2182
      %2184 = vrot.lane.b32.xlu0 %v1607, 48
      %v2185 = vpop.permute.xlu0 %2184
      %2186 = vrot.lane.b32.xlu0 %v1508, 48
      %v2187 = vpop.permute.xlu0 %2186
      %2188 = vrot.lane.b32.xlu0 %v1430, 48
      %v2189 = vpop.permute.xlu0 %2188
      %2222 = vrot.lane.b32.xlu0 %v1271, 56
      %v2223 = vpop.permute.xlu0 %2222
      %2224 = vrot.lane.b32.xlu0 %v1383, 56
      %v2225 = vpop.permute.xlu0 %2224
      %2226 = vrot.lane.b32.xlu0 %v1272, 56
      %v2227 = vpop.permute.xlu0 %2226
      %2228 = vrot.lane.b32.xlu0 %v1384, 56
      %v2229 = vpop.permute.xlu0 %2228
      %2230 = vrot.lane.b32.xlu0 %v1273, 56
      %v2231 = vpop.permute.xlu0 %2230
      %2232 = vrot.lane.b32.xlu0 %v1385, 56
      %v2233 = vpop.permute.xlu0 %2232
      %2234 = vrot.lane.b32.xlu0 %v1274, 56
      %v2235 = vpop.permute.xlu0 %2234
      %2236 = vrot.lane.b32.xlu0 %v1386, 56
      %v2237 = vpop.permute.xlu0 %2236
      %2238 = vrot.lane.b32.xlu0 %v1275, 56
      %v2239 = vpop.permute.xlu0 %2238
      %2240 = vrot.lane.b32.xlu0 %v1387, 56
      %v2241 = vpop.permute.xlu0 %2240
      %2242 = vrot.lane.b32.xlu0 %v1276, 56
      %v2243 = vpop.permute.xlu0 %2242
      %2244 = vrot.lane.b32.xlu0 %v1388, 56
      %v2245 = vpop.permute.xlu0 %2244
      %2246 = vrot.lane.b32.xlu0 %v1277, 56
      %v2247 = vpop.permute.xlu0 %2246
      %2248 = vrot.lane.b32.xlu0 %v1389, 56
      %v2249 = vpop.permute.xlu0 %2248
      %2250 = vrot.lane.b32.xlu0 %v1278, 56
      %v2251 = vpop.permute.xlu0 %2250
      %2252 = vrot.lane.b32.xlu0 %v1390, 56
      %v2253 = vpop.permute.xlu0 %2252
      %2254 = vrot.lane.b32.xlu0 %v1279, 56
      %v2255 = vpop.permute.xlu0 %2254
      %2256 = vrot.lane.b32.xlu0 %v1391, 56
      %v2257 = vpop.permute.xlu0 %2256
      %2258 = vrot.lane.b32.xlu0 %v1280, 56
      %v2259 = vpop.permute.xlu0 %2258
      %2260 = vrot.lane.b32.xlu0 %v1392, 56
      %v2261 = vpop.permute.xlu0 %2260
      %2262 = vrot.lane.b32.xlu0 %v1281, 56
      %v2263 = vpop.permute.xlu0 %2262
      %2264 = vrot.lane.b32.xlu0 %v1393, 56
      %v2265 = vpop.permute.xlu0 %2264
      %2266 = vrot.lane.b32.xlu0 %v1282, 56
      %v2267 = vpop.permute.xlu0 %2266
      %2268 = vrot.lane.b32.xlu0 %v1394, 56
      %v2269 = vpop.permute.xlu0 %2268
      %2270 = vrot.lane.b32.xlu0 %v1283, 56
      %v2271 = vpop.permute.xlu0 %2270
      %2272 = vrot.lane.b32.xlu0 %v1395, 56
      %v2273 = vpop.permute.xlu0 %2272
      %2274 = vrot.lane.b32.xlu0 %v1284, 56
      %v2275 = vpop.permute.xlu0 %2274
      %2276 = vrot.lane.b32.xlu0 %v1396, 56
      %v2277 = vpop.permute.xlu0 %2276
      %2278 = vrot.lane.b32.xlu0 %v1285, 56
      %v2279 = vpop.permute.xlu0 %2278
      %2280 = vrot.lane.b32.xlu0 %v1397, 56
      %v2281 = vpop.permute.xlu0 %2280
      %2282 = vrot.lane.b32.xlu0 0.0, 56
      %v2283 = vpop.permute.xlu0 %2282
      %2315 = vrot.lane.b32.xlu0 %v1531, 64
      %v2316 = vpop.permute.xlu0 %2315
      %2317 = vrot.lane.b32.xlu0 %v1589, 64
      %v2318 = vpop.permute.xlu0 %2317
      %2319 = vrot.lane.b32.xlu0 %v1534, 64
      %v2320 = vpop.permute.xlu0 %2319
      %2321 = vrot.lane.b32.xlu0 %v1590, 64
      %v2322 = vpop.permute.xlu0 %2321
      %2323 = vrot.lane.b32.xlu0 %v1537, 64
      %v2324 = vpop.permute.xlu0 %2323
      %2325 = vrot.lane.b32.xlu0 %v1591, 64
      %v2326 = vpop.permute.xlu0 %2325
      %2327 = vrot.lane.b32.xlu0 %v1540, 64
      %v2328 = vpop.permute.xlu0 %2327
      %2329 = vrot.lane.b32.xlu0 %v1592, 64
      %v2330 = vpop.permute.xlu0 %2329
      %2331 = vrot.lane.b32.xlu0 %v1543, 64
      %v2332 = vpop.permute.xlu0 %2331
      %2333 = vrot.lane.b32.xlu0 %v1593, 64
      %v2334 = vpop.permute.xlu0 %2333
      %2335 = vrot.lane.b32.xlu0 %v1546, 64
      %v2336 = vpop.permute.xlu0 %2335
      %2337 = vrot.lane.b32.xlu0 %v1594, 64
      %v2338 = vpop.permute.xlu0 %2337
      %2339 = vrot.lane.b32.xlu0 %v1549, 64
      %v2340 = vpop.permute.xlu0 %2339
      %2341 = vrot.lane.b32.xlu0 %v1595, 64
      %v2342 = vpop.permute.xlu0 %2341
      %2343 = vrot.lane.b32.xlu0 %v1552, 64
      %v2344 = vpop.permute.xlu0 %2343
      %2345 = vrot.lane.b32.xlu0 %v1596, 64
      %v2346 = vpop.permute.xlu0 %2345
      %2347 = vrot.lane.b32.xlu0 %v1555, 64
      %v2348 = vpop.permute.xlu0 %2347
      %2349 = vrot.lane.b32.xlu0 %v1597, 64
      %v2350 = vpop.permute.xlu0 %2349
      %2351 = vrot.lane.b32.xlu0 %v1558, 64
      %v2352 = vpop.permute.xlu0 %2351
      %2353 = vrot.lane.b32.xlu0 %v1598, 64
      %v2354 = vpop.permute.xlu0 %2353
      %2355 = vrot.lane.b32.xlu0 %v1561, 64
      %v2356 = vpop.permute.xlu0 %2355
      %2357 = vrot.lane.b32.xlu0 %v1599, 64
      %v2358 = vpop.permute.xlu0 %2357
      %2359 = vrot.lane.b32.xlu0 %v1564, 64
      %v2360 = vpop.permute.xlu0 %2359
      %2361 = vrot.lane.b32.xlu0 %v1600, 64
      %v2362 = vpop.permute.xlu0 %2361
      %2363 = vrot.lane.b32.xlu0 %v1567, 64
      %v2364 = vpop.permute.xlu0 %2363
      %2365 = vrot.lane.b32.xlu0 %v1601, 64
      %v2366 = vpop.permute.xlu0 %2365
      %2367 = vrot.lane.b32.xlu0 %v1570, 64
      %v2368 = vpop.permute.xlu0 %2367
      %2369 = vrot.lane.b32.xlu0 %v1602, 64
      %v2370 = vpop.permute.xlu0 %2369
      %2371 = vrot.lane.b32.xlu0 %v1612, 64
      %v2372 = vpop.permute.xlu0 %2371
      %2373 = vrot.lane.b32.xlu0 %v1614, 64
      %v2374 = vpop.permute.xlu0 %2373
      %2375 = vrot.lane.b32.xlu0 %v1525, 64
      %v2376 = vpop.permute.xlu0 %2375
      %2377 = vrot.lane.b32.xlu0 %v1587, 64
      %v2378 = vpop.permute.xlu0 %2377
      %vm2411 = vcmask 64512
      %v2412 = vsel %vm2411, %v1508, %v1616
      %v2413 = vsel %vm2411, %v1430, %v1616
      %v2414 = vsel %vm2411, %v1509, %v1618
      %v2415 = vsel %vm2411, %v1433, %v1620
      %v2416 = vsel %vm2411, %v1510, %v1622
      %v2417 = vsel %vm2411, %v1436, %v1624
      %v2418 = vsel %vm2411, %v1511, %v1626
      %v2419 = vsel %vm2411, %v1439, %v1628
      %v2420 = vsel %vm2411, %v1512, %v1630
      %v2421 = vsel %vm2411, %v1442, %v1632
      %v2422 = vsel %vm2411, %v1513, %v1634
      %v2423 = vsel %vm2411, %v1445, %v1636
      %v2424 = vsel %vm2411, %v1514, %v1638
      %v2425 = vsel %vm2411, %v1448, %v1640
      %v2426 = vsel %vm2411, %v1515, %v1642
      %v2427 = vsel %vm2411, %v1451, %v1644
      %v2428 = vsel %vm2411, %v1516, %v1646
      %v2429 = vsel %vm2411, %v1454, %v1648
      %v2430 = vsel %vm2411, %v1517, %v1650
      %v2431 = vsel %vm2411, %v1457, %v1652
      %v2432 = vsel %vm2411, %v1518, %v1654
      %v2433 = vsel %vm2411, %v1460, %v1656
      %v2434 = vsel %vm2411, %v1519, %v1658
      %v2435 = vsel %vm2411, %v1463, %v1660
      %v2436 = vsel %vm2411, %v1520, %v1662
      %v2437 = vsel %vm2411, %v1466, %v1664
      %v2438 = vsel %vm2411, %v1521, %v1666
      %v2439 = vsel %vm2411, %v1469, %v1668
      %v2440 = vsel %vm2411, %v1522, %v1670
      %v2441 = vsel %vm2411, %v1472, %v1672
      %v2442 = vsel %vm2411, %v1523, %v1674
      %v2443 = vsel %vm2411, %v1475, %v1676
      %vm2444 = vcmask 130048
      %v2445 = vsel %vm2444, %v2412, %v1725
      %v2446 = vsel %vm2444, %v2413, %v1727
      %v2447 = vsel %vm2444, %v2414, %v1729
      %v2448 = vsel %vm2444, %v2415, %v1731
      %v2449 = vsel %vm2444, %v2416, %v1733
      %v2450 = vsel %vm2444, %v2417, %v1735
      %v2451 = vsel %vm2444, %v2418, %v1737
      %v2452 = vsel %vm2444, %v2419, %v1739
      %v2453 = vsel %vm2444, %v2420, %v1741
      %v2454 = vsel %vm2444, %v2421, %v1743
      %v2455 = vsel %vm2444, %v2422, %v1745
      %v2456 = vsel %vm2444, %v2423, %v1747
      %v2457 = vsel %vm2444, %v2424, %v1749
      %v2458 = vsel %vm2444, %v2425, %v1751
      %v2459 = vsel %vm2444, %v2426, %v1753
      %v2460 = vsel %vm2444, %v2427, %v1755
      %v2461 = vsel %vm2444, %v2428, %v1757
      %v2462 = vsel %vm2444, %v2429, %v1759
      %v2463 = vsel %vm2444, %v2430, %v1761
      %v2464 = vsel %vm2444, %v2431, %v1763
      %v2465 = vsel %vm2444, %v2432, %v1765
      %v2466 = vsel %vm2444, %v2433, %v1767
      %v2467 = vsel %vm2444, %v2434, %v1769
      %v2468 = vsel %vm2444, %v2435, %v1771
      %v2469 = vsel %vm2444, %v2436, %v1773
      %v2470 = vsel %vm2444, %v2437, %v1775
      %v2471 = vsel %vm2444, %v2438, %v1777
      %v2472 = vsel %vm2444, %v2439, %v1779
      %v2473 = vsel %vm2444, %v2440, %v1781
      %v2474 = vsel %vm2444, %v2441, %v1783
      %v2475 = vsel %vm2444, %v2442, %v1785
      %v2476 = vsel %vm2444, %v2443, %v1787
      %vm2477 = vcmask 195584
      %v2478 = vsel %vm2477, %v2445, %v1837
      %v2479 = vsel %vm2477, %v2446, %v1839
      %v2480 = vsel %vm2477, %v2447, %v1841
      %v2481 = vsel %vm2477, %v2448, %v1843
      %v2482 = vsel %vm2477, %v2449, %v1845
      %v2483 = vsel %vm2477, %v2450, %v1847
      %v2484 = vsel %vm2477, %v2451, %v1849
      %v2485 = vsel %vm2477, %v2452, %v1851
      %v2486 = vsel %vm2477, %v2453, %v1853
      %v2487 = vsel %vm2477, %v2454, %v1855
      %v2488 = vsel %vm2477, %v2455, %v1857
      %v2489 = vsel %vm2477, %v2456, %v1859
      %v2490 = vsel %vm2477, %v2457, %v1861
      %v2491 = vsel %vm2477, %v2458, %v1863
      %v2492 = vsel %vm2477, %v2459, %v1865
      %v2493 = vsel %vm2477, %v2460, %v1867
      %v2494 = vsel %vm2477, %v2461, %v1869
      %v2495 = vsel %vm2477, %v2462, %v1871
      %v2496 = vsel %vm2477, %v2463, %v1873
      %v2497 = vsel %vm2477, %v2464, %v1875
      %v2498 = vsel %vm2477, %v2465, %v1877
      %v2499 = vsel %vm2477, %v2466, %v1879
      %v2500 = vsel %vm2477, %v2467, %v1881
      %v2501 = vsel %vm2477, %v2468, %v1883
      %v2502 = vsel %vm2477, %v2469, %v1885
      %v2503 = vsel %vm2477, %v2470, %v1887
      %v2504 = vsel %vm2477, %v2471, %v1889
      %v2505 = vsel %vm2477, %v2472, %v1891
      %v2506 = vsel %vm2477, %v2473, %v1893
      %v2507 = vsel %vm2477, %v2474, %v1895
      %v2508 = vsel %vm2477, %v2475, %v1897
      %v2509 = vsel %vm2477, %v2476, %v1899
      %vm2510 = vcmask 261120
      %v2511 = vsel %vm2510, %v2478, %v1933
      %v2512 = vsel %vm2510, %v2479, %v1935
      %v2513 = vsel %vm2510, %v2480, %v1937
      %v2514 = vsel %vm2510, %v2481, %v1939
      %v2515 = vsel %vm2510, %v2482, %v1941
      %v2516 = vsel %vm2510, %v2483, %v1943
      %v2517 = vsel %vm2510, %v2484, %v1945
      %v2518 = vsel %vm2510, %v2485, %v1947
      %v2519 = vsel %vm2510, %v2486, %v1949
      %v2520 = vsel %vm2510, %v2487, %v1951
      %v2521 = vsel %vm2510, %v2488, %v1953
      %v2522 = vsel %vm2510, %v2489, %v1955
      %v2523 = vsel %vm2510, %v2490, %v1957
      %v2524 = vsel %vm2510, %v2491, %v1959
      %v2525 = vsel %vm2510, %v2492, %v1961
      %v2526 = vsel %vm2510, %v2493, %v1963
      %v2527 = vsel %vm2510, %v2494, %v1965
      %v2528 = vsel %vm2510, %v2495, %v1967
      %v2529 = vsel %vm2510, %v2496, %v1969
      %v2530 = vsel %vm2510, %v2497, %v1971
      %v2531 = vsel %vm2510, %v2498, %v1973
      %v2532 = vsel %vm2510, %v2499, %v1975
      %v2533 = vsel %vm2510, %v2500, %v1977
      %v2534 = vsel %vm2510, %v2501, %v1979
      %v2535 = vsel %vm2510, %v2502, %v1981
      %v2536 = vsel %vm2510, %v2503, %v1983
      %v2537 = vsel %vm2510, %v2504, %v1985
      %v2538 = vsel %vm2510, %v2505, %v1987
      %v2539 = vsel %vm2510, %v2506, %v1989
      %v2540 = vsel %vm2510, %v2507, %v1991
      %v2541 = vsel %vm2510, %v2508, %v1993
      %v2542 = vsel %vm2510, %v2509, %v1995
      %vm2543 = vcmask 326656
      %v2544 = vsel %vm2543, %v2511, %v2030
      %v2545 = vsel %vm2543, %v2512, %v2032
      %v2546 = vsel %vm2543, %v2513, %v2034
      %v2547 = vsel %vm2543, %v2514, %v2036
      %v2548 = vsel %vm2543, %v2515, %v2038
      %v2549 = vsel %vm2543, %v2516, %v2040
      %v2550 = vsel %vm2543, %v2517, %v2042
      %v2551 = vsel %vm2543, %v2518, %v2044
      %v2552 = vsel %vm2543, %v2519, %v2046
      %v2553 = vsel %vm2543, %v2520, %v2048
      %v2554 = vsel %vm2543, %v2521, %v2050
      %v2555 = vsel %vm2543, %v2522, %v2052
      %v2556 = vsel %vm2543, %v2523, %v2054
      %v2557 = vsel %vm2543, %v2524, %v2056
      %v2558 = vsel %vm2543, %v2525, %v2058
      %v2559 = vsel %vm2543, %v2526, %v2060
      %v2560 = vsel %vm2543, %v2527, %v2062
      %v2561 = vsel %vm2543, %v2528, %v2064
      %v2562 = vsel %vm2543, %v2529, %v2066
      %v2563 = vsel %vm2543, %v2530, %v2068
      %v2564 = vsel %vm2543, %v2531, %v2070
      %v2565 = vsel %vm2543, %v2532, %v2072
      %v2566 = vsel %vm2543, %v2533, %v2074
      %v2567 = vsel %vm2543, %v2534, %v2076
      %v2568 = vsel %vm2543, %v2535, %v2078
      %v2569 = vsel %vm2543, %v2536, %v2080
      %v2570 = vsel %vm2543, %v2537, %v2082
      %v2571 = vsel %vm2543, %v2538, %v2084
      %v2572 = vsel %vm2543, %v2539, %v2086
      %v2573 = vsel %vm2543, %v2540, %v2088
      %v2574 = vsel %vm2543, %v2541, %v2090
      %v2575 = vsel %vm2543, %v2542, %v2092
      %vm2576 = vcmask 392192
      %v2577 = vsel %vm2576, %v2544, %v2127
      %v2578 = vsel %vm2576, %v2545, %v2129
      %v2579 = vsel %vm2576, %v2546, %v2131
      %v2580 = vsel %vm2576, %v2547, %v2133
      %v2581 = vsel %vm2576, %v2548, %v2135
      %v2582 = vsel %vm2576, %v2549, %v2137
      %v2583 = vsel %vm2576, %v2550, %v2139
      %v2584 = vsel %vm2576, %v2551, %v2141
      %v2585 = vsel %vm2576, %v2552, %v2143
      %v2586 = vsel %vm2576, %v2553, %v2145
      %v2587 = vsel %vm2576, %v2554, %v2147
      %v2588 = vsel %vm2576, %v2555, %v2149
      %v2589 = vsel %vm2576, %v2556, %v2151
      %v2590 = vsel %vm2576, %v2557, %v2153
      %v2591 = vsel %vm2576, %v2558, %v2155
      %v2592 = vsel %vm2576, %v2559, %v2157
      %v2593 = vsel %vm2576, %v2560, %v2159
      %v2594 = vsel %vm2576, %v2561, %v2161
      %v2595 = vsel %vm2576, %v2562, %v2163
      %v2596 = vsel %vm2576, %v2563, %v2165
      %v2597 = vsel %vm2576, %v2564, %v2167
      %v2598 = vsel %vm2576, %v2565, %v2169
      %v2599 = vsel %vm2576, %v2566, %v2171
      %v2600 = vsel %vm2576, %v2567, %v2173
      %v2601 = vsel %vm2576, %v2568, %v2175
      %v2602 = vsel %vm2576, %v2569, %v2177
      %v2603 = vsel %vm2576, %v2570, %v2179
      %v2604 = vsel %vm2576, %v2571, %v2181
      %v2605 = vsel %vm2576, %v2572, %v2183
      %v2606 = vsel %vm2576, %v2573, %v2185
      %v2607 = vsel %vm2576, %v2574, %v2187
      %v2608 = vsel %vm2576, %v2575, %v2189
      %vm2609 = vcmask 457728
      %v2610 = vsel %vm2609, %v2577, %v2223
      %v2611 = vsel %vm2609, %v2578, %v2225
      %v2612 = vsel %vm2609, %v2579, %v2227
      %v2613 = vsel %vm2609, %v2580, %v2229
      %v2614 = vsel %vm2609, %v2581, %v2231
      %v2615 = vsel %vm2609, %v2582, %v2233
      %v2616 = vsel %vm2609, %v2583, %v2235
      %v2617 = vsel %vm2609, %v2584, %v2237
      %v2618 = vsel %vm2609, %v2585, %v2239
      %v2619 = vsel %vm2609, %v2586, %v2241
      %v2620 = vsel %vm2609, %v2587, %v2243
      %v2621 = vsel %vm2609, %v2588, %v2245
      %v2622 = vsel %vm2609, %v2589, %v2247
      %v2623 = vsel %vm2609, %v2590, %v2249
      %v2624 = vsel %vm2609, %v2591, %v2251
      %v2625 = vsel %vm2609, %v2592, %v2253
      %v2626 = vsel %vm2609, %v2593, %v2255
      %v2627 = vsel %vm2609, %v2594, %v2257
      %v2628 = vsel %vm2609, %v2595, %v2259
      %v2629 = vsel %vm2609, %v2596, %v2261
      %v2630 = vsel %vm2609, %v2597, %v2263
      %v2631 = vsel %vm2609, %v2598, %v2265
      %v2632 = vsel %vm2609, %v2599, %v2267
      %v2633 = vsel %vm2609, %v2600, %v2269
      %v2634 = vsel %vm2609, %v2601, %v2271
      %v2635 = vsel %vm2609, %v2602, %v2273
      %v2636 = vsel %vm2609, %v2603, %v2275
      %v2637 = vsel %vm2609, %v2604, %v2277
      %v2638 = vsel %vm2609, %v2605, %v2279
      %v2639 = vsel %vm2609, %v2606, %v2281
      %v2640 = vsel %vm2609, %v2607, %v2283
      %v2641 = vsel %vm2609, %v2608, %v2283
      %vm2642 = vcmask 523264
      %v2643 = vsel %vm2642, %v2610, %v2316
      %v2644 = vsel %vm2642, %v2611, %v2318
      %v2645 = vsel %vm2642, %v2612, %v2320
      %v2646 = vsel %vm2642, %v2613, %v2322
      %v2647 = vsel %vm2642, %v2614, %v2324
      %v2648 = vsel %vm2642, %v2615, %v2326
      %v2649 = vsel %vm2642, %v2616, %v2328
      %v2650 = vsel %vm2642, %v2617, %v2330
      %v2651 = vsel %vm2642, %v2618, %v2332
      %v2652 = vsel %vm2642, %v2619, %v2334
      %v2653 = vsel %vm2642, %v2620, %v2336
      %v2654 = vsel %vm2642, %v2621, %v2338
      %v2655 = vsel %vm2642, %v2622, %v2340
      %v2656 = vsel %vm2642, %v2623, %v2342
      %v2657 = vsel %vm2642, %v2624, %v2344
      %v2658 = vsel %vm2642, %v2625, %v2346
      %v2659 = vsel %vm2642, %v2626, %v2348
      %v2660 = vsel %vm2642, %v2627, %v2350
      %v2661 = vsel %vm2642, %v2628, %v2352
      %v2662 = vsel %vm2642, %v2629, %v2354
      %v2663 = vsel %vm2642, %v2630, %v2356
      %v2664 = vsel %vm2642, %v2631, %v2358
      %v2665 = vsel %vm2642, %v2632, %v2360
      %v2666 = vsel %vm2642, %v2633, %v2362
      %v2667 = vsel %vm2642, %v2634, %v2364
      %v2668 = vsel %vm2642, %v2635, %v2366
      %v2669 = vsel %vm2642, %v2636, %v2368
      %v2670 = vsel %vm2642, %v2637, %v2370
      %v2671 = vsel %vm2642, %v2638, %v2372
      %v2672 = vsel %vm2642, %v2639, %v2374
      %v2673 = vsel %vm2642, %v2640, %v2376
      %v2674 = vsel %vm2642, %v2641, %v2378
      %v2675 = vld [vmem:[%s3] sm:$0xff]
      %v2676 = vld [vmem:[%s3 + $0x8] sm:$0xff]
      %v2677 = vld [vmem:[%s3 + $0x10] sm:$0xff]
      %v2678 = vld [vmem:[%s3 + $0x18] sm:$0xff]
      %v2679 = vld [vmem:[%s3 + $0x20] sm:$0xff]
      %v2680 = vld [vmem:[%s3 + $0x28] sm:$0xff]
      %v2681 = vld [vmem:[%s3 + $0x30] sm:$0xff]
      %v2682 = vld [vmem:[%s3 + $0x38] sm:$0xff]
      %v2683 = vld [vmem:[%s3 + $0x40] sm:$0xff]
      %vm2684 = vcmask 588800
      %v2686 = vsel %vm2684, %v2643, 0
      %v2689 = vsel %vm2684, %v2644, 0
      %v2692 = vsel %vm2684, %v2645, 0
      %v2695 = vsel %vm2684, %v2646, 0
      %v2698 = vsel %vm2684, %v2647, 0
      %v2701 = vsel %vm2684, %v2648, 0
      %v2704 = vsel %vm2684, %v2649, 0
      %v2707 = vsel %vm2684, %v2650, 0
      %v2710 = vsel %vm2684, %v2651, 0
      %v2713 = vsel %vm2684, %v2652, 0
      %v2716 = vsel %vm2684, %v2653, 0
      %v2719 = vsel %vm2684, %v2654, 0
      %v2722 = vsel %vm2684, %v2655, 0
      %v2725 = vsel %vm2684, %v2656, 0
      %v2728 = vsel %vm2684, %v2657, 0
      %v2731 = vsel %vm2684, %v2658, 0
      %v2734 = vsel %vm2684, %v2659, 0
      %v2737 = vsel %vm2684, %v2660, 0
      %v2740 = vsel %vm2684, %v2661, 0
      %v2743 = vsel %vm2684, %v2662, 0
      %v2746 = vsel %vm2684, %v2663, 0
      %v2749 = vsel %vm2684, %v2664, 0
      %v2752 = vsel %vm2684, %v2665, 0
      %v2755 = vsel %vm2684, %v2666, 0
      %v2758 = vsel %vm2684, %v2667, 0
      %v2761 = vsel %vm2684, %v2668, 0
      %v2764 = vsel %vm2684, %v2669, 0
      %v2767 = vsel %vm2684, %v2670, 0
      %v2770 = vsel %vm2684, %v2671, 0
      %v2773 = vsel %vm2684, %v2672, 0
      %v2776 = vsel %vm2684, %v2673, 0
      %v2779 = vsel %vm2684, %v2674, 0
      %2781 = vmatprep.subr.mxu0 0.0
      %2782 = vmatpush1.msra.mxu0 0.0
      %2783 = vmatprep.subr.mxu0 0.0
      %2784 = vmatpush1.msra.mxu0 0.0
      %2785 = vmatprep.subr.mxu0 0.0
      %2786 = vmatpush1.msra.mxu0 0.0
      %2787 = vmatprep.subr.mxu0 0.0
      %2788 = vmatpush1.msra.mxu0 0.0
      %2789 = vmatprep.subr.mxu0 0.0
      %2790 = vmatpush1.msra.mxu0 0.0
      %2791 = vmatprep.subr.mxu0 0.0
      %2792 = vmatpush1.msra.mxu0 0.0
      %2793 = vmatprep.subr.mxu0 0.0
      %2794 = vmatpush1.msra.mxu0 0.0
      %2795 = vmatprep.subr.mxu0 0.0
      %2796 = vmatpush1.msra.mxu0 %v2683
      %2797 = vmatprep.subr.mxu0 0.0
      %2798 = vmatpush1.msra.mxu0 %v2682
      %2799 = vmatprep.subr.mxu0 0.0
      %2800 = vmatpush1.msra.mxu0 %v2681
      %2801 = vmatprep.subr.mxu0 0.0
      %2802 = vmatpush1.msra.mxu0 %v2680
      %2803 = vmatprep.subr.mxu0 0.0
      %2804 = vmatpush1.msra.mxu0 %v2679
      %2805 = vmatprep.subr.mxu0 0.0
      %2806 = vmatpush1.msra.mxu0 %v2678
      %2807 = vmatprep.subr.mxu0 0.0
      %2808 = vmatpush1.msra.mxu0 %v2677
      %2809 = vmatprep.subr.mxu0 0.0
      %2810 = vmatpush1.msra.mxu0 %v2676
      %2811 = vmatprep.subr.mxu0 0.0
      %2812 = vmatpush1.msra.mxu0 %v2675
      %2813 = vmatprep.subr.mxu0 0.0
      %2814 = vmatpush2.msra.mxu0 0.0
      %2815 = vmatprep.subr.mxu0 0.0
      %2816 = vmatpush2.msra.mxu0 0.0
      %2817 = vmatprep.subr.mxu0 0.0
      %2818 = vmatpush2.msra.mxu0 0.0
      %2819 = vmatprep.subr.mxu0 0.0
      %2820 = vmatpush2.msra.mxu0 0.0
      %2821 = vmatprep.subr.mxu0 0.0
      %2822 = vmatpush2.msra.mxu0 0.0
      %2823 = vmatprep.subr.mxu0 0.0
      %2824 = vmatpush2.msra.mxu0 0.0
      %2825 = vmatprep.subr.mxu0 0.0
      %2826 = vmatpush2.msra.mxu0 0.0
      %2827 = vmatprep.subr.mxu0 0.0
      %2828 = vmatpush2.msra.mxu0 0.0
      %2829 = vmatprep.subr.mxu0 0.0
      %2830 = vmatpush2.msra.mxu0 0.0
      %2831 = vmatprep.subr.mxu0 0.0
      %2832 = vmatpush2.msra.mxu0 0.0
      %2833 = vmatprep.subr.mxu0 0.0
      %2834 = vmatpush2.msra.mxu0 0.0
      %2835 = vmatprep.subr.mxu0 0.0
      %2836 = vmatpush2.msra.mxu0 0.0
      %2837 = vmatprep.subr.mxu0 0.0
      %2838 = vmatpush2.msra.mxu0 0.0
      %2839 = vmatprep.subr.mxu0 0.0
      %2840 = vmatpush2.msra.mxu0 0.0
      %2841 = vmatprep.subr.mxu0 0.0
      %2842 = vmatpush2.msra.mxu0 0.0
      %2843 = vmatprep.subr.mxu0 0.0
      %2844 = vmatpush2.msra.mxu0 0.0
      %2845 = vmatprep.mubr.f32.mxu0 0.0
      %2846 = vmatmul.mubr.f32.gmra.mxu0 %v2686
      %v2847 = vpop.f32.mrf.mxu0
      %v2848 = vadd.f32 0.0, %v2847
      %v2849 = vpop.f32.mrf.mxu0
      %2850 = vmatprep.mubr.f32.mxu0 0.0
      %2851 = vmatmul.mubr.f32.gmra.mxu0 %v2689
      %v2852 = vpop.f32.mrf.mxu0
      %v2853 = vadd.f32 0.0, %v2852
      %v2854 = vpop.f32.mrf.mxu0
      %2855 = vmatprep.mubr.f32.mxu0 0.0
      %2856 = vmatmul.mubr.f32.gmra.mxu0 %v2692
      %v2857 = vpop.f32.mrf.mxu0
      %v2858 = vadd.f32 0.0, %v2857
      %v2859 = vpop.f32.mrf.mxu0
      %2860 = vmatprep.mubr.f32.mxu0 0.0
      %2861 = vmatmul.mubr.f32.gmra.mxu0 %v2695
      %v2862 = vpop.f32.mrf.mxu0
      %v2863 = vadd.f32 0.0, %v2862
      %v2864 = vpop.f32.mrf.mxu0
      %2865 = vmatprep.mubr.f32.mxu0 0.0
      %2866 = vmatmul.mubr.f32.gmra.mxu0 %v2698
      %v2867 = vpop.f32.mrf.mxu0
      %v2868 = vadd.f32 0.0, %v2867
      %v2869 = vpop.f32.mrf.mxu0
      %2870 = vmatprep.mubr.f32.mxu0 0.0
      %2871 = vmatmul.mubr.f32.gmra.mxu0 %v2701
      %v2872 = vpop.f32.mrf.mxu0
      %v2873 = vadd.f32 0.0, %v2872
      %v2874 = vpop.f32.mrf.mxu0
      %2875 = vmatprep.mubr.f32.mxu0 0.0
      %2876 = vmatmul.mubr.f32.gmra.mxu0 %v2704
      %v2877 = vpop.f32.mrf.mxu0
      %v2878 = vadd.f32 0.0, %v2877
      %v2879 = vpop.f32.mrf.mxu0
      %2880 = vmatprep.mubr.f32.mxu0 0.0
      %2881 = vmatmul.mubr.f32.gmra.mxu0 %v2707
      %v2882 = vpop.f32.mrf.mxu0
      %v2883 = vadd.f32 0.0, %v2882
      %v2884 = vpop.f32.mrf.mxu0
      %2885 = vmatprep.mubr.f32.mxu0 0.0
      %2886 = vmatmul.mubr.f32.gmra.mxu0 %v2710
      %v2887 = vpop.f32.mrf.mxu0
      %v2888 = vadd.f32 0.0, %v2887
      %v2889 = vpop.f32.mrf.mxu0
      %2890 = vmatprep.mubr.f32.mxu0 0.0
      %2891 = vmatmul.mubr.f32.gmra.mxu0 %v2713
      %v2892 = vpop.f32.mrf.mxu0
      %v2893 = vadd.f32 0.0, %v2892
      %v2894 = vpop.f32.mrf.mxu0
      %2895 = vmatprep.mubr.f32.mxu0 0.0
      %2896 = vmatmul.mubr.f32.gmra.mxu0 %v2716
      %v2897 = vpop.f32.mrf.mxu0
      %v2898 = vadd.f32 0.0, %v2897
      %v2899 = vpop.f32.mrf.mxu0
      %2900 = vmatprep.mubr.f32.mxu0 0.0
      %2901 = vmatmul.mubr.f32.gmra.mxu0 %v2719
      %v2902 = vpop.f32.mrf.mxu0
      %v2903 = vadd.f32 0.0, %v2902
      %v2904 = vpop.f32.mrf.mxu0
      %2905 = vmatprep.mubr.f32.mxu0 0.0
      %2906 = vmatmul.mubr.f32.gmra.mxu0 %v2722
      %v2907 = vpop.f32.mrf.mxu0
      %v2908 = vadd.f32 0.0, %v2907
      %v2909 = vpop.f32.mrf.mxu0
      %2910 = vmatprep.mubr.f32.mxu0 0.0
      %2911 = vmatmul.mubr.f32.gmra.mxu0 %v2725
      %v2912 = vpop.f32.mrf.mxu0
      %v2913 = vadd.f32 0.0, %v2912
      %v2914 = vpop.f32.mrf.mxu0
      %2915 = vmatprep.mubr.f32.mxu0 0.0
      %2916 = vmatmul.mubr.f32.gmra.mxu0 %v2728
      %v2917 = vpop.f32.mrf.mxu0
      %v2918 = vadd.f32 0.0, %v2917
      %v2919 = vpop.f32.mrf.mxu0
      %2920 = vmatprep.mubr.f32.mxu0 0.0
      %2921 = vmatmul.mubr.f32.gmra.mxu0 %v2731
      %v2922 = vpop.f32.mrf.mxu0
      %v2923 = vadd.f32 0.0, %v2922
      %v2924 = vpop.f32.mrf.mxu0
      %2925 = vmatprep.mubr.f32.mxu0 0.0
      %2926 = vmatmul.mubr.f32.gmra.mxu0 %v2734
      %v2927 = vpop.f32.mrf.mxu0
      %v2928 = vadd.f32 0.0, %v2927
      %v2929 = vpop.f32.mrf.mxu0
      %2930 = vmatprep.mubr.f32.mxu0 0.0
      %2931 = vmatmul.mubr.f32.gmra.mxu0 %v2737
      %v2932 = vpop.f32.mrf.mxu0
      %v2933 = vadd.f32 0.0, %v2932
      %v2934 = vpop.f32.mrf.mxu0
      %2935 = vmatprep.mubr.f32.mxu0 0.0
      %2936 = vmatmul.mubr.f32.gmra.mxu0 %v2740
      %v2937 = vpop.f32.mrf.mxu0
      %v2938 = vadd.f32 0.0, %v2937
      %v2939 = vpop.f32.mrf.mxu0
      %2940 = vmatprep.mubr.f32.mxu0 0.0
      %2941 = vmatmul.mubr.f32.gmra.mxu0 %v2743
      %v2942 = vpop.f32.mrf.mxu0
      %v2943 = vadd.f32 0.0, %v2942
      %v2944 = vpop.f32.mrf.mxu0
      %2945 = vmatprep.mubr.f32.mxu0 0.0
      %2946 = vmatmul.mubr.f32.gmra.mxu0 %v2746
      %v2947 = vpop.f32.mrf.mxu0
      %v2948 = vadd.f32 0.0, %v2947
      %v2949 = vpop.f32.mrf.mxu0
      %2950 = vmatprep.mubr.f32.mxu0 0.0
      %2951 = vmatmul.mubr.f32.gmra.mxu0 %v2749
      %v2952 = vpop.f32.mrf.mxu0
      %v2953 = vadd.f32 0.0, %v2952
      %v2954 = vpop.f32.mrf.mxu0
      %2955 = vmatprep.mubr.f32.mxu0 0.0
      %2956 = vmatmul.mubr.f32.gmra.mxu0 %v2752
      %v2957 = vpop.f32.mrf.mxu0
      %v2958 = vadd.f32 0.0, %v2957
      %v2959 = vpop.f32.mrf.mxu0
      %2960 = vmatprep.mubr.f32.mxu0 0.0
      %2961 = vmatmul.mubr.f32.gmra.mxu0 %v2755
      %v2962 = vpop.f32.mrf.mxu0
      %v2963 = vadd.f32 0.0, %v2962
      %v2964 = vpop.f32.mrf.mxu0
      %2965 = vmatprep.mubr.f32.mxu0 0.0
      %2966 = vmatmul.mubr.f32.gmra.mxu0 %v2758
      %v2967 = vpop.f32.mrf.mxu0
      %v2968 = vadd.f32 0.0, %v2967
      %v2969 = vpop.f32.mrf.mxu0
      %2970 = vmatprep.mubr.f32.mxu0 0.0
      %2971 = vmatmul.mubr.f32.gmra.mxu0 %v2761
      %v2972 = vpop.f32.mrf.mxu0
      %v2973 = vadd.f32 0.0, %v2972
      %v2974 = vpop.f32.mrf.mxu0
      %2975 = vmatprep.mubr.f32.mxu0 0.0
      %2976 = vmatmul.mubr.f32.gmra.mxu0 %v2764
      %v2977 = vpop.f32.mrf.mxu0
      %v2978 = vadd.f32 0.0, %v2977
      %v2979 = vpop.f32.mrf.mxu0
      %2980 = vmatprep.mubr.f32.mxu0 0.0
      %2981 = vmatmul.mubr.f32.gmra.mxu0 %v2767
      %v2982 = vpop.f32.mrf.mxu0
      %v2983 = vadd.f32 0.0, %v2982
      %v2984 = vpop.f32.mrf.mxu0
      %2985 = vmatprep.mubr.f32.mxu0 0.0
      %2986 = vmatmul.mubr.f32.gmra.mxu0 %v2770
      %v2987 = vpop.f32.mrf.mxu0
      %v2988 = vadd.f32 0.0, %v2987
      %v2989 = vpop.f32.mrf.mxu0
      %2990 = vmatprep.mubr.f32.mxu0 0.0
      %2991 = vmatmul.mubr.f32.gmra.mxu0 %v2773
      %v2992 = vpop.f32.mrf.mxu0
      %v2993 = vadd.f32 0.0, %v2992
      %v2994 = vpop.f32.mrf.mxu0
      %2995 = vmatprep.mubr.f32.mxu0 0.0
      %2996 = vmatmul.mubr.f32.gmra.mxu0 %v2776
      %v2997 = vpop.f32.mrf.mxu0
      %v2998 = vadd.f32 0.0, %v2997
      %v2999 = vpop.f32.mrf.mxu0
      %3000 = vmatprep.mubr.f32.mxu0 0.0
      %3001 = vmatmul.mubr.f32.gmra.mxu0 %v2779
      %v3002 = vpop.f32.mrf.mxu0
      %v3003 = vadd.f32 0.0, %v3002
      %v3004 = vpop.f32.mrf.mxu0
      %3005 = vdwg.mxu0
      %v3022 = vrot.slane %v2858, 7
      %vm3023 = vcmask 1041409
      %v3024 = vsel %vm3023, %v3022, %v2848
      %v3025 = vrot.slane %v2868, 6
      %vm3026 = vcmask 1042434
      %v3027 = vsel %vm3026, %v3025, %v3024
      %v3028 = vrot.slane %v2878, 5
      %vm3029 = vcmask 1043459
      %v3030 = vsel %vm3029, %v3028, %v3027
      %v3031 = vrot.slane %v2888, 4
      %vm3032 = vcmask 1044484
      %v3033 = vsel %vm3032, %v3031, %v3030
      %v3034 = vrot.slane %v2898, 3
      %vm3035 = vcmask 1045509
      %v3036 = vsel %vm3035, %v3034, %v3033
      %v3037 = vrot.slane %v2908, 2
      %vm3038 = vcmask 1046534
      %v3039 = vsel %vm3038, %v3037, %v3036
      %v3040 = vrot.slane %v2918, 1
      %vm3041 = vcmask 1047559
      %v3042 = vsel %vm3041, %v3040, %v3039
      %v3043 = vrot.slane %v2938, 7
      %v3044 = vsel %vm3023, %v3043, %v2928
      %v3045 = vrot.slane %v2948, 6
      %v3046 = vsel %vm3026, %v3045, %v3044
      %v3047 = vrot.slane %v2958, 5
      %v3048 = vsel %vm3029, %v3047, %v3046
      %v3049 = vrot.slane %v2968, 4
      %v3050 = vsel %vm3032, %v3049, %v3048
      %v3051 = vrot.slane %v2978, 3
      %v3052 = vsel %vm3035, %v3051, %v3050
      %v3053 = vrot.slane %v2988, 2
      %v3054 = vsel %vm3038, %v3053, %v3052
      %v3055 = vrot.slane %v2998, 1
      %v3056 = vsel %vm3041, %v3055, %v3054
      %v3059 = vrot.slane %v2848, 1
      %v3060 = vsel %vm3023, %v2858, %v3059
      %v3061 = vrot.slane %v2868, 7
      %v3062 = vsel %vm3026, %v3061, %v3060
      %v3063 = vrot.slane %v2878, 6
      %v3064 = vsel %vm3029, %v3063, %v3062
      %v3065 = vrot.slane %v2888, 5
      %v3066 = vsel %vm3032, %v3065, %v3064
      %v3067 = vrot.slane %v2898, 4
      %v3068 = vsel %vm3035, %v3067, %v3066
      %v3069 = vrot.slane %v2908, 3
      %v3070 = vsel %vm3038, %v3069, %v3068
      %v3071 = vrot.slane %v2918, 2
      %v3072 = vsel %vm3041, %v3071, %v3070
      %v3073 = vrot.slane %v2928, 1
      %v3074 = vsel %vm3023, %v2938, %v3073
      %v3075 = vrot.slane %v2948, 7
      %v3076 = vsel %vm3026, %v3075, %v3074
      %v3077 = vrot.slane %v2958, 6
      %v3078 = vsel %vm3029, %v3077, %v3076
      %v3079 = vrot.slane %v2968, 5
      %v3080 = vsel %vm3032, %v3079, %v3078
      %v3081 = vrot.slane %v2978, 4
      %v3082 = vsel %vm3035, %v3081, %v3080
      %v3083 = vrot.slane %v2988, 3
      %v3084 = vsel %vm3038, %v3083, %v3082
      %v3085 = vrot.slane %v2998, 2
      %v3086 = vsel %vm3041, %v3085, %v3084
      %3087 = vrot.lane.b32.xlu0 %v3072, 8
      %v3088 = vpop.permute.xlu0 %3087
      %3089 = vrot.lane.b32.xlu0 %v3086, 8
      %v3090 = vpop.permute.xlu0 %3089
      %v3093 = vrot.slane %v2848, 2
      %v3094 = vrot.slane %v2858, 1
      %v3095 = vsel %vm3023, %v3094, %v3093
      %v3096 = vsel %vm3026, %v2868, %v3095
      %v3097 = vrot.slane %v2878, 7
      %v3098 = vsel %vm3029, %v3097, %v3096
      %v3099 = vrot.slane %v2888, 6
      %v3100 = vsel %vm3032, %v3099, %v3098
      %v3101 = vrot.slane %v2898, 5
      %v3102 = vsel %vm3035, %v3101, %v3100
      %v3103 = vrot.slane %v2908, 4
      %v3104 = vsel %vm3038, %v3103, %v3102
      %v3105 = vrot.slane %v2918, 3
      %v3106 = vsel %vm3041, %v3105, %v3104
      %v3107 = vrot.slane %v2928, 2
      %v3108 = vrot.slane %v2938, 1
      %v3109 = vsel %vm3023, %v3108, %v3107
      %v3110 = vsel %vm3026, %v2948, %v3109
      %v3111 = vrot.slane %v2958, 7
      %v3112 = vsel %vm3029, %v3111, %v3110
      %v3113 = vrot.slane %v2968, 6
      %v3114 = vsel %vm3032, %v3113, %v3112
      %v3115 = vrot.slane %v2978, 5
      %v3116 = vsel %vm3035, %v3115, %v3114
      %v3117 = vrot.slane %v2988, 4
      %v3118 = vsel %vm3038, %v3117, %v3116
      %v3119 = vrot.slane %v2998, 3
      %v3120 = vsel %vm3041, %v3119, %v3118
      %3121 = vrot.lane.b32.xlu0 %v3106, 16
      %v3122 = vpop.permute.xlu0 %3121
      %3123 = vrot.lane.b32.xlu0 %v3120, 16
      %v3124 = vpop.permute.xlu0 %3123
      %v3127 = vrot.slane %v2848, 3
      %v3128 = vrot.slane %v2858, 2
      %v3129 = vsel %vm3023, %v3128, %v3127
      %v3130 = vrot.slane %v2868, 1
      %v3131 = vsel %vm3026, %v3130, %v3129
      %v3132 = vsel %vm3029, %v2878, %v3131
      %v3133 = vrot.slane %v2888, 7
      %v3134 = vsel %vm3032, %v3133, %v3132
      %v3135 = vrot.slane %v2898, 6
      %v3136 = vsel %vm3035, %v3135, %v3134
      %v3137 = vrot.slane %v2908, 5
      %v3138 = vsel %vm3038, %v3137, %v3136
      %v3139 = vrot.slane %v2918, 4
      %v3140 = vsel %vm3041, %v3139, %v3138
      %v3141 = vrot.slane %v2928, 3
      %v3142 = vrot.slane %v2938, 2
      %v3143 = vsel %vm3023, %v3142, %v3141
      %v3144 = vrot.slane %v2948, 1
      %v3145 = vsel %vm3026, %v3144, %v3143
      %v3146 = vsel %vm3029, %v2958, %v3145
      %v3147 = vrot.slane %v2968, 7
      %v3148 = vsel %vm3032, %v3147, %v3146
      %v3149 = vrot.slane %v2978, 6
      %v3150 = vsel %vm3035, %v3149, %v3148
      %v3151 = vrot.slane %v2988, 5
      %v3152 = vsel %vm3038, %v3151, %v3150
      %v3153 = vrot.slane %v2998, 4
      %v3154 = vsel %vm3041, %v3153, %v3152
      %3155 = vrot.lane.b32.xlu0 %v3140, 24
      %v3156 = vpop.permute.xlu0 %3155
      %3157 = vrot.lane.b32.xlu0 %v3154, 24
      %v3158 = vpop.permute.xlu0 %3157
      %v3161 = vrot.slane %v2848, 4
      %v3162 = vrot.slane %v2858, 3
      %v3163 = vsel %vm3023, %v3162, %v3161
      %v3164 = vrot.slane %v2868, 2
      %v3165 = vsel %vm3026, %v3164, %v3163
      %v3166 = vrot.slane %v2878, 1
      %v3167 = vsel %vm3029, %v3166, %v3165
      %v3168 = vsel %vm3032, %v2888, %v3167
      %v3169 = vrot.slane %v2898, 7
      %v3170 = vsel %vm3035, %v3169, %v3168
      %v3171 = vrot.slane %v2908, 6
      %v3172 = vsel %vm3038, %v3171, %v3170
      %v3173 = vrot.slane %v2918, 5
      %v3174 = vsel %vm3041, %v3173, %v3172
      %v3175 = vrot.slane %v2928, 4
      %v3176 = vrot.slane %v2938, 3
      %v3177 = vsel %vm3023, %v3176, %v3175
      %v3178 = vrot.slane %v2948, 2
      %v3179 = vsel %vm3026, %v3178, %v3177
      %v3180 = vrot.slane %v2958, 1
      %v3181 = vsel %vm3029, %v3180, %v3179
      %v3182 = vsel %vm3032, %v2968, %v3181
      %v3183 = vrot.slane %v2978, 7
      %v3184 = vsel %vm3035, %v3183, %v3182
      %v3185 = vrot.slane %v2988, 6
      %v3186 = vsel %vm3038, %v3185, %v3184
      %v3187 = vrot.slane %v2998, 5
      %v3188 = vsel %vm3041, %v3187, %v3186
      %3189 = vrot.lane.b32.xlu0 %v3174, 32
      %v3190 = vpop.permute.xlu0 %3189
      %3191 = vrot.lane.b32.xlu0 %v3188, 32
      %v3192 = vpop.permute.xlu0 %3191
      %v3195 = vrot.slane %v2848, 5
      %v3196 = vrot.slane %v2858, 4
      %v3197 = vsel %vm3023, %v3196, %v3195
      %v3198 = vrot.slane %v2868, 3
      %v3199 = vsel %vm3026, %v3198, %v3197
      %v3200 = vrot.slane %v2878, 2
      %v3201 = vsel %vm3029, %v3200, %v3199
      %v3202 = vrot.slane %v2888, 1
      %v3203 = vsel %vm3032, %v3202, %v3201
      %v3204 = vsel %vm3035, %v2898, %v3203
      %v3205 = vrot.slane %v2908, 7
      %v3206 = vsel %vm3038, %v3205, %v3204
      %v3207 = vrot.slane %v2918, 6
      %v3208 = vsel %vm3041, %v3207, %v3206
      %v3209 = vrot.slane %v2928, 5
      %v3210 = vrot.slane %v2938, 4
      %v3211 = vsel %vm3023, %v3210, %v3209
      %v3212 = vrot.slane %v2948, 3
      %v3213 = vsel %vm3026, %v3212, %v3211
      %v3214 = vrot.slane %v2958, 2
      %v3215 = vsel %vm3029, %v3214, %v3213
      %v3216 = vrot.slane %v2968, 1
      %v3217 = vsel %vm3032, %v3216, %v3215
      %v3218 = vsel %vm3035, %v2978, %v3217
      %v3219 = vrot.slane %v2988, 7
      %v3220 = vsel %vm3038, %v3219, %v3218
      %v3221 = vrot.slane %v2998, 6
      %v3222 = vsel %vm3041, %v3221, %v3220
      %3223 = vrot.lane.b32.xlu0 %v3208, 40
      %v3224 = vpop.permute.xlu0 %3223
      %3225 = vrot.lane.b32.xlu0 %v3222, 40
      %v3226 = vpop.permute.xlu0 %3225
      %v3229 = vrot.slane %v2848, 6
      %v3230 = vrot.slane %v2858, 5
      %v3231 = vsel %vm3023, %v3230, %v3229
      %v3232 = vrot.slane %v2868, 4
      %v3233 = vsel %vm3026, %v3232, %v3231
      %v3234 = vrot.slane %v2878, 3
      %v3235 = vsel %vm3029, %v3234, %v3233
      %v3236 = vrot.slane %v2888, 2
      %v3237 = vsel %vm3032, %v3236, %v3235
      %v3238 = vrot.slane %v2898, 1
      %v3239 = vsel %vm3035, %v3238, %v3237
      %v3240 = vsel %vm3038, %v2908, %v3239
      %v3241 = vrot.slane %v2918, 7
      %v3242 = vsel %vm3041, %v3241, %v3240
      %v3243 = vrot.slane %v2928, 6
      %v3244 = vrot.slane %v2938, 5
      %v3245 = vsel %vm3023, %v3244, %v3243
      %v3246 = vrot.slane %v2948, 4
      %v3247 = vsel %vm3026, %v3246, %v3245
      %v3248 = vrot.slane %v2958, 3
      %v3249 = vsel %vm3029, %v3248, %v3247
      %v3250 = vrot.slane %v2968, 2
      %v3251 = vsel %vm3032, %v3250, %v3249
      %v3252 = vrot.slane %v2978, 1
      %v3253 = vsel %vm3035, %v3252, %v3251
      %v3254 = vsel %vm3038, %v2988, %v3253
      %v3255 = vrot.slane %v2998, 7
      %v3256 = vsel %vm3041, %v3255, %v3254
      %3257 = vrot.lane.b32.xlu0 %v3242, 48
      %v3258 = vpop.permute.xlu0 %3257
      %3259 = vrot.lane.b32.xlu0 %v3256, 48
      %v3260 = vpop.permute.xlu0 %3259
      %v3263 = vrot.slane %v2848, 7
      %v3264 = vrot.slane %v2858, 6
      %v3265 = vsel %vm3023, %v3264, %v3263
      %v3266 = vrot.slane %v2868, 5
      %v3267 = vsel %vm3026, %v3266, %v3265
      %v3268 = vrot.slane %v2878, 4
      %v3269 = vsel %vm3029, %v3268, %v3267
      %v3270 = vrot.slane %v2888, 3
      %v3271 = vsel %vm3032, %v3270, %v3269
      %v3272 = vrot.slane %v2898, 2
      %v3273 = vsel %vm3035, %v3272, %v3271
      %v3274 = vrot.slane %v2908, 1
      %v3275 = vsel %vm3038, %v3274, %v3273
      %v3276 = vsel %vm3041, %v2918, %v3275
      %v3277 = vrot.slane %v2928, 7
      %v3278 = vrot.slane %v2938, 6
      %v3279 = vsel %vm3023, %v3278, %v3277
      %v3280 = vrot.slane %v2948, 5
      %v3281 = vsel %vm3026, %v3280, %v3279
      %v3282 = vrot.slane %v2958, 4
      %v3283 = vsel %vm3029, %v3282, %v3281
      %v3284 = vrot.slane %v2968, 3
      %v3285 = vsel %vm3032, %v3284, %v3283
      %v3286 = vrot.slane %v2978, 2
      %v3287 = vsel %vm3035, %v3286, %v3285
      %v3288 = vrot.slane %v2988, 1
      %v3289 = vsel %vm3038, %v3288, %v3287
      %v3290 = vsel %vm3041, %v2998, %v3289
      %3291 = vrot.lane.b32.xlu0 %v3276, 56
      %v3292 = vpop.permute.xlu0 %3291
      %3293 = vrot.lane.b32.xlu0 %v3290, 56
      %v3294 = vpop.permute.xlu0 %3293
      %v3313 = vrot.slane %v2863, 7
      %v3314 = vsel %vm3023, %v3313, %v2853
      %v3315 = vrot.slane %v2873, 6
      %v3316 = vsel %vm3026, %v3315, %v3314
      %v3317 = vrot.slane %v2883, 5
      %v3318 = vsel %vm3029, %v3317, %v3316
      %v3319 = vrot.slane %v2893, 4
      %v3320 = vsel %vm3032, %v3319, %v3318
      %v3321 = vrot.slane %v2903, 3
      %v3322 = vsel %vm3035, %v3321, %v3320
      %v3323 = vrot.slane %v2913, 2
      %v3324 = vsel %vm3038, %v3323, %v3322
      %v3325 = vrot.slane %v2923, 1
      %v3326 = vsel %vm3041, %v3325, %v3324
      %v3327 = vrot.slane %v2943, 7
      %v3328 = vsel %vm3023, %v3327, %v2933
      %v3329 = vrot.slane %v2953, 6
      %v3330 = vsel %vm3026, %v3329, %v3328
      %v3331 = vrot.slane %v2963, 5
      %v3332 = vsel %vm3029, %v3331, %v3330
      %v3333 = vrot.slane %v2973, 4
      %v3334 = vsel %vm3032, %v3333, %v3332
      %v3335 = vrot.slane %v2983, 3
      %v3336 = vsel %vm3035, %v3335, %v3334
      %v3337 = vrot.slane %v2993, 2
      %v3338 = vsel %vm3038, %v3337, %v3336
      %v3339 = vrot.slane %v3003, 1
      %v3340 = vsel %vm3041, %v3339, %v3338
      %3341 = vrot.lane.b32.xlu0 %v3326, 64
      %v3342 = vpop.permute.xlu0 %3341
      %3343 = vrot.lane.b32.xlu0 %v3340, 64
      %v3344 = vpop.permute.xlu0 %3343
      %v3347 = vrot.slane %v2853, 1
      %v3348 = vsel %vm3023, %v2863, %v3347
      %v3349 = vrot.slane %v2873, 7
      %v3350 = vsel %vm3026, %v3349, %v3348
      %v3351 = vrot.slane %v2883, 6
      %v3352 = vsel %vm3029, %v3351, %v3350
      %v3353 = vrot.slane %v2893, 5
      %v3354 = vsel %vm3032, %v3353, %v3352
      %v3355 = vrot.slane %v2903, 4
      %v3356 = vsel %vm3035, %v3355, %v3354
      %v3357 = vrot.slane %v2913, 3
      %v3358 = vsel %vm3038, %v3357, %v3356
      %v3359 = vrot.slane %v2923, 2
      %v3360 = vsel %vm3041, %v3359, %v3358
      %v3361 = vrot.slane %v2933, 1
      %v3362 = vsel %vm3023, %v2943, %v3361
      %v3363 = vrot.slane %v2953, 7
      %v3364 = vsel %vm3026, %v3363, %v3362
      %v3365 = vrot.slane %v2963, 6
      %v3366 = vsel %vm3029, %v3365, %v3364
      %v3367 = vrot.slane %v2973, 5
      %v3368 = vsel %vm3032, %v3367, %v3366
      %v3369 = vrot.slane %v2983, 4
      %v3370 = vsel %vm3035, %v3369, %v3368
      %v3371 = vrot.slane %v2993, 3
      %v3372 = vsel %vm3038, %v3371, %v3370
      %v3373 = vrot.slane %v3003, 2
      %v3374 = vsel %vm3041, %v3373, %v3372
      %3375 = vrot.lane.b32.xlu0 %v3360, 72
      %v3376 = vpop.permute.xlu0 %3375
      %3377 = vrot.lane.b32.xlu0 %v3374, 72
      %v3378 = vpop.permute.xlu0 %3377
      %v3381 = vrot.slane %v2853, 2
      %v3382 = vrot.slane %v2863, 1
      %v3383 = vsel %vm3023, %v3382, %v3381
      %v3384 = vsel %vm3026, %v2873, %v3383
      %v3385 = vrot.slane %v2883, 7
      %v3386 = vsel %vm3029, %v3385, %v3384
      %v3387 = vrot.slane %v2893, 6
      %v3388 = vsel %vm3032, %v3387, %v3386
      %v3389 = vrot.slane %v2903, 5
      %v3390 = vsel %vm3035, %v3389, %v3388
      %v3391 = vrot.slane %v2913, 4
      %v3392 = vsel %vm3038, %v3391, %v3390
      %v3393 = vrot.slane %v2923, 3
      %v3394 = vsel %vm3041, %v3393, %v3392
      %v3395 = vrot.slane %v2933, 2
      %v3396 = vrot.slane %v2943, 1
      %v3397 = vsel %vm3023, %v3396, %v3395
      %v3398 = vsel %vm3026, %v2953, %v3397
      %v3399 = vrot.slane %v2963, 7
      %v3400 = vsel %vm3029, %v3399, %v3398
      %v3401 = vrot.slane %v2973, 6
      %v3402 = vsel %vm3032, %v3401, %v3400
      %v3403 = vrot.slane %v2983, 5
      %v3404 = vsel %vm3035, %v3403, %v3402
      %v3405 = vrot.slane %v2993, 4
      %v3406 = vsel %vm3038, %v3405, %v3404
      %v3407 = vrot.slane %v3003, 3
      %v3408 = vsel %vm3041, %v3407, %v3406
      %3409 = vrot.lane.b32.xlu0 %v3394, 80
      %v3410 = vpop.permute.xlu0 %3409
      %3411 = vrot.lane.b32.xlu0 %v3408, 80
      %v3412 = vpop.permute.xlu0 %3411
      %v3415 = vrot.slane %v2853, 3
      %v3416 = vrot.slane %v2863, 2
      %v3417 = vsel %vm3023, %v3416, %v3415
      %v3418 = vrot.slane %v2873, 1
      %v3419 = vsel %vm3026, %v3418, %v3417
      %v3420 = vsel %vm3029, %v2883, %v3419
      %v3421 = vrot.slane %v2893, 7
      %v3422 = vsel %vm3032, %v3421, %v3420
      %v3423 = vrot.slane %v2903, 6
      %v3424 = vsel %vm3035, %v3423, %v3422
      %v3425 = vrot.slane %v2913, 5
      %v3426 = vsel %vm3038, %v3425, %v3424
      %v3427 = vrot.slane %v2923, 4
      %v3428 = vsel %vm3041, %v3427, %v3426
      %v3429 = vrot.slane %v2933, 3
      %v3430 = vrot.slane %v2943, 2
      %v3431 = vsel %vm3023, %v3430, %v3429
      %v3432 = vrot.slane %v2953, 1
      %v3433 = vsel %vm3026, %v3432, %v3431
      %v3434 = vsel %vm3029, %v2963, %v3433
      %v3435 = vrot.slane %v2973, 7
      %v3436 = vsel %vm3032, %v3435, %v3434
      %v3437 = vrot.slane %v2983, 6
      %v3438 = vsel %vm3035, %v3437, %v3436
      %v3439 = vrot.slane %v2993, 5
      %v3440 = vsel %vm3038, %v3439, %v3438
      %v3441 = vrot.slane %v3003, 4
      %v3442 = vsel %vm3041, %v3441, %v3440
      %3443 = vrot.lane.b32.xlu0 %v3428, 88
      %v3444 = vpop.permute.xlu0 %3443
      %3445 = vrot.lane.b32.xlu0 %v3442, 88
      %v3446 = vpop.permute.xlu0 %3445
      %v3449 = vrot.slane %v2853, 4
      %v3450 = vrot.slane %v2863, 3
      %v3451 = vsel %vm3023, %v3450, %v3449
      %v3452 = vrot.slane %v2873, 2
      %v3453 = vsel %vm3026, %v3452, %v3451
      %v3454 = vrot.slane %v2883, 1
      %v3455 = vsel %vm3029, %v3454, %v3453
      %v3456 = vsel %vm3032, %v2893, %v3455
      %v3457 = vrot.slane %v2903, 7
      %v3458 = vsel %vm3035, %v3457, %v3456
      %v3459 = vrot.slane %v2913, 6
      %v3460 = vsel %vm3038, %v3459, %v3458
      %v3461 = vrot.slane %v2923, 5
      %v3462 = vsel %vm3041, %v3461, %v3460
      %v3463 = vrot.slane %v2933, 4
      %v3464 = vrot.slane %v2943, 3
      %v3465 = vsel %vm3023, %v3464, %v3463
      %v3466 = vrot.slane %v2953, 2
      %v3467 = vsel %vm3026, %v3466, %v3465
      %v3468 = vrot.slane %v2963, 1
      %v3469 = vsel %vm3029, %v3468, %v3467
      %v3470 = vsel %vm3032, %v2973, %v3469
      %v3471 = vrot.slane %v2983, 7
      %v3472 = vsel %vm3035, %v3471, %v3470
      %v3473 = vrot.slane %v2993, 6
      %v3474 = vsel %vm3038, %v3473, %v3472
      %v3475 = vrot.slane %v3003, 5
      %v3476 = vsel %vm3041, %v3475, %v3474
      %3477 = vrot.lane.b32.xlu0 %v3462, 96
      %v3478 = vpop.permute.xlu0 %3477
      %3479 = vrot.lane.b32.xlu0 %v3476, 96
      %v3480 = vpop.permute.xlu0 %3479
      %v3483 = vrot.slane %v2853, 5
      %v3484 = vrot.slane %v2863, 4
      %v3485 = vsel %vm3023, %v3484, %v3483
      %v3486 = vrot.slane %v2873, 3
      %v3487 = vsel %vm3026, %v3486, %v3485
      %v3488 = vrot.slane %v2883, 2
      %v3489 = vsel %vm3029, %v3488, %v3487
      %v3490 = vrot.slane %v2893, 1
      %v3491 = vsel %vm3032, %v3490, %v3489
      %v3492 = vsel %vm3035, %v2903, %v3491
      %v3493 = vrot.slane %v2913, 7
      %v3494 = vsel %vm3038, %v3493, %v3492
      %v3495 = vrot.slane %v2923, 6
      %v3496 = vsel %vm3041, %v3495, %v3494
      %v3497 = vrot.slane %v2933, 5
      %v3498 = vrot.slane %v2943, 4
      %v3499 = vsel %vm3023, %v3498, %v3497
      %v3500 = vrot.slane %v2953, 3
      %v3501 = vsel %vm3026, %v3500, %v3499
      %v3502 = vrot.slane %v2963, 2
      %v3503 = vsel %vm3029, %v3502, %v3501
      %v3504 = vrot.slane %v2973, 1
      %v3505 = vsel %vm3032, %v3504, %v3503
      %v3506 = vsel %vm3035, %v2983, %v3505
      %v3507 = vrot.slane %v2993, 7
      %v3508 = vsel %vm3038, %v3507, %v3506
      %v3509 = vrot.slane %v3003, 6
      %v3510 = vsel %vm3041, %v3509, %v3508
      %3511 = vrot.lane.b32.xlu0 %v3496, 104
      %v3512 = vpop.permute.xlu0 %3511
      %3513 = vrot.lane.b32.xlu0 %v3510, 104
      %v3514 = vpop.permute.xlu0 %3513
      %v3517 = vrot.slane %v2853, 6
      %v3518 = vrot.slane %v2863, 5
      %v3519 = vsel %vm3023, %v3518, %v3517
      %v3520 = vrot.slane %v2873, 4
      %v3521 = vsel %vm3026, %v3520, %v3519
      %v3522 = vrot.slane %v2883, 3
      %v3523 = vsel %vm3029, %v3522, %v3521
      %v3524 = vrot.slane %v2893, 2
      %v3525 = vsel %vm3032, %v3524, %v3523
      %v3526 = vrot.slane %v2903, 1
      %v3527 = vsel %vm3035, %v3526, %v3525
      %v3528 = vsel %vm3038, %v2913, %v3527
      %v3529 = vrot.slane %v2923, 7
      %v3530 = vsel %vm3041, %v3529, %v3528
      %v3531 = vrot.slane %v2933, 6
      %v3532 = vrot.slane %v2943, 5
      %v3533 = vsel %vm3023, %v3532, %v3531
      %v3534 = vrot.slane %v2953, 4
      %v3535 = vsel %vm3026, %v3534, %v3533
      %v3536 = vrot.slane %v2963, 3
      %v3537 = vsel %vm3029, %v3536, %v3535
      %v3538 = vrot.slane %v2973, 2
      %v3539 = vsel %vm3032, %v3538, %v3537
      %v3540 = vrot.slane %v2983, 1
      %v3541 = vsel %vm3035, %v3540, %v3539
      %v3542 = vsel %vm3038, %v2993, %v3541
      %v3543 = vrot.slane %v3003, 7
      %v3544 = vsel %vm3041, %v3543, %v3542
      %3545 = vrot.lane.b32.xlu0 %v3530, 112
      %v3546 = vpop.permute.xlu0 %3545
      %3547 = vrot.lane.b32.xlu0 %v3544, 112
      %v3548 = vpop.permute.xlu0 %3547
      %v3551 = vrot.slane %v2853, 7
      %v3552 = vrot.slane %v2863, 6
      %v3553 = vsel %vm3023, %v3552, %v3551
      %v3554 = vrot.slane %v2873, 5
      %v3555 = vsel %vm3026, %v3554, %v3553
      %v3556 = vrot.slane %v2883, 4
      %v3557 = vsel %vm3029, %v3556, %v3555
      %v3558 = vrot.slane %v2893, 3
      %v3559 = vsel %vm3032, %v3558, %v3557
      %v3560 = vrot.slane %v2903, 2
      %v3561 = vsel %vm3035, %v3560, %v3559
      %v3562 = vrot.slane %v2913, 1
      %v3563 = vsel %vm3038, %v3562, %v3561
      %v3564 = vsel %vm3041, %v2923, %v3563
      %v3565 = vrot.slane %v2933, 7
      %v3566 = vrot.slane %v2943, 6
      %v3567 = vsel %vm3023, %v3566, %v3565
      %v3568 = vrot.slane %v2953, 5
      %v3569 = vsel %vm3026, %v3568, %v3567
      %v3570 = vrot.slane %v2963, 4
      %v3571 = vsel %vm3029, %v3570, %v3569
      %v3572 = vrot.slane %v2973, 3
      %v3573 = vsel %vm3032, %v3572, %v3571
      %v3574 = vrot.slane %v2983, 2
      %v3575 = vsel %vm3035, %v3574, %v3573
      %v3576 = vrot.slane %v2993, 1
      %v3577 = vsel %vm3038, %v3576, %v3575
      %v3578 = vsel %vm3041, %v3003, %v3577
      %3579 = vrot.lane.b32.xlu0 %v3564, 120
      %v3580 = vpop.permute.xlu0 %3579
      %3581 = vrot.lane.b32.xlu0 %v3578, 120
      %v3582 = vpop.permute.xlu0 %3581
      %v3585 = vsel %vm2411, %v3042, %v3088
      %v3586 = vsel %vm2411, %v3056, %v3090
      %v3587 = vsel %vm2444, %v3585, %v3122
      %v3588 = vsel %vm2444, %v3586, %v3124
      %v3589 = vsel %vm2477, %v3587, %v3156
      %v3590 = vsel %vm2477, %v3588, %v3158
      %v3591 = vsel %vm2510, %v3589, %v3190
      %v3592 = vsel %vm2510, %v3590, %v3192
      %v3593 = vsel %vm2543, %v3591, %v3224
      %v3594 = vsel %vm2543, %v3592, %v3226
      %v3595 = vsel %vm2576, %v3593, %v3258
      %v3596 = vsel %vm2576, %v3594, %v3260
      %v3597 = vsel %vm2609, %v3595, %v3292
      %v3598 = vsel %vm2609, %v3596, %v3294
      %v3599 = vsel %vm2642, %v3597, %v3342
      %v3600 = vsel %vm2642, %v3598, %v3344
      %v3601 = vsel %vm2684, %v3599, %v3376
      %v3602 = vsel %vm2684, %v3600, %v3378
      %vm3603 = vcmask 654336
      %v3604 = vsel %vm3603, %v3601, %v3410
      %v3605 = vsel %vm3603, %v3602, %v3412
      %vm3606 = vcmask 719872
      %v3607 = vsel %vm3606, %v3604, %v3444
      %v3608 = vsel %vm3606, %v3605, %v3446
      %vm3609 = vcmask 785408
      %v3610 = vsel %vm3609, %v3607, %v3478
      %v3611 = vsel %vm3609, %v3608, %v3480
      %vm3612 = vcmask 850944
      %v3613 = vsel %vm3612, %v3610, %v3512
      %v3614 = vsel %vm3612, %v3611, %v3514
      %vm3615 = vcmask 916480
      %v3616 = vsel %vm3615, %v3613, %v3546
      %v3617 = vsel %vm3615, %v3614, %v3548
      %vm3618 = vcmask 982016
      %v3619 = vsel %vm3618, %v3616, %v3580
      %v3620 = vsel %vm3618, %v3617, %v3582
      %v3621 = vld [vmem:[%s239] sm:$0xff]
      %v3622 = vld [vmem:[%s239 + $0x8] sm:$0xff]
      %v3623 = vadd.f32 %v3619, %v3621
      %v3624 = vadd.f32 %v3620, %v3622
      %3625 = vst [vmem:[%s244] sm:$0xff] %v3623
      %3626 = vst [vmem:[%s244 + $0x8] sm:$0xff] %v3624
      %p3627 = scmp.lt.s32.totalorder %s16, 1
      %s3628 = scalar_select %p3627, %s16, 1
      %s3629 = smul.addr %s3628, 2
      %s3630 = smul.addr %s3629, 8
      %s3631 = scalar_lea.vmem %s5, %s3630
      // Predicated region
      $region41: #{preact_block_forward.3} parent=39 // pred_check
        %p3632 = pneg %p149
      $region42: #{preact_block_forward.3} parent=39 // pred_check_branch
        %3634 = sbr.rel (%p3632) target = $region44
      $region43: #{preact_block_forward.3} parent=39 // pred_region
        _
      $region44: #{preact_block_forward.3} parent=39 // pred_fallthru
        _
    $region40: #{preact_block_forward.3} parent=5 // pred_fallthru
      _
    %p3635 = scmp.le.s32.totalorder 2, %s11
    // Predicated region
    $region45: #{preact_block_forward.3} parent=5 // pred_check
      %p3636 = pneg %p3635
    $region46: #{preact_block_forward.3} parent=5 // pred_check_branch
      %3638 = sbr.rel (%p3636) target = $region48
    $region47: #{preact_block_forward.3} parent=5 // pred_region
      %s3639 = ssub.s32 %s11, 2
      // Predicated region
      $region49: #{preact_block_forward.3} parent=47 // pred_check
        %p3640 = pneg %p155
      $region50: #{preact_block_forward.3} parent=47 // pred_check_branch
        %3642 = sbr.rel (%p3640) target = $region52
      $region51: #{preact_block_forward.3} parent=47 // pred_region
        %p3643 = scmp.lt.s32.totalorder %s17, 1
        %s3644 = scalar_select %p3643, %s17, 1
        %s3645 = smul.addr %s3644, 2
        %s3646 = smul.addr %s3645, 8
        %s3647 = scalar_lea.vmem %s5, %s3646
      $region52: #{preact_block_forward.3} parent=47 // pred_fallthru
        _
    $region48: #{preact_block_forward.3} parent=5 // pred_fallthru
      _
  $region6: #{preact_block_forward.3} parent=0 // loop_footer
    %s15 = sadd.s32 1, %s11
  $region7: #{preact_block_forward.3} parent=0 // loop_footer_branch
    %10 = sbr.rel target = $region3
  $region8: #{preact_block_forward.3} parent=0 // loop_exit
    _

// kernel: preact_block_forward.2
$region0: #{preact_block_forward.2}
  #allocation0 [shape = 'u32[]', space=smem, size = 0x4, offset = 0x4, fixed_abs, tag = 'smem constant byte address 0x4 - core index']
  #allocation1 [shape = 'u32[144,128]{1,0:T(1,128)}', space=vmem, size = 0x12000, scoped, tag = 'internal scratch']
  %s0 = inlined_call_operand.vmem [shape: f32[2,16,64], index: 0, kind: input, shape index: {}]
  %s1 = inlined_call_operand.vmem [shape: f32[1,64], index: 1, kind: input, shape index: {}]
  %s2 = inlined_call_operand.vmem [shape: f32[1,64], index: 2, kind: input, shape index: {}]
  %s3 = inlined_call_operand.vmem [shape: f32[36,16], index: 3, kind: input, shape index: {}]
  %s4 = inlined_call_operand.vmem [shape: f32[2,16,128], index: 4, kind: output, shape index: {0}]
  %s5 = inlined_call_operand.vmem [shape: f32[2,16,128], index: 5, kind: output, shape index: {1}]
  %s6 = inlined_call_operand.vmem [shape: f32[2,1,8], index: 6, kind: output, shape index: {2}]
  %s7 = inlined_call_operand.vmem [shape: f32[2,1,8], index: 7, kind: output, shape index: {3}]
  %8 = xla_tuple %s4, %s5, %s6, %s7
  %s9 = sld [smem:[#allocation0]]
  $region73: #{preact_block_forward.2} parent=0
    _
  %s11 = ssub.s32 1, %s9
  %s12 = scalar_select 0, %s11, %s9
  loop: start=0, step=1, limit=4
  $region2: #{preact_block_forward.2} parent=0 // loop_pre_header
    _
  $region3: #{preact_block_forward.2} parent=0 // loop_header
    %s14 = sphi 0, %s18
    %p15 = scmp.ge.s32.totalorder %s14, 4
    %s24 = sphi 0, %s26
    %s27 = sphi 0, %s24
    %s28 = sphi 0, %s27
    %s44 = sphi 0, %s28
    %s48 = sphi 0, %s48
    %s50 = sphi 0, %s48
    %s51 = sphi 0, %s50
    %s65 = sphi 0, %s51
    %s69 = sphi 0, %s69
    %s71 = sphi 0, %s69
    %s72 = sphi 0, %s71
    %s86 = sphi 0, %s72
    %s90 = sphi 0, %s90
    %s92 = sphi 0, %s90
    %s93 = sphi 0, %s92
    %s107 = sphi 0, %s93
    %s113 = sphi 0, %s115
    %s116 = sphi 0, %s113
    %s117 = sphi 0, %s116
    %s133 = sphi 0, %s117
    %s139 = sphi 0, %s141
    %s142 = sphi 0, %s139
    %s143 = sphi 0, %s142
    %s159 = sphi 0, %s143
    %s165 = sphi 0, %s167
    %s168 = sphi 0, %s165
    %s169 = sphi 0, %s168
    %s185 = sphi 0, %s169
    %s191 = sphi 0, %s193
    %s194 = sphi 0, %s191
    %s195 = sphi 0, %s194
    %s211 = sphi 0, %s195
  $region4: #{preact_block_forward.2} parent=0 // loop_header_branch
    %17 = sbr.rel (%p15) target = $region8
  $region5: #{preact_block_forward.2} parent=0 // loop_body
    %s19 = ssub.s32 %s14, 1
    %s20 = ssub.s32 %s14, 2
    %s21 = sadd.s32 %s14, 1
    %s22 = ssub.s32 %s14, %s21
    %p23 = scmp.eq.s32.totalorder %s22, 0
    %s25 = sadd.s32 %s24, 1
    %s26 = scalar_select %p23, %s24, %s25
    %p29 = pneg %p23
    %p30 = scmp.eq.s32.totalorder %s14, 1
    %p31 = por %p29, %p30
    %p32 = scmp.ne.s32.totalorder %s24, %s27
    %p33 = scmp.eq.s32.totalorder %s14, 0
    %p34 = por %p32, %p33
    %p35 = scmp.ne.s32.totalorder %s24, %s27
    %p36 = scmp.eq.s32.totalorder %s19, 1
    %p37 = por %p35, %p36
    %p38 = scmp.ne.s32.totalorder %s27, %s28
    %p39 = scmp.eq.s32.totalorder %s19, 0
    %p40 = por %p38, %p39
    %p41 = scmp.ne.s32.totalorder %s27, %s28
    %p42 = scmp.eq.s32.totalorder %s20, 1
    %p43 = por %p41, %p42
    %p45 = scmp.ne.s32.totalorder %s28, %s44
    %p46 = scmp.eq.s32.totalorder %s20, 0
    %p47 = por %p45, %p46
    %s49 = sadd.s32 %s48, 1
    %p52 = scmp.eq.s32.totalorder %s14, 1
    %p53 = scmp.ne.s32.totalorder %s48, %s50
    %p54 = scmp.eq.s32.totalorder %s14, 0
    %p55 = por %p53, %p54
    %p56 = scmp.ne.s32.totalorder %s48, %s50
    %p57 = scmp.eq.s32.totalorder %s19, 1
    %p58 = por %p56, %p57
    %p59 = scmp.ne.s32.totalorder %s50, %s51
    %p60 = scmp.eq.s32.totalorder %s19, 0
    %p61 = por %p59, %p60
    %p62 = scmp.ne.s32.totalorder %s50, %s51
    %p63 = scmp.eq.s32.totalorder %s20, 1
    %p64 = por %p62, %p63
    %p66 = scmp.ne.s32.totalorder %s51, %s65
    %p67 = scmp.eq.s32.totalorder %s20, 0
    %p68 = por %p66, %p67
    %s70 = sadd.s32 %s69, 1
    %p73 = scmp.eq.s32.totalorder %s14, 1
    %p74 = scmp.ne.s32.totalorder %s69, %s71
    %p75 = scmp.eq.s32.totalorder %s14, 0
    %p76 = por %p74, %p75
    %p77 = scmp.ne.s32.totalorder %s69, %s71
    %p78 = scmp.eq.s32.totalorder %s19, 1
    %p79 = por %p77, %p78
    %p80 = scmp.ne.s32.totalorder %s71, %s72
    %p81 = scmp.eq.s32.totalorder %s19, 0
    %p82 = por %p80, %p81
    %p83 = scmp.ne.s32.totalorder %s71, %s72
    %p84 = scmp.eq.s32.totalorder %s20, 1
    %p85 = por %p83, %p84
    %p87 = scmp.ne.s32.totalorder %s72, %s86
    %p88 = scmp.eq.s32.totalorder %s20, 0
    %p89 = por %p87, %p88
    %s91 = sadd.s32 %s90, 1
    %p94 = scmp.eq.s32.totalorder %s14, 1
    %p95 = scmp.ne.s32.totalorder %s90, %s92
    %p96 = scmp.eq.s32.totalorder %s14, 0
    %p97 = por %p95, %p96
    %p98 = scmp.ne.s32.totalorder %s90, %s92
    %p99 = scmp.eq.s32.totalorder %s19, 1
    %p100 = por %p98, %p99
    %p101 = scmp.ne.s32.totalorder %s92, %s93
    %p102 = scmp.eq.s32.totalorder %s19, 0
    %p103 = por %p101, %p102
    %p104 = scmp.ne.s32.totalorder %s92, %s93
    %p105 = scmp.eq.s32.totalorder %s20, 1
    %p106 = por %p104, %p105
    %p108 = scmp.ne.s32.totalorder %s93, %s107
    %p109 = scmp.eq.s32.totalorder %s20, 0
    %p110 = por %p108, %p109
    %s111 = ssub.s32 %s14, %s21
    %p112 = scmp.eq.s32.totalorder %s111, 0
    %s114 = sadd.s32 %s113, 1
    %s115 = scalar_select %p112, %s113, %s114
    %p118 = pneg %p112
    %p119 = scmp.eq.s32.totalorder %s14, 1
    %p120 = por %p118, %p119
    %p121 = scmp.ne.s32.totalorder %s113, %s116
    %p122 = scmp.eq.s32.totalorder %s14, 0
    %p123 = por %p121, %p122
    %p124 = scmp.ne.s32.totalorder %s113, %s116
    %p125 = scmp.eq.s32.totalorder %s19, 1
    %p126 = por %p124, %p125
    %p127 = scmp.ne.s32.totalorder %s116, %s117
    %p128 = scmp.eq.s32.totalorder %s19, 0
    %p129 = por %p127, %p128
    %p130 = scmp.ne.s32.totalorder %s116, %s117
    %p131 = scmp.eq.s32.totalorder %s20, 1
    %p132 = por %p130, %p131
    %p134 = scmp.ne.s32.totalorder %s117, %s133
    %p135 = scmp.eq.s32.totalorder %s20, 0
    %p136 = por %p134, %p135
    %s137 = ssub.s32 %s14, %s21
    %p138 = scmp.eq.s32.totalorder %s137, 0
    %s140 = sadd.s32 %s139, 1
    %s141 = scalar_select %p138, %s139, %s140
    %p144 = pneg %p138
    %p145 = scmp.eq.s32.totalorder %s14, 1
    %p146 = por %p144, %p145
    %p147 = scmp.ne.s32.totalorder %s139, %s142
    %p148 = scmp.eq.s32.totalorder %s14, 0
    %p149 = por %p147, %p148
    %p150 = scmp.ne.s32.totalorder %s139, %s142
    %p151 = scmp.eq.s32.totalorder %s19, 1
    %p152 = por %p150, %p151
    %p153 = scmp.ne.s32.totalorder %s142, %s143
    %p154 = scmp.eq.s32.totalorder %s19, 0
    %p155 = por %p153, %p154
    %p156 = scmp.ne.s32.totalorder %s142, %s143
    %p157 = scmp.eq.s32.totalorder %s20, 1
    %p158 = por %p156, %p157
    %p160 = scmp.ne.s32.totalorder %s143, %s159
    %p161 = scmp.eq.s32.totalorder %s20, 0
    %p162 = por %p160, %p161
    %s163 = ssub.s32 %s14, %s21
    %p164 = scmp.eq.s32.totalorder %s163, 0
    %s166 = sadd.s32 %s165, 1
    %s167 = scalar_select %p164, %s165, %s166
    %p170 = pneg %p164
    %p171 = scmp.eq.s32.totalorder %s14, 1
    %p172 = por %p170, %p171
    %p173 = scmp.ne.s32.totalorder %s165, %s168
    %p174 = scmp.eq.s32.totalorder %s14, 0
    %p175 = por %p173, %p174
    %p176 = scmp.ne.s32.totalorder %s165, %s168
    %p177 = scmp.eq.s32.totalorder %s19, 1
    %p178 = por %p176, %p177
    %p179 = scmp.ne.s32.totalorder %s168, %s169
    %p180 = scmp.eq.s32.totalorder %s19, 0
    %p181 = por %p179, %p180
    %p182 = scmp.ne.s32.totalorder %s168, %s169
    %p183 = scmp.eq.s32.totalorder %s20, 1
    %p184 = por %p182, %p183
    %p186 = scmp.ne.s32.totalorder %s169, %s185
    %p187 = scmp.eq.s32.totalorder %s20, 0
    %p188 = por %p186, %p187
    %s189 = ssub.s32 %s14, %s21
    %p190 = scmp.eq.s32.totalorder %s189, 0
    %s192 = sadd.s32 %s191, 1
    %s193 = scalar_select %p190, %s191, %s192
    %p196 = pneg %p190
    %p197 = scmp.eq.s32.totalorder %s14, 1
    %p198 = por %p196, %p197
    %p199 = scmp.ne.s32.totalorder %s191, %s194
    %p200 = scmp.eq.s32.totalorder %s14, 0
    %p201 = por %p199, %p200
    %p202 = scmp.ne.s32.totalorder %s191, %s194
    %p203 = scmp.eq.s32.totalorder %s19, 1
    %p204 = por %p202, %p203
    %p205 = scmp.ne.s32.totalorder %s194, %s195
    %p206 = scmp.eq.s32.totalorder %s19, 0
    %p207 = por %p205, %p206
    %p208 = scmp.ne.s32.totalorder %s194, %s195
    %p209 = scmp.eq.s32.totalorder %s20, 1
    %p210 = por %p208, %p209
    %p212 = scmp.ne.s32.totalorder %s195, %s211
    %p213 = scmp.eq.s32.totalorder %s20, 0
    %p214 = por %p212, %p213
    %p215 = scmp.le.s32.totalorder 1, %s14
    %p216 = scmp.lt.s32.totalorder %s14, 3
    %p217 = pnand %p215, %p216
    %p218 = pneg %p217
    // Predicated region
    $region9: #{preact_block_forward.2} parent=5 // pred_check
      _
    $region10: #{preact_block_forward.2} parent=5 // pred_check_branch
      %220 = sbr.rel (%p217) target = $region12
    $region11: #{preact_block_forward.2} parent=5 // pred_region
      %s221 = ssub.s32 %s14, 1
      // Predicated region
      $region13: #{preact_block_forward.2} parent=11 // pred_check
        %p222 = pneg %p61
      $region14: #{preact_block_forward.2} parent=11 // pred_check_branch
        %224 = sbr.rel (%p222) target = $region16
      $region15: #{preact_block_forward.2} parent=11 // pred_region
        _
      $region16: #{preact_block_forward.2} parent=11 // pred_fallthru
        _
      // Predicated region
      $region17: #{preact_block_forward.2} parent=11 // pred_check
        %p225 = pneg %p82
      $region18: #{preact_block_forward.2} parent=11 // pred_check_branch
        %227 = sbr.rel (%p225) target = $region20
      $region19: #{preact_block_forward.2} parent=11 // pred_region
        _
      $region20: #{preact_block_forward.2} parent=11 // pred_fallthru
        _
      // Predicated region
      $region21: #{preact_block_forward.2} parent=11 // pred_check
        %p228 = pneg %p103
      $region22: #{preact_block_forward.2} parent=11 // pred_check_branch
        %230 = sbr.rel (%p228) target = $region24
      $region23: #{preact_block_forward.2} parent=11 // pred_region
        _
      $region24: #{preact_block_forward.2} parent=11 // pred_fallthru
        _
    $region12: #{preact_block_forward.2} parent=5 // pred_fallthru
      _
    %p231 = scmp.lt.s32.totalorder %s14, 2
    // Predicated region
    $region25: #{preact_block_forward.2} parent=5 // pred_check
      %p232 = pneg %p231
    $region26: #{preact_block_forward.2} parent=5 // pred_check_branch
      %234 = sbr.rel (%p232) target = $region28
    $region27: #{preact_block_forward.2} parent=5 // pred_region
      // Predicated region
      $region29: #{preact_block_forward.2} parent=27 // pred_check
        %p235 = pneg %p34
      $region30: #{preact_block_forward.2} parent=27 // pred_check_branch
        %237 = sbr.rel (%p235) target = $region32
      $region31: #{preact_block_forward.2} parent=27 // pred_region
        %p238 = scmp.lt.s32.totalorder %s14, 1
        %s239 = scalar_select %p238, %s14, 1
        %s240 = smul.addr %s239, 2
        %s241 = smul.addr %s240, 8
        %s242 = scalar_lea.vmem %s0, %s241
      $region32: #{preact_block_forward.2} parent=27 // pred_fallthru
        _
    $region28: #{preact_block_forward.2} parent=5 // pred_fallthru
      _
    %p243 = scmp.le.s32.totalorder 1, %s14
    %p244 = scmp.lt.s32.totalorder %s14, 3
    %p245 = pnand %p243, %p244
    %p246 = pneg %p245
    // Predicated region
    $region33: #{preact_block_forward.2} parent=5 // pred_check
      _
    $region34: #{preact_block_forward.2} parent=5 // pred_check_branch
      %248 = sbr.rel (%p245) target = $region36
    $region35: #{preact_block_forward.2} parent=5 // pred_region
      %s249 = ssub.s32 %s14, 1
      %p250 = scmp.lt.s32.totalorder %s19, 1
      %s251 = scalar_select %p250, %s19, 1
      %s252 = smul.addr %s251, 2
      %s253 = smul.addr %s252, 8
      %s254 = scalar_lea.vmem %s0, %s253
      %p255 = pneg %p40
      %p256 = pneg %p37
      %p257 = pneg %p61
      %p258 = pneg %p58
      %p259 = pneg %p82
      %p260 = pneg %p79
      %p261 = pneg %p103
      %p262 = pneg %p100
      %p263 = pneg %p129
      %p264 = pneg %p126
      %p265 = scmp.lt.s32.totalorder %s19, 1
      %s266 = scalar_select %p265, %s19, 1
      %s267 = smul.addr %s266, 2
      %s268 = smul.addr %s267, 8
      %s269 = scalar_lea.vmem %s4, %s268
      %p270 = pneg %p155
      %p271 = pneg %p152
      %p272 = scmp.lt.s32.totalorder %s19, 1
      %s273 = scalar_select %p272, %s19, 1
      %s274 = smul.addr %s273, 2
      %s275 = smul.addr %s274, 8
      %s276 = scalar_lea.vmem %s5, %s275
      %p277 = pneg %p181
      %p278 = pneg %p178
      %p279 = scmp.lt.s32.totalorder %s19, 1
      %s280 = scalar_select %p279, %s19, 1
      %s281 = scalar_lea.vmem %s6, %s280
      %p282 = pneg %p207
      %p283 = pneg %p204
      %p284 = scmp.lt.s32.totalorder %s19, 1
      %s285 = scalar_select %p284, %s19, 1
      %s286 = scalar_lea.vmem %s7, %s285
      %p287 = scmp.lt.s32.totalorder %s19, 1
      %s288 = scalar_select %p287, %s19, 1
      %s289 = smul.addr %s288, 2
      %s290 = smul.addr %s289, 8
      %s291 = scalar_lea.vmem %s0, %s290
      %p292 = scmp.lt.s32.totalorder %s19, 1
      %s293 = scalar_select %p292, %s19, 1
      %s294 = smul.addr %s293, 2
      %s295 = smul.addr %s294, 8
      %s296 = scalar_lea.vmem %s4, %s295
      %p297 = scmp.lt.s32.totalorder %s19, 1
      %s298 = scalar_select %p297, %s19, 1
      %s299 = smul.addr %s298, 2
      %s300 = smul.addr %s299, 8
      %s301 = scalar_lea.vmem %s5, %s300
      %p302 = scmp.lt.s32.totalorder %s19, 1
      %s303 = scalar_select %p302, %s19, 1
      %s304 = scalar_lea.vmem %s6, %s303
      %p305 = scmp.lt.s32.totalorder %s19, 1
      %s306 = scalar_select %p305, %s19, 1
      %s307 = scalar_lea.vmem %s7, %s306
      %v308 = vld [vmem:[%s291] sm:$0xff]
      %v309 = vld [vmem:[%s291 + $0x8] sm:$0xff]
      %v310 = vld [vmem:[%s1] sm:$0x1]
      %v312 = vlaneseq
      %v313 = vshrl.u32 %v312, 7
      %v314 = vsub.s32 0, %v313
      %v315 = vrot.slane %v310, %v314
      %v317 = vmul.f32 %v308, %v315
      %v318 = vmul.f32 %v309, %v315
      %v319 = vld [vmem:[%s2] sm:$0x1]
      %v321 = vlaneseq
      %v322 = vshrl.u32 %v321, 7
      %v323 = vsub.s32 0, %v322
      %v324 = vrot.slane %v319, %v323
      %v326 = vadd.f32 %v317, %v324
      %v327 = vadd.f32 %v318, %v324
      %v328 = vmax.f32 %v326, 0.0
      %v329 = vmax.f32 %v327, 0.0
      %v332 = vcombine.high %v328, %v328
      %v334 = vunpack.c.l.s4 1966171168
      %v335 = vunpack.c.0.s8 %v334
      %v336 = vlaneseq
      %v337 = vshrl.u32 %v336, 7
      %v338 = vsub.s32 %v335, %v337
      %v339 = vrot.slane %v328, %v338
      %v341 = vunpack.c.l.s4 1966171168
      %v342 = vunpack.c.0.s8 %v341
      %v343 = vlaneseq
      %v344 = vshrl.u32 %v343, 7
      %v345 = vsub.s32 %v342, %v344
      %v346 = vrot.slane %v332, %v345
      %v347 = vcombine.high %v339, %v339
      %v348 = vcombine.high %v346, %v346
      %v350 = vunpack.c.l.s4 1966171168
      %v351 = vunpack.c.0.s8 %v350
      %v352 = vlaneseq
      %v353 = vshrl.u32 %v352, 7
      %v354 = vsub.s32 %v351, %v353
      %v355 = vrot.slane %v339, %v354
      %v357 = vunpack.c.l.s4 1966171168
      %v358 = vunpack.c.0.s8 %v357
      %v359 = vlaneseq
      %v360 = vshrl.u32 %v359, 7
      %v361 = vsub.s32 %v358, %v360
      %v362 = vrot.slane %v346, %v361
      %v364 = vunpack.c.l.s4 1966171168
      %v365 = vunpack.c.0.s8 %v364
      %v366 = vlaneseq
      %v367 = vshrl.u32 %v366, 7
      %v368 = vsub.s32 %v365, %v367
      %v369 = vrot.slane %v347, %v368
      %v371 = vunpack.c.l.s4 1966171168
      %v372 = vunpack.c.0.s8 %v371
      %v373 = vlaneseq
      %v374 = vshrl.u32 %v373, 7
      %v375 = vsub.s32 %v372, %v374
      %v376 = vrot.slane %v348, %v375
      %v377 = vcombine.high %v355, %v355
      %v378 = vcombine.high %v362, %v362
      %v379 = vcombine.high %v369, %v369
      %v380 = vcombine.high %v376, %v376
      %v381 = vcombine.high %v329, %v329
      %v383 = vunpack.c.l.s4 1966171168
      %v384 = vunpack.c.0.s8 %v383
      %v385 = vlaneseq
      %v386 = vshrl.u32 %v385, 7
      %v387 = vsub.s32 %v384, %v386
      %v388 = vrot.slane %v329, %v387
      %v390 = vunpack.c.l.s4 1966171168
      %v391 = vunpack.c.0.s8 %v390
      %v392 = vlaneseq
      %v393 = vshrl.u32 %v392, 7
      %v394 = vsub.s32 %v391, %v393
      %v395 = vrot.slane %v381, %v394
      %v396 = vcombine.high %v388, %v388
      %v397 = vcombine.high %v395, %v395
      %v399 = vunpack.c.l.s4 1966171168
      %v400 = vunpack.c.0.s8 %v399
      %v401 = vlaneseq
      %v402 = vshrl.u32 %v401, 7
      %v403 = vsub.s32 %v400, %v402
      %v404 = vrot.slane %v388, %v403
      %v406 = vunpack.c.l.s4 1966171168
      %v407 = vunpack.c.0.s8 %v406
      %v408 = vlaneseq
      %v409 = vshrl.u32 %v408, 7
      %v410 = vsub.s32 %v407, %v409
      %v411 = vrot.slane %v395, %v410
      %v413 = vunpack.c.l.s4 1966171168
      %v414 = vunpack.c.0.s8 %v413
      %v415 = vlaneseq
      %v416 = vshrl.u32 %v415, 7
      %v417 = vsub.s32 %v414, %v416
      %v418 = vrot.slane %v396, %v417
      %v420 = vunpack.c.l.s4 1966171168
      %v421 = vunpack.c.0.s8 %v420
      %v422 = vlaneseq
      %v423 = vshrl.u32 %v422, 7
      %v424 = vsub.s32 %v421, %v423
      %v425 = vrot.slane %v397, %v424
      %v426 = vcombine.high %v404, %v404
      %v427 = vcombine.high %v411, %v411
      %v428 = vcombine.high %v418, %v418
      %v429 = vcombine.high %v425, %v425
      %v446 = vlaneseq
      %v447 = vshrl.u32 %v446, 7
      %v448 = vsub.s32 0, %v447
      %v449 = vrot.slane %v355, %v448
      %v450 = vlaneseq
      %v451 = vshrl.u32 %v450, 7
      %v452 = vsub.s32 0, %v451
      %v453 = vrot.slane %v369, %v452
      %v454 = vlaneseq
      %v455 = vshrl.u32 %v454, 7
      %v456 = vsub.s32 0, %v455
      %v457 = vrot.slane %v377, %v456
      %v458 = vlaneseq
      %v459 = vshrl.u32 %v458, 7
      %v460 = vsub.s32 0, %v459
      %v461 = vrot.slane %v379, %v460
      %v462 = vlaneseq
      %v463 = vshrl.u32 %v462, 7
      %v464 = vsub.s32 0, %v463
      %v465 = vrot.slane %v362, %v464
      %v466 = vlaneseq
      %v467 = vshrl.u32 %v466, 7
      %v468 = vsub.s32 0, %v467
      %v469 = vrot.slane %v376, %v468
      %v470 = vlaneseq
      %v471 = vshrl.u32 %v470, 7
      %v472 = vsub.s32 0, %v471
      %v473 = vrot.slane %v378, %v472
      %v474 = vlaneseq
      %v475 = vshrl.u32 %v474, 7
      %v476 = vsub.s32 0, %v475
      %v477 = vrot.slane %v380, %v476
      %v478 = vlaneseq
      %v479 = vshrl.u32 %v478, 7
      %v480 = vsub.s32 0, %v479
      %v481 = vrot.slane %v404, %v480
      %v482 = vlaneseq
      %v483 = vshrl.u32 %v482, 7
      %v484 = vsub.s32 0, %v483
      %v485 = vrot.slane %v418, %v484
      %v486 = vlaneseq
      %v487 = vshrl.u32 %v486, 7
      %v488 = vsub.s32 0, %v487
      %v489 = vrot.slane %v426, %v488
      %v490 = vlaneseq
      %v491 = vshrl.u32 %v490, 7
      %v492 = vsub.s32 0, %v491
      %v493 = vrot.slane %v428, %v492
      %v494 = vlaneseq
      %v495 = vshrl.u32 %v494, 7
      %v496 = vsub.s32 0, %v495
      %v497 = vrot.slane %v411, %v496
      %v498 = vlaneseq
      %v499 = vshrl.u32 %v498, 7
      %v500 = vsub.s32 0, %v499
      %v501 = vrot.slane %v425, %v500
      %v502 = vlaneseq
      %v503 = vshrl.u32 %v502, 7
      %v504 = vsub.s32 0, %v503
      %v505 = vrot.slane %v427, %v504
      %v506 = vlaneseq
      %v507 = vshrl.u32 %v506, 7
      %v508 = vsub.s32 0, %v507
      %v509 = vrot.slane %v429, %v508
      %510 = vrot.lane.b32.xlu0 %v449, 124
      %v511 = vpop.permute.xlu0 %510
      %512 = vrot.lane.b32.xlu0 %v453, 124
      %v513 = vpop.permute.xlu0 %512
      %514 = vrot.lane.b32.xlu0 %v457, 124
      %v515 = vpop.permute.xlu0 %514
      %516 = vrot.lane.b32.xlu0 %v461, 124
      %v517 = vpop.permute.xlu0 %516
      %518 = vrot.lane.b32.xlu0 %v465, 124
      %v519 = vpop.permute.xlu0 %518
      %520 = vrot.lane.b32.xlu0 %v469, 124
      %v521 = vpop.permute.xlu0 %520
      %522 = vrot.lane.b32.xlu0 %v473, 124
      %v523 = vpop.permute.xlu0 %522
      %524 = vrot.lane.b32.xlu0 %v477, 124
      %v525 = vpop.permute.xlu0 %524
      %526 = vrot.lane.b32.xlu0 %v481, 124
      %v527 = vpop.permute.xlu0 %526
      %528 = vrot.lane.b32.xlu0 %v485, 124
      %v529 = vpop.permute.xlu0 %528
      %530 = vrot.lane.b32.xlu0 %v489, 124
      %v531 = vpop.permute.xlu0 %530
      %532 = vrot.lane.b32.xlu0 %v493, 124
      %v533 = vpop.permute.xlu0 %532
      %534 = vrot.lane.b32.xlu0 %v497, 124
      %v535 = vpop.permute.xlu0 %534
      %536 = vrot.lane.b32.xlu0 %v501, 124
      %v537 = vpop.permute.xlu0 %536
      %538 = vrot.lane.b32.xlu0 %v505, 124
      %v539 = vpop.permute.xlu0 %538
      %540 = vrot.lane.b32.xlu0 %v509, 124
      %v541 = vpop.permute.xlu0 %540
      %558 = vrot.lane.b32.xlu0 %v449, 120
      %v559 = vpop.permute.xlu0 %558
      %560 = vrot.lane.b32.xlu0 %v453, 120
      %v561 = vpop.permute.xlu0 %560
      %562 = vrot.lane.b32.xlu0 %v457, 120
      %v563 = vpop.permute.xlu0 %562
      %564 = vrot.lane.b32.xlu0 %v461, 120
      %v565 = vpop.permute.xlu0 %564
      %566 = vrot.lane.b32.xlu0 %v465, 120
      %v567 = vpop.permute.xlu0 %566
      %568 = vrot.lane.b32.xlu0 %v469, 120
      %v569 = vpop.permute.xlu0 %568
      %570 = vrot.lane.b32.xlu0 %v473, 120
      %v571 = vpop.permute.xlu0 %570
      %572 = vrot.lane.b32.xlu0 %v477, 120
      %v573 = vpop.permute.xlu0 %572
      %574 = vrot.lane.b32.xlu0 %v481, 120
      %v575 = vpop.permute.xlu0 %574
      %576 = vrot.lane.b32.xlu0 %v485, 120
      %v577 = vpop.permute.xlu0 %576
      %578 = vrot.lane.b32.xlu0 %v489, 120
      %v579 = vpop.permute.xlu0 %578
      %580 = vrot.lane.b32.xlu0 %v493, 120
      %v581 = vpop.permute.xlu0 %580
      %582 = vrot.lane.b32.xlu0 %v497, 120
      %v583 = vpop.permute.xlu0 %582
      %584 = vrot.lane.b32.xlu0 %v501, 120
      %v585 = vpop.permute.xlu0 %584
      %586 = vrot.lane.b32.xlu0 %v505, 120
      %v587 = vpop.permute.xlu0 %586
      %588 = vrot.lane.b32.xlu0 %v509, 120
      %v589 = vpop.permute.xlu0 %588
      %606 = vrot.lane.b32.xlu0 %v449, 116
      %v607 = vpop.permute.xlu0 %606
      %608 = vrot.lane.b32.xlu0 %v453, 116
      %v609 = vpop.permute.xlu0 %608
      %610 = vrot.lane.b32.xlu0 %v457, 116
      %v611 = vpop.permute.xlu0 %610
      %612 = vrot.lane.b32.xlu0 %v461, 116
      %v613 = vpop.permute.xlu0 %612
      %614 = vrot.lane.b32.xlu0 %v465, 116
      %v615 = vpop.permute.xlu0 %614
      %616 = vrot.lane.b32.xlu0 %v469, 116
      %v617 = vpop.permute.xlu0 %616
      %618 = vrot.lane.b32.xlu0 %v473, 116
      %v619 = vpop.permute.xlu0 %618
      %620 = vrot.lane.b32.xlu0 %v477, 116
      %v621 = vpop.permute.xlu0 %620
      %622 = vrot.lane.b32.xlu0 %v481, 116
      %v623 = vpop.permute.xlu0 %622
      %624 = vrot.lane.b32.xlu0 %v485, 116
      %v625 = vpop.permute.xlu0 %624
      %626 = vrot.lane.b32.xlu0 %v489, 116
      %v627 = vpop.permute.xlu0 %626
      %628 = vrot.lane.b32.xlu0 %v493, 116
      %v629 = vpop.permute.xlu0 %628
      %630 = vrot.lane.b32.xlu0 %v497, 116
      %v631 = vpop.permute.xlu0 %630
      %632 = vrot.lane.b32.xlu0 %v501, 116
      %v633 = vpop.permute.xlu0 %632
      %634 = vrot.lane.b32.xlu0 %v505, 116
      %v635 = vpop.permute.xlu0 %634
      %636 = vrot.lane.b32.xlu0 %v509, 116
      %v637 = vpop.permute.xlu0 %636
      %654 = vrot.lane.b32.xlu0 %v449, 112
      %v655 = vpop.permute.xlu0 %654
      %656 = vrot.lane.b32.xlu0 %v453, 112
      %v657 = vpop.permute.xlu0 %656
      %658 = vrot.lane.b32.xlu0 %v457, 112
      %v659 = vpop.permute.xlu0 %658
      %660 = vrot.lane.b32.xlu0 %v461, 112
      %v661 = vpop.permute.xlu0 %660
      %662 = vrot.lane.b32.xlu0 %v465, 112
      %v663 = vpop.permute.xlu0 %662
      %664 = vrot.lane.b32.xlu0 %v469, 112
      %v665 = vpop.permute.xlu0 %664
      %666 = vrot.lane.b32.xlu0 %v473, 112
      %v667 = vpop.permute.xlu0 %666
      %668 = vrot.lane.b32.xlu0 %v477, 112
      %v669 = vpop.permute.xlu0 %668
      %670 = vrot.lane.b32.xlu0 %v481, 112
      %v671 = vpop.permute.xlu0 %670
      %672 = vrot.lane.b32.xlu0 %v485, 112
      %v673 = vpop.permute.xlu0 %672
      %674 = vrot.lane.b32.xlu0 %v489, 112
      %v675 = vpop.permute.xlu0 %674
      %676 = vrot.lane.b32.xlu0 %v493, 112
      %v677 = vpop.permute.xlu0 %676
      %678 = vrot.lane.b32.xlu0 %v497, 112
      %v679 = vpop.permute.xlu0 %678
      %680 = vrot.lane.b32.xlu0 %v501, 112
      %v681 = vpop.permute.xlu0 %680
      %682 = vrot.lane.b32.xlu0 %v505, 112
      %v683 = vpop.permute.xlu0 %682
      %684 = vrot.lane.b32.xlu0 %v509, 112
      %v685 = vpop.permute.xlu0 %684
      %702 = vrot.lane.b32.xlu0 %v449, 108
      %v703 = vpop.permute.xlu0 %702
      %704 = vrot.lane.b32.xlu0 %v453, 108
      %v705 = vpop.permute.xlu0 %704
      %706 = vrot.lane.b32.xlu0 %v457, 108
      %v707 = vpop.permute.xlu0 %706
      %708 = vrot.lane.b32.xlu0 %v461, 108
      %v709 = vpop.permute.xlu0 %708
      %710 = vrot.lane.b32.xlu0 %v465, 108
      %v711 = vpop.permute.xlu0 %710
      %712 = vrot.lane.b32.xlu0 %v469, 108
      %v713 = vpop.permute.xlu0 %712
      %714 = vrot.lane.b32.xlu0 %v473, 108
      %v715 = vpop.permute.xlu0 %714
      %716 = vrot.lane.b32.xlu0 %v477, 108
      %v717 = vpop.permute.xlu0 %716
      %718 = vrot.lane.b32.xlu0 %v481, 108
      %v719 = vpop.permute.xlu0 %718
      %720 = vrot.lane.b32.xlu0 %v485, 108
      %v721 = vpop.permute.xlu0 %720
      %722 = vrot.lane.b32.xlu0 %v489, 108
      %v723 = vpop.permute.xlu0 %722
      %724 = vrot.lane.b32.xlu0 %v493, 108
      %v725 = vpop.permute.xlu0 %724
      %726 = vrot.lane.b32.xlu0 %v497, 108
      %v727 = vpop.permute.xlu0 %726
      %728 = vrot.lane.b32.xlu0 %v501, 108
      %v729 = vpop.permute.xlu0 %728
      %730 = vrot.lane.b32.xlu0 %v505, 108
      %v731 = vpop.permute.xlu0 %730
      %732 = vrot.lane.b32.xlu0 %v509, 108
      %v733 = vpop.permute.xlu0 %732
      %750 = vrot.lane.b32.xlu0 %v449, 104
      %v751 = vpop.permute.xlu0 %750
      %752 = vrot.lane.b32.xlu0 %v453, 104
      %v753 = vpop.permute.xlu0 %752
      %754 = vrot.lane.b32.xlu0 %v457, 104
      %v755 = vpop.permute.xlu0 %754
      %756 = vrot.lane.b32.xlu0 %v461, 104
      %v757 = vpop.permute.xlu0 %756
      %758 = vrot.lane.b32.xlu0 %v465, 104
      %v759 = vpop.permute.xlu0 %758
      %760 = vrot.lane.b32.xlu0 %v469, 104
      %v761 = vpop.permute.xlu0 %760
      %762 = vrot.lane.b32.xlu0 %v473, 104
      %v763 = vpop.permute.xlu0 %762
      %764 = vrot.lane.b32.xlu0 %v477, 104
      %v765 = vpop.permute.xlu0 %764
      %766 = vrot.lane.b32.xlu0 %v481, 104
      %v767 = vpop.permute.xlu0 %766
      %768 = vrot.lane.b32.xlu0 %v485, 104
      %v769 = vpop.permute.xlu0 %768
      %770 = vrot.lane.b32.xlu0 %v489, 104
      %v771 = vpop.permute.xlu0 %770
      %772 = vrot.lane.b32.xlu0 %v493, 104
      %v773 = vpop.permute.xlu0 %772
      %774 = vrot.lane.b32.xlu0 %v497, 104
      %v775 = vpop.permute.xlu0 %774
      %776 = vrot.lane.b32.xlu0 %v501, 104
      %v777 = vpop.permute.xlu0 %776
      %778 = vrot.lane.b32.xlu0 %v505, 104
      %v779 = vpop.permute.xlu0 %778
      %780 = vrot.lane.b32.xlu0 %v509, 104
      %v781 = vpop.permute.xlu0 %780
      %798 = vrot.lane.b32.xlu0 %v449, 100
      %v799 = vpop.permute.xlu0 %798
      %800 = vrot.lane.b32.xlu0 %v453, 100
      %v801 = vpop.permute.xlu0 %800
      %802 = vrot.lane.b32.xlu0 %v457, 100
      %v803 = vpop.permute.xlu0 %802
      %804 = vrot.lane.b32.xlu0 %v461, 100
      %v805 = vpop.permute.xlu0 %804
      %806 = vrot.lane.b32.xlu0 %v465, 100
      %v807 = vpop.permute.xlu0 %806
      %808 = vrot.lane.b32.xlu0 %v469, 100
      %v809 = vpop.permute.xlu0 %808
      %810 = vrot.lane.b32.xlu0 %v473, 100
      %v811 = vpop.permute.xlu0 %810
      %812 = vrot.lane.b32.xlu0 %v477, 100
      %v813 = vpop.permute.xlu0 %812
      %814 = vrot.lane.b32.xlu0 %v481, 100
      %v815 = vpop.permute.xlu0 %814
      %816 = vrot.lane.b32.xlu0 %v485, 100
      %v817 = vpop.permute.xlu0 %816
      %818 = vrot.lane.b32.xlu0 %v489, 100
      %v819 = vpop.permute.xlu0 %818
      %820 = vrot.lane.b32.xlu0 %v493, 100
      %v821 = vpop.permute.xlu0 %820
      %822 = vrot.lane.b32.xlu0 %v497, 100
      %v823 = vpop.permute.xlu0 %822
      %824 = vrot.lane.b32.xlu0 %v501, 100
      %v825 = vpop.permute.xlu0 %824
      %826 = vrot.lane.b32.xlu0 %v505, 100
      %v827 = vpop.permute.xlu0 %826
      %828 = vrot.lane.b32.xlu0 %v509, 100
      %v829 = vpop.permute.xlu0 %828
      %846 = vrot.lane.b32.xlu0 %v449, 96
      %v847 = vpop.permute.xlu0 %846
      %848 = vrot.lane.b32.xlu0 %v453, 96
      %v849 = vpop.permute.xlu0 %848
      %850 = vrot.lane.b32.xlu0 %v457, 96
      %v851 = vpop.permute.xlu0 %850
      %852 = vrot.lane.b32.xlu0 %v461, 96
      %v853 = vpop.permute.xlu0 %852
      %854 = vrot.lane.b32.xlu0 %v465, 96
      %v855 = vpop.permute.xlu0 %854
      %856 = vrot.lane.b32.xlu0 %v469, 96
      %v857 = vpop.permute.xlu0 %856
      %858 = vrot.lane.b32.xlu0 %v473, 96
      %v859 = vpop.permute.xlu0 %858
      %860 = vrot.lane.b32.xlu0 %v477, 96
      %v861 = vpop.permute.xlu0 %860
      %862 = vrot.lane.b32.xlu0 %v481, 96
      %v863 = vpop.permute.xlu0 %862
      %864 = vrot.lane.b32.xlu0 %v485, 96
      %v865 = vpop.permute.xlu0 %864
      %866 = vrot.lane.b32.xlu0 %v489, 96
      %v867 = vpop.permute.xlu0 %866
      %868 = vrot.lane.b32.xlu0 %v493, 96
      %v869 = vpop.permute.xlu0 %868
      %870 = vrot.lane.b32.xlu0 %v497, 96
      %v871 = vpop.permute.xlu0 %870
      %872 = vrot.lane.b32.xlu0 %v501, 96
      %v873 = vpop.permute.xlu0 %872
      %874 = vrot.lane.b32.xlu0 %v505, 96
      %v875 = vpop.permute.xlu0 %874
      %876 = vrot.lane.b32.xlu0 %v509, 96
      %v877 = vpop.permute.xlu0 %876
      %894 = vrot.lane.b32.xlu0 %v449, 92
      %v895 = vpop.permute.xlu0 %894
      %896 = vrot.lane.b32.xlu0 %v453, 92
      %v897 = vpop.permute.xlu0 %896
      %898 = vrot.lane.b32.xlu0 %v457, 92
      %v899 = vpop.permute.xlu0 %898
      %900 = vrot.lane.b32.xlu0 %v461, 92
      %v901 = vpop.permute.xlu0 %900
      %902 = vrot.lane.b32.xlu0 %v465, 92
      %v903 = vpop.permute.xlu0 %902
      %904 = vrot.lane.b32.xlu0 %v469, 92
      %v905 = vpop.permute.xlu0 %904
      %906 = vrot.lane.b32.xlu0 %v473, 92
      %v907 = vpop.permute.xlu0 %906
      %908 = vrot.lane.b32.xlu0 %v477, 92
      %v909 = vpop.permute.xlu0 %908
      %910 = vrot.lane.b32.xlu0 %v481, 92
      %v911 = vpop.permute.xlu0 %910
      %912 = vrot.lane.b32.xlu0 %v485, 92
      %v913 = vpop.permute.xlu0 %912
      %914 = vrot.lane.b32.xlu0 %v489, 92
      %v915 = vpop.permute.xlu0 %914
      %916 = vrot.lane.b32.xlu0 %v493, 92
      %v917 = vpop.permute.xlu0 %916
      %918 = vrot.lane.b32.xlu0 %v497, 92
      %v919 = vpop.permute.xlu0 %918
      %920 = vrot.lane.b32.xlu0 %v501, 92
      %v921 = vpop.permute.xlu0 %920
      %922 = vrot.lane.b32.xlu0 %v505, 92
      %v923 = vpop.permute.xlu0 %922
      %924 = vrot.lane.b32.xlu0 %v509, 92
      %v925 = vpop.permute.xlu0 %924
      %942 = vrot.lane.b32.xlu0 %v449, 88
      %v943 = vpop.permute.xlu0 %942
      %944 = vrot.lane.b32.xlu0 %v453, 88
      %v945 = vpop.permute.xlu0 %944
      %946 = vrot.lane.b32.xlu0 %v457, 88
      %v947 = vpop.permute.xlu0 %946
      %948 = vrot.lane.b32.xlu0 %v461, 88
      %v949 = vpop.permute.xlu0 %948
      %950 = vrot.lane.b32.xlu0 %v465, 88
      %v951 = vpop.permute.xlu0 %950
      %952 = vrot.lane.b32.xlu0 %v469, 88
      %v953 = vpop.permute.xlu0 %952
      %954 = vrot.lane.b32.xlu0 %v473, 88
      %v955 = vpop.permute.xlu0 %954
      %956 = vrot.lane.b32.xlu0 %v477, 88
      %v957 = vpop.permute.xlu0 %956
      %958 = vrot.lane.b32.xlu0 %v481, 88
      %v959 = vpop.permute.xlu0 %958
      %960 = vrot.lane.b32.xlu0 %v485, 88
      %v961 = vpop.permute.xlu0 %960
      %962 = vrot.lane.b32.xlu0 %v489, 88
      %v963 = vpop.permute.xlu0 %962
      %964 = vrot.lane.b32.xlu0 %v493, 88
      %v965 = vpop.permute.xlu0 %964
      %966 = vrot.lane.b32.xlu0 %v497, 88
      %v967 = vpop.permute.xlu0 %966
      %968 = vrot.lane.b32.xlu0 %v501, 88
      %v969 = vpop.permute.xlu0 %968
      %970 = vrot.lane.b32.xlu0 %v505, 88
      %v971 = vpop.permute.xlu0 %970
      %972 = vrot.lane.b32.xlu0 %v509, 88
      %v973 = vpop.permute.xlu0 %972
      %990 = vrot.lane.b32.xlu0 %v449, 84
      %v991 = vpop.permute.xlu0 %990
      %992 = vrot.lane.b32.xlu0 %v453, 84
      %v993 = vpop.permute.xlu0 %992
      %994 = vrot.lane.b32.xlu0 %v457, 84
      %v995 = vpop.permute.xlu0 %994
      %996 = vrot.lane.b32.xlu0 %v461, 84
      %v997 = vpop.permute.xlu0 %996
      %998 = vrot.lane.b32.xlu0 %v465, 84
      %v999 = vpop.permute.xlu0 %998
      %1000 = vrot.lane.b32.xlu0 %v469, 84
      %v1001 = vpop.permute.xlu0 %1000
      %1002 = vrot.lane.b32.xlu0 %v473, 84
      %v1003 = vpop.permute.xlu0 %1002
      %1004 = vrot.lane.b32.xlu0 %v477, 84
      %v1005 = vpop.permute.xlu0 %1004
      %1006 = vrot.lane.b32.xlu0 %v481, 84
      %v1007 = vpop.permute.xlu0 %1006
      %1008 = vrot.lane.b32.xlu0 %v485, 84
      %v1009 = vpop.permute.xlu0 %1008
      %1010 = vrot.lane.b32.xlu0 %v489, 84
      %v1011 = vpop.permute.xlu0 %1010
      %1012 = vrot.lane.b32.xlu0 %v493, 84
      %v1013 = vpop.permute.xlu0 %1012
      %1014 = vrot.lane.b32.xlu0 %v497, 84
      %v1015 = vpop.permute.xlu0 %1014
      %1016 = vrot.lane.b32.xlu0 %v501, 84
      %v1017 = vpop.permute.xlu0 %1016
      %1018 = vrot.lane.b32.xlu0 %v505, 84
      %v1019 = vpop.permute.xlu0 %1018
      %1020 = vrot.lane.b32.xlu0 %v509, 84
      %v1021 = vpop.permute.xlu0 %1020
      %1038 = vrot.lane.b32.xlu0 %v449, 80
      %v1039 = vpop.permute.xlu0 %1038
      %1040 = vrot.lane.b32.xlu0 %v453, 80
      %v1041 = vpop.permute.xlu0 %1040
      %1042 = vrot.lane.b32.xlu0 %v457, 80
      %v1043 = vpop.permute.xlu0 %1042
      %1044 = vrot.lane.b32.xlu0 %v461, 80
      %v1045 = vpop.permute.xlu0 %1044
      %1046 = vrot.lane.b32.xlu0 %v465, 80
      %v1047 = vpop.permute.xlu0 %1046
      %1048 = vrot.lane.b32.xlu0 %v469, 80
      %v1049 = vpop.permute.xlu0 %1048
      %1050 = vrot.lane.b32.xlu0 %v473, 80
      %v1051 = vpop.permute.xlu0 %1050
      %1052 = vrot.lane.b32.xlu0 %v477, 80
      %v1053 = vpop.permute.xlu0 %1052
      %1054 = vrot.lane.b32.xlu0 %v481, 80
      %v1055 = vpop.permute.xlu0 %1054
      %1056 = vrot.lane.b32.xlu0 %v485, 80
      %v1057 = vpop.permute.xlu0 %1056
      %1058 = vrot.lane.b32.xlu0 %v489, 80
      %v1059 = vpop.permute.xlu0 %1058
      %1060 = vrot.lane.b32.xlu0 %v493, 80
      %v1061 = vpop.permute.xlu0 %1060
      %1062 = vrot.lane.b32.xlu0 %v497, 80
      %v1063 = vpop.permute.xlu0 %1062
      %1064 = vrot.lane.b32.xlu0 %v501, 80
      %v1065 = vpop.permute.xlu0 %1064
      %1066 = vrot.lane.b32.xlu0 %v505, 80
      %v1067 = vpop.permute.xlu0 %1066
      %1068 = vrot.lane.b32.xlu0 %v509, 80
      %v1069 = vpop.permute.xlu0 %1068
      %1086 = vrot.lane.b32.xlu0 %v449, 76
      %v1087 = vpop.permute.xlu0 %1086
      %1088 = vrot.lane.b32.xlu0 %v453, 76
      %v1089 = vpop.permute.xlu0 %1088
      %1090 = vrot.lane.b32.xlu0 %v457, 76
      %v1091 = vpop.permute.xlu0 %1090
      %1092 = vrot.lane.b32.xlu0 %v461, 76
      %v1093 = vpop.permute.xlu0 %1092
      %1094 = vrot.lane.b32.xlu0 %v465, 76
      %v1095 = vpop.permute.xlu0 %1094
      %1096 = vrot.lane.b32.xlu0 %v469, 76
      %v1097 = vpop.permute.xlu0 %1096
      %1098 = vrot.lane.b32.xlu0 %v473, 76
      %v1099 = vpop.permute.xlu0 %1098
      %1100 = vrot.lane.b32.xlu0 %v477, 76
      %v1101 = vpop.permute.xlu0 %1100
      %1102 = vrot.lane.b32.xlu0 %v481, 76
      %v1103 = vpop.permute.xlu0 %1102
      %1104 = vrot.lane.b32.xlu0 %v485, 76
      %v1105 = vpop.permute.xlu0 %1104
      %1106 = vrot.lane.b32.xlu0 %v489, 76
      %v1107 = vpop.permute.xlu0 %1106
      %1108 = vrot.lane.b32.xlu0 %v493, 76
      %v1109 = vpop.permute.xlu0 %1108
      %1110 = vrot.lane.b32.xlu0 %v497, 76
      %v1111 = vpop.permute.xlu0 %1110
      %1112 = vrot.lane.b32.xlu0 %v501, 76
      %v1113 = vpop.permute.xlu0 %1112
      %1114 = vrot.lane.b32.xlu0 %v505, 76
      %v1115 = vpop.permute.xlu0 %1114
      %1116 = vrot.lane.b32.xlu0 %v509, 76
      %v1117 = vpop.permute.xlu0 %1116
      %1134 = vrot.lane.b32.xlu0 %v449, 72
      %v1135 = vpop.permute.xlu0 %1134
      %1136 = vrot.lane.b32.xlu0 %v453, 72
      %v1137 = vpop.permute.xlu0 %1136
      %1138 = vrot.lane.b32.xlu0 %v457, 72
      %v1139 = vpop.permute.xlu0 %1138
      %1140 = vrot.lane.b32.xlu0 %v461, 72
      %v1141 = vpop.permute.xlu0 %1140
      %1142 = vrot.lane.b32.xlu0 %v465, 72
      %v1143 = vpop.permute.xlu0 %1142
      %1144 = vrot.lane.b32.xlu0 %v469, 72
      %v1145 = vpop.permute.xlu0 %1144
      %1146 = vrot.lane.b32.xlu0 %v473, 72
      %v1147 = vpop.permute.xlu0 %1146
      %1148 = vrot.lane.b32.xlu0 %v477, 72
      %v1149 = vpop.permute.xlu0 %1148
      %1150 = vrot.lane.b32.xlu0 %v481, 72
      %v1151 = vpop.permute.xlu0 %1150
      %1152 = vrot.lane.b32.xlu0 %v485, 72
      %v1153 = vpop.permute.xlu0 %1152
      %1154 = vrot.lane.b32.xlu0 %v489, 72
      %v1155 = vpop.permute.xlu0 %1154
      %1156 = vrot.lane.b32.xlu0 %v493, 72
      %v1157 = vpop.permute.xlu0 %1156
      %1158 = vrot.lane.b32.xlu0 %v497, 72
      %v1159 = vpop.permute.xlu0 %1158
      %1160 = vrot.lane.b32.xlu0 %v501, 72
      %v1161 = vpop.permute.xlu0 %1160
      %1162 = vrot.lane.b32.xlu0 %v505, 72
      %v1163 = vpop.permute.xlu0 %1162
      %1164 = vrot.lane.b32.xlu0 %v509, 72
      %v1165 = vpop.permute.xlu0 %1164
      %1182 = vrot.lane.b32.xlu0 %v449, 68
      %v1183 = vpop.permute.xlu0 %1182
      %1184 = vrot.lane.b32.xlu0 %v453, 68
      %v1185 = vpop.permute.xlu0 %1184
      %1186 = vrot.lane.b32.xlu0 %v457, 68
      %v1187 = vpop.permute.xlu0 %1186
      %1188 = vrot.lane.b32.xlu0 %v461, 68
      %v1189 = vpop.permute.xlu0 %1188
      %1190 = vrot.lane.b32.xlu0 %v465, 68
      %v1191 = vpop.permute.xlu0 %1190
      %1192 = vrot.lane.b32.xlu0 %v469, 68
      %v1193 = vpop.permute.xlu0 %1192
      %1194 = vrot.lane.b32.xlu0 %v473, 68
      %v1195 = vpop.permute.xlu0 %1194
      %1196 = vrot.lane.b32.xlu0 %v477, 68
      %v1197 = vpop.permute.xlu0 %1196
      %1198 = vrot.lane.b32.xlu0 %v481, 68
      %v1199 = vpop.permute.xlu0 %1198
      %1200 = vrot.lane.b32.xlu0 %v485, 68
      %v1201 = vpop.permute.xlu0 %1200
      %1202 = vrot.lane.b32.xlu0 %v489, 68
      %v1203 = vpop.permute.xlu0 %1202
      %1204 = vrot.lane.b32.xlu0 %v493, 68
      %v1205 = vpop.permute.xlu0 %1204
      %1206 = vrot.lane.b32.xlu0 %v497, 68
      %v1207 = vpop.permute.xlu0 %1206
      %1208 = vrot.lane.b32.xlu0 %v501, 68
      %v1209 = vpop.permute.xlu0 %1208
      %1210 = vrot.lane.b32.xlu0 %v505, 68
      %v1211 = vpop.permute.xlu0 %1210
      %1212 = vrot.lane.b32.xlu0 %v509, 68
      %v1213 = vpop.permute.xlu0 %1212
      %vm1230 = vcmask 1040384
      %v1231 = vsel %vm1230, %v355, %v511
      %v1232 = vsel %vm1230, %v369, %v513
      %v1233 = vsel %vm1230, %v377, %v515
      %v1234 = vsel %vm1230, %v379, %v517
      %v1235 = vsel %vm1230, %v362, %v519
      %v1236 = vsel %vm1230, %v376, %v521
      %v1237 = vsel %vm1230, %v378, %v523
      %v1238 = vsel %vm1230, %v380, %v525
      %v1239 = vsel %vm1230, %v404, %v527
      %v1240 = vsel %vm1230, %v418, %v529
      %v1241 = vsel %vm1230, %v426, %v531
      %v1242 = vsel %vm1230, %v428, %v533
      %v1243 = vsel %vm1230, %v411, %v535
      %v1244 = vsel %vm1230, %v425, %v537
      %v1245 = vsel %vm1230, %v427, %v539
      %v1246 = vsel %vm1230, %v429, %v541
      %vm1247 = vcmask 1041408
      %v1248 = vsel %vm1247, %v1231, %v559
      %v1249 = vsel %vm1247, %v1232, %v561
      %v1250 = vsel %vm1247, %v1233, %v563
      %v1251 = vsel %vm1247, %v1234, %v565
      %v1252 = vsel %vm1247, %v1235, %v567
      %v1253 = vsel %vm1247, %v1236, %v569
      %v1254 = vsel %vm1247, %v1237, %v571
      %v1255 = vsel %vm1247, %v1238, %v573
      %v1256 = vsel %vm1247, %v1239, %v575
      %v1257 = vsel %vm1247, %v1240, %v577
      %v1258 = vsel %vm1247, %v1241, %v579
      %v1259 = vsel %vm1247, %v1242, %v581
      %v1260 = vsel %vm1247, %v1243, %v583
      %v1261 = vsel %vm1247, %v1244, %v585
      %v1262 = vsel %vm1247, %v1245, %v587
      %v1263 = vsel %vm1247, %v1246, %v589
      %vm1264 = vcmask 1042432
      %v1265 = vsel %vm1264, %v1248, %v607
      %v1266 = vsel %vm1264, %v1249, %v609
      %v1267 = vsel %vm1264, %v1250, %v611
      %v1268 = vsel %vm1264, %v1251, %v613
      %v1269 = vsel %vm1264, %v1252, %v615
      %v1270 = vsel %vm1264, %v1253, %v617
      %v1271 = vsel %vm1264, %v1254, %v619
      %v1272 = vsel %vm1264, %v1255, %v621
      %v1273 = vsel %vm1264, %v1256, %v623
      %v1274 = vsel %vm1264, %v1257, %v625
      %v1275 = vsel %vm1264, %v1258, %v627
      %v1276 = vsel %vm1264, %v1259, %v629
      %v1277 = vsel %vm1264, %v1260, %v631
      %v1278 = vsel %vm1264, %v1261, %v633
      %v1279 = vsel %vm1264, %v1262, %v635
      %v1280 = vsel %vm1264, %v1263, %v637
      %vm1281 = vcmask 1043456
      %v1282 = vsel %vm1281, %v1265, %v655
      %v1283 = vsel %vm1281, %v1266, %v657
      %v1284 = vsel %vm1281, %v1267, %v659
      %v1285 = vsel %vm1281, %v1268, %v661
      %v1286 = vsel %vm1281, %v1269, %v663
      %v1287 = vsel %vm1281, %v1270, %v665
      %v1288 = vsel %vm1281, %v1271, %v667
      %v1289 = vsel %vm1281, %v1272, %v669
      %v1290 = vsel %vm1281, %v1273, %v671
      %v1291 = vsel %vm1281, %v1274, %v673
      %v1292 = vsel %vm1281, %v1275, %v675
      %v1293 = vsel %vm1281, %v1276, %v677
      %v1294 = vsel %vm1281, %v1277, %v679
      %v1295 = vsel %vm1281, %v1278, %v681
      %v1296 = vsel %vm1281, %v1279, %v683
      %v1297 = vsel %vm1281, %v1280, %v685
      %vm1298 = vcmask 1044480
      %v1299 = vsel %vm1298, %v1282, %v703
      %v1300 = vsel %vm1298, %v1283, %v705
      %v1301 = vsel %vm1298, %v1284, %v707
      %v1302 = vsel %vm1298, %v1285, %v709
      %v1303 = vsel %vm1298, %v1286, %v711
      %v1304 = vsel %vm1298, %v1287, %v713
      %v1305 = vsel %vm1298, %v1288, %v715
      %v1306 = vsel %vm1298, %v1289, %v717
      %v1307 = vsel %vm1298, %v1290, %v719
      %v1308 = vsel %vm1298, %v1291, %v721
      %v1309 = vsel %vm1298, %v1292, %v723
      %v1310 = vsel %vm1298, %v1293, %v725
      %v1311 = vsel %vm1298, %v1294, %v727
      %v1312 = vsel %vm1298, %v1295, %v729
      %v1313 = vsel %vm1298, %v1296, %v731
      %v1314 = vsel %vm1298, %v1297, %v733
      %vm1315 = vcmask 1045504
      %v1316 = vsel %vm1315, %v1299, %v751
      %v1317 = vsel %vm1315, %v1300, %v753
      %v1318 = vsel %vm1315, %v1301, %v755
      %v1319 = vsel %vm1315, %v1302, %v757
      %v1320 = vsel %vm1315, %v1303, %v759
      %v1321 = vsel %vm1315, %v1304, %v761
      %v1322 = vsel %vm1315, %v1305, %v763
      %v1323 = vsel %vm1315, %v1306, %v765
      %v1324 = vsel %vm1315, %v1307, %v767
      %v1325 = vsel %vm1315, %v1308, %v769
      %v1326 = vsel %vm1315, %v1309, %v771
      %v1327 = vsel %vm1315, %v1310, %v773
      %v1328 = vsel %vm1315, %v1311, %v775
      %v1329 = vsel %vm1315, %v1312, %v777
      %v1330 = vsel %vm1315, %v1313, %v779
      %v1331 = vsel %vm1315, %v1314, %v781
      %vm1332 = vcmask 1046528
      %v1333 = vsel %vm1332, %v1316, %v799
      %v1334 = vsel %vm1332, %v1317, %v801
      %v1335 = vsel %vm1332, %v1318, %v803
      %v1336 = vsel %vm1332, %v1319, %v805
      %v1337 = vsel %vm1332, %v1320, %v807
      %v1338 = vsel %vm1332, %v1321, %v809
      %v1339 = vsel %vm1332, %v1322, %v811
      %v1340 = vsel %vm1332, %v1323, %v813
      %v1341 = vsel %vm1332, %v1324, %v815
      %v1342 = vsel %vm1332, %v1325, %v817
      %v1343 = vsel %vm1332, %v1326, %v819
      %v1344 = vsel %vm1332, %v1327, %v821
      %v1345 = vsel %vm1332, %v1328, %v823
      %v1346 = vsel %vm1332, %v1329, %v825
      %v1347 = vsel %vm1332, %v1330, %v827
      %v1348 = vsel %vm1332, %v1331, %v829
      %v1349 = vsel %vm1230, %v847, %v895
      %v1350 = vsel %vm1230, %v849, %v897
      %v1351 = vsel %vm1230, %v851, %v899
      %v1352 = vsel %vm1230, %v853, %v901
      %v1353 = vsel %vm1230, %v855, %v903
      %v1354 = vsel %vm1230, %v857, %v905
      %v1355 = vsel %vm1230, %v859, %v907
      %v1356 = vsel %vm1230, %v861, %v909
      %v1357 = vsel %vm1230, %v863, %v911
      %v1358 = vsel %vm1230, %v865, %v913
      %v1359 = vsel %vm1230, %v867, %v915
      %v1360 = vsel %vm1230, %v869, %v917
      %v1361 = vsel %vm1230, %v871, %v919
      %v1362 = vsel %vm1230, %v873, %v921
      %v1363 = vsel %vm1230, %v875, %v923
      %v1364 = vsel %vm1230, %v877, %v925
      %v1365 = vsel %vm1247, %v1349, %v943
      %v1366 = vsel %vm1247, %v1350, %v945
      %v1367 = vsel %vm1247, %v1351, %v947
      %v1368 = vsel %vm1247, %v1352, %v949
      %v1369 = vsel %vm1247, %v1353, %v951
      %v1370 = vsel %vm1247, %v1354, %v953
      %v1371 = vsel %vm1247, %v1355, %v955
      %v1372 = vsel %vm1247, %v1356, %v957
      %v1373 = vsel %vm1247, %v1357, %v959
      %v1374 = vsel %vm1247, %v1358, %v961
      %v1375 = vsel %vm1247, %v1359, %v963
      %v1376 = vsel %vm1247, %v1360, %v965
      %v1377 = vsel %vm1247, %v1361, %v967
      %v1378 = vsel %vm1247, %v1362, %v969
      %v1379 = vsel %vm1247, %v1363, %v971
      %v1380 = vsel %vm1247, %v1364, %v973
      %v1381 = vsel %vm1264, %v1365, %v991
      %v1382 = vsel %vm1264, %v1366, %v993
      %v1383 = vsel %vm1264, %v1367, %v995
      %v1384 = vsel %vm1264, %v1368, %v997
      %v1385 = vsel %vm1264, %v1369, %v999
      %v1386 = vsel %vm1264, %v1370, %v1001
      %v1387 = vsel %vm1264, %v1371, %v1003
      %v1388 = vsel %vm1264, %v1372, %v1005
      %v1389 = vsel %vm1264, %v1373, %v1007
      %v1390 = vsel %vm1264, %v1374, %v1009
      %v1391 = vsel %vm1264, %v1375, %v1011
      %v1392 = vsel %vm1264, %v1376, %v1013
      %v1393 = vsel %vm1264, %v1377, %v1015
      %v1394 = vsel %vm1264, %v1378, %v1017
      %v1395 = vsel %vm1264, %v1379, %v1019
      %v1396 = vsel %vm1264, %v1380, %v1021
      %v1397 = vsel %vm1281, %v1381, %v1039
      %v1398 = vsel %vm1281, %v1382, %v1041
      %v1399 = vsel %vm1281, %v1383, %v1043
      %v1400 = vsel %vm1281, %v1384, %v1045
      %v1401 = vsel %vm1281, %v1385, %v1047
      %v1402 = vsel %vm1281, %v1386, %v1049
      %v1403 = vsel %vm1281, %v1387, %v1051
      %v1404 = vsel %vm1281, %v1388, %v1053
      %v1405 = vsel %vm1281, %v1389, %v1055
      %v1406 = vsel %vm1281, %v1390, %v1057
      %v1407 = vsel %vm1281, %v1391, %v1059
      %v1408 = vsel %vm1281, %v1392, %v1061
      %v1409 = vsel %vm1281, %v1393, %v1063
      %v1410 = vsel %vm1281, %v1394, %v1065
      %v1411 = vsel %vm1281, %v1395, %v1067
      %v1412 = vsel %vm1281, %v1396, %v1069
      %v1413 = vsel %vm1298, %v1397, %v1087
      %v1414 = vsel %vm1298, %v1398, %v1089
      %v1415 = vsel %vm1298, %v1399, %v1091
      %v1416 = vsel %vm1298, %v1400, %v1093
      %v1417 = vsel %vm1298, %v1401, %v1095
      %v1418 = vsel %vm1298, %v1402, %v1097
      %v1419 = vsel %vm1298, %v1403, %v1099
      %v1420 = vsel %vm1298, %v1404, %v1101
      %v1421 = vsel %vm1298, %v1405, %v1103
      %v1422 = vsel %vm1298, %v1406, %v1105
      %v1423 = vsel %vm1298, %v1407, %v1107
      %v1424 = vsel %vm1298, %v1408, %v1109
      %v1425 = vsel %vm1298, %v1409, %v1111
      %v1426 = vsel %vm1298, %v1410, %v1113
      %v1427 = vsel %vm1298, %v1411, %v1115
      %v1428 = vsel %vm1298, %v1412, %v1117
      %v1429 = vsel %vm1315, %v1413, %v1135
      %v1430 = vsel %vm1315, %v1414, %v1137
      %v1431 = vsel %vm1315, %v1415, %v1139
      %v1432 = vsel %vm1315, %v1416, %v1141
      %v1433 = vsel %vm1315, %v1417, %v1143
      %v1434 = vsel %vm1315, %v1418, %v1145
      %v1435 = vsel %vm1315, %v1419, %v1147
      %v1436 = vsel %vm1315, %v1420, %v1149
      %v1437 = vsel %vm1315, %v1421, %v1151
      %v1438 = vsel %vm1315, %v1422, %v1153
      %v1439 = vsel %vm1315, %v1423, %v1155
      %v1440 = vsel %vm1315, %v1424, %v1157
      %v1441 = vsel %vm1315, %v1425, %v1159
      %v1442 = vsel %vm1315, %v1426, %v1161
      %v1443 = vsel %vm1315, %v1427, %v1163
      %v1444 = vsel %vm1315, %v1428, %v1165
      %v1445 = vsel %vm1332, %v1429, %v1183
      %v1446 = vsel %vm1332, %v1430, %v1185
      %v1447 = vsel %vm1332, %v1431, %v1187
      %v1448 = vsel %vm1332, %v1432, %v1189
      %v1449 = vsel %vm1332, %v1433, %v1191
      %v1450 = vsel %vm1332, %v1434, %v1193
      %v1451 = vsel %vm1332, %v1435, %v1195
      %v1452 = vsel %vm1332, %v1436, %v1197
      %v1453 = vsel %vm1332, %v1437, %v1199
      %v1454 = vsel %vm1332, %v1438, %v1201
      %v1455 = vsel %vm1332, %v1439, %v1203
      %v1456 = vsel %vm1332, %v1440, %v1205
      %v1457 = vsel %vm1332, %v1441, %v1207
      %v1458 = vsel %vm1332, %v1442, %v1209
      %v1459 = vsel %vm1332, %v1443, %v1211
      %v1460 = vsel %vm1332, %v1444, %v1213
      %v1492 = vrot.slane 0.0, 7
      %v1493 = vsel %vm1230, %v1492, %v1492
      %v1494 = vrot.slane %v1333, 7
      %v1495 = vrot.slane %v1445, 7
      %v1496 = vsel %vm1230, %v1494, %v1495
      %v1497 = vrot.slane %v1334, 7
      %v1498 = vrot.slane %v1446, 7
      %v1499 = vsel %vm1230, %v1497, %v1498
      %v1500 = vrot.slane %v1335, 7
      %v1501 = vrot.slane %v1447, 7
      %v1502 = vsel %vm1230, %v1500, %v1501
      %v1503 = vrot.slane %v1336, 7
      %v1504 = vrot.slane %v1448, 7
      %v1505 = vsel %vm1230, %v1503, %v1504
      %v1506 = vrot.slane %v1337, 7
      %v1507 = vrot.slane %v1449, 7
      %v1508 = vsel %vm1230, %v1506, %v1507
      %v1509 = vrot.slane %v1338, 7
      %v1510 = vrot.slane %v1450, 7
      %v1511 = vsel %vm1230, %v1509, %v1510
      %v1512 = vrot.slane %v1339, 7
      %v1513 = vrot.slane %v1451, 7
      %v1514 = vsel %vm1230, %v1512, %v1513
      %v1515 = vrot.slane %v1340, 7
      %v1516 = vrot.slane %v1452, 7
      %v1517 = vsel %vm1230, %v1515, %v1516
      %v1518 = vrot.slane %v1341, 7
      %v1519 = vrot.slane %v1453, 7
      %v1520 = vsel %vm1230, %v1518, %v1519
      %v1521 = vrot.slane %v1342, 7
      %v1522 = vrot.slane %v1454, 7
      %v1523 = vsel %vm1230, %v1521, %v1522
      %v1524 = vrot.slane %v1343, 7
      %v1525 = vrot.slane %v1455, 7
      %v1526 = vsel %vm1230, %v1524, %v1525
      %v1527 = vrot.slane %v1344, 7
      %v1528 = vrot.slane %v1456, 7
      %v1529 = vsel %vm1230, %v1527, %v1528
      %v1530 = vrot.slane %v1345, 7
      %v1531 = vrot.slane %v1457, 7
      %v1532 = vsel %vm1230, %v1530, %v1531
      %v1533 = vrot.slane %v1346, 7
      %v1534 = vrot.slane %v1458, 7
      %v1535 = vsel %vm1230, %v1533, %v1534
      %v1536 = vrot.slane %v1347, 7
      %v1537 = vrot.slane %v1459, 7
      %v1538 = vsel %vm1230, %v1536, %v1537
      %v1571 = vsel %vm1230, 0.0, %v1492
      %v1572 = vsel %vm1230, 0.0, %v1494
      %v1573 = vsel %vm1230, 0.0, %v1497
      %v1574 = vsel %vm1230, 0.0, %v1500
      %v1575 = vsel %vm1230, 0.0, %v1503
      %v1576 = vsel %vm1230, 0.0, %v1506
      %v1577 = vsel %vm1230, 0.0, %v1509
      %v1578 = vsel %vm1230, 0.0, %v1512
      %v1579 = vsel %vm1230, 0.0, %v1515
      %v1580 = vsel %vm1230, 0.0, %v1518
      %v1581 = vsel %vm1230, 0.0, %v1521
      %v1582 = vsel %vm1230, 0.0, %v1524
      %v1583 = vsel %vm1230, 0.0, %v1527
      %v1584 = vsel %vm1230, 0.0, %v1530
      %v1585 = vsel %vm1230, 0.0, %v1533
      %v1586 = vsel %vm1230, 0.0, %v1536
      %v1587 = vrot.slane 0.0, 1
      %v1588 = vsel %vm1332, %v1587, %v1587
      %v1589 = vrot.slane %v1333, 1
      %v1590 = vrot.slane %v1445, 1
      %v1591 = vsel %vm1332, %v1589, %v1590
      %v1592 = vrot.slane %v1334, 1
      %v1593 = vrot.slane %v1446, 1
      %v1594 = vsel %vm1332, %v1592, %v1593
      %v1595 = vrot.slane %v1335, 1
      %v1596 = vrot.slane %v1447, 1
      %v1597 = vsel %vm1332, %v1595, %v1596
      %v1598 = vrot.slane %v1336, 1
      %v1599 = vrot.slane %v1448, 1
      %v1600 = vsel %vm1332, %v1598, %v1599
      %v1601 = vrot.slane %v1337, 1
      %v1602 = vrot.slane %v1449, 1
      %v1603 = vsel %vm1332, %v1601, %v1602
      %v1604 = vrot.slane %v1338, 1
      %v1605 = vrot.slane %v1450, 1
      %v1606 = vsel %vm1332, %v1604, %v1605
      %v1607 = vrot.slane %v1339, 1
      %v1608 = vrot.slane %v1451, 1
      %v1609 = vsel %vm1332, %v1607, %v1608
      %v1610 = vrot.slane %v1340, 1
      %v1611 = vrot.slane %v1452, 1
      %v1612 = vsel %vm1332, %v1610, %v1611
      %v1613 = vrot.slane %v1341, 1
      %v1614 = vrot.slane %v1453, 1
      %v1615 = vsel %vm1332, %v1613, %v1614
      %v1616 = vrot.slane %v1342, 1
      %v1617 = vrot.slane %v1454, 1
      %v1618 = vsel %vm1332, %v1616, %v1617
      %v1619 = vrot.slane %v1343, 1
      %v1620 = vrot.slane %v1455, 1
      %v1621 = vsel %vm1332, %v1619, %v1620
      %v1622 = vrot.slane %v1344, 1
      %v1623 = vrot.slane %v1456, 1
      %v1624 = vsel %vm1332, %v1622, %v1623
      %v1625 = vrot.slane %v1345, 1
      %v1626 = vrot.slane %v1457, 1
      %v1627 = vsel %vm1332, %v1625, %v1626
      %v1628 = vrot.slane %v1346, 1
      %v1629 = vrot.slane %v1458, 1
      %v1630 = vsel %vm1332, %v1628, %v1629
      %v1631 = vrot.slane %v1347, 1
      %v1632 = vrot.slane %v1459, 1
      %v1633 = vsel %vm1332, %v1631, %v1632
      %v1650 = vsel %vm1332, %v1587, 0.0
      %v1651 = vsel %vm1332, %v1590, 0.0
      %v1652 = vsel %vm1332, %v1593, 0.0
      %v1653 = vsel %vm1332, %v1596, 0.0
      %v1654 = vsel %vm1332, %v1599, 0.0
      %v1655 = vsel %vm1332, %v1602, 0.0
      %v1656 = vsel %vm1332, %v1605, 0.0
      %v1657 = vsel %vm1332, %v1608, 0.0
      %v1658 = vsel %vm1332, %v1611, 0.0
      %v1659 = vsel %vm1332, %v1614, 0.0
      %v1660 = vsel %vm1332, %v1617, 0.0
      %v1661 = vsel %vm1332, %v1620, 0.0
      %v1662 = vsel %vm1332, %v1623, 0.0
      %v1663 = vsel %vm1332, %v1626, 0.0
      %v1664 = vsel %vm1332, %v1629, 0.0
      %v1665 = vsel %vm1332, %v1632, 0.0
      %v1668 = vrot.slane %v1348, 7
      %v1669 = vrot.slane %v1460, 7
      %v1670 = vsel %vm1230, %v1668, %v1669
      %v1672 = vsel %vm1230, 0.0, %v1668
      %v1673 = vrot.slane %v1348, 1
      %v1674 = vrot.slane %v1460, 1
      %v1675 = vsel %vm1332, %v1673, %v1674
      %v1677 = vsel %vm1332, %v1674, 0.0
      %1678 = vrot.lane.b32.xlu0 0.0, 4
      %v1679 = vpop.permute.xlu0 %1678
      %1680 = vrot.lane.b32.xlu0 %v1333, 4
      %v1681 = vpop.permute.xlu0 %1680
      %1682 = vrot.lane.b32.xlu0 %v1445, 4
      %v1683 = vpop.permute.xlu0 %1682
      %1684 = vrot.lane.b32.xlu0 %v1334, 4
      %v1685 = vpop.permute.xlu0 %1684
      %1686 = vrot.lane.b32.xlu0 %v1446, 4
      %v1687 = vpop.permute.xlu0 %1686
      %1688 = vrot.lane.b32.xlu0 %v1335, 4
      %v1689 = vpop.permute.xlu0 %1688
      %1690 = vrot.lane.b32.xlu0 %v1447, 4
      %v1691 = vpop.permute.xlu0 %1690
      %1692 = vrot.lane.b32.xlu0 %v1336, 4
      %v1693 = vpop.permute.xlu0 %1692
      %1694 = vrot.lane.b32.xlu0 %v1448, 4
      %v1695 = vpop.permute.xlu0 %1694
      %1696 = vrot.lane.b32.xlu0 %v1337, 4
      %v1697 = vpop.permute.xlu0 %1696
      %1698 = vrot.lane.b32.xlu0 %v1449, 4
      %v1699 = vpop.permute.xlu0 %1698
      %1700 = vrot.lane.b32.xlu0 %v1338, 4
      %v1701 = vpop.permute.xlu0 %1700
      %1702 = vrot.lane.b32.xlu0 %v1450, 4
      %v1703 = vpop.permute.xlu0 %1702
      %1704 = vrot.lane.b32.xlu0 %v1339, 4
      %v1705 = vpop.permute.xlu0 %1704
      %1706 = vrot.lane.b32.xlu0 %v1451, 4
      %v1707 = vpop.permute.xlu0 %1706
      %1708 = vrot.lane.b32.xlu0 %v1340, 4
      %v1709 = vpop.permute.xlu0 %1708
      %1710 = vrot.lane.b32.xlu0 %v1452, 4
      %v1711 = vpop.permute.xlu0 %1710
      %1712 = vrot.lane.b32.xlu0 %v1341, 4
      %v1713 = vpop.permute.xlu0 %1712
      %1714 = vrot.lane.b32.xlu0 %v1453, 4
      %v1715 = vpop.permute.xlu0 %1714
      %1716 = vrot.lane.b32.xlu0 %v1342, 4
      %v1717 = vpop.permute.xlu0 %1716
      %1718 = vrot.lane.b32.xlu0 %v1454, 4
      %v1719 = vpop.permute.xlu0 %1718
      %1720 = vrot.lane.b32.xlu0 %v1343, 4
      %v1721 = vpop.permute.xlu0 %1720
      %1722 = vrot.lane.b32.xlu0 %v1455, 4
      %v1723 = vpop.permute.xlu0 %1722
      %1724 = vrot.lane.b32.xlu0 %v1344, 4
      %v1725 = vpop.permute.xlu0 %1724
      %1726 = vrot.lane.b32.xlu0 %v1456, 4
      %v1727 = vpop.permute.xlu0 %1726
      %1728 = vrot.lane.b32.xlu0 %v1345, 4
      %v1729 = vpop.permute.xlu0 %1728
      %1730 = vrot.lane.b32.xlu0 %v1457, 4
      %v1731 = vpop.permute.xlu0 %1730
      %1732 = vrot.lane.b32.xlu0 %v1346, 4
      %v1733 = vpop.permute.xlu0 %1732
      %1734 = vrot.lane.b32.xlu0 %v1458, 4
      %v1735 = vpop.permute.xlu0 %1734
      %1736 = vrot.lane.b32.xlu0 %v1347, 4
      %v1737 = vpop.permute.xlu0 %1736
      %1738 = vrot.lane.b32.xlu0 %v1459, 4
      %v1739 = vpop.permute.xlu0 %1738
      %1787 = vrot.lane.b32.xlu0 %v1588, 8
      %v1788 = vpop.permute.xlu0 %1787
      %1789 = vrot.lane.b32.xlu0 %v1650, 8
      %v1790 = vpop.permute.xlu0 %1789
      %1791 = vrot.lane.b32.xlu0 %v1591, 8
      %v1792 = vpop.permute.xlu0 %1791
      %1793 = vrot.lane.b32.xlu0 %v1651, 8
      %v1794 = vpop.permute.xlu0 %1793
      %1795 = vrot.lane.b32.xlu0 %v1594, 8
      %v1796 = vpop.permute.xlu0 %1795
      %1797 = vrot.lane.b32.xlu0 %v1652, 8
      %v1798 = vpop.permute.xlu0 %1797
      %1799 = vrot.lane.b32.xlu0 %v1597, 8
      %v1800 = vpop.permute.xlu0 %1799
      %1801 = vrot.lane.b32.xlu0 %v1653, 8
      %v1802 = vpop.permute.xlu0 %1801
      %1803 = vrot.lane.b32.xlu0 %v1600, 8
      %v1804 = vpop.permute.xlu0 %1803
      %1805 = vrot.lane.b32.xlu0 %v1654, 8
      %v1806 = vpop.permute.xlu0 %1805
      %1807 = vrot.lane.b32.xlu0 %v1603, 8
      %v1808 = vpop.permute.xlu0 %1807
      %1809 = vrot.lane.b32.xlu0 %v1655, 8
      %v1810 = vpop.permute.xlu0 %1809
      %1811 = vrot.lane.b32.xlu0 %v1606, 8
      %v1812 = vpop.permute.xlu0 %1811
      %1813 = vrot.lane.b32.xlu0 %v1656, 8
      %v1814 = vpop.permute.xlu0 %1813
      %1815 = vrot.lane.b32.xlu0 %v1609, 8
      %v1816 = vpop.permute.xlu0 %1815
      %1817 = vrot.lane.b32.xlu0 %v1657, 8
      %v1818 = vpop.permute.xlu0 %1817
      %1819 = vrot.lane.b32.xlu0 %v1612, 8
      %v1820 = vpop.permute.xlu0 %1819
      %1821 = vrot.lane.b32.xlu0 %v1658, 8
      %v1822 = vpop.permute.xlu0 %1821
      %1823 = vrot.lane.b32.xlu0 %v1615, 8
      %v1824 = vpop.permute.xlu0 %1823
      %1825 = vrot.lane.b32.xlu0 %v1659, 8
      %v1826 = vpop.permute.xlu0 %1825
      %1827 = vrot.lane.b32.xlu0 %v1618, 8
      %v1828 = vpop.permute.xlu0 %1827
      %1829 = vrot.lane.b32.xlu0 %v1660, 8
      %v1830 = vpop.permute.xlu0 %1829
      %1831 = vrot.lane.b32.xlu0 %v1621, 8
      %v1832 = vpop.permute.xlu0 %1831
      %1833 = vrot.lane.b32.xlu0 %v1661, 8
      %v1834 = vpop.permute.xlu0 %1833
      %1835 = vrot.lane.b32.xlu0 %v1624, 8
      %v1836 = vpop.permute.xlu0 %1835
      %1837 = vrot.lane.b32.xlu0 %v1662, 8
      %v1838 = vpop.permute.xlu0 %1837
      %1839 = vrot.lane.b32.xlu0 %v1627, 8
      %v1840 = vpop.permute.xlu0 %1839
      %1841 = vrot.lane.b32.xlu0 %v1663, 8
      %v1842 = vpop.permute.xlu0 %1841
      %1843 = vrot.lane.b32.xlu0 %v1630, 8
      %v1844 = vpop.permute.xlu0 %1843
      %1845 = vrot.lane.b32.xlu0 %v1664, 8
      %v1846 = vpop.permute.xlu0 %1845
      %1847 = vrot.lane.b32.xlu0 %v1633, 8
      %v1848 = vpop.permute.xlu0 %1847
      %1849 = vrot.lane.b32.xlu0 %v1665, 8
      %v1850 = vpop.permute.xlu0 %1849
      %1899 = vrot.lane.b32.xlu0 %v1572, 12
      %v1900 = vpop.permute.xlu0 %1899
      %1901 = vrot.lane.b32.xlu0 %v1496, 12
      %v1902 = vpop.permute.xlu0 %1901
      %1903 = vrot.lane.b32.xlu0 %v1573, 12
      %v1904 = vpop.permute.xlu0 %1903
      %1905 = vrot.lane.b32.xlu0 %v1499, 12
      %v1906 = vpop.permute.xlu0 %1905
      %1907 = vrot.lane.b32.xlu0 %v1574, 12
      %v1908 = vpop.permute.xlu0 %1907
      %1909 = vrot.lane.b32.xlu0 %v1502, 12
      %v1910 = vpop.permute.xlu0 %1909
      %1911 = vrot.lane.b32.xlu0 %v1575, 12
      %v1912 = vpop.permute.xlu0 %1911
      %1913 = vrot.lane.b32.xlu0 %v1505, 12
      %v1914 = vpop.permute.xlu0 %1913
      %1915 = vrot.lane.b32.xlu0 %v1576, 12
      %v1916 = vpop.permute.xlu0 %1915
      %1917 = vrot.lane.b32.xlu0 %v1508, 12
      %v1918 = vpop.permute.xlu0 %1917
      %1919 = vrot.lane.b32.xlu0 %v1577, 12
      %v1920 = vpop.permute.xlu0 %1919
      %1921 = vrot.lane.b32.xlu0 %v1511, 12
      %v1922 = vpop.permute.xlu0 %1921
      %1923 = vrot.lane.b32.xlu0 %v1578, 12
      %v1924 = vpop.permute.xlu0 %1923
      %1925 = vrot.lane.b32.xlu0 %v1514, 12
      %v1926 = vpop.permute.xlu0 %1925
      %1927 = vrot.lane.b32.xlu0 %v1579, 12
      %v1928 = vpop.permute.xlu0 %1927
      %1929 = vrot.lane.b32.xlu0 %v1517, 12
      %v1930 = vpop.permute.xlu0 %1929
      %1931 = vrot.lane.b32.xlu0 %v1580, 12
      %v1932 = vpop.permute.xlu0 %1931
      %1933 = vrot.lane.b32.xlu0 %v1520, 12
      %v1934 = vpop.permute.xlu0 %1933
      %1935 = vrot.lane.b32.xlu0 %v1581, 12
      %v1936 = vpop.permute.xlu0 %1935
      %1937 = vrot.lane.b32.xlu0 %v1523, 12
      %v1938 = vpop.permute.xlu0 %1937
      %1939 = vrot.lane.b32.xlu0 %v1582, 12
      %v1940 = vpop.permute.xlu0 %1939
      %1941 = vrot.lane.b32.xlu0 %v1526, 12
      %v1942 = vpop.permute.xlu0 %1941
      %1943 = vrot.lane.b32.xlu0 %v1583, 12
      %v1944 = vpop.permute.xlu0 %1943
      %1945 = vrot.lane.b32.xlu0 %v1529, 12
      %v1946 = vpop.permute.xlu0 %1945
      %1947 = vrot.lane.b32.xlu0 %v1584, 12
      %v1948 = vpop.permute.xlu0 %1947
      %1949 = vrot.lane.b32.xlu0 %v1532, 12
      %v1950 = vpop.permute.xlu0 %1949
      %1951 = vrot.lane.b32.xlu0 %v1585, 12
      %v1952 = vpop.permute.xlu0 %1951
      %1953 = vrot.lane.b32.xlu0 %v1535, 12
      %v1954 = vpop.permute.xlu0 %1953
      %1955 = vrot.lane.b32.xlu0 %v1586, 12
      %v1956 = vpop.permute.xlu0 %1955
      %1957 = vrot.lane.b32.xlu0 %v1538, 12
      %v1958 = vpop.permute.xlu0 %1957
      %1959 = vrot.lane.b32.xlu0 %v1672, 12
      %v1960 = vpop.permute.xlu0 %1959
      %1961 = vrot.lane.b32.xlu0 %v1670, 12
      %v1962 = vpop.permute.xlu0 %1961
      %1995 = vrot.lane.b32.xlu0 %v1333, 16
      %v1996 = vpop.permute.xlu0 %1995
      %1997 = vrot.lane.b32.xlu0 %v1445, 16
      %v1998 = vpop.permute.xlu0 %1997
      %1999 = vrot.lane.b32.xlu0 %v1334, 16
      %v2000 = vpop.permute.xlu0 %1999
      %2001 = vrot.lane.b32.xlu0 %v1446, 16
      %v2002 = vpop.permute.xlu0 %2001
      %2003 = vrot.lane.b32.xlu0 %v1335, 16
      %v2004 = vpop.permute.xlu0 %2003
      %2005 = vrot.lane.b32.xlu0 %v1447, 16
      %v2006 = vpop.permute.xlu0 %2005
      %2007 = vrot.lane.b32.xlu0 %v1336, 16
      %v2008 = vpop.permute.xlu0 %2007
      %2009 = vrot.lane.b32.xlu0 %v1448, 16
      %v2010 = vpop.permute.xlu0 %2009
      %2011 = vrot.lane.b32.xlu0 %v1337, 16
      %v2012 = vpop.permute.xlu0 %2011
      %2013 = vrot.lane.b32.xlu0 %v1449, 16
      %v2014 = vpop.permute.xlu0 %2013
      %2015 = vrot.lane.b32.xlu0 %v1338, 16
      %v2016 = vpop.permute.xlu0 %2015
      %2017 = vrot.lane.b32.xlu0 %v1450, 16
      %v2018 = vpop.permute.xlu0 %2017
      %2019 = vrot.lane.b32.xlu0 %v1339, 16
      %v2020 = vpop.permute.xlu0 %2019
      %2021 = vrot.lane.b32.xlu0 %v1451, 16
      %v2022 = vpop.permute.xlu0 %2021
      %2023 = vrot.lane.b32.xlu0 %v1340, 16
      %v2024 = vpop.permute.xlu0 %2023
      %2025 = vrot.lane.b32.xlu0 %v1452, 16
      %v2026 = vpop.permute.xlu0 %2025
      %2027 = vrot.lane.b32.xlu0 %v1341, 16
      %v2028 = vpop.permute.xlu0 %2027
      %2029 = vrot.lane.b32.xlu0 %v1453, 16
      %v2030 = vpop.permute.xlu0 %2029
      %2031 = vrot.lane.b32.xlu0 %v1342, 16
      %v2032 = vpop.permute.xlu0 %2031
      %2033 = vrot.lane.b32.xlu0 %v1454, 16
      %v2034 = vpop.permute.xlu0 %2033
      %2035 = vrot.lane.b32.xlu0 %v1343, 16
      %v2036 = vpop.permute.xlu0 %2035
      %2037 = vrot.lane.b32.xlu0 %v1455, 16
      %v2038 = vpop.permute.xlu0 %2037
      %2039 = vrot.lane.b32.xlu0 %v1344, 16
      %v2040 = vpop.permute.xlu0 %2039
      %2041 = vrot.lane.b32.xlu0 %v1456, 16
      %v2042 = vpop.permute.xlu0 %2041
      %2043 = vrot.lane.b32.xlu0 %v1345, 16
      %v2044 = vpop.permute.xlu0 %2043
      %2045 = vrot.lane.b32.xlu0 %v1457, 16
      %v2046 = vpop.permute.xlu0 %2045
      %2047 = vrot.lane.b32.xlu0 %v1346, 16
      %v2048 = vpop.permute.xlu0 %2047
      %2049 = vrot.lane.b32.xlu0 %v1458, 16
      %v2050 = vpop.permute.xlu0 %2049
      %2051 = vrot.lane.b32.xlu0 %v1347, 16
      %v2052 = vpop.permute.xlu0 %2051
      %2053 = vrot.lane.b32.xlu0 %v1459, 16
      %v2054 = vpop.permute.xlu0 %2053
      %2055 = vrot.lane.b32.xlu0 %v1348, 16
      %v2056 = vpop.permute.xlu0 %2055
      %2057 = vrot.lane.b32.xlu0 %v1460, 16
      %v2058 = vpop.permute.xlu0 %2057
      %2092 = vrot.lane.b32.xlu0 %v1591, 20
      %v2093 = vpop.permute.xlu0 %2092
      %2094 = vrot.lane.b32.xlu0 %v1651, 20
      %v2095 = vpop.permute.xlu0 %2094
      %2096 = vrot.lane.b32.xlu0 %v1594, 20
      %v2097 = vpop.permute.xlu0 %2096
      %2098 = vrot.lane.b32.xlu0 %v1652, 20
      %v2099 = vpop.permute.xlu0 %2098
      %2100 = vrot.lane.b32.xlu0 %v1597, 20
      %v2101 = vpop.permute.xlu0 %2100
      %2102 = vrot.lane.b32.xlu0 %v1653, 20
      %v2103 = vpop.permute.xlu0 %2102
      %2104 = vrot.lane.b32.xlu0 %v1600, 20
      %v2105 = vpop.permute.xlu0 %2104
      %2106 = vrot.lane.b32.xlu0 %v1654, 20
      %v2107 = vpop.permute.xlu0 %2106
      %2108 = vrot.lane.b32.xlu0 %v1603, 20
      %v2109 = vpop.permute.xlu0 %2108
      %2110 = vrot.lane.b32.xlu0 %v1655, 20
      %v2111 = vpop.permute.xlu0 %2110
      %2112 = vrot.lane.b32.xlu0 %v1606, 20
      %v2113 = vpop.permute.xlu0 %2112
      %2114 = vrot.lane.b32.xlu0 %v1656, 20
      %v2115 = vpop.permute.xlu0 %2114
      %2116 = vrot.lane.b32.xlu0 %v1609, 20
      %v2117 = vpop.permute.xlu0 %2116
      %2118 = vrot.lane.b32.xlu0 %v1657, 20
      %v2119 = vpop.permute.xlu0 %2118
      %2120 = vrot.lane.b32.xlu0 %v1612, 20
      %v2121 = vpop.permute.xlu0 %2120
      %2122 = vrot.lane.b32.xlu0 %v1658, 20
      %v2123 = vpop.permute.xlu0 %2122
      %2124 = vrot.lane.b32.xlu0 %v1615, 20
      %v2125 = vpop.permute.xlu0 %2124
      %2126 = vrot.lane.b32.xlu0 %v1659, 20
      %v2127 = vpop.permute.xlu0 %2126
      %2128 = vrot.lane.b32.xlu0 %v1618, 20
      %v2129 = vpop.permute.xlu0 %2128
      %2130 = vrot.lane.b32.xlu0 %v1660, 20
      %v2131 = vpop.permute.xlu0 %2130
      %2132 = vrot.lane.b32.xlu0 %v1621, 20
      %v2133 = vpop.permute.xlu0 %2132
      %2134 = vrot.lane.b32.xlu0 %v1661, 20
      %v2135 = vpop.permute.xlu0 %2134
      %2136 = vrot.lane.b32.xlu0 %v1624, 20
      %v2137 = vpop.permute.xlu0 %2136
      %2138 = vrot.lane.b32.xlu0 %v1662, 20
      %v2139 = vpop.permute.xlu0 %2138
      %2140 = vrot.lane.b32.xlu0 %v1627, 20
      %v2141 = vpop.permute.xlu0 %2140
      %2142 = vrot.lane.b32.xlu0 %v1663, 20
      %v2143 = vpop.permute.xlu0 %2142
      %2144 = vrot.lane.b32.xlu0 %v1630, 20
      %v2145 = vpop.permute.xlu0 %2144
      %2146 = vrot.lane.b32.xlu0 %v1664, 20
      %v2147 = vpop.permute.xlu0 %2146
      %2148 = vrot.lane.b32.xlu0 %v1633, 20
      %v2149 = vpop.permute.xlu0 %2148
      %2150 = vrot.lane.b32.xlu0 %v1665, 20
      %v2151 = vpop.permute.xlu0 %2150
      %2152 = vrot.lane.b32.xlu0 %v1675, 20
      %v2153 = vpop.permute.xlu0 %2152
      %2154 = vrot.lane.b32.xlu0 %v1677, 20
      %v2155 = vpop.permute.xlu0 %2154
      %2189 = vrot.lane.b32.xlu0 %v1573, 24
      %v2190 = vpop.permute.xlu0 %2189
      %2191 = vrot.lane.b32.xlu0 %v1499, 24
      %v2192 = vpop.permute.xlu0 %2191
      %2193 = vrot.lane.b32.xlu0 %v1574, 24
      %v2194 = vpop.permute.xlu0 %2193
      %2195 = vrot.lane.b32.xlu0 %v1502, 24
      %v2196 = vpop.permute.xlu0 %2195
      %2197 = vrot.lane.b32.xlu0 %v1575, 24
      %v2198 = vpop.permute.xlu0 %2197
      %2199 = vrot.lane.b32.xlu0 %v1505, 24
      %v2200 = vpop.permute.xlu0 %2199
      %2201 = vrot.lane.b32.xlu0 %v1576, 24
      %v2202 = vpop.permute.xlu0 %2201
      %2203 = vrot.lane.b32.xlu0 %v1508, 24
      %v2204 = vpop.permute.xlu0 %2203
      %2205 = vrot.lane.b32.xlu0 %v1577, 24
      %v2206 = vpop.permute.xlu0 %2205
      %2207 = vrot.lane.b32.xlu0 %v1511, 24
      %v2208 = vpop.permute.xlu0 %2207
      %2209 = vrot.lane.b32.xlu0 %v1578, 24
      %v2210 = vpop.permute.xlu0 %2209
      %2211 = vrot.lane.b32.xlu0 %v1514, 24
      %v2212 = vpop.permute.xlu0 %2211
      %2213 = vrot.lane.b32.xlu0 %v1579, 24
      %v2214 = vpop.permute.xlu0 %2213
      %2215 = vrot.lane.b32.xlu0 %v1517, 24
      %v2216 = vpop.permute.xlu0 %2215
      %2217 = vrot.lane.b32.xlu0 %v1580, 24
      %v2218 = vpop.permute.xlu0 %2217
      %2219 = vrot.lane.b32.xlu0 %v1520, 24
      %v2220 = vpop.permute.xlu0 %2219
      %2221 = vrot.lane.b32.xlu0 %v1581, 24
      %v2222 = vpop.permute.xlu0 %2221
      %2223 = vrot.lane.b32.xlu0 %v1523, 24
      %v2224 = vpop.permute.xlu0 %2223
      %2225 = vrot.lane.b32.xlu0 %v1582, 24
      %v2226 = vpop.permute.xlu0 %2225
      %2227 = vrot.lane.b32.xlu0 %v1526, 24
      %v2228 = vpop.permute.xlu0 %2227
      %2229 = vrot.lane.b32.xlu0 %v1583, 24
      %v2230 = vpop.permute.xlu0 %2229
      %2231 = vrot.lane.b32.xlu0 %v1529, 24
      %v2232 = vpop.permute.xlu0 %2231
      %2233 = vrot.lane.b32.xlu0 %v1584, 24
      %v2234 = vpop.permute.xlu0 %2233
      %2235 = vrot.lane.b32.xlu0 %v1532, 24
      %v2236 = vpop.permute.xlu0 %2235
      %2237 = vrot.lane.b32.xlu0 %v1585, 24
      %v2238 = vpop.permute.xlu0 %2237
      %2239 = vrot.lane.b32.xlu0 %v1535, 24
      %v2240 = vpop.permute.xlu0 %2239
      %2241 = vrot.lane.b32.xlu0 %v1586, 24
      %v2242 = vpop.permute.xlu0 %2241
      %2243 = vrot.lane.b32.xlu0 %v1538, 24
      %v2244 = vpop.permute.xlu0 %2243
      %2245 = vrot.lane.b32.xlu0 %v1672, 24
      %v2246 = vpop.permute.xlu0 %2245
      %2247 = vrot.lane.b32.xlu0 %v1670, 24
      %v2248 = vpop.permute.xlu0 %2247
      %2249 = vrot.lane.b32.xlu0 %v1571, 24
      %v2250 = vpop.permute.xlu0 %2249
      %2251 = vrot.lane.b32.xlu0 %v1493, 24
      %v2252 = vpop.permute.xlu0 %2251
      %2285 = vrot.lane.b32.xlu0 %v1334, 28
      %v2286 = vpop.permute.xlu0 %2285
      %2287 = vrot.lane.b32.xlu0 %v1446, 28
      %v2288 = vpop.permute.xlu0 %2287
      %2289 = vrot.lane.b32.xlu0 %v1335, 28
      %v2290 = vpop.permute.xlu0 %2289
      %2291 = vrot.lane.b32.xlu0 %v1447, 28
      %v2292 = vpop.permute.xlu0 %2291
      %2293 = vrot.lane.b32.xlu0 %v1336, 28
      %v2294 = vpop.permute.xlu0 %2293
      %2295 = vrot.lane.b32.xlu0 %v1448, 28
      %v2296 = vpop.permute.xlu0 %2295
      %2297 = vrot.lane.b32.xlu0 %v1337, 28
      %v2298 = vpop.permute.xlu0 %2297
      %2299 = vrot.lane.b32.xlu0 %v1449, 28
      %v2300 = vpop.permute.xlu0 %2299
      %2301 = vrot.lane.b32.xlu0 %v1338, 28
      %v2302 = vpop.permute.xlu0 %2301
      %2303 = vrot.lane.b32.xlu0 %v1450, 28
      %v2304 = vpop.permute.xlu0 %2303
      %2305 = vrot.lane.b32.xlu0 %v1339, 28
      %v2306 = vpop.permute.xlu0 %2305
      %2307 = vrot.lane.b32.xlu0 %v1451, 28
      %v2308 = vpop.permute.xlu0 %2307
      %2309 = vrot.lane.b32.xlu0 %v1340, 28
      %v2310 = vpop.permute.xlu0 %2309
      %2311 = vrot.lane.b32.xlu0 %v1452, 28
      %v2312 = vpop.permute.xlu0 %2311
      %2313 = vrot.lane.b32.xlu0 %v1341, 28
      %v2314 = vpop.permute.xlu0 %2313
      %2315 = vrot.lane.b32.xlu0 %v1453, 28
      %v2316 = vpop.permute.xlu0 %2315
      %2317 = vrot.lane.b32.xlu0 %v1342, 28
      %v2318 = vpop.permute.xlu0 %2317
      %2319 = vrot.lane.b32.xlu0 %v1454, 28
      %v2320 = vpop.permute.xlu0 %2319
      %2321 = vrot.lane.b32.xlu0 %v1343, 28
      %v2322 = vpop.permute.xlu0 %2321
      %2323 = vrot.lane.b32.xlu0 %v1455, 28
      %v2324 = vpop.permute.xlu0 %2323
      %2325 = vrot.lane.b32.xlu0 %v1344, 28
      %v2326 = vpop.permute.xlu0 %2325
      %2327 = vrot.lane.b32.xlu0 %v1456, 28
      %v2328 = vpop.permute.xlu0 %2327
      %2329 = vrot.lane.b32.xlu0 %v1345, 28
      %v2330 = vpop.permute.xlu0 %2329
      %2331 = vrot.lane.b32.xlu0 %v1457, 28
      %v2332 = vpop.permute.xlu0 %2331
      %2333 = vrot.lane.b32.xlu0 %v1346, 28
      %v2334 = vpop.permute.xlu0 %2333
      %2335 = vrot.lane.b32.xlu0 %v1458, 28
      %v2336 = vpop.permute.xlu0 %2335
      %2337 = vrot.lane.b32.xlu0 %v1347, 28
      %v2338 = vpop.permute.xlu0 %2337
      %2339 = vrot.lane.b32.xlu0 %v1459, 28
      %v2340 = vpop.permute.xlu0 %2339
      %2341 = vrot.lane.b32.xlu0 %v1348, 28
      %v2342 = vpop.permute.xlu0 %2341
      %2343 = vrot.lane.b32.xlu0 %v1460, 28
      %v2344 = vpop.permute.xlu0 %2343
      %2345 = vrot.lane.b32.xlu0 0.0, 28
      %v2346 = vpop.permute.xlu0 %2345
      %2378 = vrot.lane.b32.xlu0 %v1594, 32
      %v2379 = vpop.permute.xlu0 %2378
      %2380 = vrot.lane.b32.xlu0 %v1652, 32
      %v2381 = vpop.permute.xlu0 %2380
      %2382 = vrot.lane.b32.xlu0 %v1597, 32
      %v2383 = vpop.permute.xlu0 %2382
      %2384 = vrot.lane.b32.xlu0 %v1653, 32
      %v2385 = vpop.permute.xlu0 %2384
      %2386 = vrot.lane.b32.xlu0 %v1600, 32
      %v2387 = vpop.permute.xlu0 %2386
      %2388 = vrot.lane.b32.xlu0 %v1654, 32
      %v2389 = vpop.permute.xlu0 %2388
      %2390 = vrot.lane.b32.xlu0 %v1603, 32
      %v2391 = vpop.permute.xlu0 %2390
      %2392 = vrot.lane.b32.xlu0 %v1655, 32
      %v2393 = vpop.permute.xlu0 %2392
      %2394 = vrot.lane.b32.xlu0 %v1606, 32
      %v2395 = vpop.permute.xlu0 %2394
      %2396 = vrot.lane.b32.xlu0 %v1656, 32
      %v2397 = vpop.permute.xlu0 %2396
      %2398 = vrot.lane.b32.xlu0 %v1609, 32
      %v2399 = vpop.permute.xlu0 %2398
      %2400 = vrot.lane.b32.xlu0 %v1657, 32
      %v2401 = vpop.permute.xlu0 %2400
      %2402 = vrot.lane.b32.xlu0 %v1612, 32
      %v2403 = vpop.permute.xlu0 %2402
      %2404 = vrot.lane.b32.xlu0 %v1658, 32
      %v2405 = vpop.permute.xlu0 %2404
      %2406 = vrot.lane.b32.xlu0 %v1615, 32
      %v2407 = vpop.permute.xlu0 %2406
      %2408 = vrot.lane.b32.xlu0 %v1659, 32
      %v2409 = vpop.permute.xlu0 %2408
      %2410 = vrot.lane.b32.xlu0 %v1618, 32
      %v2411 = vpop.permute.xlu0 %2410
      %2412 = vrot.lane.b32.xlu0 %v1660, 32
      %v2413 = vpop.permute.xlu0 %2412
      %2414 = vrot.lane.b32.xlu0 %v1621, 32
      %v2415 = vpop.permute.xlu0 %2414
      %2416 = vrot.lane.b32.xlu0 %v1661, 32
      %v2417 = vpop.permute.xlu0 %2416
      %2418 = vrot.lane.b32.xlu0 %v1624, 32
      %v2419 = vpop.permute.xlu0 %2418
      %2420 = vrot.lane.b32.xlu0 %v1662, 32
      %v2421 = vpop.permute.xlu0 %2420
      %2422 = vrot.lane.b32.xlu0 %v1627, 32
      %v2423 = vpop.permute.xlu0 %2422
      %2424 = vrot.lane.b32.xlu0 %v1663, 32
      %v2425 = vpop.permute.xlu0 %2424
      %2426 = vrot.lane.b32.xlu0 %v1630, 32
      %v2427 = vpop.permute.xlu0 %2426
      %2428 = vrot.lane.b32.xlu0 %v1664, 32
      %v2429 = vpop.permute.xlu0 %2428
      %2430 = vrot.lane.b32.xlu0 %v1633, 32
      %v2431 = vpop.permute.xlu0 %2430
      %2432 = vrot.lane.b32.xlu0 %v1665, 32
      %v2433 = vpop.permute.xlu0 %2432
      %2434 = vrot.lane.b32.xlu0 %v1675, 32
      %v2435 = vpop.permute.xlu0 %2434
      %2436 = vrot.lane.b32.xlu0 %v1677, 32
      %v2437 = vpop.permute.xlu0 %2436
      %2438 = vrot.lane.b32.xlu0 %v1588, 32
      %v2439 = vpop.permute.xlu0 %2438
      %2440 = vrot.lane.b32.xlu0 %v1650, 32
      %v2441 = vpop.permute.xlu0 %2440
      %vm2474 = vcmask 31744
      %v2475 = vsel %vm2474, %v1571, %v1679
      %v2476 = vsel %vm2474, %v1493, %v1679
      %v2477 = vsel %vm2474, %v1572, %v1681
      %v2478 = vsel %vm2474, %v1496, %v1683
      %v2479 = vsel %vm2474, %v1573, %v1685
      %v2480 = vsel %vm2474, %v1499, %v1687
      %v2481 = vsel %vm2474, %v1574, %v1689
      %v2482 = vsel %vm2474, %v1502, %v1691
      %v2483 = vsel %vm2474, %v1575, %v1693
      %v2484 = vsel %vm2474, %v1505, %v1695
      %v2485 = vsel %vm2474, %v1576, %v1697
      %v2486 = vsel %vm2474, %v1508, %v1699
      %v2487 = vsel %vm2474, %v1577, %v1701
      %v2488 = vsel %vm2474, %v1511, %v1703
      %v2489 = vsel %vm2474, %v1578, %v1705
      %v2490 = vsel %vm2474, %v1514, %v1707
      %v2491 = vsel %vm2474, %v1579, %v1709
      %v2492 = vsel %vm2474, %v1517, %v1711
      %v2493 = vsel %vm2474, %v1580, %v1713
      %v2494 = vsel %vm2474, %v1520, %v1715
      %v2495 = vsel %vm2474, %v1581, %v1717
      %v2496 = vsel %vm2474, %v1523, %v1719
      %v2497 = vsel %vm2474, %v1582, %v1721
      %v2498 = vsel %vm2474, %v1526, %v1723
      %v2499 = vsel %vm2474, %v1583, %v1725
      %v2500 = vsel %vm2474, %v1529, %v1727
      %v2501 = vsel %vm2474, %v1584, %v1729
      %v2502 = vsel %vm2474, %v1532, %v1731
      %v2503 = vsel %vm2474, %v1585, %v1733
      %v2504 = vsel %vm2474, %v1535, %v1735
      %v2505 = vsel %vm2474, %v1586, %v1737
      %v2506 = vsel %vm2474, %v1538, %v1739
      %vm2507 = vcmask 64512
      %v2508 = vsel %vm2507, %v2475, %v1788
      %v2509 = vsel %vm2507, %v2476, %v1790
      %v2510 = vsel %vm2507, %v2477, %v1792
      %v2511 = vsel %vm2507, %v2478, %v1794
      %v2512 = vsel %vm2507, %v2479, %v1796
      %v2513 = vsel %vm2507, %v2480, %v1798
      %v2514 = vsel %vm2507, %v2481, %v1800
      %v2515 = vsel %vm2507, %v2482, %v1802
      %v2516 = vsel %vm2507, %v2483, %v1804
      %v2517 = vsel %vm2507, %v2484, %v1806
      %v2518 = vsel %vm2507, %v2485, %v1808
      %v2519 = vsel %vm2507, %v2486, %v1810
      %v2520 = vsel %vm2507, %v2487, %v1812
      %v2521 = vsel %vm2507, %v2488, %v1814
      %v2522 = vsel %vm2507, %v2489, %v1816
      %v2523 = vsel %vm2507, %v2490, %v1818
      %v2524 = vsel %vm2507, %v2491, %v1820
      %v2525 = vsel %vm2507, %v2492, %v1822
      %v2526 = vsel %vm2507, %v2493, %v1824
      %v2527 = vsel %vm2507, %v2494, %v1826
      %v2528 = vsel %vm2507, %v2495, %v1828
      %v2529 = vsel %vm2507, %v2496, %v1830
      %v2530 = vsel %vm2507, %v2497, %v1832
      %v2531 = vsel %vm2507, %v2498, %v1834
      %v2532 = vsel %vm2507, %v2499, %v1836
      %v2533 = vsel %vm2507, %v2500, %v1838
      %v2534 = vsel %vm2507, %v2501, %v1840
      %v2535 = vsel %vm2507, %v2502, %v1842
      %v2536 = vsel %vm2507, %v2503, %v1844
      %v2537 = vsel %vm2507, %v2504, %v1846
      %v2538 = vsel %vm2507, %v2505, %v1848
      %v2539 = vsel %vm2507, %v2506, %v1850
      %vm2540 = vcmask 97280
      %v2541 = vsel %vm2540, %v2508, %v1900
      %v2542 = vsel %vm2540, %v2509, %v1902
      %v2543 = vsel %vm2540, %v2510, %v1904
      %v2544 = vsel %vm2540, %v2511, %v1906
      %v2545 = vsel %vm2540, %v2512, %v1908
      %v2546 = vsel %vm2540, %v2513, %v1910
      %v2547 = vsel %vm2540, %v2514, %v1912
      %v2548 = vsel %vm2540, %v2515, %v1914
      %v2549 = vsel %vm2540, %v2516, %v1916
      %v2550 = vsel %vm2540, %v2517, %v1918
      %v2551 = vsel %vm2540, %v2518, %v1920
      %v2552 = vsel %vm2540, %v2519, %v1922
      %v2553 = vsel %vm2540, %v2520, %v1924
      %v2554 = vsel %vm2540, %v2521, %v1926
      %v2555 = vsel %vm2540, %v2522, %v1928
      %v2556 = vsel %vm2540, %v2523, %v1930
      %v2557 = vsel %vm2540, %v2524, %v1932
      %v2558 = vsel %vm2540, %v2525, %v1934
      %v2559 = vsel %vm2540, %v2526, %v1936
      %v2560 = vsel %vm2540, %v2527, %v1938
      %v2561 = vsel %vm2540, %v2528, %v1940
      %v2562 = vsel %vm2540, %v2529, %v1942
      %v2563 = vsel %vm2540, %v2530, %v1944
      %v2564 = vsel %vm2540, %v2531, %v1946
      %v2565 = vsel %vm2540, %v2532, %v1948
      %v2566 = vsel %vm2540, %v2533, %v1950
      %v2567 = vsel %vm2540, %v2534, %v1952
      %v2568 = vsel %vm2540, %v2535, %v1954
      %v2569 = vsel %vm2540, %v2536, %v1956
      %v2570 = vsel %vm2540, %v2537, %v1958
      %v2571 = vsel %vm2540, %v2538, %v1960
      %v2572 = vsel %vm2540, %v2539, %v1962
      %vm2573 = vcmask 130048
      %v2574 = vsel %vm2573, %v2541, %v1996
      %v2575 = vsel %vm2573, %v2542, %v1998
      %v2576 = vsel %vm2573, %v2543, %v2000
      %v2577 = vsel %vm2573, %v2544, %v2002
      %v2578 = vsel %vm2573, %v2545, %v2004
      %v2579 = vsel %vm2573, %v2546, %v2006
      %v2580 = vsel %vm2573, %v2547, %v2008
      %v2581 = vsel %vm2573, %v2548, %v2010
      %v2582 = vsel %vm2573, %v2549, %v2012
      %v2583 = vsel %vm2573, %v2550, %v2014
      %v2584 = vsel %vm2573, %v2551, %v2016
      %v2585 = vsel %vm2573, %v2552, %v2018
      %v2586 = vsel %vm2573, %v2553, %v2020
      %v2587 = vsel %vm2573, %v2554, %v2022
      %v2588 = vsel %vm2573, %v2555, %v2024
      %v2589 = vsel %vm2573, %v2556, %v2026
      %v2590 = vsel %vm2573, %v2557, %v2028
      %v2591 = vsel %vm2573, %v2558, %v2030
      %v2592 = vsel %vm2573, %v2559, %v2032
      %v2593 = vsel %vm2573, %v2560, %v2034
      %v2594 = vsel %vm2573, %v2561, %v2036
      %v2595 = vsel %vm2573, %v2562, %v2038
      %v2596 = vsel %vm2573, %v2563, %v2040
      %v2597 = vsel %vm2573, %v2564, %v2042
      %v2598 = vsel %vm2573, %v2565, %v2044
      %v2599 = vsel %vm2573, %v2566, %v2046
      %v2600 = vsel %vm2573, %v2567, %v2048
      %v2601 = vsel %vm2573, %v2568, %v2050
      %v2602 = vsel %vm2573, %v2569, %v2052
      %v2603 = vsel %vm2573, %v2570, %v2054
      %v2604 = vsel %vm2573, %v2571, %v2056
      %v2605 = vsel %vm2573, %v2572, %v2058
      %vm2606 = vcmask 162816
      %v2607 = vsel %vm2606, %v2574, %v2093
      %v2608 = vsel %vm2606, %v2575, %v2095
      %v2609 = vsel %vm2606, %v2576, %v2097
      %v2610 = vsel %vm2606, %v2577, %v2099
      %v2611 = vsel %vm2606, %v2578, %v2101
      %v2612 = vsel %vm2606, %v2579, %v2103
      %v2613 = vsel %vm2606, %v2580, %v2105
      %v2614 = vsel %vm2606, %v2581, %v2107
      %v2615 = vsel %vm2606, %v2582, %v2109
      %v2616 = vsel %vm2606, %v2583, %v2111
      %v2617 = vsel %vm2606, %v2584, %v2113
      %v2618 = vsel %vm2606, %v2585, %v2115
      %v2619 = vsel %vm2606, %v2586, %v2117
      %v2620 = vsel %vm2606, %v2587, %v2119
      %v2621 = vsel %vm2606, %v2588, %v2121
      %v2622 = vsel %vm2606, %v2589, %v2123
      %v2623 = vsel %vm2606, %v2590, %v2125
      %v2624 = vsel %vm2606, %v2591, %v2127
      %v2625 = vsel %vm2606, %v2592, %v2129
      %v2626 = vsel %vm2606, %v2593, %v2131
      %v2627 = vsel %vm2606, %v2594, %v2133
      %v2628 = vsel %vm2606, %v2595, %v2135
      %v2629 = vsel %vm2606, %v2596, %v2137
      %v2630 = vsel %vm2606, %v2597, %v2139
      %v2631 = vsel %vm2606, %v2598, %v2141
      %v2632 = vsel %vm2606, %v2599, %v2143
      %v2633 = vsel %vm2606, %v2600, %v2145
      %v2634 = vsel %vm2606, %v2601, %v2147
      %v2635 = vsel %vm2606, %v2602, %v2149
      %v2636 = vsel %vm2606, %v2603, %v2151
      %v2637 = vsel %vm2606, %v2604, %v2153
      %v2638 = vsel %vm2606, %v2605, %v2155
      %vm2639 = vcmask 195584
      %v2640 = vsel %vm2639, %v2607, %v2190
      %v2641 = vsel %vm2639, %v2608, %v2192
      %v2642 = vsel %vm2639, %v2609, %v2194
      %v2643 = vsel %vm2639, %v2610, %v2196
      %v2644 = vsel %vm2639, %v2611, %v2198
      %v2645 = vsel %vm2639, %v2612, %v2200
      %v2646 = vsel %vm2639, %v2613, %v2202
      %v2647 = vsel %vm2639, %v2614, %v2204
      %v2648 = vsel %vm2639, %v2615, %v2206
      %v2649 = vsel %vm2639, %v2616, %v2208
      %v2650 = vsel %vm2639, %v2617, %v2210
      %v2651 = vsel %vm2639, %v2618, %v2212
      %v2652 = vsel %vm2639, %v2619, %v2214
      %v2653 = vsel %vm2639, %v2620, %v2216
      %v2654 = vsel %vm2639, %v2621, %v2218
      %v2655 = vsel %vm2639, %v2622, %v2220
      %v2656 = vsel %vm2639, %v2623, %v2222
      %v2657 = vsel %vm2639, %v2624, %v2224
      %v2658 = vsel %vm2639, %v2625, %v2226
      %v2659 = vsel %vm2639, %v2626, %v2228
      %v2660 = vsel %vm2639, %v2627, %v2230
      %v2661 = vsel %vm2639, %v2628, %v2232
      %v2662 = vsel %vm2639, %v2629, %v2234
      %v2663 = vsel %vm2639, %v2630, %v2236
      %v2664 = vsel %vm2639, %v2631, %v2238
      %v2665 = vsel %vm2639, %v2632, %v2240
      %v2666 = vsel %vm2639, %v2633, %v2242
      %v2667 = vsel %vm2639, %v2634, %v2244
      %v2668 = vsel %vm2639, %v2635, %v2246
      %v2669 = vsel %vm2639, %v2636, %v2248
      %v2670 = vsel %vm2639, %v2637, %v2250
      %v2671 = vsel %vm2639, %v2638, %v2252
      %vm2672 = vcmask 228352
      %v2673 = vsel %vm2672, %v2640, %v2286
      %v2674 = vsel %vm2672, %v2641, %v2288
      %v2675 = vsel %vm2672, %v2642, %v2290
      %v2676 = vsel %vm2672, %v2643, %v2292
      %v2677 = vsel %vm2672, %v2644, %v2294
      %v2678 = vsel %vm2672, %v2645, %v2296
      %v2679 = vsel %vm2672, %v2646, %v2298
      %v2680 = vsel %vm2672, %v2647, %v2300
      %v2681 = vsel %vm2672, %v2648, %v2302
      %v2682 = vsel %vm2672, %v2649, %v2304
      %v2683 = vsel %vm2672, %v2650, %v2306
      %v2684 = vsel %vm2672, %v2651, %v2308
      %v2685 = vsel %vm2672, %v2652, %v2310
      %v2686 = vsel %vm2672, %v2653, %v2312
      %v2687 = vsel %vm2672, %v2654, %v2314
      %v2688 = vsel %vm2672, %v2655, %v2316
      %v2689 = vsel %vm2672, %v2656, %v2318
      %v2690 = vsel %vm2672, %v2657, %v2320
      %v2691 = vsel %vm2672, %v2658, %v2322
      %v2692 = vsel %vm2672, %v2659, %v2324
      %v2693 = vsel %vm2672, %v2660, %v2326
      %v2694 = vsel %vm2672, %v2661, %v2328
      %v2695 = vsel %vm2672, %v2662, %v2330
      %v2696 = vsel %vm2672, %v2663, %v2332
      %v2697 = vsel %vm2672, %v2664, %v2334
      %v2698 = vsel %vm2672, %v2665, %v2336
      %v2699 = vsel %vm2672, %v2666, %v2338
      %v2700 = vsel %vm2672, %v2667, %v2340
      %v2701 = vsel %vm2672, %v2668, %v2342
      %v2702 = vsel %vm2672, %v2669, %v2344
      %v2703 = vsel %vm2672, %v2670, %v2346
      %v2704 = vsel %vm2672, %v2671, %v2346
      %vm2705 = vcmask 261120
      %v2706 = vsel %vm2705, %v2673, %v2379
      %v2707 = vsel %vm2705, %v2674, %v2381
      %v2708 = vsel %vm2705, %v2675, %v2383
      %v2709 = vsel %vm2705, %v2676, %v2385
      %v2710 = vsel %vm2705, %v2677, %v2387
      %v2711 = vsel %vm2705, %v2678, %v2389
      %v2712 = vsel %vm2705, %v2679, %v2391
      %v2713 = vsel %vm2705, %v2680, %v2393
      %v2714 = vsel %vm2705, %v2681, %v2395
      %v2715 = vsel %vm2705, %v2682, %v2397
      %v2716 = vsel %vm2705, %v2683, %v2399
      %v2717 = vsel %vm2705, %v2684, %v2401
      %v2718 = vsel %vm2705, %v2685, %v2403
      %v2719 = vsel %vm2705, %v2686, %v2405
      %v2720 = vsel %vm2705, %v2687, %v2407
      %v2721 = vsel %vm2705, %v2688, %v2409
      %v2722 = vsel %vm2705, %v2689, %v2411
      %v2723 = vsel %vm2705, %v2690, %v2413
      %v2724 = vsel %vm2705, %v2691, %v2415
      %v2725 = vsel %vm2705, %v2692, %v2417
      %v2726 = vsel %vm2705, %v2693, %v2419
      %v2727 = vsel %vm2705, %v2694, %v2421
      %v2728 = vsel %vm2705, %v2695, %v2423
      %v2729 = vsel %vm2705, %v2696, %v2425
      %v2730 = vsel %vm2705, %v2697, %v2427
      %v2731 = vsel %vm2705, %v2698, %v2429
      %v2732 = vsel %vm2705, %v2699, %v2431
      %v2733 = vsel %vm2705, %v2700, %v2433
      %v2734 = vsel %vm2705, %v2701, %v2435
      %v2735 = vsel %vm2705, %v2702, %v2437
      %v2736 = vsel %vm2705, %v2703, %v2439
      %v2737 = vsel %vm2705, %v2704, %v2441
      %v2738 = vld [vmem:[%s3] sm:$0xff]
      %v2739 = vld [vmem:[%s3 + $0x8] sm:$0xff]
      %v2740 = vld [vmem:[%s3 + $0x10] sm:$0xff]
      %v2741 = vld [vmem:[%s3 + $0x18] sm:$0xff]
      %v2742 = vld [vmem:[%s3 + $0x20] sm:$0xf]
      %vm2743 = vcmask 293888
      %v2745 = vsel %vm2743, %v2706, 0
      %v2748 = vsel %vm2743, %v2707, 0
      %v2751 = vsel %vm2743, %v2708, 0
      %v2754 = vsel %vm2743, %v2709, 0
      %v2757 = vsel %vm2743, %v2710, 0
      %v2760 = vsel %vm2743, %v2711, 0
      %v2763 = vsel %vm2743, %v2712, 0
      %v2766 = vsel %vm2743, %v2713, 0
      %v2769 = vsel %vm2743, %v2714, 0
      %v2772 = vsel %vm2743, %v2715, 0
      %v2775 = vsel %vm2743, %v2716, 0
      %v2778 = vsel %vm2743, %v2717, 0
      %v2781 = vsel %vm2743, %v2718, 0
      %v2784 = vsel %vm2743, %v2719, 0
      %v2787 = vsel %vm2743, %v2720, 0
      %v2790 = vsel %vm2743, %v2721, 0
      %v2793 = vsel %vm2743, %v2722, 0
      %v2796 = vsel %vm2743, %v2723, 0
      %v2799 = vsel %vm2743, %v2724, 0
      %v2802 = vsel %vm2743, %v2725, 0
      %v2805 = vsel %vm2743, %v2726, 0
      %v2808 = vsel %vm2743, %v2727, 0
      %v2811 = vsel %vm2743, %v2728, 0
      %v2814 = vsel %vm2743, %v2729, 0
      %v2817 = vsel %vm2743, %v2730, 0
      %v2820 = vsel %vm2743, %v2731, 0
      %v2823 = vsel %vm2743, %v2732, 0
      %v2826 = vsel %vm2743, %v2733, 0
      %v2829 = vsel %vm2743, %v2734, 0
      %v2832 = vsel %vm2743, %v2735, 0
      %v2835 = vsel %vm2743, %v2736, 0
      %v2838 = vsel %vm2743, %v2737, 0
      %v2841 = vsel %vm1281, %v2742, 0
      %2843 = vmatprep.subr.mxu0 0.0
      %2844 = vmatpush1.msra.mxu0 0.0
      %2845 = vmatprep.subr.mxu0 0.0
      %2846 = vmatpush1.msra.mxu0 0.0
      %2847 = vmatprep.subr.mxu0 0.0
      %2848 = vmatpush1.msra.mxu0 0.0
      %2849 = vmatprep.subr.mxu0 0.0
      %2850 = vmatpush1.msra.mxu0 0.0
      %2851 = vmatprep.subr.mxu0 0.0
      %2852 = vmatpush1.msra.mxu0 0.0
      %2853 = vmatprep.subr.mxu0 0.0
      %2854 = vmatpush1.msra.mxu0 0.0
      %2855 = vmatprep.subr.mxu0 0.0
      %2856 = vmatpush1.msra.mxu0 0.0
      %2857 = vmatprep.subr.mxu0 0.0
      %2858 = vmatpush1.msra.mxu0 0.0
      %2859 = vmatprep.subr.mxu0 0.0
      %2860 = vmatpush1.msra.mxu0 0.0
      %2861 = vmatprep.subr.mxu0 0.0
      %2862 = vmatpush1.msra.mxu0 0.0
      %2863 = vmatprep.subr.mxu0 0.0
      %2864 = vmatpush1.msra.mxu0 0.0
      %2865 = vmatprep.subr.mxu0 0.0
      %2866 = vmatpush1.msra.mxu0 %v2841
      %2867 = vmatprep.subr.mxu0 0.0
      %2868 = vmatpush1.msra.mxu0 %v2741
      %2869 = vmatprep.subr.mxu0 0.0
      %2870 = vmatpush1.msra.mxu0 %v2740
      %2871 = vmatprep.subr.mxu0 0.0
      %2872 = vmatpush1.msra.mxu0 %v2739
      %2873 = vmatprep.subr.mxu0 0.0
      %2874 = vmatpush1.msra.mxu0 %v2738
      %2875 = vmatprep.subr.mxu0 0.0
      %2876 = vmatpush2.msra.mxu0 0.0
      %2877 = vmatprep.subr.mxu0 0.0
      %2878 = vmatpush2.msra.mxu0 0.0
      %2879 = vmatprep.subr.mxu0 0.0
      %2880 = vmatpush2.msra.mxu0 0.0
      %2881 = vmatprep.subr.mxu0 0.0
      %2882 = vmatpush2.msra.mxu0 0.0
      %2883 = vmatprep.subr.mxu0 0.0
      %2884 = vmatpush2.msra.mxu0 0.0
      %2885 = vmatprep.subr.mxu0 0.0
      %2886 = vmatpush2.msra.mxu0 0.0
      %2887 = vmatprep.subr.mxu0 0.0
      %2888 = vmatpush2.msra.mxu0 0.0
      %2889 = vmatprep.subr.mxu0 0.0
      %2890 = vmatpush2.msra.mxu0 0.0
      %2891 = vmatprep.subr.mxu0 0.0
      %2892 = vmatpush2.msra.mxu0 0.0
      %2893 = vmatprep.subr.mxu0 0.0
      %2894 = vmatpush2.msra.mxu0 0.0
      %2895 = vmatprep.subr.mxu0 0.0
      %2896 = vmatpush2.msra.mxu0 0.0
      %2897 = vmatprep.subr.mxu0 0.0
      %2898 = vmatpush2.msra.mxu0 0.0
      %2899 = vmatprep.subr.mxu0 0.0
      %2900 = vmatpush2.msra.mxu0 0.0
      %2901 = vmatprep.subr.mxu0 0.0
      %2902 = vmatpush2.msra.mxu0 0.0
      %2903 = vmatprep.subr.mxu0 0.0
      %2904 = vmatpush2.msra.mxu0 0.0
      %2905 = vmatprep.subr.mxu0 0.0
      %2906 = vmatpush2.msra.mxu0 0.0
      %2907 = vmatprep.mubr.f32.mxu0 0.0
      %2908 = vmatmul.mubr.f32.gmra.mxu0 %v2745
      %v2909 = vpop.f32.mrf.mxu0
      %v2910 = vadd.f32 0.0, %v2909
      %v2911 = vpop.f32.mrf.mxu0
      %2912 = vmatprep.mubr.f32.mxu0 0.0
      %2913 = vmatmul.mubr.f32.gmra.mxu0 %v2748
      %v2914 = vpop.f32.mrf.mxu0
      %v2915 = vadd.f32 0.0, %v2914
      %v2916 = vpop.f32.mrf.mxu0
      %2917 = vmatprep.mubr.f32.mxu0 0.0
      %2918 = vmatmul.mubr.f32.gmra.mxu0 %v2751
      %v2919 = vpop.f32.mrf.mxu0
      %v2920 = vadd.f32 0.0, %v2919
      %v2921 = vpop.f32.mrf.mxu0
      %2922 = vmatprep.mubr.f32.mxu0 0.0
      %2923 = vmatmul.mubr.f32.gmra.mxu0 %v2754
      %v2924 = vpop.f32.mrf.mxu0
      %v2925 = vadd.f32 0.0, %v2924
      %v2926 = vpop.f32.mrf.mxu0
      %2927 = vmatprep.mubr.f32.mxu0 0.0
      %2928 = vmatmul.mubr.f32.gmra.mxu0 %v2757
      %v2929 = vpop.f32.mrf.mxu0
      %v2930 = vadd.f32 0.0, %v2929
      %v2931 = vpop.f32.mrf.mxu0
      %2932 = vmatprep.mubr.f32.mxu0 0.0
      %2933 = vmatmul.mubr.f32.gmra.mxu0 %v2760
      %v2934 = vpop.f32.mrf.mxu0
      %v2935 = vadd.f32 0.0, %v2934
      %v2936 = vpop.f32.mrf.mxu0
      %2937 = vmatprep.mubr.f32.mxu0 0.0
      %2938 = vmatmul.mubr.f32.gmra.mxu0 %v2763
      %v2939 = vpop.f32.mrf.mxu0
      %v2940 = vadd.f32 0.0, %v2939
      %v2941 = vpop.f32.mrf.mxu0
      %2942 = vmatprep.mubr.f32.mxu0 0.0
      %2943 = vmatmul.mubr.f32.gmra.mxu0 %v2766
      %v2944 = vpop.f32.mrf.mxu0
      %v2945 = vadd.f32 0.0, %v2944
      %v2946 = vpop.f32.mrf.mxu0
      %2947 = vmatprep.mubr.f32.mxu0 0.0
      %2948 = vmatmul.mubr.f32.gmra.mxu0 %v2769
      %v2949 = vpop.f32.mrf.mxu0
      %v2950 = vadd.f32 0.0, %v2949
      %v2951 = vpop.f32.mrf.mxu0
      %2952 = vmatprep.mubr.f32.mxu0 0.0
      %2953 = vmatmul.mubr.f32.gmra.mxu0 %v2772
      %v2954 = vpop.f32.mrf.mxu0
      %v2955 = vadd.f32 0.0, %v2954
      %v2956 = vpop.f32.mrf.mxu0
      %2957 = vmatprep.mubr.f32.mxu0 0.0
      %2958 = vmatmul.mubr.f32.gmra.mxu0 %v2775
      %v2959 = vpop.f32.mrf.mxu0
      %v2960 = vadd.f32 0.0, %v2959
      %v2961 = vpop.f32.mrf.mxu0
      %2962 = vmatprep.mubr.f32.mxu0 0.0
      %2963 = vmatmul.mubr.f32.gmra.mxu0 %v2778
      %v2964 = vpop.f32.mrf.mxu0
      %v2965 = vadd.f32 0.0, %v2964
      %v2966 = vpop.f32.mrf.mxu0
      %2967 = vmatprep.mubr.f32.mxu0 0.0
      %2968 = vmatmul.mubr.f32.gmra.mxu0 %v2781
      %v2969 = vpop.f32.mrf.mxu0
      %v2970 = vadd.f32 0.0, %v2969
      %v2971 = vpop.f32.mrf.mxu0
      %2972 = vmatprep.mubr.f32.mxu0 0.0
      %2973 = vmatmul.mubr.f32.gmra.mxu0 %v2784
      %v2974 = vpop.f32.mrf.mxu0
      %v2975 = vadd.f32 0.0, %v2974
      %v2976 = vpop.f32.mrf.mxu0
      %2977 = vmatprep.mubr.f32.mxu0 0.0
      %2978 = vmatmul.mubr.f32.gmra.mxu0 %v2787
      %v2979 = vpop.f32.mrf.mxu0
      %v2980 = vadd.f32 0.0, %v2979
      %v2981 = vpop.f32.mrf.mxu0
      %2982 = vmatprep.mubr.f32.mxu0 0.0
      %2983 = vmatmul.mubr.f32.gmra.mxu0 %v2790
      %v2984 = vpop.f32.mrf.mxu0
      %v2985 = vadd.f32 0.0, %v2984
      %v2986 = vpop.f32.mrf.mxu0
      %2987 = vmatprep.mubr.f32.mxu0 0.0
      %2988 = vmatmul.mubr.f32.gmra.mxu0 %v2793
      %v2989 = vpop.f32.mrf.mxu0
      %v2990 = vadd.f32 0.0, %v2989
      %v2991 = vpop.f32.mrf.mxu0
      %2992 = vmatprep.mubr.f32.mxu0 0.0
      %2993 = vmatmul.mubr.f32.gmra.mxu0 %v2796
      %v2994 = vpop.f32.mrf.mxu0
      %v2995 = vadd.f32 0.0, %v2994
      %v2996 = vpop.f32.mrf.mxu0
      %2997 = vmatprep.mubr.f32.mxu0 0.0
      %2998 = vmatmul.mubr.f32.gmra.mxu0 %v2799
      %v2999 = vpop.f32.mrf.mxu0
      %v3000 = vadd.f32 0.0, %v2999
      %v3001 = vpop.f32.mrf.mxu0
      %3002 = vmatprep.mubr.f32.mxu0 0.0
      %3003 = vmatmul.mubr.f32.gmra.mxu0 %v2802
      %v3004 = vpop.f32.mrf.mxu0
      %v3005 = vadd.f32 0.0, %v3004
      %v3006 = vpop.f32.mrf.mxu0
      %3007 = vmatprep.mubr.f32.mxu0 0.0
      %3008 = vmatmul.mubr.f32.gmra.mxu0 %v2805
      %v3009 = vpop.f32.mrf.mxu0
      %v3010 = vadd.f32 0.0, %v3009
      %v3011 = vpop.f32.mrf.mxu0
      %3012 = vmatprep.mubr.f32.mxu0 0.0
      %3013 = vmatmul.mubr.f32.gmra.mxu0 %v2808
      %v3014 = vpop.f32.mrf.mxu0
      %v3015 = vadd.f32 0.0, %v3014
      %v3016 = vpop.f32.mrf.mxu0
      %3017 = vmatprep.mubr.f32.mxu0 0.0
      %3018 = vmatmul.mubr.f32.gmra.mxu0 %v2811
      %v3019 = vpop.f32.mrf.mxu0
      %v3020 = vadd.f32 0.0, %v3019
      %v3021 = vpop.f32.mrf.mxu0
      %3022 = vmatprep.mubr.f32.mxu0 0.0
      %3023 = vmatmul.mubr.f32.gmra.mxu0 %v2814
      %v3024 = vpop.f32.mrf.mxu0
      %v3025 = vadd.f32 0.0, %v3024
      %v3026 = vpop.f32.mrf.mxu0
      %3027 = vmatprep.mubr.f32.mxu0 0.0
      %3028 = vmatmul.mubr.f32.gmra.mxu0 %v2817
      %v3029 = vpop.f32.mrf.mxu0
      %v3030 = vadd.f32 0.0, %v3029
      %v3031 = vpop.f32.mrf.mxu0
      %3032 = vmatprep.mubr.f32.mxu0 0.0
      %3033 = vmatmul.mubr.f32.gmra.mxu0 %v2820
      %v3034 = vpop.f32.mrf.mxu0
      %v3035 = vadd.f32 0.0, %v3034
      %v3036 = vpop.f32.mrf.mxu0
      %3037 = vmatprep.mubr.f32.mxu0 0.0
      %3038 = vmatmul.mubr.f32.gmra.mxu0 %v2823
      %v3039 = vpop.f32.mrf.mxu0
      %v3040 = vadd.f32 0.0, %v3039
      %v3041 = vpop.f32.mrf.mxu0
      %3042 = vmatprep.mubr.f32.mxu0 0.0
      %3043 = vmatmul.mubr.f32.gmra.mxu0 %v2826
      %v3044 = vpop.f32.mrf.mxu0
      %v3045 = vadd.f32 0.0, %v3044
      %v3046 = vpop.f32.mrf.mxu0
      %3047 = vmatprep.mubr.f32.mxu0 0.0
      %3048 = vmatmul.mubr.f32.gmra.mxu0 %v2829
      %v3049 = vpop.f32.mrf.mxu0
      %v3050 = vadd.f32 0.0, %v3049
      %v3051 = vpop.f32.mrf.mxu0
      %3052 = vmatprep.mubr.f32.mxu0 0.0
      %3053 = vmatmul.mubr.f32.gmra.mxu0 %v2832
      %v3054 = vpop.f32.mrf.mxu0
      %v3055 = vadd.f32 0.0, %v3054
      %v3056 = vpop.f32.mrf.mxu0
      %3057 = vmatprep.mubr.f32.mxu0 0.0
      %3058 = vmatmul.mubr.f32.gmra.mxu0 %v2835
      %v3059 = vpop.f32.mrf.mxu0
      %v3060 = vadd.f32 0.0, %v3059
      %v3061 = vpop.f32.mrf.mxu0
      %3062 = vmatprep.mubr.f32.mxu0 0.0
      %3063 = vmatmul.mubr.f32.gmra.mxu0 %v2838
      %v3064 = vpop.f32.mrf.mxu0
      %v3065 = vadd.f32 0.0, %v3064
      %v3066 = vpop.f32.mrf.mxu0
      %3067 = vdwg.mxu0
      %v3068 = vsel %vm2507, %v2910, 0.0
      %v3069 = vsel %vm2507, %v2915, 0.0
      %v3070 = vadd.f32 %v3068, %v3069
      %v3071 = vsel %vm2507, %v2920, 0.0
      %v3072 = vadd.f32 %v3070, %v3071
      %v3073 = vsel %vm2507, %v2925, 0.0
      %v3074 = vadd.f32 %v3072, %v3073
      %v3075 = vsel %vm2507, %v2930, 0.0
      %v3076 = vadd.f32 %v3074, %v3075
      %v3077 = vsel %vm2507, %v2935, 0.0
      %v3078 = vadd.f32 %v3076, %v3077
      %v3079 = vsel %vm2507, %v2940, 0.0
      %v3080 = vadd.f32 %v3078, %v3079
      %v3081 = vsel %vm2507, %v2945, 0.0
      %v3082 = vadd.f32 %v3080, %v3081
      %v3083 = vsel %vm2507, %v2950, 0.0
      %v3084 = vadd.f32 %v3082, %v3083
      %v3085 = vsel %vm2507, %v2955, 0.0
      %v3086 = vadd.f32 %v3084, %v3085
      %v3087 = vsel %vm2507, %v2960, 0.0
      %v3088 = vadd.f32 %v3086, %v3087
      %v3089 = vsel %vm2507, %v2965, 0.0
      %v3090 = vadd.f32 %v3088, %v3089
      %v3091 = vsel %vm2507, %v2970, 0.0
      %v3092 = vadd.f32 %v3090, %v3091
      %v3093 = vsel %vm2507, %v2975, 0.0
      %v3094 = vadd.f32 %v3092, %v3093
      %v3095 = vsel %vm2507, %v2980, 0.0
      %v3096 = vadd.f32 %v3094, %v3095
      %v3097 = vsel %vm2507, %v2985, 0.0
      %v3098 = vadd.f32 %v3096, %v3097
      %v3099 = vsel %vm2507, %v2990, 0.0
      %v3100 = vadd.f32 %v3098, %v3099
      %v3101 = vsel %vm2507, %v2995, 0.0
      %v3102 = vadd.f32 %v3100, %v3101
      %v3103 = vsel %vm2507, %v3000, 0.0
      %v3104 = vadd.f32 %v3102, %v3103
      %v3105 = vsel %vm2507, %v3005, 0.0
      %v3106 = vadd.f32 %v3104, %v3105
      %v3107 = vsel %vm2507, %v3010, 0.0
      %v3108 = vadd.f32 %v3106, %v3107
      %v3109 = vsel %vm2507, %v3015, 0.0
      %v3110 = vadd.f32 %v3108, %v3109
      %v3111 = vsel %vm2507, %v3020, 0.0
      %v3112 = vadd.f32 %v3110, %v3111
      %v3113 = vsel %vm2507, %v3025, 0.0
      %v3114 = vadd.f32 %v3112, %v3113
      %v3115 = vsel %vm2507, %v3030, 0.0
      %v3116 = vadd.f32 %v3114, %v3115
      %v3117 = vsel %vm2507, %v3035, 0.0
      %v3118 = vadd.f32 %v3116, %v3117
      %v3119 = vsel %vm2507, %v3040, 0.0
      %v3120 = vadd.f32 %v3118, %v3119
      %v3121 = vsel %vm2507, %v3045, 0.0
      %v3122 = vadd.f32 %v3120, %v3121
      %v3123 = vsel %vm2507, %v3050, 0.0
      %v3124 = vadd.f32 %v3122, %v3123
      %v3125 = vsel %vm2507, %v3055, 0.0
      %v3126 = vadd.f32 %v3124, %v3125
      %v3127 = vsel %vm2507, %v3060, 0.0
      %v3128 = vadd.f32 %v3126, %v3127
      %v3129 = vsel %vm2507, %v3065, 0.0
      %v3130 = vadd.f32 %v3128, %v3129
      %v3131 = vrot.slane %v3130, 4
      %v3132 = vadd.f32 %v3130, %v3131
      %v3133 = vrot.slane %v3132, 2
      %v3134 = vadd.f32 %v3132, %v3133
      %v3135 = vrot.slane %v3134, 1
      %v3136 = vadd.f32 %v3134, %v3135
      %vm3137 = vcmask 57344
      %3138 = vst.msk [vmem:[%s304] sm:$0x1] %vm3137, %v3136
      %v3139 = vmul.f32 %v2910, %v2910
      %v3140 = vmul.f32 %v2915, %v2915
      %v3141 = vmul.f32 %v2920, %v2920
      %v3142 = vmul.f32 %v2925, %v2925
      %v3143 = vmul.f32 %v2930, %v2930
      %v3144 = vmul.f32 %v2935, %v2935
      %v3145 = vmul.f32 %v2940, %v2940
      %v3146 = vmul.f32 %v2945, %v2945
      %v3147 = vmul.f32 %v2950, %v2950
      %v3148 = vmul.f32 %v2955, %v2955
      %v3149 = vmul.f32 %v2960, %v2960
      %v3150 = vmul.f32 %v2965, %v2965
      %v3151 = vmul.f32 %v2970, %v2970
      %v3152 = vmul.f32 %v2975, %v2975
      %v3153 = vmul.f32 %v2980, %v2980
      %v3154 = vmul.f32 %v2985, %v2985
      %v3155 = vmul.f32 %v2990, %v2990
      %v3156 = vmul.f32 %v2995, %v2995
      %v3157 = vmul.f32 %v3000, %v3000
      %v3158 = vmul.f32 %v3005, %v3005
      %v3159 = vmul.f32 %v3010, %v3010
      %v3160 = vmul.f32 %v3015, %v3015
      %v3161 = vmul.f32 %v3020, %v3020
      %v3162 = vmul.f32 %v3025, %v3025
      %v3163 = vmul.f32 %v3030, %v3030
      %v3164 = vmul.f32 %v3035, %v3035
      %v3165 = vmul.f32 %v3040, %v3040
      %v3166 = vmul.f32 %v3045, %v3045
      %v3167 = vmul.f32 %v3050, %v3050
      %v3168 = vmul.f32 %v3055, %v3055
      %v3169 = vmul.f32 %v3060, %v3060
      %v3170 = vmul.f32 %v3065, %v3065
      %v3171 = vsel %vm2507, %v3139, 0.0
      %v3172 = vsel %vm2507, %v3140, 0.0
      %v3173 = vadd.f32 %v3171, %v3172
      %v3174 = vsel %vm2507, %v3141, 0.0
      %v3175 = vadd.f32 %v3173, %v3174
      %v3176 = vsel %vm2507, %v3142, 0.0
      %v3177 = vadd.f32 %v3175, %v3176
      %v3178 = vsel %vm2507, %v3143, 0.0
      %v3179 = vadd.f32 %v3177, %v3178
      %v3180 = vsel %vm2507, %v3144, 0.0
      %v3181 = vadd.f32 %v3179, %v3180
      %v3182 = vsel %vm2507, %v3145, 0.0
      %v3183 = vadd.f32 %v3181, %v3182
      %v3184 = vsel %vm2507, %v3146, 0.0
      %v3185 = vadd.f32 %v3183, %v3184
      %v3186 = vsel %vm2507, %v3147, 0.0
      %v3187 = vadd.f32 %v3185, %v3186
      %v3188 = vsel %vm2507, %v3148, 0.0
      %v3189 = vadd.f32 %v3187, %v3188
      %v3190 = vsel %vm2507, %v3149, 0.0
      %v3191 = vadd.f32 %v3189, %v3190
      %v3192 = vsel %vm2507, %v3150, 0.0
      %v3193 = vadd.f32 %v3191, %v3192
      %v3194 = vsel %vm2507, %v3151, 0.0
      %v3195 = vadd.f32 %v3193, %v3194
      %v3196 = vsel %vm2507, %v3152, 0.0
      %v3197 = vadd.f32 %v3195, %v3196
      %v3198 = vsel %vm2507, %v3153, 0.0
      %v3199 = vadd.f32 %v3197, %v3198
      %v3200 = vsel %vm2507, %v3154, 0.0
      %v3201 = vadd.f32 %v3199, %v3200
      %v3202 = vsel %vm2507, %v3155, 0.0
      %v3203 = vadd.f32 %v3201, %v3202
      %v3204 = vsel %vm2507, %v3156, 0.0
      %v3205 = vadd.f32 %v3203, %v3204
      %v3206 = vsel %vm2507, %v3157, 0.0
      %v3207 = vadd.f32 %v3205, %v3206
      %v3208 = vsel %vm2507, %v3158, 0.0
      %v3209 = vadd.f32 %v3207, %v3208
      %v3210 = vsel %vm2507, %v3159, 0.0
      %v3211 = vadd.f32 %v3209, %v3210
      %v3212 = vsel %vm2507, %v3160, 0.0
      %v3213 = vadd.f32 %v3211, %v3212
      %v3214 = vsel %vm2507, %v3161, 0.0
      %v3215 = vadd.f32 %v3213, %v3214
      %v3216 = vsel %vm2507, %v3162, 0.0
      %v3217 = vadd.f32 %v3215, %v3216
      %v3218 = vsel %vm2507, %v3163, 0.0
      %v3219 = vadd.f32 %v3217, %v3218
      %v3220 = vsel %vm2507, %v3164, 0.0
      %v3221 = vadd.f32 %v3219, %v3220
      %v3222 = vsel %vm2507, %v3165, 0.0
      %v3223 = vadd.f32 %v3221, %v3222
      %v3224 = vsel %vm2507, %v3166, 0.0
      %v3225 = vadd.f32 %v3223, %v3224
      %v3226 = vsel %vm2507, %v3167, 0.0
      %v3227 = vadd.f32 %v3225, %v3226
      %v3228 = vsel %vm2507, %v3168, 0.0
      %v3229 = vadd.f32 %v3227, %v3228
      %v3230 = vsel %vm2507, %v3169, 0.0
      %v3231 = vadd.f32 %v3229, %v3230
      %v3232 = vsel %vm2507, %v3170, 0.0
      %v3233 = vadd.f32 %v3231, %v3232
      %v3234 = vrot.slane %v3233, 4
      %v3235 = vadd.f32 %v3233, %v3234
      %v3236 = vrot.slane %v3235, 2
      %v3237 = vadd.f32 %v3235, %v3236
      %v3238 = vrot.slane %v3237, 1
      %v3239 = vadd.f32 %v3237, %v3238
      %3240 = vst.msk [vmem:[%s307] sm:$0x1] %vm3137, %v3239
      %v3257 = vrot.slane %v2920, 7
      %vm3258 = vcmask 1041409
      %v3259 = vsel %vm3258, %v3257, %v2910
      %v3260 = vrot.slane %v2930, 6
      %vm3261 = vcmask 1042434
      %v3262 = vsel %vm3261, %v3260, %v3259
      %v3263 = vrot.slane %v2940, 5
      %vm3264 = vcmask 1043459
      %v3265 = vsel %vm3264, %v3263, %v3262
      %v3266 = vrot.slane %v2950, 4
      %vm3267 = vcmask 1044484
      %v3268 = vsel %vm3267, %v3266, %v3265
      %v3269 = vrot.slane %v2960, 3
      %vm3270 = vcmask 1045509
      %v3271 = vsel %vm3270, %v3269, %v3268
      %v3272 = vrot.slane %v2970, 2
      %vm3273 = vcmask 1046534
      %v3274 = vsel %vm3273, %v3272, %v3271
      %v3275 = vrot.slane %v2980, 1
      %vm3276 = vcmask 1047559
      %v3277 = vsel %vm3276, %v3275, %v3274
      %v3278 = vrot.slane %v3000, 7
      %v3279 = vsel %vm3258, %v3278, %v2990
      %v3280 = vrot.slane %v3010, 6
      %v3281 = vsel %vm3261, %v3280, %v3279
      %v3282 = vrot.slane %v3020, 5
      %v3283 = vsel %vm3264, %v3282, %v3281
      %v3284 = vrot.slane %v3030, 4
      %v3285 = vsel %vm3267, %v3284, %v3283
      %v3286 = vrot.slane %v3040, 3
      %v3287 = vsel %vm3270, %v3286, %v3285
      %v3288 = vrot.slane %v3050, 2
      %v3289 = vsel %vm3273, %v3288, %v3287
      %v3290 = vrot.slane %v3060, 1
      %v3291 = vsel %vm3276, %v3290, %v3289
      %v3294 = vrot.slane %v2910, 1
      %v3295 = vsel %vm3258, %v2920, %v3294
      %v3296 = vrot.slane %v2930, 7
      %v3297 = vsel %vm3261, %v3296, %v3295
      %v3298 = vrot.slane %v2940, 6
      %v3299 = vsel %vm3264, %v3298, %v3297
      %v3300 = vrot.slane %v2950, 5
      %v3301 = vsel %vm3267, %v3300, %v3299
      %v3302 = vrot.slane %v2960, 4
      %v3303 = vsel %vm3270, %v3302, %v3301
      %v3304 = vrot.slane %v2970, 3
      %v3305 = vsel %vm3273, %v3304, %v3303
      %v3306 = vrot.slane %v2980, 2
      %v3307 = vsel %vm3276, %v3306, %v3305
      %v3308 = vrot.slane %v2990, 1
      %v3309 = vsel %vm3258, %v3000, %v3308
      %v3310 = vrot.slane %v3010, 7
      %v3311 = vsel %vm3261, %v3310, %v3309
      %v3312 = vrot.slane %v3020, 6
      %v3313 = vsel %vm3264, %v3312, %v3311
      %v3314 = vrot.slane %v3030, 5
      %v3315 = vsel %vm3267, %v3314, %v3313
      %v3316 = vrot.slane %v3040, 4
      %v3317 = vsel %vm3270, %v3316, %v3315
      %v3318 = vrot.slane %v3050, 3
      %v3319 = vsel %vm3273, %v3318, %v3317
      %v3320 = vrot.slane %v3060, 2
      %v3321 = vsel %vm3276, %v3320, %v3319
      %3322 = vrot.lane.b32.xlu0 %v3307, 8
      %v3323 = vpop.permute.xlu0 %3322
      %3324 = vrot.lane.b32.xlu0 %v3321, 8
      %v3325 = vpop.permute.xlu0 %3324
      %v3328 = vrot.slane %v2910, 2
      %v3329 = vrot.slane %v2920, 1
      %v3330 = vsel %vm3258, %v3329, %v3328
      %v3331 = vsel %vm3261, %v2930, %v3330
      %v3332 = vrot.slane %v2940, 7
      %v3333 = vsel %vm3264, %v3332, %v3331
      %v3334 = vrot.slane %v2950, 6
      %v3335 = vsel %vm3267, %v3334, %v3333
      %v3336 = vrot.slane %v2960, 5
      %v3337 = vsel %vm3270, %v3336, %v3335
      %v3338 = vrot.slane %v2970, 4
      %v3339 = vsel %vm3273, %v3338, %v3337
      %v3340 = vrot.slane %v2980, 3
      %v3341 = vsel %vm3276, %v3340, %v3339
      %v3342 = vrot.slane %v2990, 2
      %v3343 = vrot.slane %v3000, 1
      %v3344 = vsel %vm3258, %v3343, %v3342
      %v3345 = vsel %vm3261, %v3010, %v3344
      %v3346 = vrot.slane %v3020, 7
      %v3347 = vsel %vm3264, %v3346, %v3345
      %v3348 = vrot.slane %v3030, 6
      %v3349 = vsel %vm3267, %v3348, %v3347
      %v3350 = vrot.slane %v3040, 5
      %v3351 = vsel %vm3270, %v3350, %v3349
      %v3352 = vrot.slane %v3050, 4
      %v3353 = vsel %vm3273, %v3352, %v3351
      %v3354 = vrot.slane %v3060, 3
      %v3355 = vsel %vm3276, %v3354, %v3353
      %3356 = vrot.lane.b32.xlu0 %v3341, 16
      %v3357 = vpop.permute.xlu0 %3356
      %3358 = vrot.lane.b32.xlu0 %v3355, 16
      %v3359 = vpop.permute.xlu0 %3358
      %v3362 = vrot.slane %v2910, 3
      %v3363 = vrot.slane %v2920, 2
      %v3364 = vsel %vm3258, %v3363, %v3362
      %v3365 = vrot.slane %v2930, 1
      %v3366 = vsel %vm3261, %v3365, %v3364
      %v3367 = vsel %vm3264, %v2940, %v3366
      %v3368 = vrot.slane %v2950, 7
      %v3369 = vsel %vm3267, %v3368, %v3367
      %v3370 = vrot.slane %v2960, 6
      %v3371 = vsel %vm3270, %v3370, %v3369
      %v3372 = vrot.slane %v2970, 5
      %v3373 = vsel %vm3273, %v3372, %v3371
      %v3374 = vrot.slane %v2980, 4
      %v3375 = vsel %vm3276, %v3374, %v3373
      %v3376 = vrot.slane %v2990, 3
      %v3377 = vrot.slane %v3000, 2
      %v3378 = vsel %vm3258, %v3377, %v3376
      %v3379 = vrot.slane %v3010, 1
      %v3380 = vsel %vm3261, %v3379, %v3378
      %v3381 = vsel %vm3264, %v3020, %v3380
      %v3382 = vrot.slane %v3030, 7
      %v3383 = vsel %vm3267, %v3382, %v3381
      %v3384 = vrot.slane %v3040, 6
      %v3385 = vsel %vm3270, %v3384, %v3383
      %v3386 = vrot.slane %v3050, 5
      %v3387 = vsel %vm3273, %v3386, %v3385
      %v3388 = vrot.slane %v3060, 4
      %v3389 = vsel %vm3276, %v3388, %v3387
      %3390 = vrot.lane.b32.xlu0 %v3375, 24
      %v3391 = vpop.permute.xlu0 %3390
      %3392 = vrot.lane.b32.xlu0 %v3389, 24
      %v3393 = vpop.permute.xlu0 %3392
      %v3396 = vrot.slane %v2910, 4
      %v3397 = vrot.slane %v2920, 3
      %v3398 = vsel %vm3258, %v3397, %v3396
      %v3399 = vrot.slane %v2930, 2
      %v3400 = vsel %vm3261, %v3399, %v3398
      %v3401 = vrot.slane %v2940, 1
      %v3402 = vsel %vm3264, %v3401, %v3400
      %v3403 = vsel %vm3267, %v2950, %v3402
      %v3404 = vrot.slane %v2960, 7
      %v3405 = vsel %vm3270, %v3404, %v3403
      %v3406 = vrot.slane %v2970, 6
      %v3407 = vsel %vm3273, %v3406, %v3405
      %v3408 = vrot.slane %v2980, 5
      %v3409 = vsel %vm3276, %v3408, %v3407
      %v3410 = vrot.slane %v2990, 4
      %v3411 = vrot.slane %v3000, 3
      %v3412 = vsel %vm3258, %v3411, %v3410
      %v3413 = vrot.slane %v3010, 2
      %v3414 = vsel %vm3261, %v3413, %v3412
      %v3415 = vrot.slane %v3020, 1
      %v3416 = vsel %vm3264, %v3415, %v3414
      %v3417 = vsel %vm3267, %v3030, %v3416
      %v3418 = vrot.slane %v3040, 7
      %v3419 = vsel %vm3270, %v3418, %v3417
      %v3420 = vrot.slane %v3050, 6
      %v3421 = vsel %vm3273, %v3420, %v3419
      %v3422 = vrot.slane %v3060, 5
      %v3423 = vsel %vm3276, %v3422, %v3421
      %3424 = vrot.lane.b32.xlu0 %v3409, 32
      %v3425 = vpop.permute.xlu0 %3424
      %3426 = vrot.lane.b32.xlu0 %v3423, 32
      %v3427 = vpop.permute.xlu0 %3426
      %v3430 = vrot.slane %v2910, 5
      %v3431 = vrot.slane %v2920, 4
      %v3432 = vsel %vm3258, %v3431, %v3430
      %v3433 = vrot.slane %v2930, 3
      %v3434 = vsel %vm3261, %v3433, %v3432
      %v3435 = vrot.slane %v2940, 2
      %v3436 = vsel %vm3264, %v3435, %v3434
      %v3437 = vrot.slane %v2950, 1
      %v3438 = vsel %vm3267, %v3437, %v3436
      %v3439 = vsel %vm3270, %v2960, %v3438
      %v3440 = vrot.slane %v2970, 7
      %v3441 = vsel %vm3273, %v3440, %v3439
      %v3442 = vrot.slane %v2980, 6
      %v3443 = vsel %vm3276, %v3442, %v3441
      %v3444 = vrot.slane %v2990, 5
      %v3445 = vrot.slane %v3000, 4
      %v3446 = vsel %vm3258, %v3445, %v3444
      %v3447 = vrot.slane %v3010, 3
      %v3448 = vsel %vm3261, %v3447, %v3446
      %v3449 = vrot.slane %v3020, 2
      %v3450 = vsel %vm3264, %v3449, %v3448
      %v3451 = vrot.slane %v3030, 1
      %v3452 = vsel %vm3267, %v3451, %v3450
      %v3453 = vsel %vm3270, %v3040, %v3452
      %v3454 = vrot.slane %v3050, 7
      %v3455 = vsel %vm3273, %v3454, %v3453
      %v3456 = vrot.slane %v3060, 6
      %v3457 = vsel %vm3276, %v3456, %v3455
      %3458 = vrot.lane.b32.xlu0 %v3443, 40
      %v3459 = vpop.permute.xlu0 %3458
      %3460 = vrot.lane.b32.xlu0 %v3457, 40
      %v3461 = vpop.permute.xlu0 %3460
      %v3464 = vrot.slane %v2910, 6
      %v3465 = vrot.slane %v2920, 5
      %v3466 = vsel %vm3258, %v3465, %v3464
      %v3467 = vrot.slane %v2930, 4
      %v3468 = vsel %vm3261, %v3467, %v3466
      %v3469 = vrot.slane %v2940, 3
      %v3470 = vsel %vm3264, %v3469, %v3468
      %v3471 = vrot.slane %v2950, 2
      %v3472 = vsel %vm3267, %v3471, %v3470
      %v3473 = vrot.slane %v2960, 1
      %v3474 = vsel %vm3270, %v3473, %v3472
      %v3475 = vsel %vm3273, %v2970, %v3474
      %v3476 = vrot.slane %v2980, 7
      %v3477 = vsel %vm3276, %v3476, %v3475
      %v3478 = vrot.slane %v2990, 6
      %v3479 = vrot.slane %v3000, 5
      %v3480 = vsel %vm3258, %v3479, %v3478
      %v3481 = vrot.slane %v3010, 4
      %v3482 = vsel %vm3261, %v3481, %v3480
      %v3483 = vrot.slane %v3020, 3
      %v3484 = vsel %vm3264, %v3483, %v3482
      %v3485 = vrot.slane %v3030, 2
      %v3486 = vsel %vm3267, %v3485, %v3484
      %v3487 = vrot.slane %v3040, 1
      %v3488 = vsel %vm3270, %v3487, %v3486
      %v3489 = vsel %vm3273, %v3050, %v3488
      %v3490 = vrot.slane %v3060, 7
      %v3491 = vsel %vm3276, %v3490, %v3489
      %3492 = vrot.lane.b32.xlu0 %v3477, 48
      %v3493 = vpop.permute.xlu0 %3492
      %3494 = vrot.lane.b32.xlu0 %v3491, 48
      %v3495 = vpop.permute.xlu0 %3494
      %v3498 = vrot.slane %v2910, 7
      %v3499 = vrot.slane %v2920, 6
      %v3500 = vsel %vm3258, %v3499, %v3498
      %v3501 = vrot.slane %v2930, 5
      %v3502 = vsel %vm3261, %v3501, %v3500
      %v3503 = vrot.slane %v2940, 4
      %v3504 = vsel %vm3264, %v3503, %v3502
      %v3505 = vrot.slane %v2950, 3
      %v3506 = vsel %vm3267, %v3505, %v3504
      %v3507 = vrot.slane %v2960, 2
      %v3508 = vsel %vm3270, %v3507, %v3506
      %v3509 = vrot.slane %v2970, 1
      %v3510 = vsel %vm3273, %v3509, %v3508
      %v3511 = vsel %vm3276, %v2980, %v3510
      %v3512 = vrot.slane %v2990, 7
      %v3513 = vrot.slane %v3000, 6
      %v3514 = vsel %vm3258, %v3513, %v3512
      %v3515 = vrot.slane %v3010, 5
      %v3516 = vsel %vm3261, %v3515, %v3514
      %v3517 = vrot.slane %v3020, 4
      %v3518 = vsel %vm3264, %v3517, %v3516
      %v3519 = vrot.slane %v3030, 3
      %v3520 = vsel %vm3267, %v3519, %v3518
      %v3521 = vrot.slane %v3040, 2
      %v3522 = vsel %vm3270, %v3521, %v3520
      %v3523 = vrot.slane %v3050, 1
      %v3524 = vsel %vm3273, %v3523, %v3522
      %v3525 = vsel %vm3276, %v3060, %v3524
      %3526 = vrot.lane.b32.xlu0 %v3511, 56
      %v3527 = vpop.permute.xlu0 %3526
      %3528 = vrot.lane.b32.xlu0 %v3525, 56
      %v3529 = vpop.permute.xlu0 %3528
      %v3548 = vrot.slane %v2925, 7
      %v3549 = vsel %vm3258, %v3548, %v2915
      %v3550 = vrot.slane %v2935, 6
      %v3551 = vsel %vm3261, %v3550, %v3549
      %v3552 = vrot.slane %v2945, 5
      %v3553 = vsel %vm3264, %v3552, %v3551
      %v3554 = vrot.slane %v2955, 4
      %v3555 = vsel %vm3267, %v3554, %v3553
      %v3556 = vrot.slane %v2965, 3
      %v3557 = vsel %vm3270, %v3556, %v3555
      %v3558 = vrot.slane %v2975, 2
      %v3559 = vsel %vm3273, %v3558, %v3557
      %v3560 = vrot.slane %v2985, 1
      %v3561 = vsel %vm3276, %v3560, %v3559
      %v3562 = vrot.slane %v3005, 7
      %v3563 = vsel %vm3258, %v3562, %v2995
      %v3564 = vrot.slane %v3015, 6
      %v3565 = vsel %vm3261, %v3564, %v3563
      %v3566 = vrot.slane %v3025, 5
      %v3567 = vsel %vm3264, %v3566, %v3565
      %v3568 = vrot.slane %v3035, 4
      %v3569 = vsel %vm3267, %v3568, %v3567
      %v3570 = vrot.slane %v3045, 3
      %v3571 = vsel %vm3270, %v3570, %v3569
      %v3572 = vrot.slane %v3055, 2
      %v3573 = vsel %vm3273, %v3572, %v3571
      %v3574 = vrot.slane %v3065, 1
      %v3575 = vsel %vm3276, %v3574, %v3573
      %3576 = vrot.lane.b32.xlu0 %v3561, 64
      %v3577 = vpop.permute.xlu0 %3576
      %3578 = vrot.lane.b32.xlu0 %v3575, 64
      %v3579 = vpop.permute.xlu0 %3578
      %v3582 = vrot.slane %v2915, 1
      %v3583 = vsel %vm3258, %v2925, %v3582
      %v3584 = vrot.slane %v2935, 7
      %v3585 = vsel %vm3261, %v3584, %v3583
      %v3586 = vrot.slane %v2945, 6
      %v3587 = vsel %vm3264, %v3586, %v3585
      %v3588 = vrot.slane %v2955, 5
      %v3589 = vsel %vm3267, %v3588, %v3587
      %v3590 = vrot.slane %v2965, 4
      %v3591 = vsel %vm3270, %v3590, %v3589
      %v3592 = vrot.slane %v2975, 3
      %v3593 = vsel %vm3273, %v3592, %v3591
      %v3594 = vrot.slane %v2985, 2
      %v3595 = vsel %vm3276, %v3594, %v3593
      %v3596 = vrot.slane %v2995, 1
      %v3597 = vsel %vm3258, %v3005, %v3596
      %v3598 = vrot.slane %v3015, 7
      %v3599 = vsel %vm3261, %v3598, %v3597
      %v3600 = vrot.slane %v3025, 6
      %v3601 = vsel %vm3264, %v3600, %v3599
      %v3602 = vrot.slane %v3035, 5
      %v3603 = vsel %vm3267, %v3602, %v3601
      %v3604 = vrot.slane %v3045, 4
      %v3605 = vsel %vm3270, %v3604, %v3603
      %v3606 = vrot.slane %v3055, 3
      %v3607 = vsel %vm3273, %v3606, %v3605
      %v3608 = vrot.slane %v3065, 2
      %v3609 = vsel %vm3276, %v3608, %v3607
      %3610 = vrot.lane.b32.xlu0 %v3595, 72
      %v3611 = vpop.permute.xlu0 %3610
      %3612 = vrot.lane.b32.xlu0 %v3609, 72
      %v3613 = vpop.permute.xlu0 %3612
      %v3616 = vrot.slane %v2915, 2
      %v3617 = vrot.slane %v2925, 1
      %v3618 = vsel %vm3258, %v3617, %v3616
      %v3619 = vsel %vm3261, %v2935, %v3618
      %v3620 = vrot.slane %v2945, 7
      %v3621 = vsel %vm3264, %v3620, %v3619
      %v3622 = vrot.slane %v2955, 6
      %v3623 = vsel %vm3267, %v3622, %v3621
      %v3624 = vrot.slane %v2965, 5
      %v3625 = vsel %vm3270, %v3624, %v3623
      %v3626 = vrot.slane %v2975, 4
      %v3627 = vsel %vm3273, %v3626, %v3625
      %v3628 = vrot.slane %v2985, 3
      %v3629 = vsel %vm3276, %v3628, %v3627
      %v3630 = vrot.slane %v2995, 2
      %v3631 = vrot.slane %v3005, 1
      %v3632 = vsel %vm3258, %v3631, %v3630
      %v3633 = vsel %vm3261, %v3015, %v3632
      %v3634 = vrot.slane %v3025, 7
      %v3635 = vsel %vm3264, %v3634, %v3633
      %v3636 = vrot.slane %v3035, 6
      %v3637 = vsel %vm3267, %v3636, %v3635
      %v3638 = vrot.slane %v3045, 5
      %v3639 = vsel %vm3270, %v3638, %v3637
      %v3640 = vrot.slane %v3055, 4
      %v3641 = vsel %vm3273, %v3640, %v3639
      %v3642 = vrot.slane %v3065, 3
      %v3643 = vsel %vm3276, %v3642, %v3641
      %3644 = vrot.lane.b32.xlu0 %v3629, 80
      %v3645 = vpop.permute.xlu0 %3644
      %3646 = vrot.lane.b32.xlu0 %v3643, 80
      %v3647 = vpop.permute.xlu0 %3646
      %v3650 = vrot.slane %v2915, 3
      %v3651 = vrot.slane %v2925, 2
      %v3652 = vsel %vm3258, %v3651, %v3650
      %v3653 = vrot.slane %v2935, 1
      %v3654 = vsel %vm3261, %v3653, %v3652
      %v3655 = vsel %vm3264, %v2945, %v3654
      %v3656 = vrot.slane %v2955, 7
      %v3657 = vsel %vm3267, %v3656, %v3655
      %v3658 = vrot.slane %v2965, 6
      %v3659 = vsel %vm3270, %v3658, %v3657
      %v3660 = vrot.slane %v2975, 5
      %v3661 = vsel %vm3273, %v3660, %v3659
      %v3662 = vrot.slane %v2985, 4
      %v3663 = vsel %vm3276, %v3662, %v3661
      %v3664 = vrot.slane %v2995, 3
      %v3665 = vrot.slane %v3005, 2
      %v3666 = vsel %vm3258, %v3665, %v3664
      %v3667 = vrot.slane %v3015, 1
      %v3668 = vsel %vm3261, %v3667, %v3666
      %v3669 = vsel %vm3264, %v3025, %v3668
      %v3670 = vrot.slane %v3035, 7
      %v3671 = vsel %vm3267, %v3670, %v3669
      %v3672 = vrot.slane %v3045, 6
      %v3673 = vsel %vm3270, %v3672, %v3671
      %v3674 = vrot.slane %v3055, 5
      %v3675 = vsel %vm3273, %v3674, %v3673
      %v3676 = vrot.slane %v3065, 4
      %v3677 = vsel %vm3276, %v3676, %v3675
      %3678 = vrot.lane.b32.xlu0 %v3663, 88
      %v3679 = vpop.permute.xlu0 %3678
      %3680 = vrot.lane.b32.xlu0 %v3677, 88
      %v3681 = vpop.permute.xlu0 %3680
      %v3684 = vrot.slane %v2915, 4
      %v3685 = vrot.slane %v2925, 3
      %v3686 = vsel %vm3258, %v3685, %v3684
      %v3687 = vrot.slane %v2935, 2
      %v3688 = vsel %vm3261, %v3687, %v3686
      %v3689 = vrot.slane %v2945, 1
      %v3690 = vsel %vm3264, %v3689, %v3688
      %v3691 = vsel %vm3267, %v2955, %v3690
      %v3692 = vrot.slane %v2965, 7
      %v3693 = vsel %vm3270, %v3692, %v3691
      %v3694 = vrot.slane %v2975, 6
      %v3695 = vsel %vm3273, %v3694, %v3693
      %v3696 = vrot.slane %v2985, 5
      %v3697 = vsel %vm3276, %v3696, %v3695
      %v3698 = vrot.slane %v2995, 4
      %v3699 = vrot.slane %v3005, 3
      %v3700 = vsel %vm3258, %v3699, %v3698
      %v3701 = vrot.slane %v3015, 2
      %v3702 = vsel %vm3261, %v3701, %v3700
      %v3703 = vrot.slane %v3025, 1
      %v3704 = vsel %vm3264, %v3703, %v3702
      %v3705 = vsel %vm3267, %v3035, %v3704
      %v3706 = vrot.slane %v3045, 7
      %v3707 = vsel %vm3270, %v3706, %v3705
      %v3708 = vrot.slane %v3055, 6
      %v3709 = vsel %vm3273, %v3708, %v3707
      %v3710 = vrot.slane %v3065, 5
      %v3711 = vsel %vm3276, %v3710, %v3709
      %3712 = vrot.lane.b32.xlu0 %v3697, 96
      %v3713 = vpop.permute.xlu0 %3712
      %3714 = vrot.lane.b32.xlu0 %v3711, 96
      %v3715 = vpop.permute.xlu0 %3714
      %v3718 = vrot.slane %v2915, 5
      %v3719 = vrot.slane %v2925, 4
      %v3720 = vsel %vm3258, %v3719, %v3718
      %v3721 = vrot.slane %v2935, 3
      %v3722 = vsel %vm3261, %v3721, %v3720
      %v3723 = vrot.slane %v2945, 2
      %v3724 = vsel %vm3264, %v3723, %v3722
      %v3725 = vrot.slane %v2955, 1
      %v3726 = vsel %vm3267, %v3725, %v3724
      %v3727 = vsel %vm3270, %v2965, %v3726
      %v3728 = vrot.slane %v2975, 7
      %v3729 = vsel %vm3273, %v3728, %v3727
      %v3730 = vrot.slane %v2985, 6
      %v3731 = vsel %vm3276, %v3730, %v3729
      %v3732 = vrot.slane %v2995, 5
      %v3733 = vrot.slane %v3005, 4
      %v3734 = vsel %vm3258, %v3733, %v3732
      %v3735 = vrot.slane %v3015, 3
      %v3736 = vsel %vm3261, %v3735, %v3734
      %v3737 = vrot.slane %v3025, 2
      %v3738 = vsel %vm3264, %v3737, %v3736
      %v3739 = vrot.slane %v3035, 1
      %v3740 = vsel %vm3267, %v3739, %v3738
      %v3741 = vsel %vm3270, %v3045, %v3740
      %v3742 = vrot.slane %v3055, 7
      %v3743 = vsel %vm3273, %v3742, %v3741
      %v3744 = vrot.slane %v3065, 6
      %v3745 = vsel %vm3276, %v3744, %v3743
      %3746 = vrot.lane.b32.xlu0 %v3731, 104
      %v3747 = vpop.permute.xlu0 %3746
      %3748 = vrot.lane.b32.xlu0 %v3745, 104
      %v3749 = vpop.permute.xlu0 %3748
      %v3752 = vrot.slane %v2915, 6
      %v3753 = vrot.slane %v2925, 5
      %v3754 = vsel %vm3258, %v3753, %v3752
      %v3755 = vrot.slane %v2935, 4
      %v3756 = vsel %vm3261, %v3755, %v3754
      %v3757 = vrot.slane %v2945, 3
      %v3758 = vsel %vm3264, %v3757, %v3756
      %v3759 = vrot.slane %v2955, 2
      %v3760 = vsel %vm3267, %v3759, %v3758
      %v3761 = vrot.slane %v2965, 1
      %v3762 = vsel %vm3270, %v3761, %v3760
      %v3763 = vsel %vm3273, %v2975, %v3762
      %v3764 = vrot.slane %v2985, 7
      %v3765 = vsel %vm3276, %v3764, %v3763
      %v3766 = vrot.slane %v2995, 6
      %v3767 = vrot.slane %v3005, 5
      %v3768 = vsel %vm3258, %v3767, %v3766
      %v3769 = vrot.slane %v3015, 4
      %v3770 = vsel %vm3261, %v3769, %v3768
      %v3771 = vrot.slane %v3025, 3
      %v3772 = vsel %vm3264, %v3771, %v3770
      %v3773 = vrot.slane %v3035, 2
      %v3774 = vsel %vm3267, %v3773, %v3772
      %v3775 = vrot.slane %v3045, 1
      %v3776 = vsel %vm3270, %v3775, %v3774
      %v3777 = vsel %vm3273, %v3055, %v3776
      %v3778 = vrot.slane %v3065, 7
      %v3779 = vsel %vm3276, %v3778, %v3777
      %3780 = vrot.lane.b32.xlu0 %v3765, 112
      %v3781 = vpop.permute.xlu0 %3780
      %3782 = vrot.lane.b32.xlu0 %v3779, 112
      %v3783 = vpop.permute.xlu0 %3782
      %v3786 = vrot.slane %v2915, 7
      %v3787 = vrot.slane %v2925, 6
      %v3788 = vsel %vm3258, %v3787, %v3786
      %v3789 = vrot.slane %v2935, 5
      %v3790 = vsel %vm3261, %v3789, %v3788
      %v3791 = vrot.slane %v2945, 4
      %v3792 = vsel %vm3264, %v3791, %v3790
      %v3793 = vrot.slane %v2955, 3
      %v3794 = vsel %vm3267, %v3793, %v3792
      %v3795 = vrot.slane %v2965, 2
      %v3796 = vsel %vm3270, %v3795, %v3794
      %v3797 = vrot.slane %v2975, 1
      %v3798 = vsel %vm3273, %v3797, %v3796
      %v3799 = vsel %vm3276, %v2985, %v3798
      %v3800 = vrot.slane %v2995, 7
      %v3801 = vrot.slane %v3005, 6
      %v3802 = vsel %vm3258, %v3801, %v3800
      %v3803 = vrot.slane %v3015, 5
      %v3804 = vsel %vm3261, %v3803, %v3802
      %v3805 = vrot.slane %v3025, 4
      %v3806 = vsel %vm3264, %v3805, %v3804
      %v3807 = vrot.slane %v3035, 3
      %v3808 = vsel %vm3267, %v3807, %v3806
      %v3809 = vrot.slane %v3045, 2
      %v3810 = vsel %vm3270, %v3809, %v3808
      %v3811 = vrot.slane %v3055, 1
      %v3812 = vsel %vm3273, %v3811, %v3810
      %v3813 = vsel %vm3276, %v3065, %v3812
      %3814 = vrot.lane.b32.xlu0 %v3799, 120
      %v3815 = vpop.permute.xlu0 %3814
      %3816 = vrot.lane.b32.xlu0 %v3813, 120
      %v3817 = vpop.permute.xlu0 %3816
      %v3820 = vsel %vm2507, %v3277, %v3323
      %v3821 = vsel %vm2507, %v3291, %v3325
      %v3822 = vsel %vm2573, %v3820, %v3357
      %v3823 = vsel %vm2573, %v3821, %v3359
      %v3824 = vsel %vm2639, %v3822, %v3391
      %v3825 = vsel %vm2639, %v3823, %v3393
      %v3826 = vsel %vm2705, %v3824, %v3425
      %v3827 = vsel %vm2705, %v3825, %v3427
      %vm3828 = vcmask 326656
      %v3829 = vsel %vm3828, %v3826, %v3459
      %v3830 = vsel %vm3828, %v3827, %v3461
      %vm3831 = vcmask 392192
      %v3832 = vsel %vm3831, %v3829, %v3493
      %v3833 = vsel %vm3831, %v3830, %v3495
      %vm3834 = vcmask 457728
      %v3835 = vsel %vm3834, %v3832, %v3527
      %v3836 = vsel %vm3834, %v3833, %v3529
      %vm3837 = vcmask 523264
      %v3838 = vsel %vm3837, %v3835, %v3577
      %v3839 = vsel %vm3837, %v3836, %v3579
      %vm3840 = vcmask 588800
      %v3841 = vsel %vm3840, %v3838, %v3611
      %v3842 = vsel %vm3840, %v3839, %v3613
      %vm3843 = vcmask 654336
      %v3844 = vsel %vm3843, %v3841, %v3645
      %v3845 = vsel %vm3843, %v3842, %v3647
      %vm3846 = vcmask 719872
      %v3847 = vsel %vm3846, %v3844, %v3679
      %v3848 = vsel %vm3846, %v3845, %v3681
      %vm3849 = vcmask 785408
      %v3850 = vsel %vm3849, %v3847, %v3713
      %v3851 = vsel %vm3849, %v3848, %v3715
      %vm3852 = vcmask 850944
      %v3853 = vsel %vm3852, %v3850, %v3747
      %v3854 = vsel %vm3852, %v3851, %v3749
      %vm3855 = vcmask 916480
      %v3856 = vsel %vm3855, %v3853, %v3781
      %v3857 = vsel %vm3855, %v3854, %v3783
      %vm3858 = vcmask 982016
      %v3859 = vsel %vm3858, %v3856, %v3815
      %v3860 = vsel %vm3858, %v3857, %v3817
      %3861 = vst [vmem:[%s296] sm:$0xff] %v3859
      %3862 = vst [vmem:[%s296 + $0x8] sm:$0xff] %v3860
      %3863 = vrot.lane.b32.xlu0 %v3277, 120
      %v3864 = vpop.permute.xlu0 %3863
      %3865 = vrot.lane.b32.xlu0 %v3291, 120
      %v3866 = vpop.permute.xlu0 %3865
      %3871 = vrot.lane.b32.xlu0 %v3341, 8
      %v3872 = vpop.permute.xlu0 %3871
      %3873 = vrot.lane.b32.xlu0 %v3355, 8
      %v3874 = vpop.permute.xlu0 %3873
      %3877 = vrot.lane.b32.xlu0 %v3375, 16
      %v3878 = vpop.permute.xlu0 %3877
      %3879 = vrot.lane.b32.xlu0 %v3389, 16
      %v3880 = vpop.permute.xlu0 %3879
      %3883 = vrot.lane.b32.xlu0 %v3409, 24
      %v3884 = vpop.permute.xlu0 %3883
      %3885 = vrot.lane.b32.xlu0 %v3423, 24
      %v3886 = vpop.permute.xlu0 %3885
      %3889 = vrot.lane.b32.xlu0 %v3443, 32
      %v3890 = vpop.permute.xlu0 %3889
      %3891 = vrot.lane.b32.xlu0 %v3457, 32
      %v3892 = vpop.permute.xlu0 %3891
      %3895 = vrot.lane.b32.xlu0 %v3477, 40
      %v3896 = vpop.permute.xlu0 %3895
      %3897 = vrot.lane.b32.xlu0 %v3491, 40
      %v3898 = vpop.permute.xlu0 %3897
      %3901 = vrot.lane.b32.xlu0 %v3511, 48
      %v3902 = vpop.permute.xlu0 %3901
      %3903 = vrot.lane.b32.xlu0 %v3525, 48
      %v3904 = vpop.permute.xlu0 %3903
      %3907 = vrot.lane.b32.xlu0 %v3561, 56
      %v3908 = vpop.permute.xlu0 %3907
      %3909 = vrot.lane.b32.xlu0 %v3575, 56
      %v3910 = vpop.permute.xlu0 %3909
      %3913 = vrot.lane.b32.xlu0 %v3595, 64
      %v3914 = vpop.permute.xlu0 %3913
      %3915 = vrot.lane.b32.xlu0 %v3609, 64
      %v3916 = vpop.permute.xlu0 %3915
      %3919 = vrot.lane.b32.xlu0 %v3629, 72
      %v3920 = vpop.permute.xlu0 %3919
      %3921 = vrot.lane.b32.xlu0 %v3643, 72
      %v3922 = vpop.permute.xlu0 %3921
      %3925 = vrot.lane.b32.xlu0 %v3663, 80
      %v3926 = vpop.permute.xlu0 %3925
      %3927 = vrot.lane.b32.xlu0 %v3677, 80
      %v3928 = vpop.permute.xlu0 %3927
      %3931 = vrot.lane.b32.xlu0 %v3697, 88
      %v3932 = vpop.permute.xlu0 %3931
      %3933 = vrot.lane.b32.xlu0 %v3711, 88
      %v3934 = vpop.permute.xlu0 %3933
      %3937 = vrot.lane.b32.xlu0 %v3731, 96
      %v3938 = vpop.permute.xlu0 %3937
      %3939 = vrot.lane.b32.xlu0 %v3745, 96
      %v3940 = vpop.permute.xlu0 %3939
      %3943 = vrot.lane.b32.xlu0 %v3765, 104
      %v3944 = vpop.permute.xlu0 %3943
      %3945 = vrot.lane.b32.xlu0 %v3779, 104
      %v3946 = vpop.permute.xlu0 %3945
      %3949 = vrot.lane.b32.xlu0 %v3799, 112
      %v3950 = vpop.permute.xlu0 %3949
      %3951 = vrot.lane.b32.xlu0 %v3813, 112
      %v3952 = vpop.permute.xlu0 %3951
      %v3955 = vsel %vm2507, %v3864, %v3307
      %v3956 = vsel %vm2507, %v3866, %v3321
      %v3957 = vsel %vm2573, %v3955, %v3872
      %v3958 = vsel %vm2573, %v3956, %v3874
      %v3959 = vsel %vm2639, %v3957, %v3878
      %v3960 = vsel %vm2639, %v3958, %v3880
      %v3961 = vsel %vm2705, %v3959, %v3884
      %v3962 = vsel %vm2705, %v3960, %v3886
      %v3963 = vsel %vm3828, %v3961, %v3890
      %v3964 = vsel %vm3828, %v3962, %v3892
      %v3965 = vsel %vm3831, %v3963, %v3896
      %v3966 = vsel %vm3831, %v3964, %v3898
      %v3967 = vsel %vm3834, %v3965, %v3902
      %v3968 = vsel %vm3834, %v3966, %v3904
      %v3969 = vsel %vm3837, %v3967, %v3908
      %v3970 = vsel %vm3837, %v3968, %v3910
      %v3971 = vsel %vm3840, %v3969, %v3914
      %v3972 = vsel %vm3840, %v3970, %v3916
      %v3973 = vsel %vm3843, %v3971, %v3920
      %v3974 = vsel %vm3843, %v3972, %v3922
      %v3975 = vsel %vm3846, %v3973, %v3926
      %v3976 = vsel %vm3846, %v3974, %v3928
      %v3977 = vsel %vm3849, %v3975, %v3932
      %v3978 = vsel %vm3849, %v3976, %v3934
      %v3979 = vsel %vm3852, %v3977, %v3938
      %v3980 = vsel %vm3852, %v3978, %v3940
      %v3981 = vsel %vm3855, %v3979, %v3944
      %v3982 = vsel %vm3855, %v3980, %v3946
      %v3983 = vsel %vm3858, %v3981, %v3950
      %v3984 = vsel %vm3858, %v3982, %v3952
      %3985 = vst [vmem:[%s301] sm:$0xff] %v3983
      %3986 = vst [vmem:[%s301 + $0x8] sm:$0xff] %v3984
      %p3987 = scmp.lt.s32.totalorder %s19, 1
      %s3988 = scalar_select %p3987, %s19, 1
      %s3989 = smul.addr %s3988, 2
      %s3990 = smul.addr %s3989, 8
      %s3991 = scalar_lea.vmem %s4, %s3990
      %p3992 = scmp.lt.s32.totalorder %s19, 1
      %s3993 = scalar_select %p3992, %s19, 1
      %s3994 = smul.addr %s3993, 2
      %s3995 = smul.addr %s3994, 8
      %s3996 = scalar_lea.vmem %s5, %s3995
      %p3997 = scmp.lt.s32.totalorder %s19, 1
      %s3998 = scalar_select %p3997, %s19, 1
      %s3999 = scalar_lea.vmem %s6, %s3998
      %p4000 = scmp.lt.s32.totalorder %s19, 1
      %s4001 = scalar_select %p4000, %s19, 1
      %s4002 = scalar_lea.vmem %s7, %s4001
      // Predicated region
      $region37: #{preact_block_forward.2} parent=35 // pred_check
        %p4003 = pneg %p126
      $region38: #{preact_block_forward.2} parent=35 // pred_check_branch
        %4005 = sbr.rel (%p4003) target = $region40
      $region39: #{preact_block_forward.2} parent=35 // pred_region
        _
      $region40: #{preact_block_forward.2} parent=35 // pred_fallthru
        _
      // Predicated region
      $region41: #{preact_block_forward.2} parent=35 // pred_check
        %p4006 = pneg %p152
      $region42: #{preact_block_forward.2} parent=35 // pred_check_branch
        %4008 = sbr.rel (%p4006) target = $region44
      $region43: #{preact_block_forward.2} parent=35 // pred_region
        _
      $region44: #{preact_block_forward.2} parent=35 // pred_fallthru
        _
      // Predicated region
      $region45: #{preact_block_forward.2} parent=35 // pred_check
        %p4009 = pneg %p178
      $region46: #{preact_block_forward.2} parent=35 // pred_check_branch
        %4011 = sbr.rel (%p4009) target = $region48
      $region47: #{preact_block_forward.2} parent=35 // pred_region
        _
      $region48: #{preact_block_forward.2} parent=35 // pred_fallthru
        _
      // Predicated region
      $region49: #{preact_block_forward.2} parent=35 // pred_check
        %p4012 = pneg %p204
      $region50: #{preact_block_forward.2} parent=35 // pred_check_branch
        %4014 = sbr.rel (%p4012) target = $region52
      $region51: #{preact_block_forward.2} parent=35 // pred_region
        _
      $region52: #{preact_block_forward.2} parent=35 // pred_fallthru
        _
    $region36: #{preact_block_forward.2} parent=5 // pred_fallthru
      _
    %p4015 = scmp.le.s32.totalorder 2, %s14
    // Predicated region
    $region53: #{preact_block_forward.2} parent=5 // pred_check
      %p4016 = pneg %p4015
    $region54: #{preact_block_forward.2} parent=5 // pred_check_branch
      %4018 = sbr.rel (%p4016) target = $region56
    $region55: #{preact_block_forward.2} parent=5 // pred_region
      %s4019 = ssub.s32 %s14, 2
      // Predicated region
      $region57: #{preact_block_forward.2} parent=55 // pred_check
        %p4020 = pneg %p132
      $region58: #{preact_block_forward.2} parent=55 // pred_check_branch
        %4022 = sbr.rel (%p4020) target = $region60
      $region59: #{preact_block_forward.2} parent=55 // pred_region
        %p4023 = scmp.lt.s32.totalorder %s20, 1
        %s4024 = scalar_select %p4023, %s20, 1
        %s4025 = smul.addr %s4024, 2
        %s4026 = smul.addr %s4025, 8
        %s4027 = scalar_lea.vmem %s4, %s4026
      $region60: #{preact_block_forward.2} parent=55 // pred_fallthru
        _
      // Predicated region
      $region61: #{preact_block_forward.2} parent=55 // pred_check
        %p4028 = pneg %p158
      $region62: #{preact_block_forward.2} parent=55 // pred_check_branch
        %4030 = sbr.rel (%p4028) target = $region64
      $region63: #{preact_block_forward.2} parent=55 // pred_region
        %p4031 = scmp.lt.s32.totalorder %s20, 1
        %s4032 = scalar_select %p4031, %s20, 1
        %s4033 = smul.addr %s4032, 2
        %s4034 = smul.addr %s4033, 8
        %s4035 = scalar_lea.vmem %s5, %s4034
      $region64: #{preact_block_forward.2} parent=55 // pred_fallthru
        _
      // Predicated region
      $region65: #{preact_block_forward.2} parent=55 // pred_check
        %p4036 = pneg %p184
      $region66: #{preact_block_forward.2} parent=55 // pred_check_branch
        %4038 = sbr.rel (%p4036) target = $region68
      $region67: #{preact_block_forward.2} parent=55 // pred_region
        %p4039 = scmp.lt.s32.totalorder %s20, 1
        %s4040 = scalar_select %p4039, %s20, 1
        %s4041 = scalar_lea.vmem %s6, %s4040
      $region68: #{preact_block_forward.2} parent=55 // pred_fallthru
        _
      // Predicated region
      $region69: #{preact_block_forward.2} parent=55 // pred_check
        %p4042 = pneg %p210
      $region70: #{preact_block_forward.2} parent=55 // pred_check_branch
        %4044 = sbr.rel (%p4042) target = $region72
      $region71: #{preact_block_forward.2} parent=55 // pred_region
        %p4045 = scmp.lt.s32.totalorder %s20, 1
        %s4046 = scalar_select %p4045, %s20, 1
        %s4047 = scalar_lea.vmem %s7, %s4046
      $region72: #{preact_block_forward.2} parent=55 // pred_fallthru
        _
    $region56: #{preact_block_forward.2} parent=5 // pred_fallthru
      _
  $region6: #{preact_block_forward.2} parent=0 // loop_footer
    %s18 = sadd.s32 1, %s14
  $region7: #{preact_block_forward.2} parent=0 // loop_footer_branch
    %13 = sbr.rel target = $region3
  $region8: #{preact_block_forward.2} parent=0 // loop_exit
    _

</llo_original>
